<compile_context>
chip_gen: v5e
topology: v5e:2x2
jax: 0.10.0
libtpu: 0.0.40
codegen_flags: <defaults>
</compile_context>

<pallas_src>
import functools

import jax
import jax.numpy as jnp
from jax.experimental import pallas as pl
from jax.experimental.pallas import tpu as pltpu

_LANE = 128                 # vreg lane width
_SUB = 8                    # vreg sublane count
_GATE_PERM = (0, 1, 3, 2)   # PyTorch (i, f, g, o) -> kernel (i, f, o, g)
_MAX_UNROLL = 64            # bound unrolled-loop code size / compile time


def _round_up(v, m):
    return ((v + m - 1) // m) * m


def _vmem_budget_bytes():
    """Per-generation VMEM budget (v5e/v6e ~96 MiB, v7x ~48 MiB)."""
    cap = 64 * 1024 * 1024                      # safe fallback = v7x physical
    try:
        info = pltpu.get_tpu_info()
        cap = int(getattr(info, "vmem_capacity_bytes", cap))
    except Exception:
        pass
    return int((cap * 3) // 4)                  # headroom for compiler scratch


def _pick_t_chunk(T, Bp, Hp, vmem_budget):
    """Largest time-chunk whose double-buffered tiles fit the VMEM budget."""
    per_t = 2 * (Bp * 4 * Hp * 4 + Bp * Hp * 2)        # gx f32 + out bf16, x2 bufs
    fixed = 2 * (Hp * 4 * Hp * 2) + 2 * (Bp * Hp * 4)  # W_hh bf16 (x2) + h/c carry
    avail = max(vmem_budget - fixed, per_t)
    return int(min(T, avail // per_t, _MAX_UNROLL))


def _lstm_recurrence_kernel(gx_ref, h0_ref, c0_ref, w_hh_t_ref,
                            out_ref, hn_ref, cn_ref, h_sc, c_sc,
                            *, t_chunk, h_pad, n_valid_last):
    # gx_ref:    (t_chunk, Bp, 4*Hp) f32   precomputed x@W_ih^T + b (i,f,o,g)
    # w_hh_t:    (Hp, 4*Hp)          bf16  gate-blocked recurrent weight
    # out_ref:   (t_chunk, Bp, Hp)   bf16  hidden states for this chunk
    # hn/cn:     (Bp, Hp)            f32   final states (written on last step)
    # h_sc/c_sc: (Bp, Hp)            f32   carry across grid steps

    @pl.when(pl.program_id(0) == 0)
    def _():
        h_sc[...] = h0_ref[...]
        c_sc[...] = c0_ref[...]

    h = h_sc[...]
    c = c_sc[...]

    # True on every chunk except the (possibly T-padded) final one.
    not_last = pl.program_id(0) < pl.num_programs(0) - 1

    # Fully-unrolled serial recurrence: per step only the small-LHS recurrent
    # MXU matmul, one fused 3*Hp sigmoid, one Hp tanh, and VPU gating.
    for t in range(t_chunk):
        gates = gx_ref[t] + jnp.dot(h.astype(jnp.bfloat16), w_hh_t_ref[...],
                                    preferred_element_type=jnp.float32)
        sig = jax.nn.sigmoid(gates[:, :3 * h_pad])        # i | f | o, one EUP call
        g = jnp.tanh(gates[:, 3 * h_pad:])
        i = sig[:, 0 * h_pad:1 * h_pad]
        f = sig[:, 1 * h_pad:2 * h_pad]
        o = sig[:, 2 * h_pad:3 * h_pad]
        c_new = f * c + i * g
        h_new = o * jnp.tanh(c_new)
        if t < n_valid_last:                               # static check
            h, c = h_new, c_new
        else:
            # This timestep only exists as T-padding in the final chunk:
            # keep the carry there so hn/cn stay exact.
            h = jnp.where(not_last, h_new, h)
            c = jnp.where(not_last, c_new, c)
        out_ref[t] = h.astype(out_ref.dtype)               # lane-dense store

    h_sc[...] = h
    c_sc[...] = c

    @pl.when(pl.program_id(0) == pl.num_programs(0) - 1)
    def _():
        hn_ref[...] = h
        cn_ref[...] = c


def lstm_forward(x, h0, c0, w_ih, w_hh, b_ih, b_hh, *, t_chunk=None):
    """Matches torch.nn.LSTM(in_dim, out_dim, 1) forward (time-major).

    x: (T, B, D); h0, c0: (1, B, H); w_ih: (4H, D); w_hh: (4H, H);
    b_ih, b_hh: (4H,).  Returns out (T, B, H), (h_n (1,B,H), c_n (1,B,H)).
    """
    T, B, D = x.shape
    depth, _, H = h0.shape
    assert depth == 1, "single-layer LSTM only"

    Hp = _round_up(H, _LANE)
    Bp = _round_up(B, _SUB)
    vmem_budget = _vmem_budget_bytes()
    if t_chunk is None:
        t_chunk = _pick_t_chunk(T, Bp, Hp, vmem_budget)
    T_pad = _round_up(T, t_chunk)
    n_chunks = T_pad // t_chunk
    n_valid_last = T - (n_chunks - 1) * t_chunk

    # ---- XLA-side input projection (off the serial kernel path) ------------
    # gates_x[t, b] = x[t, b] @ W_ih^T + (b_ih + b_hh), re-blocked to gate
    # order (i, f, o, g) and padded to (T_pad, Bp, 4*Hp).
    # TODO(synk): cache the packed weights / projection at parameter-load time
    # for repeated inference instead of per call.
    gx = jnp.einsum('tbd,gd->tbg', x.astype(jnp.float32),
                    w_ih.astype(jnp.float32)) + (b_ih + b_hh)
    gx = gx.reshape(T, B, 4, H)
    gx = jnp.stack([gx[:, :, g, :] for g in _GATE_PERM], axis=2)
    gx = jnp.pad(gx, ((0, T_pad - T), (0, Bp - B), (0, 0), (0, Hp - H)))
    gx = gx.reshape(T_pad, Bp, 4 * Hp).astype(jnp.float32)

    # Recurrent weight, gate-blocked (i, f, o, g), (Hp, 4*Hp) bf16.  Rows that
    # correspond to padded h lanes are zero, so junk in those lanes never
    # contaminates real gate lanes.
    w4 = w_hh.reshape(4, H, H)
    w4 = jnp.stack([w4[g] for g in _GATE_PERM])
    w4 = jnp.pad(w4, ((0, 0), (0, Hp - H), (0, Hp - H)))
    w_hh_t = jnp.transpose(w4.reshape(4 * Hp, Hp)).astype(jnp.bfloat16)

    h0_p = jnp.pad(h0[0], ((0, Bp - B), (0, Hp - H))).astype(jnp.float32)
    c0_p = jnp.pad(c0[0], ((0, Bp - B), (0, Hp - H))).astype(jnp.float32)

    kernel = functools.partial(_lstm_recurrence_kernel, t_chunk=t_chunk,
                               h_pad=Hp, n_valid_last=n_valid_last)

    out_p, hn_p, cn_p = pl.pallas_call(
        kernel,
        out_shape=(
            jax.ShapeDtypeStruct((T_pad, Bp, Hp), jnp.bfloat16),
            jax.ShapeDtypeStruct((Bp, Hp), jnp.float32),
            jax.ShapeDtypeStruct((Bp, Hp), jnp.float32),
        ),
        grid_spec=pltpu.PrefetchScalarGridSpec(
            num_scalar_prefetch=0,
            grid=(n_chunks,),
            in_specs=[
                pl.BlockSpec((t_chunk, Bp, 4 * Hp), lambda i: (i, 0, 0)),  # gates_x
                pl.BlockSpec((Bp, Hp), lambda i: (0, 0)),                  # h0
                pl.BlockSpec((Bp, Hp), lambda i: (0, 0)),                  # c0
                pl.BlockSpec((Hp, 4 * Hp), lambda i: (0, 0)),              # W_hh^T
            ],
            out_specs=(
                pl.BlockSpec((t_chunk, Bp, Hp), lambda i: (i, 0, 0)),      # out chunk
                pl.BlockSpec((Bp, Hp), lambda i: (0, 0)),                  # h_n
                pl.BlockSpec((Bp, Hp), lambda i: (0, 0)),                  # c_n
            ),
            scratch_shapes=[
                pltpu.VMEM((Bp, Hp), jnp.float32),   # h carry across chunks
                pltpu.VMEM((Bp, Hp), jnp.float32),   # c carry across chunks
            ],
        ),
        compiler_params=pltpu.CompilerParams(
            # Recurrence is sequential over time -> "arbitrary".
            dimension_semantics=("arbitrary",),
            vmem_limit_bytes=int(vmem_budget),
        ),
    )(gx, h0_p, c0_p, w_hh_t)

    out = out_p[:T, :B, :H].astype(x.dtype)
    hn = hn_p[:B, :H].reshape(1, B, H).astype(x.dtype)
    cn = cn_p[:B, :H].reshape(1, B, H).astype(x.dtype)
    return out, (hn, cn)


def _lstm_reference(x, h0, c0, w_ih, w_hh, b_ih, b_hh):
    """Pure-JAX f32 reference (mirrors torch.nn.LSTM forward)."""
    T, _, _ = x.shape
    H = h0.shape[-1]
    h, c = h0[0], c0[0]
    b = b_ih + b_hh
    outs = []
    for t in range(T):
        gates = x[t] @ w_ih.T + h @ w_hh.T + b
        i = jax.nn.sigmoid(gates[:, 0 * H:1 * H])
        f = jax.nn.sigmoid(gates[:, 1 * H:2 * H])
        g = jnp.tanh(gates[:, 2 * H:3 * H])
        o = jax.nn.sigmoid(gates[:, 3 * H:4 * H])
        c = f * c + i * g
        h = o * jnp.tanh(c)
        outs.append(h)
    return jnp.stack(outs), h[None], c[None]


if __name__ == "__main__":
    # Shapes from the PyTorch demo module.
    batch_size = 1
    lstm_depth = 1
    model_dimension = 8
    sequence_length = 20
    D = model_dimension
    H = model_dimension

    key = jax.random.PRNGKey(0)
    k = jax.random.split(key, 7)
    scale = 1.0 / jnp.sqrt(jnp.float32(H))

    # Inputs (like torch.randn in the demo).
    x = jax.random.normal(k[0], (sequence_length, batch_size, D), jnp.float32)
    h0 = jax.random.normal(k[1], (lstm_depth, batch_size, H), jnp.float32)
    c0 = jax.random.normal(k[2], (lstm_depth, batch_size, H), jnp.float32)

    # Deterministic synthetic parameters (nn.LSTM-style uniform init).
    w_ih = jax.random.uniform(k[3], (4 * H, D), jnp.float32, -scale, scale)
    w_hh = jax.random.uniform(k[4], (4 * H, H), jnp.float32, -scale, scale)
    b_ih = jax.random.uniform(k[5], (4 * H,), jnp.float32, -scale, scale)
    b_hh = jax.random.uniform(k[6], (4 * H,), jnp.float32, -scale, scale)

    fwd = jax.jit(lstm_forward)
    out, (hn, cn) = fwd(x, h0, c0, w_ih, w_hh, b_ih, b_hh)
    jax.block_until_ready((out, hn, cn))

    assert out.shape == (sequence_length, batch_size, H)
    assert hn.shape == (lstm_depth, batch_size, H)
    assert cn.shape == (lstm_depth, batch_size, H)

    # Numerical sanity check vs. pure-JAX f32 reference (bf16 recurrent matmul
    # + bf16 hidden-state storage tolerance).
    out_r, hn_r, cn_r = _lstm_reference(x, h0, c0, w_ih, w_hh, b_ih, b_hh)
    assert jnp.allclose(out, out_r, atol=5e-2, rtol=5e-2), \
        float(jnp.max(jnp.abs(out - out_r)))
    assert jnp.allclose(hn[0], hn_r, atol=5e-2, rtol=5e-2)
    assert jnp.allclose(cn[0], cn_r, atol=5e-2, rtol=5e-2)

    print("KERNEL_OK")
</pallas_src>

<mosaic_0001>
module attributes {stable_mosaic.version = 11 : i64} {
  func.func @_lstm_recurrence_kernel(%arg0: i32, %arg1: memref<20x8x512xf32, #tpu.memory_space<vmem>>, %arg2: memref<8x128xf32, #tpu.memory_space<vmem>>, %arg3: memref<8x128xf32, #tpu.memory_space<vmem>>, %arg4: memref<128x512xbf16, #tpu.memory_space<vmem>>, %arg5: memref<20x8x128xbf16, #tpu.memory_space<vmem>>, %arg6: memref<8x128xf32, #tpu.memory_space<vmem>>, %arg7: memref<8x128xf32, #tpu.memory_space<vmem>>, %arg8: memref<8x128xf32, #tpu.memory_space<vmem>>, %arg9: memref<8x128xf32, #tpu.memory_space<vmem>>) attributes {dimension_semantics = [#tpu.dimension_semantics<arbitrary>], iteration_bounds = array<i64: 1>, scalar_prefetch = 0 : i64, scratch_operands = 2 : i64, tpu.core_type = #tpu.core_type<tc>, window_params = [{transform_indices = @transform_0, window_bounds = array<i64: 20, 8, 512>}, {pipeline_mode = #tpu.pipeline_mode<synchronous>, transform_indices = @transform_1, window_bounds = array<i64: 8, 128>}, {pipeline_mode = #tpu.pipeline_mode<synchronous>, transform_indices = @transform_2, window_bounds = array<i64: 8, 128>}, {pipeline_mode = #tpu.pipeline_mode<synchronous>, transform_indices = @transform_3, window_bounds = array<i64: 128, 512>}, {transform_indices = @transform_4, window_bounds = array<i64: 20, 8, 128>}, {pipeline_mode = #tpu.pipeline_mode<synchronous>, transform_indices = @transform_5, window_bounds = array<i64: 8, 128>}, {pipeline_mode = #tpu.pipeline_mode<synchronous>, transform_indices = @transform_6, window_bounds = array<i64: 8, 128>}]} {
    %c0_i32 = arith.constant 0 : i32
    %0 = arith.cmpi eq, %arg0, %c0_i32 : i32
    %1 = arith.extui %0 : i1 to i32
    %c0_i32_0 = arith.constant 0 : i32
    %2 = arith.cmpi ne, %1, %c0_i32_0 : i32
    scf.if %2 {
      %c0_190 = arith.constant 0 : index
      %c0_191 = arith.constant 0 : index
      %530 = vector.load %arg2[%c0_190, %c0_191] : memref<8x128xf32, #tpu.memory_space<vmem>>, vector<8x128xf32>
      %c0_192 = arith.constant 0 : index
      %c0_193 = arith.constant 0 : index
      %531 = vector.load %arg8[%c0_192, %c0_193] : memref<8x128xf32, #tpu.memory_space<vmem>>, vector<8x128xf32>
      tpu.vector_store %arg8[%c0_192, %c0_193], %530 {strides = array<i32>} : memref<8x128xf32, #tpu.memory_space<vmem>>, vector<8x128xf32>,
      %c0_194 = arith.constant 0 : index
      %c0_195 = arith.constant 0 : index
      %532 = vector.load %arg3[%c0_194, %c0_195] : memref<8x128xf32, #tpu.memory_space<vmem>>, vector<8x128xf32>
      %c0_196 = arith.constant 0 : index
      %c0_197 = arith.constant 0 : index
      %533 = vector.load %arg9[%c0_196, %c0_197] : memref<8x128xf32, #tpu.memory_space<vmem>>, vector<8x128xf32>
      tpu.vector_store %arg9[%c0_196, %c0_197], %532 {strides = array<i32>} : memref<8x128xf32, #tpu.memory_space<vmem>>, vector<8x128xf32>,
    } else {
    }
    %c0 = arith.constant 0 : index
    %c0_1 = arith.constant 0 : index
    %3 = vector.load %arg8[%c0, %c0_1] : memref<8x128xf32, #tpu.memory_space<vmem>>, vector<8x128xf32>
    %c0_2 = arith.constant 0 : index
    %c0_3 = arith.constant 0 : index
    %4 = vector.load %arg9[%c0_2, %c0_3] : memref<8x128xf32, #tpu.memory_space<vmem>>, vector<8x128xf32>
    %c0_4 = arith.constant 0 : index
    %c0_5 = arith.constant 0 : index
    %c0_6 = arith.constant 0 : index
    %5 = vector.load %arg1[%c0_4, %c0_5, %c0_6] : memref<20x8x512xf32, #tpu.memory_space<vmem>>, vector<1x8x512xf32>
    %6 = vector.shape_cast %5 : vector<1x8x512xf32> to vector<8x512xf32>
    %7 = arith.truncf %3 : vector<8x128xf32> to vector<8x128xbf16>
    %c0_7 = arith.constant 0 : index
    %c0_8 = arith.constant 0 : index
    %8 = vector.load %arg4[%c0_7, %c0_8] : memref<128x512xbf16, #tpu.memory_space<vmem>>, vector<128x512xbf16>
    %cst = arith.constant dense<0.000000e+00> : vector<8x512xf32>
    %9 = tpu.matmul %7, %8, %cst {dimension_numbers = #tpu.dot_dimension_numbers<[1], [0], [0], [1], [0, 0, 1, 1], [], []>} : vector<8x128xbf16>, vector<128x512xbf16>, vector<8x512xf32> -> vector<8x512xf32>
    %10 = arith.addf %6, %9 : vector<8x512xf32>
    %11 = vector.extract_strided_slice %10 {offsets = [0, 0], sizes = [8, 384], strides = [1, 1]} : vector<8x512xf32> to vector<8x384xf32>
    %12 = arith.negf %11 : vector<8x384xf32>
    %13 = math.exp %12 : vector<8x384xf32>
    %cst_9 = arith.constant 1.000000e+00 : f32
    %14 = vector.broadcast %cst_9 : f32 to vector<8x384xf32>
    %15 = arith.addf %14, %13 : vector<8x384xf32>
    %16 = arith.divf %14, %15 : vector<8x384xf32>
    %17 = vector.extract_strided_slice %10 {offsets = [0, 384], sizes = [8, 128], strides = [1, 1]} : vector<8x512xf32> to vector<8x128xf32>
    %18 = math.tanh %17 : vector<8x128xf32>
    %19 = vector.extract_strided_slice %16 {offsets = [0, 0], sizes = [8, 128], strides = [1, 1]} : vector<8x384xf32> to vector<8x128xf32>
    %20 = vector.extract_strided_slice %16 {offsets = [0, 128], sizes = [8, 128], strides = [1, 1]} : vector<8x384xf32> to vector<8x128xf32>
    %21 = vector.extract_strided_slice %16 {offsets = [0, 256], sizes = [8, 128], strides = [1, 1]} : vector<8x384xf32> to vector<8x128xf32>
    %22 = arith.mulf %20, %4 : vector<8x128xf32>
    %23 = arith.mulf %19, %18 : vector<8x128xf32>
    %24 = arith.addf %22, %23 : vector<8x128xf32>
    %25 = math.tanh %24 : vector<8x128xf32>
    %26 = arith.mulf %21, %25 : vector<8x128xf32>
    %27 = arith.truncf %26 : vector<8x128xf32> to vector<8x128xbf16>
    %c0_10 = arith.constant 0 : index
    %c0_11 = arith.constant 0 : index
    %c0_12 = arith.constant 0 : index
    %28 = vector.load %arg5[%c0_10, %c0_11, %c0_12] : memref<20x8x128xbf16, #tpu.memory_space<vmem>>, vector<1x8x128xbf16>
    %29 = vector.shape_cast %28 : vector<1x8x128xbf16> to vector<8x128xbf16>
    %30 = vector.shape_cast %27 : vector<8x128xbf16> to vector<1x8x128xbf16>
    tpu.vector_store %arg5[%c0_10, %c0_11, %c0_12], %30 {strides = array<i32>} : memref<20x8x128xbf16, #tpu.memory_space<vmem>>, vector<1x8x128xbf16>,
    %c1 = arith.constant 1 : index
    %c0_13 = arith.constant 0 : index
    %c0_14 = arith.constant 0 : index
    %31 = vector.load %arg1[%c1, %c0_13, %c0_14] : memref<20x8x512xf32, #tpu.memory_space<vmem>>, vector<1x8x512xf32>
    %32 = vector.shape_cast %31 : vector<1x8x512xf32> to vector<8x512xf32>
    %33 = arith.truncf %26 : vector<8x128xf32> to vector<8x128xbf16>
    %c0_15 = arith.constant 0 : index
    %c0_16 = arith.constant 0 : index
    %34 = vector.load %arg4[%c0_15, %c0_16] : memref<128x512xbf16, #tpu.memory_space<vmem>>, vector<128x512xbf16>
    %cst_17 = arith.constant dense<0.000000e+00> : vector<8x512xf32>
    %35 = tpu.matmul %33, %34, %cst_17 {dimension_numbers = #tpu.dot_dimension_numbers<[1], [0], [0], [1], [0, 0, 1, 1], [], []>} : vector<8x128xbf16>, vector<128x512xbf16>, vector<8x512xf32> -> vector<8x512xf32>
    %36 = arith.addf %32, %35 : vector<8x512xf32>
    %37 = vector.extract_strided_slice %36 {offsets = [0, 0], sizes = [8, 384], strides = [1, 1]} : vector<8x512xf32> to vector<8x384xf32>
    %38 = arith.negf %37 : vector<8x384xf32>
    %39 = math.exp %38 : vector<8x384xf32>
    %cst_18 = arith.constant 1.000000e+00 : f32
    %40 = vector.broadcast %cst_18 : f32 to vector<8x384xf32>
    %41 = arith.addf %40, %39 : vector<8x384xf32>
    %42 = arith.divf %40, %41 : vector<8x384xf32>
    %43 = vector.extract_strided_slice %36 {offsets = [0, 384], sizes = [8, 128], strides = [1, 1]} : vector<8x512xf32> to vector<8x128xf32>
    %44 = math.tanh %43 : vector<8x128xf32>
    %45 = vector.extract_strided_slice %42 {offsets = [0, 0], sizes = [8, 128], strides = [1, 1]} : vector<8x384xf32> to vector<8x128xf32>
    %46 = vector.extract_strided_slice %42 {offsets = [0, 128], sizes = [8, 128], strides = [1, 1]} : vector<8x384xf32> to vector<8x128xf32>
    %47 = vector.extract_strided_slice %42 {offsets = [0, 256], sizes = [8, 128], strides = [1, 1]} : vector<8x384xf32> to vector<8x128xf32>
    %48 = arith.mulf %46, %24 : vector<8x128xf32>
    %49 = arith.mulf %45, %44 : vector<8x128xf32>
    %50 = arith.addf %48, %49 : vector<8x128xf32>
    %51 = math.tanh %50 : vector<8x128xf32>
    %52 = arith.mulf %47, %51 : vector<8x128xf32>
    %53 = arith.truncf %52 : vector<8x128xf32> to vector<8x128xbf16>
    %c1_19 = arith.constant 1 : index
    %c0_20 = arith.constant 0 : index
    %c0_21 = arith.constant 0 : index
    %54 = vector.load %arg5[%c1_19, %c0_20, %c0_21] : memref<20x8x128xbf16, #tpu.memory_space<vmem>>, vector<1x8x128xbf16>
    %55 = vector.shape_cast %54 : vector<1x8x128xbf16> to vector<8x128xbf16>
    %56 = vector.shape_cast %53 : vector<8x128xbf16> to vector<1x8x128xbf16>
    tpu.vector_store %arg5[%c1_19, %c0_20, %c0_21], %56 {strides = array<i32>} : memref<20x8x128xbf16, #tpu.memory_space<vmem>>, vector<1x8x128xbf16>,
    %c2 = arith.constant 2 : index
    %c0_22 = arith.constant 0 : index
    %c0_23 = arith.constant 0 : index
    %57 = vector.load %arg1[%c2, %c0_22, %c0_23] : memref<20x8x512xf32, #tpu.memory_space<vmem>>, vector<1x8x512xf32>
    %58 = vector.shape_cast %57 : vector<1x8x512xf32> to vector<8x512xf32>
    %59 = arith.truncf %52 : vector<8x128xf32> to vector<8x128xbf16>
    %c0_24 = arith.constant 0 : index
    %c0_25 = arith.constant 0 : index
    %60 = vector.load %arg4[%c0_24, %c0_25] : memref<128x512xbf16, #tpu.memory_space<vmem>>, vector<128x512xbf16>
    %cst_26 = arith.constant dense<0.000000e+00> : vector<8x512xf32>
    %61 = tpu.matmul %59, %60, %cst_26 {dimension_numbers = #tpu.dot_dimension_numbers<[1], [0], [0], [1], [0, 0, 1, 1], [], []>} : vector<8x128xbf16>, vector<128x512xbf16>, vector<8x512xf32> -> vector<8x512xf32>
    %62 = arith.addf %58, %61 : vector<8x512xf32>
    %63 = vector.extract_strided_slice %62 {offsets = [0, 0], sizes = [8, 384], strides = [1, 1]} : vector<8x512xf32> to vector<8x384xf32>
    %64 = arith.negf %63 : vector<8x384xf32>
    %65 = math.exp %64 : vector<8x384xf32>
    %cst_27 = arith.constant 1.000000e+00 : f32
    %66 = vector.broadcast %cst_27 : f32 to vector<8x384xf32>
    %67 = arith.addf %66, %65 : vector<8x384xf32>
    %68 = arith.divf %66, %67 : vector<8x384xf32>
    %69 = vector.extract_strided_slice %62 {offsets = [0, 384], sizes = [8, 128], strides = [1, 1]} : vector<8x512xf32> to vector<8x128xf32>
    %70 = math.tanh %69 : vector<8x128xf32>
    %71 = vector.extract_strided_slice %68 {offsets = [0, 0], sizes = [8, 128], strides = [1, 1]} : vector<8x384xf32> to vector<8x128xf32>
    %72 = vector.extract_strided_slice %68 {offsets = [0, 128], sizes = [8, 128], strides = [1, 1]} : vector<8x384xf32> to vector<8x128xf32>
    %73 = vector.extract_strided_slice %68 {offsets = [0, 256], sizes = [8, 128], strides = [1, 1]} : vector<8x384xf32> to vector<8x128xf32>
    %74 = arith.mulf %72, %50 : vector<8x128xf32>
    %75 = arith.mulf %71, %70 : vector<8x128xf32>
    %76 = arith.addf %74, %75 : vector<8x128xf32>
    %77 = math.tanh %76 : vector<8x128xf32>
    %78 = arith.mulf %73, %77 : vector<8x128xf32>
    %79 = arith.truncf %78 : vector<8x128xf32> to vector<8x128xbf16>
    %c2_28 = arith.constant 2 : index
    %c0_29 = arith.constant 0 : index
    %c0_30 = arith.constant 0 : index
    %80 = vector.load %arg5[%c2_28, %c0_29, %c0_30] : memref<20x8x128xbf16, #tpu.memory_space<vmem>>, vector<1x8x128xbf16>
    %81 = vector.shape_cast %80 : vector<1x8x128xbf16> to vector<8x128xbf16>
    %82 = vector.shape_cast %79 : vector<8x128xbf16> to vector<1x8x128xbf16>
    tpu.vector_store %arg5[%c2_28, %c0_29, %c0_30], %82 {strides = array<i32>} : memref<20x8x128xbf16, #tpu.memory_space<vmem>>, vector<1x8x128xbf16>,
    %c3 = arith.constant 3 : index
    %c0_31 = arith.constant 0 : index
    %c0_32 = arith.constant 0 : index
    %83 = vector.load %arg1[%c3, %c0_31, %c0_32] : memref<20x8x512xf32, #tpu.memory_space<vmem>>, vector<1x8x512xf32>
    %84 = vector.shape_cast %83 : vector<1x8x512xf32> to vector<8x512xf32>
    %85 = arith.truncf %78 : vector<8x128xf32> to vector<8x128xbf16>
    %c0_33 = arith.constant 0 : index
    %c0_34 = arith.constant 0 : index
    %86 = vector.load %arg4[%c0_33, %c0_34] : memref<128x512xbf16, #tpu.memory_space<vmem>>, vector<128x512xbf16>
    %cst_35 = arith.constant dense<0.000000e+00> : vector<8x512xf32>
    %87 = tpu.matmul %85, %86, %cst_35 {dimension_numbers = #tpu.dot_dimension_numbers<[1], [0], [0], [1], [0, 0, 1, 1], [], []>} : vector<8x128xbf16>, vector<128x512xbf16>, vector<8x512xf32> -> vector<8x512xf32>
    %88 = arith.addf %84, %87 : vector<8x512xf32>
    %89 = vector.extract_strided_slice %88 {offsets = [0, 0], sizes = [8, 384], strides = [1, 1]} : vector<8x512xf32> to vector<8x384xf32>
    %90 = arith.negf %89 : vector<8x384xf32>
    %91 = math.exp %90 : vector<8x384xf32>
    %cst_36 = arith.constant 1.000000e+00 : f32
    %92 = vector.broadcast %cst_36 : f32 to vector<8x384xf32>
    %93 = arith.addf %92, %91 : vector<8x384xf32>
    %94 = arith.divf %92, %93 : vector<8x384xf32>
    %95 = vector.extract_strided_slice %88 {offsets = [0, 384], sizes = [8, 128], strides = [1, 1]} : vector<8x512xf32> to vector<8x128xf32>
    %96 = math.tanh %95 : vector<8x128xf32>
    %97 = vector.extract_strided_slice %94 {offsets = [0, 0], sizes = [8, 128], strides = [1, 1]} : vector<8x384xf32> to vector<8x128xf32>
    %98 = vector.extract_strided_slice %94 {offsets = [0, 128], sizes = [8, 128], strides = [1, 1]} : vector<8x384xf32> to vector<8x128xf32>
    %99 = vector.extract_strided_slice %94 {offsets = [0, 256], sizes = [8, 128], strides = [1, 1]} : vector<8x384xf32> to vector<8x128xf32>
    %100 = arith.mulf %98, %76 : vector<8x128xf32>
    %101 = arith.mulf %97, %96 : vector<8x128xf32>
    %102 = arith.addf %100, %101 : vector<8x128xf32>
    %103 = math.tanh %102 : vector<8x128xf32>
    %104 = arith.mulf %99, %103 : vector<8x128xf32>
    %105 = arith.truncf %104 : vector<8x128xf32> to vector<8x128xbf16>
    %c3_37 = arith.constant 3 : index
    %c0_38 = arith.constant 0 : index
    %c0_39 = arith.constant 0 : index
    %106 = vector.load %arg5[%c3_37, %c0_38, %c0_39] : memref<20x8x128xbf16, #tpu.memory_space<vmem>>, vector<1x8x128xbf16>
    %107 = vector.shape_cast %106 : vector<1x8x128xbf16> to vector<8x128xbf16>
    %108 = vector.shape_cast %105 : vector<8x128xbf16> to vector<1x8x128xbf16>
    tpu.vector_store %arg5[%c3_37, %c0_38, %c0_39], %108 {strides = array<i32>} : memref<20x8x128xbf16, #tpu.memory_space<vmem>>, vector<1x8x128xbf16>,
    %c4 = arith.constant 4 : index
    %c0_40 = arith.constant 0 : index
    %c0_41 = arith.constant 0 : index
    %109 = vector.load %arg1[%c4, %c0_40, %c0_41] : memref<20x8x512xf32, #tpu.memory_space<vmem>>, vector<1x8x512xf32>
    %110 = vector.shape_cast %109 : vector<1x8x512xf32> to vector<8x512xf32>
    %111 = arith.truncf %104 : vector<8x128xf32> to vector<8x128xbf16>
    %c0_42 = arith.constant 0 : index
    %c0_43 = arith.constant 0 : index
    %112 = vector.load %arg4[%c0_42, %c0_43] : memref<128x512xbf16, #tpu.memory_space<vmem>>, vector<128x512xbf16>
    %cst_44 = arith.constant dense<0.000000e+00> : vector<8x512xf32>
    %113 = tpu.matmul %111, %112, %cst_44 {dimension_numbers = #tpu.dot_dimension_numbers<[1], [0], [0], [1], [0, 0, 1, 1], [], []>} : vector<8x128xbf16>, vector<128x512xbf16>, vector<8x512xf32> -> vector<8x512xf32>
    %114 = arith.addf %110, %113 : vector<8x512xf32>
    %115 = vector.extract_strided_slice %114 {offsets = [0, 0], sizes = [8, 384], strides = [1, 1]} : vector<8x512xf32> to vector<8x384xf32>
    %116 = arith.negf %115 : vector<8x384xf32>
    %117 = math.exp %116 : vector<8x384xf32>
    %cst_45 = arith.constant 1.000000e+00 : f32
    %118 = vector.broadcast %cst_45 : f32 to vector<8x384xf32>
    %119 = arith.addf %118, %117 : vector<8x384xf32>
    %120 = arith.divf %118, %119 : vector<8x384xf32>
    %121 = vector.extract_strided_slice %114 {offsets = [0, 384], sizes = [8, 128], strides = [1, 1]} : vector<8x512xf32> to vector<8x128xf32>
    %122 = math.tanh %121 : vector<8x128xf32>
    %123 = vector.extract_strided_slice %120 {offsets = [0, 0], sizes = [8, 128], strides = [1, 1]} : vector<8x384xf32> to vector<8x128xf32>
    %124 = vector.extract_strided_slice %120 {offsets = [0, 128], sizes = [8, 128], strides = [1, 1]} : vector<8x384xf32> to vector<8x128xf32>
    %125 = vector.extract_strided_slice %120 {offsets = [0, 256], sizes = [8, 128], strides = [1, 1]} : vector<8x384xf32> to vector<8x128xf32>
    %126 = arith.mulf %124, %102 : vector<8x128xf32>
    %127 = arith.mulf %123, %122 : vector<8x128xf32>
    %128 = arith.addf %126, %127 : vector<8x128xf32>
    %129 = math.tanh %128 : vector<8x128xf32>
    %130 = arith.mulf %125, %129 : vector<8x128xf32>
    %131 = arith.truncf %130 : vector<8x128xf32> to vector<8x128xbf16>
    %c4_46 = arith.constant 4 : index
    %c0_47 = arith.constant 0 : index
    %c0_48 = arith.constant 0 : index
    %132 = vector.load %arg5[%c4_46, %c0_47, %c0_48] : memref<20x8x128xbf16, #tpu.memory_space<vmem>>, vector<1x8x128xbf16>
    %133 = vector.shape_cast %132 : vector<1x8x128xbf16> to vector<8x128xbf16>
    %134 = vector.shape_cast %131 : vector<8x128xbf16> to vector<1x8x128xbf16>
    tpu.vector_store %arg5[%c4_46, %c0_47, %c0_48], %134 {strides = array<i32>} : memref<20x8x128xbf16, #tpu.memory_space<vmem>>, vector<1x8x128xbf16>,
    %c5 = arith.constant 5 : index
    %c0_49 = arith.constant 0 : index
    %c0_50 = arith.constant 0 : index
    %135 = vector.load %arg1[%c5, %c0_49, %c0_50] : memref<20x8x512xf32, #tpu.memory_space<vmem>>, vector<1x8x512xf32>
    %136 = vector.shape_cast %135 : vector<1x8x512xf32> to vector<8x512xf32>
    %137 = arith.truncf %130 : vector<8x128xf32> to vector<8x128xbf16>
    %c0_51 = arith.constant 0 : index
    %c0_52 = arith.constant 0 : index
    %138 = vector.load %arg4[%c0_51, %c0_52] : memref<128x512xbf16, #tpu.memory_space<vmem>>, vector<128x512xbf16>
    %cst_53 = arith.constant dense<0.000000e+00> : vector<8x512xf32>
    %139 = tpu.matmul %137, %138, %cst_53 {dimension_numbers = #tpu.dot_dimension_numbers<[1], [0], [0], [1], [0, 0, 1, 1], [], []>} : vector<8x128xbf16>, vector<128x512xbf16>, vector<8x512xf32> -> vector<8x512xf32>
    %140 = arith.addf %136, %139 : vector<8x512xf32>
    %141 = vector.extract_strided_slice %140 {offsets = [0, 0], sizes = [8, 384], strides = [1, 1]} : vector<8x512xf32> to vector<8x384xf32>
    %142 = arith.negf %141 : vector<8x384xf32>
    %143 = math.exp %142 : vector<8x384xf32>
    %cst_54 = arith.constant 1.000000e+00 : f32
    %144 = vector.broadcast %cst_54 : f32 to vector<8x384xf32>
    %145 = arith.addf %144, %143 : vector<8x384xf32>
    %146 = arith.divf %144, %145 : vector<8x384xf32>
    %147 = vector.extract_strided_slice %140 {offsets = [0, 384], sizes = [8, 128], strides = [1, 1]} : vector<8x512xf32> to vector<8x128xf32>
    %148 = math.tanh %147 : vector<8x128xf32>
    %149 = vector.extract_strided_slice %146 {offsets = [0, 0], sizes = [8, 128], strides = [1, 1]} : vector<8x384xf32> to vector<8x128xf32>
    %150 = vector.extract_strided_slice %146 {offsets = [0, 128], sizes = [8, 128], strides = [1, 1]} : vector<8x384xf32> to vector<8x128xf32>
    %151 = vector.extract_strided_slice %146 {offsets = [0, 256], sizes = [8, 128], strides = [1, 1]} : vector<8x384xf32> to vector<8x128xf32>
    %152 = arith.mulf %150, %128 : vector<8x128xf32>
    %153 = arith.mulf %149, %148 : vector<8x128xf32>
    %154 = arith.addf %152, %153 : vector<8x128xf32>
    %155 = math.tanh %154 : vector<8x128xf32>
    %156 = arith.mulf %151, %155 : vector<8x128xf32>
    %157 = arith.truncf %156 : vector<8x128xf32> to vector<8x128xbf16>
    %c5_55 = arith.constant 5 : index
    %c0_56 = arith.constant 0 : index
    %c0_57 = arith.constant 0 : index
    %158 = vector.load %arg5[%c5_55, %c0_56, %c0_57] : memref<20x8x128xbf16, #tpu.memory_space<vmem>>, vector<1x8x128xbf16>
    %159 = vector.shape_cast %158 : vector<1x8x128xbf16> to vector<8x128xbf16>
    %160 = vector.shape_cast %157 : vector<8x128xbf16> to vector<1x8x128xbf16>
    tpu.vector_store %arg5[%c5_55, %c0_56, %c0_57], %160 {strides = array<i32>} : memref<20x8x128xbf16, #tpu.memory_space<vmem>>, vector<1x8x128xbf16>,
    %c6 = arith.constant 6 : index
    %c0_58 = arith.constant 0 : index
    %c0_59 = arith.constant 0 : index
    %161 = vector.load %arg1[%c6, %c0_58, %c0_59] : memref<20x8x512xf32, #tpu.memory_space<vmem>>, vector<1x8x512xf32>
    %162 = vector.shape_cast %161 : vector<1x8x512xf32> to vector<8x512xf32>
    %163 = arith.truncf %156 : vector<8x128xf32> to vector<8x128xbf16>
    %c0_60 = arith.constant 0 : index
    %c0_61 = arith.constant 0 : index
    %164 = vector.load %arg4[%c0_60, %c0_61] : memref<128x512xbf16, #tpu.memory_space<vmem>>, vector<128x512xbf16>
    %cst_62 = arith.constant dense<0.000000e+00> : vector<8x512xf32>
    %165 = tpu.matmul %163, %164, %cst_62 {dimension_numbers = #tpu.dot_dimension_numbers<[1], [0], [0], [1], [0, 0, 1, 1], [], []>} : vector<8x128xbf16>, vector<128x512xbf16>, vector<8x512xf32> -> vector<8x512xf32>
    %166 = arith.addf %162, %165 : vector<8x512xf32>
    %167 = vector.extract_strided_slice %166 {offsets = [0, 0], sizes = [8, 384], strides = [1, 1]} : vector<8x512xf32> to vector<8x384xf32>
    %168 = arith.negf %167 : vector<8x384xf32>
    %169 = math.exp %168 : vector<8x384xf32>
    %cst_63 = arith.constant 1.000000e+00 : f32
    %170 = vector.broadcast %cst_63 : f32 to vector<8x384xf32>
    %171 = arith.addf %170, %169 : vector<8x384xf32>
    %172 = arith.divf %170, %171 : vector<8x384xf32>
    %173 = vector.extract_strided_slice %166 {offsets = [0, 384], sizes = [8, 128], strides = [1, 1]} : vector<8x512xf32> to vector<8x128xf32>
    %174 = math.tanh %173 : vector<8x128xf32>
    %175 = vector.extract_strided_slice %172 {offsets = [0, 0], sizes = [8, 128], strides = [1, 1]} : vector<8x384xf32> to vector<8x128xf32>
    %176 = vector.extract_strided_slice %172 {offsets = [0, 128], sizes = [8, 128], strides = [1, 1]} : vector<8x384xf32> to vector<8x128xf32>
    %177 = vector.extract_strided_slice %172 {offsets = [0, 256], sizes = [8, 128], strides = [1, 1]} : vector<8x384xf32> to vector<8x128xf32>
    %178 = arith.mulf %176, %154 : vector<8x128xf32>
    %179 = arith.mulf %175, %174 : vector<8x128xf32>
    %180 = arith.addf %178, %179 : vector<8x128xf32>
    %181 = math.tanh %180 : vector<8x128xf32>
    %182 = arith.mulf %177, %181 : vector<8x128xf32>
    %183 = arith.truncf %182 : vector<8x128xf32> to vector<8x128xbf16>
    %c6_64 = arith.constant 6 : index
    %c0_65 = arith.constant 0 : index
    %c0_66 = arith.constant 0 : index
    %184 = vector.load %arg5[%c6_64, %c0_65, %c0_66] : memref<20x8x128xbf16, #tpu.memory_space<vmem>>, vector<1x8x128xbf16>
    %185 = vector.shape_cast %184 : vector<1x8x128xbf16> to vector<8x128xbf16>
    %186 = vector.shape_cast %183 : vector<8x128xbf16> to vector<1x8x128xbf16>
    tpu.vector_store %arg5[%c6_64, %c0_65, %c0_66], %186 {strides = array<i32>} : memref<20x8x128xbf16, #tpu.memory_space<vmem>>, vector<1x8x128xbf16>,
    %c7 = arith.constant 7 : index
    %c0_67 = arith.constant 0 : index
    %c0_68 = arith.constant 0 : index
    %187 = vector.load %arg1[%c7, %c0_67, %c0_68] : memref<20x8x512xf32, #tpu.memory_space<vmem>>, vector<1x8x512xf32>
    %188 = vector.shape_cast %187 : vector<1x8x512xf32> to vector<8x512xf32>
    %189 = arith.truncf %182 : vector<8x128xf32> to vector<8x128xbf16>
    %c0_69 = arith.constant 0 : index
    %c0_70 = arith.constant 0 : index
    %190 = vector.load %arg4[%c0_69, %c0_70] : memref<128x512xbf16, #tpu.memory_space<vmem>>, vector<128x512xbf16>
    %cst_71 = arith.constant dense<0.000000e+00> : vector<8x512xf32>
    %191 = tpu.matmul %189, %190, %cst_71 {dimension_numbers = #tpu.dot_dimension_numbers<[1], [0], [0], [1], [0, 0, 1, 1], [], []>} : vector<8x128xbf16>, vector<128x512xbf16>, vector<8x512xf32> -> vector<8x512xf32>
    %192 = arith.addf %188, %191 : vector<8x512xf32>
    %193 = vector.extract_strided_slice %192 {offsets = [0, 0], sizes = [8, 384], strides = [1, 1]} : vector<8x512xf32> to vector<8x384xf32>
    %194 = arith.negf %193 : vector<8x384xf32>
    %195 = math.exp %194 : vector<8x384xf32>
    %cst_72 = arith.constant 1.000000e+00 : f32
    %196 = vector.broadcast %cst_72 : f32 to vector<8x384xf32>
    %197 = arith.addf %196, %195 : vector<8x384xf32>
    %198 = arith.divf %196, %197 : vector<8x384xf32>
    %199 = vector.extract_strided_slice %192 {offsets = [0, 384], sizes = [8, 128], strides = [1, 1]} : vector<8x512xf32> to vector<8x128xf32>
    %200 = math.tanh %199 : vector<8x128xf32>
    %201 = vector.extract_strided_slice %198 {offsets = [0, 0], sizes = [8, 128], strides = [1, 1]} : vector<8x384xf32> to vector<8x128xf32>
    %202 = vector.extract_strided_slice %198 {offsets = [0, 128], sizes = [8, 128], strides = [1, 1]} : vector<8x384xf32> to vector<8x128xf32>
    %203 = vector.extract_strided_slice %198 {offsets = [0, 256], sizes = [8, 128], strides = [1, 1]} : vector<8x384xf32> to vector<8x128xf32>
    %204 = arith.mulf %202, %180 : vector<8x128xf32>
    %205 = arith.mulf %201, %200 : vector<8x128xf32>
    %206 = arith.addf %204, %205 : vector<8x128xf32>
    %207 = math.tanh %206 : vector<8x128xf32>
    %208 = arith.mulf %203, %207 : vector<8x128xf32>
    %209 = arith.truncf %208 : vector<8x128xf32> to vector<8x128xbf16>
    %c7_73 = arith.constant 7 : index
    %c0_74 = arith.constant 0 : index
    %c0_75 = arith.constant 0 : index
    %210 = vector.load %arg5[%c7_73, %c0_74, %c0_75] : memref<20x8x128xbf16, #tpu.memory_space<vmem>>, vector<1x8x128xbf16>
    %211 = vector.shape_cast %210 : vector<1x8x128xbf16> to vector<8x128xbf16>
    %212 = vector.shape_cast %209 : vector<8x128xbf16> to vector<1x8x128xbf16>
    tpu.vector_store %arg5[%c7_73, %c0_74, %c0_75], %212 {strides = array<i32>} : memref<20x8x128xbf16, #tpu.memory_space<vmem>>, vector<1x8x128xbf16>,
    %c8 = arith.constant 8 : index
    %c0_76 = arith.constant 0 : index
    %c0_77 = arith.constant 0 : index
    %213 = vector.load %arg1[%c8, %c0_76, %c0_77] : memref<20x8x512xf32, #tpu.memory_space<vmem>>, vector<1x8x512xf32>
    %214 = vector.shape_cast %213 : vector<1x8x512xf32> to vector<8x512xf32>
    %215 = arith.truncf %208 : vector<8x128xf32> to vector<8x128xbf16>
    %c0_78 = arith.constant 0 : index
    %c0_79 = arith.constant 0 : index
    %216 = vector.load %arg4[%c0_78, %c0_79] : memref<128x512xbf16, #tpu.memory_space<vmem>>, vector<128x512xbf16>
    %cst_80 = arith.constant dense<0.000000e+00> : vector<8x512xf32>
    %217 = tpu.matmul %215, %216, %cst_80 {dimension_numbers = #tpu.dot_dimension_numbers<[1], [0], [0], [1], [0, 0, 1, 1], [], []>} : vector<8x128xbf16>, vector<128x512xbf16>, vector<8x512xf32> -> vector<8x512xf32>
    %218 = arith.addf %214, %217 : vector<8x512xf32>
    %219 = vector.extract_strided_slice %218 {offsets = [0, 0], sizes = [8, 384], strides = [1, 1]} : vector<8x512xf32> to vector<8x384xf32>
    %220 = arith.negf %219 : vector<8x384xf32>
    %221 = math.exp %220 : vector<8x384xf32>
    %cst_81 = arith.constant 1.000000e+00 : f32
    %222 = vector.broadcast %cst_81 : f32 to vector<8x384xf32>
    %223 = arith.addf %222, %221 : vector<8x384xf32>
    %224 = arith.divf %222, %223 : vector<8x384xf32>
    %225 = vector.extract_strided_slice %218 {offsets = [0, 384], sizes = [8, 128], strides = [1, 1]} : vector<8x512xf32> to vector<8x128xf32>
    %226 = math.tanh %225 : vector<8x128xf32>
    %227 = vector.extract_strided_slice %224 {offsets = [0, 0], sizes = [8, 128], strides = [1, 1]} : vector<8x384xf32> to vector<8x128xf32>
    %228 = vector.extract_strided_slice %224 {offsets = [0, 128], sizes = [8, 128], strides = [1, 1]} : vector<8x384xf32> to vector<8x128xf32>
    %229 = vector.extract_strided_slice %224 {offsets = [0, 256], sizes = [8, 128], strides = [1, 1]} : vector<8x384xf32> to vector<8x128xf32>
    %230 = arith.mulf %228, %206 : vector<8x128xf32>
    %231 = arith.mulf %227, %226 : vector<8x128xf32>
    %232 = arith.addf %230, %231 : vector<8x128xf32>
    %233 = math.tanh %232 : vector<8x128xf32>
    %234 = arith.mulf %229, %233 : vector<8x128xf32>
    %235 = arith.truncf %234 : vector<8x128xf32> to vector<8x128xbf16>
    %c8_82 = arith.constant 8 : index
    %c0_83 = arith.constant 0 : index
    %c0_84 = arith.constant 0 : index
    %236 = vector.load %arg5[%c8_82, %c0_83, %c0_84] : memref<20x8x128xbf16, #tpu.memory_space<vmem>>, vector<1x8x128xbf16>
    %237 = vector.shape_cast %236 : vector<1x8x128xbf16> to vector<8x128xbf16>
    %238 = vector.shape_cast %235 : vector<8x128xbf16> to vector<1x8x128xbf16>
    tpu.vector_store %arg5[%c8_82, %c0_83, %c0_84], %238 {strides = array<i32>} : memref<20x8x128xbf16, #tpu.memory_space<vmem>>, vector<1x8x128xbf16>,
    %c9 = arith.constant 9 : index
    %c0_85 = arith.constant 0 : index
    %c0_86 = arith.constant 0 : index
    %239 = vector.load %arg1[%c9, %c0_85, %c0_86] : memref<20x8x512xf32, #tpu.memory_space<vmem>>, vector<1x8x512xf32>
    %240 = vector.shape_cast %239 : vector<1x8x512xf32> to vector<8x512xf32>
    %241 = arith.truncf %234 : vector<8x128xf32> to vector<8x128xbf16>
    %c0_87 = arith.constant 0 : index
    %c0_88 = arith.constant 0 : index
    %242 = vector.load %arg4[%c0_87, %c0_88] : memref<128x512xbf16, #tpu.memory_space<vmem>>, vector<128x512xbf16>
    %cst_89 = arith.constant dense<0.000000e+00> : vector<8x512xf32>
    %243 = tpu.matmul %241, %242, %cst_89 {dimension_numbers = #tpu.dot_dimension_numbers<[1], [0], [0], [1], [0, 0, 1, 1], [], []>} : vector<8x128xbf16>, vector<128x512xbf16>, vector<8x512xf32> -> vector<8x512xf32>
    %244 = arith.addf %240, %243 : vector<8x512xf32>
    %245 = vector.extract_strided_slice %244 {offsets = [0, 0], sizes = [8, 384], strides = [1, 1]} : vector<8x512xf32> to vector<8x384xf32>
    %246 = arith.negf %245 : vector<8x384xf32>
    %247 = math.exp %246 : vector<8x384xf32>
    %cst_90 = arith.constant 1.000000e+00 : f32
    %248 = vector.broadcast %cst_90 : f32 to vector<8x384xf32>
    %249 = arith.addf %248, %247 : vector<8x384xf32>
    %250 = arith.divf %248, %249 : vector<8x384xf32>
    %251 = vector.extract_strided_slice %244 {offsets = [0, 384], sizes = [8, 128], strides = [1, 1]} : vector<8x512xf32> to vector<8x128xf32>
    %252 = math.tanh %251 : vector<8x128xf32>
    %253 = vector.extract_strided_slice %250 {offsets = [0, 0], sizes = [8, 128], strides = [1, 1]} : vector<8x384xf32> to vector<8x128xf32>
    %254 = vector.extract_strided_slice %250 {offsets = [0, 128], sizes = [8, 128], strides = [1, 1]} : vector<8x384xf32> to vector<8x128xf32>
    %255 = vector.extract_strided_slice %250 {offsets = [0, 256], sizes = [8, 128], strides = [1, 1]} : vector<8x384xf32> to vector<8x128xf32>
    %256 = arith.mulf %254, %232 : vector<8x128xf32>
    %257 = arith.mulf %253, %252 : vector<8x128xf32>
    %258 = arith.addf %256, %257 : vector<8x128xf32>
    %259 = math.tanh %258 : vector<8x128xf32>
    %260 = arith.mulf %255, %259 : vector<8x128xf32>
    %261 = arith.truncf %260 : vector<8x128xf32> to vector<8x128xbf16>
    %c9_91 = arith.constant 9 : index
    %c0_92 = arith.constant 0 : index
    %c0_93 = arith.constant 0 : index
    %262 = vector.load %arg5[%c9_91, %c0_92, %c0_93] : memref<20x8x128xbf16, #tpu.memory_space<vmem>>, vector<1x8x128xbf16>
    %263 = vector.shape_cast %262 : vector<1x8x128xbf16> to vector<8x128xbf16>
    %264 = vector.shape_cast %261 : vector<8x128xbf16> to vector<1x8x128xbf16>
    tpu.vector_store %arg5[%c9_91, %c0_92, %c0_93], %264 {strides = array<i32>} : memref<20x8x128xbf16, #tpu.memory_space<vmem>>, vector<1x8x128xbf16>,
    %c10 = arith.constant 10 : index
    %c0_94 = arith.constant 0 : index
    %c0_95 = arith.constant 0 : index
    %265 = vector.load %arg1[%c10, %c0_94, %c0_95] : memref<20x8x512xf32, #tpu.memory_space<vmem>>, vector<1x8x512xf32>
    %266 = vector.shape_cast %265 : vector<1x8x512xf32> to vector<8x512xf32>
    %267 = arith.truncf %260 : vector<8x128xf32> to vector<8x128xbf16>
    %c0_96 = arith.constant 0 : index
    %c0_97 = arith.constant 0 : index
    %268 = vector.load %arg4[%c0_96, %c0_97] : memref<128x512xbf16, #tpu.memory_space<vmem>>, vector<128x512xbf16>
    %cst_98 = arith.constant dense<0.000000e+00> : vector<8x512xf32>
    %269 = tpu.matmul %267, %268, %cst_98 {dimension_numbers = #tpu.dot_dimension_numbers<[1], [0], [0], [1], [0, 0, 1, 1], [], []>} : vector<8x128xbf16>, vector<128x512xbf16>, vector<8x512xf32> -> vector<8x512xf32>
    %270 = arith.addf %266, %269 : vector<8x512xf32>
    %271 = vector.extract_strided_slice %270 {offsets = [0, 0], sizes = [8, 384], strides = [1, 1]} : vector<8x512xf32> to vector<8x384xf32>
    %272 = arith.negf %271 : vector<8x384xf32>
    %273 = math.exp %272 : vector<8x384xf32>
    %cst_99 = arith.constant 1.000000e+00 : f32
    %274 = vector.broadcast %cst_99 : f32 to vector<8x384xf32>
    %275 = arith.addf %274, %273 : vector<8x384xf32>
    %276 = arith.divf %274, %275 : vector<8x384xf32>
    %277 = vector.extract_strided_slice %270 {offsets = [0, 384], sizes = [8, 128], strides = [1, 1]} : vector<8x512xf32> to vector<8x128xf32>
    %278 = math.tanh %277 : vector<8x128xf32>
    %279 = vector.extract_strided_slice %276 {offsets = [0, 0], sizes = [8, 128], strides = [1, 1]} : vector<8x384xf32> to vector<8x128xf32>
    %280 = vector.extract_strided_slice %276 {offsets = [0, 128], sizes = [8, 128], strides = [1, 1]} : vector<8x384xf32> to vector<8x128xf32>
    %281 = vector.extract_strided_slice %276 {offsets = [0, 256], sizes = [8, 128], strides = [1, 1]} : vector<8x384xf32> to vector<8x128xf32>
    %282 = arith.mulf %280, %258 : vector<8x128xf32>
    %283 = arith.mulf %279, %278 : vector<8x128xf32>
    %284 = arith.addf %282, %283 : vector<8x128xf32>
    %285 = math.tanh %284 : vector<8x128xf32>
    %286 = arith.mulf %281, %285 : vector<8x128xf32>
    %287 = arith.truncf %286 : vector<8x128xf32> to vector<8x128xbf16>
    %c10_100 = arith.constant 10 : index
    %c0_101 = arith.constant 0 : index
    %c0_102 = arith.constant 0 : index
    %288 = vector.load %arg5[%c10_100, %c0_101, %c0_102] : memref<20x8x128xbf16, #tpu.memory_space<vmem>>, vector<1x8x128xbf16>
    %289 = vector.shape_cast %288 : vector<1x8x128xbf16> to vector<8x128xbf16>
    %290 = vector.shape_cast %287 : vector<8x128xbf16> to vector<1x8x128xbf16>
    tpu.vector_store %arg5[%c10_100, %c0_101, %c0_102], %290 {strides = array<i32>} : memref<20x8x128xbf16, #tpu.memory_space<vmem>>, vector<1x8x128xbf16>,
    %c11 = arith.constant 11 : index
    %c0_103 = arith.constant 0 : index
    %c0_104 = arith.constant 0 : index
    %291 = vector.load %arg1[%c11, %c0_103, %c0_104] : memref<20x8x512xf32, #tpu.memory_space<vmem>>, vector<1x8x512xf32>
    %292 = vector.shape_cast %291 : vector<1x8x512xf32> to vector<8x512xf32>
    %293 = arith.truncf %286 : vector<8x128xf32> to vector<8x128xbf16>
    %c0_105 = arith.constant 0 : index
    %c0_106 = arith.constant 0 : index
    %294 = vector.load %arg4[%c0_105, %c0_106] : memref<128x512xbf16, #tpu.memory_space<vmem>>, vector<128x512xbf16>
    %cst_107 = arith.constant dense<0.000000e+00> : vector<8x512xf32>
    %295 = tpu.matmul %293, %294, %cst_107 {dimension_numbers = #tpu.dot_dimension_numbers<[1], [0], [0], [1], [0, 0, 1, 1], [], []>} : vector<8x128xbf16>, vector<128x512xbf16>, vector<8x512xf32> -> vector<8x512xf32>
    %296 = arith.addf %292, %295 : vector<8x512xf32>
    %297 = vector.extract_strided_slice %296 {offsets = [0, 0], sizes = [8, 384], strides = [1, 1]} : vector<8x512xf32> to vector<8x384xf32>
    %298 = arith.negf %297 : vector<8x384xf32>
    %299 = math.exp %298 : vector<8x384xf32>
    %cst_108 = arith.constant 1.000000e+00 : f32
    %300 = vector.broadcast %cst_108 : f32 to vector<8x384xf32>
    %301 = arith.addf %300, %299 : vector<8x384xf32>
    %302 = arith.divf %300, %301 : vector<8x384xf32>
    %303 = vector.extract_strided_slice %296 {offsets = [0, 384], sizes = [8, 128], strides = [1, 1]} : vector<8x512xf32> to vector<8x128xf32>
    %304 = math.tanh %303 : vector<8x128xf32>
    %305 = vector.extract_strided_slice %302 {offsets = [0, 0], sizes = [8, 128], strides = [1, 1]} : vector<8x384xf32> to vector<8x128xf32>
    %306 = vector.extract_strided_slice %302 {offsets = [0, 128], sizes = [8, 128], strides = [1, 1]} : vector<8x384xf32> to vector<8x128xf32>
    %307 = vector.extract_strided_slice %302 {offsets = [0, 256], sizes = [8, 128], strides = [1, 1]} : vector<8x384xf32> to vector<8x128xf32>
    %308 = arith.mulf %306, %284 : vector<8x128xf32>
    %309 = arith.mulf %305, %304 : vector<8x128xf32>
    %310 = arith.addf %308, %309 : vector<8x128xf32>
    %311 = math.tanh %310 : vector<8x128xf32>
    %312 = arith.mulf %307, %311 : vector<8x128xf32>
    %313 = arith.truncf %312 : vector<8x128xf32> to vector<8x128xbf16>
    %c11_109 = arith.constant 11 : index
    %c0_110 = arith.constant 0 : index
    %c0_111 = arith.constant 0 : index
    %314 = vector.load %arg5[%c11_109, %c0_110, %c0_111] : memref<20x8x128xbf16, #tpu.memory_space<vmem>>, vector<1x8x128xbf16>
    %315 = vector.shape_cast %314 : vector<1x8x128xbf16> to vector<8x128xbf16>
    %316 = vector.shape_cast %313 : vector<8x128xbf16> to vector<1x8x128xbf16>
    tpu.vector_store %arg5[%c11_109, %c0_110, %c0_111], %316 {strides = array<i32>} : memref<20x8x128xbf16, #tpu.memory_space<vmem>>, vector<1x8x128xbf16>,
    %c12 = arith.constant 12 : index
    %c0_112 = arith.constant 0 : index
    %c0_113 = arith.constant 0 : index
    %317 = vector.load %arg1[%c12, %c0_112, %c0_113] : memref<20x8x512xf32, #tpu.memory_space<vmem>>, vector<1x8x512xf32>
    %318 = vector.shape_cast %317 : vector<1x8x512xf32> to vector<8x512xf32>
    %319 = arith.truncf %312 : vector<8x128xf32> to vector<8x128xbf16>
    %c0_114 = arith.constant 0 : index
    %c0_115 = arith.constant 0 : index
    %320 = vector.load %arg4[%c0_114, %c0_115] : memref<128x512xbf16, #tpu.memory_space<vmem>>, vector<128x512xbf16>
    %cst_116 = arith.constant dense<0.000000e+00> : vector<8x512xf32>
    %321 = tpu.matmul %319, %320, %cst_116 {dimension_numbers = #tpu.dot_dimension_numbers<[1], [0], [0], [1], [0, 0, 1, 1], [], []>} : vector<8x128xbf16>, vector<128x512xbf16>, vector<8x512xf32> -> vector<8x512xf32>
    %322 = arith.addf %318, %321 : vector<8x512xf32>
    %323 = vector.extract_strided_slice %322 {offsets = [0, 0], sizes = [8, 384], strides = [1, 1]} : vector<8x512xf32> to vector<8x384xf32>
    %324 = arith.negf %323 : vector<8x384xf32>
    %325 = math.exp %324 : vector<8x384xf32>
    %cst_117 = arith.constant 1.000000e+00 : f32
    %326 = vector.broadcast %cst_117 : f32 to vector<8x384xf32>
    %327 = arith.addf %326, %325 : vector<8x384xf32>
    %328 = arith.divf %326, %327 : vector<8x384xf32>
    %329 = vector.extract_strided_slice %322 {offsets = [0, 384], sizes = [8, 128], strides = [1, 1]} : vector<8x512xf32> to vector<8x128xf32>
    %330 = math.tanh %329 : vector<8x128xf32>
    %331 = vector.extract_strided_slice %328 {offsets = [0, 0], sizes = [8, 128], strides = [1, 1]} : vector<8x384xf32> to vector<8x128xf32>
    %332 = vector.extract_strided_slice %328 {offsets = [0, 128], sizes = [8, 128], strides = [1, 1]} : vector<8x384xf32> to vector<8x128xf32>
    %333 = vector.extract_strided_slice %328 {offsets = [0, 256], sizes = [8, 128], strides = [1, 1]} : vector<8x384xf32> to vector<8x128xf32>
    %334 = arith.mulf %332, %310 : vector<8x128xf32>
    %335 = arith.mulf %331, %330 : vector<8x128xf32>
    %336 = arith.addf %334, %335 : vector<8x128xf32>
    %337 = math.tanh %336 : vector<8x128xf32>
    %338 = arith.mulf %333, %337 : vector<8x128xf32>
    %339 = arith.truncf %338 : vector<8x128xf32> to vector<8x128xbf16>
    %c12_118 = arith.constant 12 : index
    %c0_119 = arith.constant 0 : index
    %c0_120 = arith.constant 0 : index
    %340 = vector.load %arg5[%c12_118, %c0_119, %c0_120] : memref<20x8x128xbf16, #tpu.memory_space<vmem>>, vector<1x8x128xbf16>
    %341 = vector.shape_cast %340 : vector<1x8x128xbf16> to vector<8x128xbf16>
    %342 = vector.shape_cast %339 : vector<8x128xbf16> to vector<1x8x128xbf16>
    tpu.vector_store %arg5[%c12_118, %c0_119, %c0_120], %342 {strides = array<i32>} : memref<20x8x128xbf16, #tpu.memory_space<vmem>>, vector<1x8x128xbf16>,
    %c13 = arith.constant 13 : index
    %c0_121 = arith.constant 0 : index
    %c0_122 = arith.constant 0 : index
    %343 = vector.load %arg1[%c13, %c0_121, %c0_122] : memref<20x8x512xf32, #tpu.memory_space<vmem>>, vector<1x8x512xf32>
    %344 = vector.shape_cast %343 : vector<1x8x512xf32> to vector<8x512xf32>
    %345 = arith.truncf %338 : vector<8x128xf32> to vector<8x128xbf16>
    %c0_123 = arith.constant 0 : index
    %c0_124 = arith.constant 0 : index
    %346 = vector.load %arg4[%c0_123, %c0_124] : memref<128x512xbf16, #tpu.memory_space<vmem>>, vector<128x512xbf16>
    %cst_125 = arith.constant dense<0.000000e+00> : vector<8x512xf32>
    %347 = tpu.matmul %345, %346, %cst_125 {dimension_numbers = #tpu.dot_dimension_numbers<[1], [0], [0], [1], [0, 0, 1, 1], [], []>} : vector<8x128xbf16>, vector<128x512xbf16>, vector<8x512xf32> -> vector<8x512xf32>
    %348 = arith.addf %344, %347 : vector<8x512xf32>
    %349 = vector.extract_strided_slice %348 {offsets = [0, 0], sizes = [8, 384], strides = [1, 1]} : vector<8x512xf32> to vector<8x384xf32>
    %350 = arith.negf %349 : vector<8x384xf32>
    %351 = math.exp %350 : vector<8x384xf32>
    %cst_126 = arith.constant 1.000000e+00 : f32
    %352 = vector.broadcast %cst_126 : f32 to vector<8x384xf32>
    %353 = arith.addf %352, %351 : vector<8x384xf32>
    %354 = arith.divf %352, %353 : vector<8x384xf32>
    %355 = vector.extract_strided_slice %348 {offsets = [0, 384], sizes = [8, 128], strides = [1, 1]} : vector<8x512xf32> to vector<8x128xf32>
    %356 = math.tanh %355 : vector<8x128xf32>
    %357 = vector.extract_strided_slice %354 {offsets = [0, 0], sizes = [8, 128], strides = [1, 1]} : vector<8x384xf32> to vector<8x128xf32>
    %358 = vector.extract_strided_slice %354 {offsets = [0, 128], sizes = [8, 128], strides = [1, 1]} : vector<8x384xf32> to vector<8x128xf32>
    %359 = vector.extract_strided_slice %354 {offsets = [0, 256], sizes = [8, 128], strides = [1, 1]} : vector<8x384xf32> to vector<8x128xf32>
    %360 = arith.mulf %358, %336 : vector<8x128xf32>
    %361 = arith.mulf %357, %356 : vector<8x128xf32>
    %362 = arith.addf %360, %361 : vector<8x128xf32>
    %363 = math.tanh %362 : vector<8x128xf32>
    %364 = arith.mulf %359, %363 : vector<8x128xf32>
    %365 = arith.truncf %364 : vector<8x128xf32> to vector<8x128xbf16>
    %c13_127 = arith.constant 13 : index
    %c0_128 = arith.constant 0 : index
    %c0_129 = arith.constant 0 : index
    %366 = vector.load %arg5[%c13_127, %c0_128, %c0_129] : memref<20x8x128xbf16, #tpu.memory_space<vmem>>, vector<1x8x128xbf16>
    %367 = vector.shape_cast %366 : vector<1x8x128xbf16> to vector<8x128xbf16>
    %368 = vector.shape_cast %365 : vector<8x128xbf16> to vector<1x8x128xbf16>
    tpu.vector_store %arg5[%c13_127, %c0_128, %c0_129], %368 {strides = array<i32>} : memref<20x8x128xbf16, #tpu.memory_space<vmem>>, vector<1x8x128xbf16>,
    %c14 = arith.constant 14 : index
    %c0_130 = arith.constant 0 : index
    %c0_131 = arith.constant 0 : index
    %369 = vector.load %arg1[%c14, %c0_130, %c0_131] : memref<20x8x512xf32, #tpu.memory_space<vmem>>, vector<1x8x512xf32>
    %370 = vector.shape_cast %369 : vector<1x8x512xf32> to vector<8x512xf32>
    %371 = arith.truncf %364 : vector<8x128xf32> to vector<8x128xbf16>
    %c0_132 = arith.constant 0 : index
    %c0_133 = arith.constant 0 : index
    %372 = vector.load %arg4[%c0_132, %c0_133] : memref<128x512xbf16, #tpu.memory_space<vmem>>, vector<128x512xbf16>
    %cst_134 = arith.constant dense<0.000000e+00> : vector<8x512xf32>
    %373 = tpu.matmul %371, %372, %cst_134 {dimension_numbers = #tpu.dot_dimension_numbers<[1], [0], [0], [1], [0, 0, 1, 1], [], []>} : vector<8x128xbf16>, vector<128x512xbf16>, vector<8x512xf32> -> vector<8x512xf32>
    %374 = arith.addf %370, %373 : vector<8x512xf32>
    %375 = vector.extract_strided_slice %374 {offsets = [0, 0], sizes = [8, 384], strides = [1, 1]} : vector<8x512xf32> to vector<8x384xf32>
    %376 = arith.negf %375 : vector<8x384xf32>
    %377 = math.exp %376 : vector<8x384xf32>
    %cst_135 = arith.constant 1.000000e+00 : f32
    %378 = vector.broadcast %cst_135 : f32 to vector<8x384xf32>
    %379 = arith.addf %378, %377 : vector<8x384xf32>
    %380 = arith.divf %378, %379 : vector<8x384xf32>
    %381 = vector.extract_strided_slice %374 {offsets = [0, 384], sizes = [8, 128], strides = [1, 1]} : vector<8x512xf32> to vector<8x128xf32>
    %382 = math.tanh %381 : vector<8x128xf32>
    %383 = vector.extract_strided_slice %380 {offsets = [0, 0], sizes = [8, 128], strides = [1, 1]} : vector<8x384xf32> to vector<8x128xf32>
    %384 = vector.extract_strided_slice %380 {offsets = [0, 128], sizes = [8, 128], strides = [1, 1]} : vector<8x384xf32> to vector<8x128xf32>
    %385 = vector.extract_strided_slice %380 {offsets = [0, 256], sizes = [8, 128], strides = [1, 1]} : vector<8x384xf32> to vector<8x128xf32>
    %386 = arith.mulf %384, %362 : vector<8x128xf32>
    %387 = arith.mulf %383, %382 : vector<8x128xf32>
    %388 = arith.addf %386, %387 : vector<8x128xf32>
    %389 = math.tanh %388 : vector<8x128xf32>
    %390 = arith.mulf %385, %389 : vector<8x128xf32>
    %391 = arith.truncf %390 : vector<8x128xf32> to vector<8x128xbf16>
    %c14_136 = arith.constant 14 : index
    %c0_137 = arith.constant 0 : index
    %c0_138 = arith.constant 0 : index
    %392 = vector.load %arg5[%c14_136, %c0_137, %c0_138] : memref<20x8x128xbf16, #tpu.memory_space<vmem>>, vector<1x8x128xbf16>
    %393 = vector.shape_cast %392 : vector<1x8x128xbf16> to vector<8x128xbf16>
    %394 = vector.shape_cast %391 : vector<8x128xbf16> to vector<1x8x128xbf16>
    tpu.vector_store %arg5[%c14_136, %c0_137, %c0_138], %394 {strides = array<i32>} : memref<20x8x128xbf16, #tpu.memory_space<vmem>>, vector<1x8x128xbf16>,
    %c15 = arith.constant 15 : index
    %c0_139 = arith.constant 0 : index
    %c0_140 = arith.constant 0 : index
    %395 = vector.load %arg1[%c15, %c0_139, %c0_140] : memref<20x8x512xf32, #tpu.memory_space<vmem>>, vector<1x8x512xf32>
    %396 = vector.shape_cast %395 : vector<1x8x512xf32> to vector<8x512xf32>
    %397 = arith.truncf %390 : vector<8x128xf32> to vector<8x128xbf16>
    %c0_141 = arith.constant 0 : index
    %c0_142 = arith.constant 0 : index
    %398 = vector.load %arg4[%c0_141, %c0_142] : memref<128x512xbf16, #tpu.memory_space<vmem>>, vector<128x512xbf16>
    %cst_143 = arith.constant dense<0.000000e+00> : vector<8x512xf32>
    %399 = tpu.matmul %397, %398, %cst_143 {dimension_numbers = #tpu.dot_dimension_numbers<[1], [0], [0], [1], [0, 0, 1, 1], [], []>} : vector<8x128xbf16>, vector<128x512xbf16>, vector<8x512xf32> -> vector<8x512xf32>
    %400 = arith.addf %396, %399 : vector<8x512xf32>
    %401 = vector.extract_strided_slice %400 {offsets = [0, 0], sizes = [8, 384], strides = [1, 1]} : vector<8x512xf32> to vector<8x384xf32>
    %402 = arith.negf %401 : vector<8x384xf32>
    %403 = math.exp %402 : vector<8x384xf32>
    %cst_144 = arith.constant 1.000000e+00 : f32
    %404 = vector.broadcast %cst_144 : f32 to vector<8x384xf32>
    %405 = arith.addf %404, %403 : vector<8x384xf32>
    %406 = arith.divf %404, %405 : vector<8x384xf32>
    %407 = vector.extract_strided_slice %400 {offsets = [0, 384], sizes = [8, 128], strides = [1, 1]} : vector<8x512xf32> to vector<8x128xf32>
    %408 = math.tanh %407 : vector<8x128xf32>
    %409 = vector.extract_strided_slice %406 {offsets = [0, 0], sizes = [8, 128], strides = [1, 1]} : vector<8x384xf32> to vector<8x128xf32>
    %410 = vector.extract_strided_slice %406 {offsets = [0, 128], sizes = [8, 128], strides = [1, 1]} : vector<8x384xf32> to vector<8x128xf32>
    %411 = vector.extract_strided_slice %406 {offsets = [0, 256], sizes = [8, 128], strides = [1, 1]} : vector<8x384xf32> to vector<8x128xf32>
    %412 = arith.mulf %410, %388 : vector<8x128xf32>
    %413 = arith.mulf %409, %408 : vector<8x128xf32>
    %414 = arith.addf %412, %413 : vector<8x128xf32>
    %415 = math.tanh %414 : vector<8x128xf32>
    %416 = arith.mulf %411, %415 : vector<8x128xf32>
    %417 = arith.truncf %416 : vector<8x128xf32> to vector<8x128xbf16>
    %c15_145 = arith.constant 15 : index
    %c0_146 = arith.constant 0 : index
    %c0_147 = arith.constant 0 : index
    %418 = vector.load %arg5[%c15_145, %c0_146, %c0_147] : memref<20x8x128xbf16, #tpu.memory_space<vmem>>, vector<1x8x128xbf16>
    %419 = vector.shape_cast %418 : vector<1x8x128xbf16> to vector<8x128xbf16>
    %420 = vector.shape_cast %417 : vector<8x128xbf16> to vector<1x8x128xbf16>
    tpu.vector_store %arg5[%c15_145, %c0_146, %c0_147], %420 {strides = array<i32>} : memref<20x8x128xbf16, #tpu.memory_space<vmem>>, vector<1x8x128xbf16>,
    %c16 = arith.constant 16 : index
    %c0_148 = arith.constant 0 : index
    %c0_149 = arith.constant 0 : index
    %421 = vector.load %arg1[%c16, %c0_148, %c0_149] : memref<20x8x512xf32, #tpu.memory_space<vmem>>, vector<1x8x512xf32>
    %422 = vector.shape_cast %421 : vector<1x8x512xf32> to vector<8x512xf32>
    %423 = arith.truncf %416 : vector<8x128xf32> to vector<8x128xbf16>
    %c0_150 = arith.constant 0 : index
    %c0_151 = arith.constant 0 : index
    %424 = vector.load %arg4[%c0_150, %c0_151] : memref<128x512xbf16, #tpu.memory_space<vmem>>, vector<128x512xbf16>
    %cst_152 = arith.constant dense<0.000000e+00> : vector<8x512xf32>
    %425 = tpu.matmul %423, %424, %cst_152 {dimension_numbers = #tpu.dot_dimension_numbers<[1], [0], [0], [1], [0, 0, 1, 1], [], []>} : vector<8x128xbf16>, vector<128x512xbf16>, vector<8x512xf32> -> vector<8x512xf32>
    %426 = arith.addf %422, %425 : vector<8x512xf32>
    %427 = vector.extract_strided_slice %426 {offsets = [0, 0], sizes = [8, 384], strides = [1, 1]} : vector<8x512xf32> to vector<8x384xf32>
    %428 = arith.negf %427 : vector<8x384xf32>
    %429 = math.exp %428 : vector<8x384xf32>
    %cst_153 = arith.constant 1.000000e+00 : f32
    %430 = vector.broadcast %cst_153 : f32 to vector<8x384xf32>
    %431 = arith.addf %430, %429 : vector<8x384xf32>
    %432 = arith.divf %430, %431 : vector<8x384xf32>
    %433 = vector.extract_strided_slice %426 {offsets = [0, 384], sizes = [8, 128], strides = [1, 1]} : vector<8x512xf32> to vector<8x128xf32>
    %434 = math.tanh %433 : vector<8x128xf32>
    %435 = vector.extract_strided_slice %432 {offsets = [0, 0], sizes = [8, 128], strides = [1, 1]} : vector<8x384xf32> to vector<8x128xf32>
    %436 = vector.extract_strided_slice %432 {offsets = [0, 128], sizes = [8, 128], strides = [1, 1]} : vector<8x384xf32> to vector<8x128xf32>
    %437 = vector.extract_strided_slice %432 {offsets = [0, 256], sizes = [8, 128], strides = [1, 1]} : vector<8x384xf32> to vector<8x128xf32>
    %438 = arith.mulf %436, %414 : vector<8x128xf32>
    %439 = arith.mulf %435, %434 : vector<8x128xf32>
    %440 = arith.addf %438, %439 : vector<8x128xf32>
    %441 = math.tanh %440 : vector<8x128xf32>
    %442 = arith.mulf %437, %441 : vector<8x128xf32>
    %443 = arith.truncf %442 : vector<8x128xf32> to vector<8x128xbf16>
    %c16_154 = arith.constant 16 : index
    %c0_155 = arith.constant 0 : index
    %c0_156 = arith.constant 0 : index
    %444 = vector.load %arg5[%c16_154, %c0_155, %c0_156] : memref<20x8x128xbf16, #tpu.memory_space<vmem>>, vector<1x8x128xbf16>
    %445 = vector.shape_cast %444 : vector<1x8x128xbf16> to vector<8x128xbf16>
    %446 = vector.shape_cast %443 : vector<8x128xbf16> to vector<1x8x128xbf16>
    tpu.vector_store %arg5[%c16_154, %c0_155, %c0_156], %446 {strides = array<i32>} : memref<20x8x128xbf16, #tpu.memory_space<vmem>>, vector<1x8x128xbf16>,
    %c17 = arith.constant 17 : index
    %c0_157 = arith.constant 0 : index
    %c0_158 = arith.constant 0 : index
    %447 = vector.load %arg1[%c17, %c0_157, %c0_158] : memref<20x8x512xf32, #tpu.memory_space<vmem>>, vector<1x8x512xf32>
    %448 = vector.shape_cast %447 : vector<1x8x512xf32> to vector<8x512xf32>
    %449 = arith.truncf %442 : vector<8x128xf32> to vector<8x128xbf16>
    %c0_159 = arith.constant 0 : index
    %c0_160 = arith.constant 0 : index
    %450 = vector.load %arg4[%c0_159, %c0_160] : memref<128x512xbf16, #tpu.memory_space<vmem>>, vector<128x512xbf16>
    %cst_161 = arith.constant dense<0.000000e+00> : vector<8x512xf32>
    %451 = tpu.matmul %449, %450, %cst_161 {dimension_numbers = #tpu.dot_dimension_numbers<[1], [0], [0], [1], [0, 0, 1, 1], [], []>} : vector<8x128xbf16>, vector<128x512xbf16>, vector<8x512xf32> -> vector<8x512xf32>
    %452 = arith.addf %448, %451 : vector<8x512xf32>
    %453 = vector.extract_strided_slice %452 {offsets = [0, 0], sizes = [8, 384], strides = [1, 1]} : vector<8x512xf32> to vector<8x384xf32>
    %454 = arith.negf %453 : vector<8x384xf32>
    %455 = math.exp %454 : vector<8x384xf32>
    %cst_162 = arith.constant 1.000000e+00 : f32
    %456 = vector.broadcast %cst_162 : f32 to vector<8x384xf32>
    %457 = arith.addf %456, %455 : vector<8x384xf32>
    %458 = arith.divf %456, %457 : vector<8x384xf32>
    %459 = vector.extract_strided_slice %452 {offsets = [0, 384], sizes = [8, 128], strides = [1, 1]} : vector<8x512xf32> to vector<8x128xf32>
    %460 = math.tanh %459 : vector<8x128xf32>
    %461 = vector.extract_strided_slice %458 {offsets = [0, 0], sizes = [8, 128], strides = [1, 1]} : vector<8x384xf32> to vector<8x128xf32>
    %462 = vector.extract_strided_slice %458 {offsets = [0, 128], sizes = [8, 128], strides = [1, 1]} : vector<8x384xf32> to vector<8x128xf32>
    %463 = vector.extract_strided_slice %458 {offsets = [0, 256], sizes = [8, 128], strides = [1, 1]} : vector<8x384xf32> to vector<8x128xf32>
    %464 = arith.mulf %462, %440 : vector<8x128xf32>
    %465 = arith.mulf %461, %460 : vector<8x128xf32>
    %466 = arith.addf %464, %465 : vector<8x128xf32>
    %467 = math.tanh %466 : vector<8x128xf32>
    %468 = arith.mulf %463, %467 : vector<8x128xf32>
    %469 = arith.truncf %468 : vector<8x128xf32> to vector<8x128xbf16>
    %c17_163 = arith.constant 17 : index
    %c0_164 = arith.constant 0 : index
    %c0_165 = arith.constant 0 : index
    %470 = vector.load %arg5[%c17_163, %c0_164, %c0_165] : memref<20x8x128xbf16, #tpu.memory_space<vmem>>, vector<1x8x128xbf16>
    %471 = vector.shape_cast %470 : vector<1x8x128xbf16> to vector<8x128xbf16>
    %472 = vector.shape_cast %469 : vector<8x128xbf16> to vector<1x8x128xbf16>
    tpu.vector_store %arg5[%c17_163, %c0_164, %c0_165], %472 {strides = array<i32>} : memref<20x8x128xbf16, #tpu.memory_space<vmem>>, vector<1x8x128xbf16>,
    %c18 = arith.constant 18 : index
    %c0_166 = arith.constant 0 : index
    %c0_167 = arith.constant 0 : index
    %473 = vector.load %arg1[%c18, %c0_166, %c0_167] : memref<20x8x512xf32, #tpu.memory_space<vmem>>, vector<1x8x512xf32>
    %474 = vector.shape_cast %473 : vector<1x8x512xf32> to vector<8x512xf32>
    %475 = arith.truncf %468 : vector<8x128xf32> to vector<8x128xbf16>
    %c0_168 = arith.constant 0 : index
    %c0_169 = arith.constant 0 : index
    %476 = vector.load %arg4[%c0_168, %c0_169] : memref<128x512xbf16, #tpu.memory_space<vmem>>, vector<128x512xbf16>
    %cst_170 = arith.constant dense<0.000000e+00> : vector<8x512xf32>
    %477 = tpu.matmul %475, %476, %cst_170 {dimension_numbers = #tpu.dot_dimension_numbers<[1], [0], [0], [1], [0, 0, 1, 1], [], []>} : vector<8x128xbf16>, vector<128x512xbf16>, vector<8x512xf32> -> vector<8x512xf32>
    %478 = arith.addf %474, %477 : vector<8x512xf32>
    %479 = vector.extract_strided_slice %478 {offsets = [0, 0], sizes = [8, 384], strides = [1, 1]} : vector<8x512xf32> to vector<8x384xf32>
    %480 = arith.negf %479 : vector<8x384xf32>
    %481 = math.exp %480 : vector<8x384xf32>
    %cst_171 = arith.constant 1.000000e+00 : f32
    %482 = vector.broadcast %cst_171 : f32 to vector<8x384xf32>
    %483 = arith.addf %482, %481 : vector<8x384xf32>
    %484 = arith.divf %482, %483 : vector<8x384xf32>
    %485 = vector.extract_strided_slice %478 {offsets = [0, 384], sizes = [8, 128], strides = [1, 1]} : vector<8x512xf32> to vector<8x128xf32>
    %486 = math.tanh %485 : vector<8x128xf32>
    %487 = vector.extract_strided_slice %484 {offsets = [0, 0], sizes = [8, 128], strides = [1, 1]} : vector<8x384xf32> to vector<8x128xf32>
    %488 = vector.extract_strided_slice %484 {offsets = [0, 128], sizes = [8, 128], strides = [1, 1]} : vector<8x384xf32> to vector<8x128xf32>
    %489 = vector.extract_strided_slice %484 {offsets = [0, 256], sizes = [8, 128], strides = [1, 1]} : vector<8x384xf32> to vector<8x128xf32>
    %490 = arith.mulf %488, %466 : vector<8x128xf32>
    %491 = arith.mulf %487, %486 : vector<8x128xf32>
    %492 = arith.addf %490, %491 : vector<8x128xf32>
    %493 = math.tanh %492 : vector<8x128xf32>
    %494 = arith.mulf %489, %493 : vector<8x128xf32>
    %495 = arith.truncf %494 : vector<8x128xf32> to vector<8x128xbf16>
    %c18_172 = arith.constant 18 : index
    %c0_173 = arith.constant 0 : index
    %c0_174 = arith.constant 0 : index
    %496 = vector.load %arg5[%c18_172, %c0_173, %c0_174] : memref<20x8x128xbf16, #tpu.memory_space<vmem>>, vector<1x8x128xbf16>
    %497 = vector.shape_cast %496 : vector<1x8x128xbf16> to vector<8x128xbf16>
    %498 = vector.shape_cast %495 : vector<8x128xbf16> to vector<1x8x128xbf16>
    tpu.vector_store %arg5[%c18_172, %c0_173, %c0_174], %498 {strides = array<i32>} : memref<20x8x128xbf16, #tpu.memory_space<vmem>>, vector<1x8x128xbf16>,
    %c19 = arith.constant 19 : index
    %c0_175 = arith.constant 0 : index
    %c0_176 = arith.constant 0 : index
    %499 = vector.load %arg1[%c19, %c0_175, %c0_176] : memref<20x8x512xf32, #tpu.memory_space<vmem>>, vector<1x8x512xf32>
    %500 = vector.shape_cast %499 : vector<1x8x512xf32> to vector<8x512xf32>
    %501 = arith.truncf %494 : vector<8x128xf32> to vector<8x128xbf16>
    %c0_177 = arith.constant 0 : index
    %c0_178 = arith.constant 0 : index
    %502 = vector.load %arg4[%c0_177, %c0_178] : memref<128x512xbf16, #tpu.memory_space<vmem>>, vector<128x512xbf16>
    %cst_179 = arith.constant dense<0.000000e+00> : vector<8x512xf32>
    %503 = tpu.matmul %501, %502, %cst_179 {dimension_numbers = #tpu.dot_dimension_numbers<[1], [0], [0], [1], [0, 0, 1, 1], [], []>} : vector<8x128xbf16>, vector<128x512xbf16>, vector<8x512xf32> -> vector<8x512xf32>
    %504 = arith.addf %500, %503 : vector<8x512xf32>
    %505 = vector.extract_strided_slice %504 {offsets = [0, 0], sizes = [8, 384], strides = [1, 1]} : vector<8x512xf32> to vector<8x384xf32>
    %506 = arith.negf %505 : vector<8x384xf32>
    %507 = math.exp %506 : vector<8x384xf32>
    %cst_180 = arith.constant 1.000000e+00 : f32
    %508 = vector.broadcast %cst_180 : f32 to vector<8x384xf32>
    %509 = arith.addf %508, %507 : vector<8x384xf32>
    %510 = arith.divf %508, %509 : vector<8x384xf32>
    %511 = vector.extract_strided_slice %504 {offsets = [0, 384], sizes = [8, 128], strides = [1, 1]} : vector<8x512xf32> to vector<8x128xf32>
    %512 = math.tanh %511 : vector<8x128xf32>
    %513 = vector.extract_strided_slice %510 {offsets = [0, 0], sizes = [8, 128], strides = [1, 1]} : vector<8x384xf32> to vector<8x128xf32>
    %514 = vector.extract_strided_slice %510 {offsets = [0, 128], sizes = [8, 128], strides = [1, 1]} : vector<8x384xf32> to vector<8x128xf32>
    %515 = vector.extract_strided_slice %510 {offsets = [0, 256], sizes = [8, 128], strides = [1, 1]} : vector<8x384xf32> to vector<8x128xf32>
    %516 = arith.mulf %514, %492 : vector<8x128xf32>
    %517 = arith.mulf %513, %512 : vector<8x128xf32>
    %518 = arith.addf %516, %517 : vector<8x128xf32>
    %519 = math.tanh %518 : vector<8x128xf32>
    %520 = arith.mulf %515, %519 : vector<8x128xf32>
    %521 = arith.truncf %520 : vector<8x128xf32> to vector<8x128xbf16>
    %c19_181 = arith.constant 19 : index
    %c0_182 = arith.constant 0 : index
    %c0_183 = arith.constant 0 : index
    %522 = vector.load %arg5[%c19_181, %c0_182, %c0_183] : memref<20x8x128xbf16, #tpu.memory_space<vmem>>, vector<1x8x128xbf16>
    %523 = vector.shape_cast %522 : vector<1x8x128xbf16> to vector<8x128xbf16>
    %524 = vector.shape_cast %521 : vector<8x128xbf16> to vector<1x8x128xbf16>
    tpu.vector_store %arg5[%c19_181, %c0_182, %c0_183], %524 {strides = array<i32>} : memref<20x8x128xbf16, #tpu.memory_space<vmem>>, vector<1x8x128xbf16>,
    %c0_184 = arith.constant 0 : index
    %c0_185 = arith.constant 0 : index
    %525 = vector.load %arg8[%c0_184, %c0_185] : memref<8x128xf32, #tpu.memory_space<vmem>>, vector<8x128xf32>
    tpu.vector_store %arg8[%c0_184, %c0_185], %520 {strides = array<i32>} : memref<8x128xf32, #tpu.memory_space<vmem>>, vector<8x128xf32>,
    %c0_186 = arith.constant 0 : index
    %c0_187 = arith.constant 0 : index
    %526 = vector.load %arg9[%c0_186, %c0_187] : memref<8x128xf32, #tpu.memory_space<vmem>>, vector<8x128xf32>
    tpu.vector_store %arg9[%c0_186, %c0_187], %518 {strides = array<i32>} : memref<8x128xf32, #tpu.memory_space<vmem>>, vector<8x128xf32>,
    %c0_i32_188 = arith.constant 0 : i32
    %527 = arith.cmpi eq, %arg0, %c0_i32_188 : i32
    %528 = arith.extui %527 : i1 to i32
    %c0_i32_189 = arith.constant 0 : i32
    %529 = arith.cmpi ne, %528, %c0_i32_189 : i32
    scf.if %529 {
      %c0_190 = arith.constant 0 : index
      %c0_191 = arith.constant 0 : index
      %530 = vector.load %arg6[%c0_190, %c0_191] : memref<8x128xf32, #tpu.memory_space<vmem>>, vector<8x128xf32>
      tpu.vector_store %arg6[%c0_190, %c0_191], %520 {strides = array<i32>} : memref<8x128xf32, #tpu.memory_space<vmem>>, vector<8x128xf32>,
      %c0_192 = arith.constant 0 : index
      %c0_193 = arith.constant 0 : index
      %531 = vector.load %arg7[%c0_192, %c0_193] : memref<8x128xf32, #tpu.memory_space<vmem>>, vector<8x128xf32>
      tpu.vector_store %arg7[%c0_192, %c0_193], %518 {strides = array<i32>} : memref<8x128xf32, #tpu.memory_space<vmem>>, vector<8x128xf32>,
    } else {
    }
    return
  }
  func.func @transform_0(%arg0: i32) -> (i32, i32, i32) {
    %c0_i32 = arith.constant 0 : i32
    %c0_i32_0 = arith.constant 0 : i32
    %c0_i32_1 = arith.constant 0 : i32
    return %arg0, %c0_i32, %c0_i32_0 : i32, i32, i32
  }
  func.func @transform_1(%arg0: i32) -> (i32, i32) {
    %c0_i32 = arith.constant 0 : i32
    %c0_i32_0 = arith.constant 0 : i32
    %c0_i32_1 = arith.constant 0 : i32
    return %c0_i32, %c0_i32_0 : i32, i32
  }
  func.func @transform_2(%arg0: i32) -> (i32, i32) {
    %c0_i32 = arith.constant 0 : i32
    %c0_i32_0 = arith.constant 0 : i32
    %c0_i32_1 = arith.constant 0 : i32
    return %c0_i32, %c0_i32_0 : i32, i32
  }
  func.func @transform_3(%arg0: i32) -> (i32, i32) {
    %c0_i32 = arith.constant 0 : i32
    %c0_i32_0 = arith.constant 0 : i32
    %c0_i32_1 = arith.constant 0 : i32
    return %c0_i32, %c0_i32_0 : i32, i32
  }
  func.func @transform_4(%arg0: i32) -> (i32, i32, i32) {
    %c0_i32 = arith.constant 0 : i32
    %c0_i32_0 = arith.constant 0 : i32
    %c0_i32_1 = arith.constant 0 : i32
    return %arg0, %c0_i32, %c0_i32_0 : i32, i32, i32
  }
  func.func @transform_5(%arg0: i32) -> (i32, i32) {
    %c0_i32 = arith.constant 0 : i32
    %c0_i32_0 = arith.constant 0 : i32
    %c0_i32_1 = arith.constant 0 : i32
    return %c0_i32, %c0_i32_0 : i32, i32
  }
  func.func @transform_6(%arg0: i32) -> (i32, i32) {
    %c0_i32 = arith.constant 0 : i32
    %c0_i32_0 = arith.constant 0 : i32
    %c0_i32_1 = arith.constant 0 : i32
    return %c0_i32, %c0_i32_0 : i32, i32
  }
}

</mosaic_0001>

<llo_original>
// kernel: lstm_forward.1
$region0: #{lstm_forward.1}
  #allocation0 [shape = 'u32[]', space=smem, size = 0x4, offset = 0x4, fixed_abs, tag = 'smem constant byte address 0x4 - core index']
  #allocation1 [shape = 'u32[72,128]{1,0:T(1,128)}', space=vmem, size = 0x9000, scoped, tag = 'internal scratch']
  #allocation2 [shape = 'f32[8,128]{1,0:T(8,128)}', space=vmem, size = 0x1000, scoped, tag = 'scratch operand']
  #allocation3 [shape = 'f32[8,128]{1,0:T(8,128)}', space=vmem, size = 0x1000, scoped, tag = 'scratch operand']
  %s0 = inlined_call_operand.vmem [shape: f32[20,8,512], index: 0, kind: input, shape index: {}]
  %s1 = inlined_call_operand.vmem [shape: f32[8,128], index: 1, kind: input, shape index: {}]
  %s2 = inlined_call_operand.vmem [shape: f32[8,128], index: 2, kind: input, shape index: {}]
  %s3 = inlined_call_operand.vmem [shape: bf16[128,512], index: 3, kind: input, shape index: {}]
  %s4 = inlined_call_operand.vmem [shape: bf16[20,8,128], index: 4, kind: output, shape index: {0}]
  %s5 = inlined_call_operand.vmem [shape: f32[8,128], index: 5, kind: output, shape index: {1}]
  %s6 = inlined_call_operand.vmem [shape: f32[8,128], index: 6, kind: output, shape index: {2}]
  %7 = xla_tuple %s4, %s5, %s6
  %s8 = sld [smem:[#allocation0]]
  $region50: #{lstm_forward.1} parent=0
    _
  %s10 = ssub.s32 1, %s8
  %s11 = scalar_select 0, %s10, %s8
  // Predicated region
  $region2: #{lstm_forward.1} parent=0 // pred_check
    _
  $region3: #{lstm_forward.1} parent=0 // pred_check_branch
    %13 = sbr.rel (0) target = $region5
  $region4: #{lstm_forward.1} parent=0 // pred_region
    _
  $region5: #{lstm_forward.1} parent=0 // pred_fallthru
    _
  // Predicated region
  $region6: #{lstm_forward.1} parent=0 // pred_check
    _
  $region7: #{lstm_forward.1} parent=0 // pred_check_branch
    %15 = sbr.rel (0) target = $region9
  $region8: #{lstm_forward.1} parent=0 // pred_region
    _
  $region9: #{lstm_forward.1} parent=0 // pred_fallthru
    _
  // Predicated region
  $region10: #{lstm_forward.1} parent=0 // pred_check
    _
  $region11: #{lstm_forward.1} parent=0 // pred_check_branch
    %17 = sbr.rel (0) target = $region13
  $region12: #{lstm_forward.1} parent=0 // pred_region
    _
  $region13: #{lstm_forward.1} parent=0 // pred_fallthru
    _
  // Predicated region
  $region14: #{lstm_forward.1} parent=0 // pred_check
    _
  $region15: #{lstm_forward.1} parent=0 // pred_check_branch
    %19 = sbr.rel (0) target = $region17
  $region16: #{lstm_forward.1} parent=0 // pred_region
    _
  $region17: #{lstm_forward.1} parent=0 // pred_fallthru
    _
  %p20 = scmp.eq.s32.totalorder 0, 0
  // Predicated region
  $region18: #{lstm_forward.1} parent=0 // pred_check
    %p21 = pneg %p20
  $region19: #{lstm_forward.1} parent=0 // pred_check_branch
    %23 = sbr.rel (%p21) target = $region21
  $region20: #{lstm_forward.1} parent=0 // pred_region
    %v24 = vld [vmem:[%s1] sm:$0xff]
    %25 = vst [vmem:[#allocation2] sm:$0xff] %v24
    %v26 = vld [vmem:[%s2] sm:$0xff]
    %27 = vst [vmem:[#allocation3] sm:$0xff] %v26
  $region21: #{lstm_forward.1} parent=0 // pred_fallthru
    _
  %v28 = vld [vmem:[#allocation2] sm:$0xff]
  %v29 = vld [vmem:[#allocation3] sm:$0xff]
  %v30 = vld [vmem:[%s0] sm:$0xff]
  %v31 = vld [vmem:[%s0 + $0x8] sm:$0xff]
  %v32 = vld [vmem:[%s0 + $0x10] sm:$0xff]
  %v33 = vld [vmem:[%s0 + $0x18] sm:$0xff]
  %v34 = vpack.c.bf16 %v28, %v28
  %v35 = vld [vmem:[%s3] sm:$0xff]
  %v36 = vld [vmem:[%s3 + $0x8] sm:$0xff]
  %v37 = vld [vmem:[%s3 + $0x10] sm:$0xff]
  %v38 = vld [vmem:[%s3 + $0x18] sm:$0xff]
  %v39 = vld [vmem:[%s3 + $0x20] sm:$0xff]
  %v40 = vld [vmem:[%s3 + $0x28] sm:$0xff]
  %v41 = vld [vmem:[%s3 + $0x30] sm:$0xff]
  %v42 = vld [vmem:[%s3 + $0x38] sm:$0xff]
  %v43 = vld [vmem:[%s3 + $0x40] sm:$0xff]
  %v44 = vld [vmem:[%s3 + $0x48] sm:$0xff]
  %v45 = vld [vmem:[%s3 + $0x50] sm:$0xff]
  %v46 = vld [vmem:[%s3 + $0x58] sm:$0xff]
  %v47 = vld [vmem:[%s3 + $0x60] sm:$0xff]
  %v48 = vld [vmem:[%s3 + $0x68] sm:$0xff]
  %v49 = vld [vmem:[%s3 + $0x70] sm:$0xff]
  %v50 = vld [vmem:[%s3 + $0x78] sm:$0xff]
  %v51 = vld [vmem:[%s3 + $0x80] sm:$0xff]
  %v52 = vld [vmem:[%s3 + $0x88] sm:$0xff]
  %v53 = vld [vmem:[%s3 + $0x90] sm:$0xff]
  %v54 = vld [vmem:[%s3 + $0x98] sm:$0xff]
  %v55 = vld [vmem:[%s3 + $0xa0] sm:$0xff]
  %v56 = vld [vmem:[%s3 + $0xa8] sm:$0xff]
  %v57 = vld [vmem:[%s3 + $0xb0] sm:$0xff]
  %v58 = vld [vmem:[%s3 + $0xb8] sm:$0xff]
  %v59 = vld [vmem:[%s3 + $0xc0] sm:$0xff]
  %v60 = vld [vmem:[%s3 + $0xc8] sm:$0xff]
  %v61 = vld [vmem:[%s3 + $0xd0] sm:$0xff]
  %v62 = vld [vmem:[%s3 + $0xd8] sm:$0xff]
  %v63 = vld [vmem:[%s3 + $0xe0] sm:$0xff]
  %v64 = vld [vmem:[%s3 + $0xe8] sm:$0xff]
  %v65 = vld [vmem:[%s3 + $0xf0] sm:$0xff]
  %v66 = vld [vmem:[%s3 + $0xf8] sm:$0xff]
  %v99 = vunpack.c.l.b16 %v35
  %v100 = vunpack.c.h.b16 %v35
  %v101 = vunpack.c.l.b16 %v36
  %v102 = vunpack.c.h.b16 %v36
  %v103 = vunpack.c.l.b16 %v37
  %v104 = vunpack.c.h.b16 %v37
  %v105 = vunpack.c.l.b16 %v38
  %v106 = vunpack.c.h.b16 %v38
  %v107 = vunpack.c.l.b16 %v39
  %v108 = vunpack.c.h.b16 %v39
  %v109 = vunpack.c.l.b16 %v40
  %v110 = vunpack.c.h.b16 %v40
  %v111 = vunpack.c.l.b16 %v41
  %v112 = vunpack.c.h.b16 %v41
  %v113 = vunpack.c.l.b16 %v42
  %v114 = vunpack.c.h.b16 %v42
  %v115 = vunpack.c.l.b16 %v43
  %v116 = vunpack.c.h.b16 %v43
  %v117 = vunpack.c.l.b16 %v44
  %v118 = vunpack.c.h.b16 %v44
  %v119 = vunpack.c.l.b16 %v45
  %v120 = vunpack.c.h.b16 %v45
  %v121 = vunpack.c.l.b16 %v46
  %v122 = vunpack.c.h.b16 %v46
  %v123 = vunpack.c.l.b16 %v47
  %v124 = vunpack.c.h.b16 %v47
  %v125 = vunpack.c.l.b16 %v48
  %v126 = vunpack.c.h.b16 %v48
  %v127 = vunpack.c.l.b16 %v49
  %v128 = vunpack.c.h.b16 %v49
  %v129 = vunpack.c.l.b16 %v50
  %v130 = vunpack.c.h.b16 %v50
  %v131 = vunpack.c.l.b16 %v51
  %v132 = vunpack.c.h.b16 %v51
  %v133 = vunpack.c.l.b16 %v52
  %v134 = vunpack.c.h.b16 %v52
  %v135 = vunpack.c.l.b16 %v53
  %v136 = vunpack.c.h.b16 %v53
  %v137 = vunpack.c.l.b16 %v54
  %v138 = vunpack.c.h.b16 %v54
  %v139 = vunpack.c.l.b16 %v55
  %v140 = vunpack.c.h.b16 %v55
  %v141 = vunpack.c.l.b16 %v56
  %v142 = vunpack.c.h.b16 %v56
  %v143 = vunpack.c.l.b16 %v57
  %v144 = vunpack.c.h.b16 %v57
  %v145 = vunpack.c.l.b16 %v58
  %v146 = vunpack.c.h.b16 %v58
  %v147 = vunpack.c.l.b16 %v59
  %v148 = vunpack.c.h.b16 %v59
  %v149 = vunpack.c.l.b16 %v60
  %v150 = vunpack.c.h.b16 %v60
  %v151 = vunpack.c.l.b16 %v61
  %v152 = vunpack.c.h.b16 %v61
  %v153 = vunpack.c.l.b16 %v62
  %v154 = vunpack.c.h.b16 %v62
  %v155 = vunpack.c.l.b16 %v63
  %v156 = vunpack.c.h.b16 %v63
  %v157 = vunpack.c.l.b16 %v64
  %v158 = vunpack.c.h.b16 %v64
  %v159 = vunpack.c.l.b16 %v65
  %v160 = vunpack.c.h.b16 %v65
  %v161 = vunpack.c.l.b16 %v66
  %v162 = vunpack.c.h.b16 %v66
  %v163 = vpack.c.b16 %v103, %v99
  %v164 = vpack.c.b16 %v104, %v100
  %v165 = vpack.c.b16 %v105, %v101
  %v166 = vpack.c.b16 %v106, %v102
  %v167 = vpack.c.b16 %v111, %v107
  %v168 = vpack.c.b16 %v112, %v108
  %v169 = vpack.c.b16 %v113, %v109
  %v170 = vpack.c.b16 %v114, %v110
  %v171 = vpack.c.b16 %v119, %v115
  %v172 = vpack.c.b16 %v120, %v116
  %v173 = vpack.c.b16 %v121, %v117
  %v174 = vpack.c.b16 %v122, %v118
  %v175 = vpack.c.b16 %v127, %v123
  %v176 = vpack.c.b16 %v128, %v124
  %v177 = vpack.c.b16 %v129, %v125
  %v178 = vpack.c.b16 %v130, %v126
  %v179 = vpack.c.b16 %v135, %v131
  %v180 = vpack.c.b16 %v136, %v132
  %v181 = vpack.c.b16 %v137, %v133
  %v182 = vpack.c.b16 %v138, %v134
  %v183 = vpack.c.b16 %v143, %v139
  %v184 = vpack.c.b16 %v144, %v140
  %v185 = vpack.c.b16 %v145, %v141
  %v186 = vpack.c.b16 %v146, %v142
  %v187 = vpack.c.b16 %v151, %v147
  %v188 = vpack.c.b16 %v152, %v148
  %v189 = vpack.c.b16 %v153, %v149
  %v190 = vpack.c.b16 %v154, %v150
  %v191 = vpack.c.b16 %v159, %v155
  %v192 = vpack.c.b16 %v160, %v156
  %v193 = vpack.c.b16 %v161, %v157
  %v194 = vpack.c.b16 %v162, %v158
  %227 = vmatpush.bf16.msra.mxu0 %v191
  %228 = vmatpush.bf16.msra.mxu0 %v187
  %229 = vmatpush.bf16.msra.mxu0 %v183
  %230 = vmatpush.bf16.msra.mxu0 %v179
  %231 = vmatpush.bf16.msra.mxu0 %v175
  %232 = vmatpush.bf16.msra.mxu0 %v171
  %233 = vmatpush.bf16.msra.mxu0 %v167
  %234 = vmatpush.bf16.msra.mxu0 %v163
  %235 = vmatmul.bf16.gmra.mxu0 %v34
  %v236 = vpop.f32.mrf.mxu0
  %v237 = vadd.f32 0.0, %v236
  %v238 = vpop.f32.mrf.mxu0
  %239 = vdwg.mxu0
  %240 = vmatpush.bf16.msra.mxu0 %v192
  %241 = vmatpush.bf16.msra.mxu0 %v188
  %242 = vmatpush.bf16.msra.mxu0 %v184
  %243 = vmatpush.bf16.msra.mxu0 %v180
  %244 = vmatpush.bf16.msra.mxu0 %v176
  %245 = vmatpush.bf16.msra.mxu0 %v172
  %246 = vmatpush.bf16.msra.mxu0 %v168
  %247 = vmatpush.bf16.msra.mxu0 %v164
  %248 = vmatmul.bf16.gmra.mxu0 %v34
  %v249 = vpop.f32.mrf.mxu0
  %v250 = vadd.f32 0.0, %v249
  %v251 = vpop.f32.mrf.mxu0
  %252 = vdwg.mxu0
  %253 = vmatpush.bf16.msra.mxu0 %v193
  %254 = vmatpush.bf16.msra.mxu0 %v189
  %255 = vmatpush.bf16.msra.mxu0 %v185
  %256 = vmatpush.bf16.msra.mxu0 %v181
  %257 = vmatpush.bf16.msra.mxu0 %v177
  %258 = vmatpush.bf16.msra.mxu0 %v173
  %259 = vmatpush.bf16.msra.mxu0 %v169
  %260 = vmatpush.bf16.msra.mxu0 %v165
  %261 = vmatmul.bf16.gmra.mxu0 %v34
  %v262 = vpop.f32.mrf.mxu0
  %v263 = vadd.f32 0.0, %v262
  %v264 = vpop.f32.mrf.mxu0
  %265 = vdwg.mxu0
  %266 = vmatpush.bf16.msra.mxu0 %v194
  %267 = vmatpush.bf16.msra.mxu0 %v190
  %268 = vmatpush.bf16.msra.mxu0 %v186
  %269 = vmatpush.bf16.msra.mxu0 %v182
  %270 = vmatpush.bf16.msra.mxu0 %v178
  %271 = vmatpush.bf16.msra.mxu0 %v174
  %272 = vmatpush.bf16.msra.mxu0 %v170
  %273 = vmatpush.bf16.msra.mxu0 %v166
  %274 = vmatmul.bf16.gmra.mxu0 %v34
  %v275 = vpop.f32.mrf.mxu0
  %v276 = vadd.f32 0.0, %v275
  %v277 = vpop.f32.mrf.mxu0
  %278 = vdwg.mxu0
  %v279 = vadd.f32 %v30, %v237
  %v280 = vadd.f32 %v31, %v250
  %v281 = vadd.f32 %v32, %v263
  %v282 = vadd.f32 %v33, %v276
  %v283 = vxor.u32 %v279, 2147483648
  %v284 = vxor.u32 %v280, 2147483648
  %v285 = vxor.u32 %v281, 2147483648
  %v286 = vmul.f32 %v283, 1.442695
  %v287 = vpow.pop %v286
  %v288 = vmul.f32 %v284, 1.442695
  %v289 = vpow.pop %v288
  %v290 = vmul.f32 %v285, 1.442695
  %v291 = vpow.pop %v290
  %v292 = vadd.f32 %v287, 1.0
  %v293 = vadd.f32 %v289, 1.0
  %v294 = vadd.f32 %v291, 1.0
  %v295 = vrcp.pop %v292
  %v296 = vmul.f32 %v292, %v295
  %v297 = vsub.f32 1.0, %v296
  %v298 = vmul.f32 %v295, %v297
  %v299 = vadd.f32 %v295, %v298
  %vm300 = vweird.f32 %v292
  %vm301 = vweird.f32 %v295
  %vm302 = vmor %vm300, %vm301
  %v303 = vsel %vm302, %v295, %v299
  %v304 = vand.u32 2147483647, %v292
  %vm305 = vcmp.eq.f32.partialorder %v304, 8.507059e+37
  %v306 = vand.u32 %v292, 2147483648
  %v307 = vor.u32 1.1754944e-38, %v306
  %v308 = vsel %vm305, %v307, %v303
  %v309 = vmul.f32 1.0, %v308
  %v310 = vrcp.pop %v293
  %v311 = vmul.f32 %v293, %v310
  %v312 = vsub.f32 1.0, %v311
  %v313 = vmul.f32 %v310, %v312
  %v314 = vadd.f32 %v310, %v313
  %vm315 = vweird.f32 %v293
  %vm316 = vweird.f32 %v310
  %vm317 = vmor %vm315, %vm316
  %v318 = vsel %vm317, %v310, %v314
  %v319 = vand.u32 2147483647, %v293
  %vm320 = vcmp.eq.f32.partialorder %v319, 8.507059e+37
  %v321 = vand.u32 %v293, 2147483648
  %v322 = vor.u32 1.1754944e-38, %v321
  %v323 = vsel %vm320, %v322, %v318
  %v324 = vmul.f32 1.0, %v323
  %v325 = vrcp.pop %v294
  %v326 = vmul.f32 %v294, %v325
  %v327 = vsub.f32 1.0, %v326
  %v328 = vmul.f32 %v325, %v327
  %v329 = vadd.f32 %v325, %v328
  %vm330 = vweird.f32 %v294
  %vm331 = vweird.f32 %v325
  %vm332 = vmor %vm330, %vm331
  %v333 = vsel %vm332, %v325, %v329
  %v334 = vand.u32 2147483647, %v294
  %vm335 = vcmp.eq.f32.partialorder %v334, 8.507059e+37
  %v336 = vand.u32 %v294, 2147483648
  %v337 = vor.u32 1.1754944e-38, %v336
  %v338 = vsel %vm335, %v337, %v333
  %v339 = vmul.f32 1.0, %v338
  %v340 = vtanh.pop %v282
  %v341 = vmul.f32 %v324, %v29
  %v342 = vmul.f32 %v309, %v340
  %v343 = vadd.f32 %v341, %v342
  %v344 = vtanh.pop %v343
  %v345 = vmul.f32 %v339, %v344
  %v346 = vpack.c.bf16 %v345, %v345
  %347 = vst [vmem:[%s4] sm:$0xf] %v346
  %s348 = scalar_lea.vmem %s0, 32
  %v349 = vld [vmem:[%s348] sm:$0xff]
  %v350 = vld [vmem:[%s348 + $0x8] sm:$0xff]
  %v351 = vld [vmem:[%s348 + $0x10] sm:$0xff]
  %v352 = vld [vmem:[%s348 + $0x18] sm:$0xff]
  %v353 = vld [vmem:[%s3] sm:$0xff]
  %v354 = vld [vmem:[%s3 + $0x8] sm:$0xff]
  %v355 = vld [vmem:[%s3 + $0x10] sm:$0xff]
  %v356 = vld [vmem:[%s3 + $0x18] sm:$0xff]
  %v357 = vld [vmem:[%s3 + $0x20] sm:$0xff]
  %v358 = vld [vmem:[%s3 + $0x28] sm:$0xff]
  %v359 = vld [vmem:[%s3 + $0x30] sm:$0xff]
  %v360 = vld [vmem:[%s3 + $0x38] sm:$0xff]
  %v361 = vld [vmem:[%s3 + $0x40] sm:$0xff]
  %v362 = vld [vmem:[%s3 + $0x48] sm:$0xff]
  %v363 = vld [vmem:[%s3 + $0x50] sm:$0xff]
  %v364 = vld [vmem:[%s3 + $0x58] sm:$0xff]
  %v365 = vld [vmem:[%s3 + $0x60] sm:$0xff]
  %v366 = vld [vmem:[%s3 + $0x68] sm:$0xff]
  %v367 = vld [vmem:[%s3 + $0x70] sm:$0xff]
  %v368 = vld [vmem:[%s3 + $0x78] sm:$0xff]
  %v369 = vld [vmem:[%s3 + $0x80] sm:$0xff]
  %v370 = vld [vmem:[%s3 + $0x88] sm:$0xff]
  %v371 = vld [vmem:[%s3 + $0x90] sm:$0xff]
  %v372 = vld [vmem:[%s3 + $0x98] sm:$0xff]
  %v373 = vld [vmem:[%s3 + $0xa0] sm:$0xff]
  %v374 = vld [vmem:[%s3 + $0xa8] sm:$0xff]
  %v375 = vld [vmem:[%s3 + $0xb0] sm:$0xff]
  %v376 = vld [vmem:[%s3 + $0xb8] sm:$0xff]
  %v377 = vld [vmem:[%s3 + $0xc0] sm:$0xff]
  %v378 = vld [vmem:[%s3 + $0xc8] sm:$0xff]
  %v379 = vld [vmem:[%s3 + $0xd0] sm:$0xff]
  %v380 = vld [vmem:[%s3 + $0xd8] sm:$0xff]
  %v381 = vld [vmem:[%s3 + $0xe0] sm:$0xff]
  %v382 = vld [vmem:[%s3 + $0xe8] sm:$0xff]
  %v383 = vld [vmem:[%s3 + $0xf0] sm:$0xff]
  %v384 = vld [vmem:[%s3 + $0xf8] sm:$0xff]
  %v417 = vunpack.c.l.b16 %v353
  %v418 = vunpack.c.h.b16 %v353
  %v419 = vunpack.c.l.b16 %v354
  %v420 = vunpack.c.h.b16 %v354
  %v421 = vunpack.c.l.b16 %v355
  %v422 = vunpack.c.h.b16 %v355
  %v423 = vunpack.c.l.b16 %v356
  %v424 = vunpack.c.h.b16 %v356
  %v425 = vunpack.c.l.b16 %v357
  %v426 = vunpack.c.h.b16 %v357
  %v427 = vunpack.c.l.b16 %v358
  %v428 = vunpack.c.h.b16 %v358
  %v429 = vunpack.c.l.b16 %v359
  %v430 = vunpack.c.h.b16 %v359
  %v431 = vunpack.c.l.b16 %v360
  %v432 = vunpack.c.h.b16 %v360
  %v433 = vunpack.c.l.b16 %v361
  %v434 = vunpack.c.h.b16 %v361
  %v435 = vunpack.c.l.b16 %v362
  %v436 = vunpack.c.h.b16 %v362
  %v437 = vunpack.c.l.b16 %v363
  %v438 = vunpack.c.h.b16 %v363
  %v439 = vunpack.c.l.b16 %v364
  %v440 = vunpack.c.h.b16 %v364
  %v441 = vunpack.c.l.b16 %v365
  %v442 = vunpack.c.h.b16 %v365
  %v443 = vunpack.c.l.b16 %v366
  %v444 = vunpack.c.h.b16 %v366
  %v445 = vunpack.c.l.b16 %v367
  %v446 = vunpack.c.h.b16 %v367
  %v447 = vunpack.c.l.b16 %v368
  %v448 = vunpack.c.h.b16 %v368
  %v449 = vunpack.c.l.b16 %v369
  %v450 = vunpack.c.h.b16 %v369
  %v451 = vunpack.c.l.b16 %v370
  %v452 = vunpack.c.h.b16 %v370
  %v453 = vunpack.c.l.b16 %v371
  %v454 = vunpack.c.h.b16 %v371
  %v455 = vunpack.c.l.b16 %v372
  %v456 = vunpack.c.h.b16 %v372
  %v457 = vunpack.c.l.b16 %v373
  %v458 = vunpack.c.h.b16 %v373
  %v459 = vunpack.c.l.b16 %v374
  %v460 = vunpack.c.h.b16 %v374
  %v461 = vunpack.c.l.b16 %v375
  %v462 = vunpack.c.h.b16 %v375
  %v463 = vunpack.c.l.b16 %v376
  %v464 = vunpack.c.h.b16 %v376
  %v465 = vunpack.c.l.b16 %v377
  %v466 = vunpack.c.h.b16 %v377
  %v467 = vunpack.c.l.b16 %v378
  %v468 = vunpack.c.h.b16 %v378
  %v469 = vunpack.c.l.b16 %v379
  %v470 = vunpack.c.h.b16 %v379
  %v471 = vunpack.c.l.b16 %v380
  %v472 = vunpack.c.h.b16 %v380
  %v473 = vunpack.c.l.b16 %v381
  %v474 = vunpack.c.h.b16 %v381
  %v475 = vunpack.c.l.b16 %v382
  %v476 = vunpack.c.h.b16 %v382
  %v477 = vunpack.c.l.b16 %v383
  %v478 = vunpack.c.h.b16 %v383
  %v479 = vunpack.c.l.b16 %v384
  %v480 = vunpack.c.h.b16 %v384
  %v481 = vpack.c.b16 %v421, %v417
  %v482 = vpack.c.b16 %v422, %v418
  %v483 = vpack.c.b16 %v423, %v419
  %v484 = vpack.c.b16 %v424, %v420
  %v485 = vpack.c.b16 %v429, %v425
  %v486 = vpack.c.b16 %v430, %v426
  %v487 = vpack.c.b16 %v431, %v427
  %v488 = vpack.c.b16 %v432, %v428
  %v489 = vpack.c.b16 %v437, %v433
  %v490 = vpack.c.b16 %v438, %v434
  %v491 = vpack.c.b16 %v439, %v435
  %v492 = vpack.c.b16 %v440, %v436
  %v493 = vpack.c.b16 %v445, %v441
  %v494 = vpack.c.b16 %v446, %v442
  %v495 = vpack.c.b16 %v447, %v443
  %v496 = vpack.c.b16 %v448, %v444
  %v497 = vpack.c.b16 %v453, %v449
  %v498 = vpack.c.b16 %v454, %v450
  %v499 = vpack.c.b16 %v455, %v451
  %v500 = vpack.c.b16 %v456, %v452
  %v501 = vpack.c.b16 %v461, %v457
  %v502 = vpack.c.b16 %v462, %v458
  %v503 = vpack.c.b16 %v463, %v459
  %v504 = vpack.c.b16 %v464, %v460
  %v505 = vpack.c.b16 %v469, %v465
  %v506 = vpack.c.b16 %v470, %v466
  %v507 = vpack.c.b16 %v471, %v467
  %v508 = vpack.c.b16 %v472, %v468
  %v509 = vpack.c.b16 %v477, %v473
  %v510 = vpack.c.b16 %v478, %v474
  %v511 = vpack.c.b16 %v479, %v475
  %v512 = vpack.c.b16 %v480, %v476
  %545 = vmatpush.bf16.msra.mxu0 %v509
  %546 = vmatpush.bf16.msra.mxu0 %v505
  %547 = vmatpush.bf16.msra.mxu0 %v501
  %548 = vmatpush.bf16.msra.mxu0 %v497
  %549 = vmatpush.bf16.msra.mxu0 %v493
  %550 = vmatpush.bf16.msra.mxu0 %v489
  %551 = vmatpush.bf16.msra.mxu0 %v485
  %552 = vmatpush.bf16.msra.mxu0 %v481
  %553 = vmatmul.bf16.gmra.mxu0 %v346
  %v554 = vpop.f32.mrf.mxu0
  %v555 = vadd.f32 0.0, %v554
  %v556 = vpop.f32.mrf.mxu0
  %557 = vdwg.mxu0
  %558 = vmatpush.bf16.msra.mxu0 %v510
  %559 = vmatpush.bf16.msra.mxu0 %v506
  %560 = vmatpush.bf16.msra.mxu0 %v502
  %561 = vmatpush.bf16.msra.mxu0 %v498
  %562 = vmatpush.bf16.msra.mxu0 %v494
  %563 = vmatpush.bf16.msra.mxu0 %v490
  %564 = vmatpush.bf16.msra.mxu0 %v486
  %565 = vmatpush.bf16.msra.mxu0 %v482
  %566 = vmatmul.bf16.gmra.mxu0 %v346
  %v567 = vpop.f32.mrf.mxu0
  %v568 = vadd.f32 0.0, %v567
  %v569 = vpop.f32.mrf.mxu0
  %570 = vdwg.mxu0
  %571 = vmatpush.bf16.msra.mxu0 %v511
  %572 = vmatpush.bf16.msra.mxu0 %v507
  %573 = vmatpush.bf16.msra.mxu0 %v503
  %574 = vmatpush.bf16.msra.mxu0 %v499
  %575 = vmatpush.bf16.msra.mxu0 %v495
  %576 = vmatpush.bf16.msra.mxu0 %v491
  %577 = vmatpush.bf16.msra.mxu0 %v487
  %578 = vmatpush.bf16.msra.mxu0 %v483
  %579 = vmatmul.bf16.gmra.mxu0 %v346
  %v580 = vpop.f32.mrf.mxu0
  %v581 = vadd.f32 0.0, %v580
  %v582 = vpop.f32.mrf.mxu0
  %583 = vdwg.mxu0
  %584 = vmatpush.bf16.msra.mxu0 %v512
  %585 = vmatpush.bf16.msra.mxu0 %v508
  %586 = vmatpush.bf16.msra.mxu0 %v504
  %587 = vmatpush.bf16.msra.mxu0 %v500
  %588 = vmatpush.bf16.msra.mxu0 %v496
  %589 = vmatpush.bf16.msra.mxu0 %v492
  %590 = vmatpush.bf16.msra.mxu0 %v488
  %591 = vmatpush.bf16.msra.mxu0 %v484
  %592 = vmatmul.bf16.gmra.mxu0 %v346
  %v593 = vpop.f32.mrf.mxu0
  %v594 = vadd.f32 0.0, %v593
  %v595 = vpop.f32.mrf.mxu0
  %596 = vdwg.mxu0
  %v597 = vadd.f32 %v349, %v555
  %v598 = vadd.f32 %v350, %v568
  %v599 = vadd.f32 %v351, %v581
  %v600 = vadd.f32 %v352, %v594
  %v601 = vxor.u32 %v597, 2147483648
  %v602 = vxor.u32 %v598, 2147483648
  %v603 = vxor.u32 %v599, 2147483648
  %v604 = vmul.f32 %v601, 1.442695
  %v605 = vpow.pop %v604
  %v606 = vmul.f32 %v602, 1.442695
  %v607 = vpow.pop %v606
  %v608 = vmul.f32 %v603, 1.442695
  %v609 = vpow.pop %v608
  %v610 = vadd.f32 %v605, 1.0
  %v611 = vadd.f32 %v607, 1.0
  %v612 = vadd.f32 %v609, 1.0
  %v613 = vrcp.pop %v610
  %v614 = vmul.f32 %v610, %v613
  %v615 = vsub.f32 1.0, %v614
  %v616 = vmul.f32 %v613, %v615
  %v617 = vadd.f32 %v613, %v616
  %vm618 = vweird.f32 %v610
  %vm619 = vweird.f32 %v613
  %vm620 = vmor %vm618, %vm619
  %v621 = vsel %vm620, %v613, %v617
  %v622 = vand.u32 2147483647, %v610
  %vm623 = vcmp.eq.f32.partialorder %v622, 8.507059e+37
  %v624 = vand.u32 %v610, 2147483648
  %v625 = vor.u32 1.1754944e-38, %v624
  %v626 = vsel %vm623, %v625, %v621
  %v627 = vmul.f32 1.0, %v626
  %v628 = vrcp.pop %v611
  %v629 = vmul.f32 %v611, %v628
  %v630 = vsub.f32 1.0, %v629
  %v631 = vmul.f32 %v628, %v630
  %v632 = vadd.f32 %v628, %v631
  %vm633 = vweird.f32 %v611
  %vm634 = vweird.f32 %v628
  %vm635 = vmor %vm633, %vm634
  %v636 = vsel %vm635, %v628, %v632
  %v637 = vand.u32 2147483647, %v611
  %vm638 = vcmp.eq.f32.partialorder %v637, 8.507059e+37
  %v639 = vand.u32 %v611, 2147483648
  %v640 = vor.u32 1.1754944e-38, %v639
  %v641 = vsel %vm638, %v640, %v636
  %v642 = vmul.f32 1.0, %v641
  %v643 = vrcp.pop %v612
  %v644 = vmul.f32 %v612, %v643
  %v645 = vsub.f32 1.0, %v644
  %v646 = vmul.f32 %v643, %v645
  %v647 = vadd.f32 %v643, %v646
  %vm648 = vweird.f32 %v612
  %vm649 = vweird.f32 %v643
  %vm650 = vmor %vm648, %vm649
  %v651 = vsel %vm650, %v643, %v647
  %v652 = vand.u32 2147483647, %v612
  %vm653 = vcmp.eq.f32.partialorder %v652, 8.507059e+37
  %v654 = vand.u32 %v612, 2147483648
  %v655 = vor.u32 1.1754944e-38, %v654
  %v656 = vsel %vm653, %v655, %v651
  %v657 = vmul.f32 1.0, %v656
  %v658 = vtanh.pop %v600
  %v659 = vmul.f32 %v642, %v343
  %v660 = vmul.f32 %v627, %v658
  %v661 = vadd.f32 %v659, %v660
  %v662 = vtanh.pop %v661
  %v663 = vmul.f32 %v657, %v662
  %v664 = vpack.c.bf16 %v663, %v663
  %s665 = scalar_lea.vmem %s4, 4
  %666 = vst [vmem:[%s665] sm:$0xf] %v664
  %s667 = scalar_lea.vmem %s0, 64
  %v668 = vld [vmem:[%s667] sm:$0xff]
  %v669 = vld [vmem:[%s667 + $0x8] sm:$0xff]
  %v670 = vld [vmem:[%s667 + $0x10] sm:$0xff]
  %v671 = vld [vmem:[%s667 + $0x18] sm:$0xff]
  %v672 = vld [vmem:[%s3] sm:$0xff]
  %v673 = vld [vmem:[%s3 + $0x8] sm:$0xff]
  %v674 = vld [vmem:[%s3 + $0x10] sm:$0xff]
  %v675 = vld [vmem:[%s3 + $0x18] sm:$0xff]
  %v676 = vld [vmem:[%s3 + $0x20] sm:$0xff]
  %v677 = vld [vmem:[%s3 + $0x28] sm:$0xff]
  %v678 = vld [vmem:[%s3 + $0x30] sm:$0xff]
  %v679 = vld [vmem:[%s3 + $0x38] sm:$0xff]
  %v680 = vld [vmem:[%s3 + $0x40] sm:$0xff]
  %v681 = vld [vmem:[%s3 + $0x48] sm:$0xff]
  %v682 = vld [vmem:[%s3 + $0x50] sm:$0xff]
  %v683 = vld [vmem:[%s3 + $0x58] sm:$0xff]
  %v684 = vld [vmem:[%s3 + $0x60] sm:$0xff]
  %v685 = vld [vmem:[%s3 + $0x68] sm:$0xff]
  %v686 = vld [vmem:[%s3 + $0x70] sm:$0xff]
  %v687 = vld [vmem:[%s3 + $0x78] sm:$0xff]
  %v688 = vld [vmem:[%s3 + $0x80] sm:$0xff]
  %v689 = vld [vmem:[%s3 + $0x88] sm:$0xff]
  %v690 = vld [vmem:[%s3 + $0x90] sm:$0xff]
  %v691 = vld [vmem:[%s3 + $0x98] sm:$0xff]
  %v692 = vld [vmem:[%s3 + $0xa0] sm:$0xff]
  %v693 = vld [vmem:[%s3 + $0xa8] sm:$0xff]
  %v694 = vld [vmem:[%s3 + $0xb0] sm:$0xff]
  %v695 = vld [vmem:[%s3 + $0xb8] sm:$0xff]
  %v696 = vld [vmem:[%s3 + $0xc0] sm:$0xff]
  %v697 = vld [vmem:[%s3 + $0xc8] sm:$0xff]
  %v698 = vld [vmem:[%s3 + $0xd0] sm:$0xff]
  %v699 = vld [vmem:[%s3 + $0xd8] sm:$0xff]
  %v700 = vld [vmem:[%s3 + $0xe0] sm:$0xff]
  %v701 = vld [vmem:[%s3 + $0xe8] sm:$0xff]
  %v702 = vld [vmem:[%s3 + $0xf0] sm:$0xff]
  %v703 = vld [vmem:[%s3 + $0xf8] sm:$0xff]
  %v736 = vunpack.c.l.b16 %v672
  %v737 = vunpack.c.h.b16 %v672
  %v738 = vunpack.c.l.b16 %v673
  %v739 = vunpack.c.h.b16 %v673
  %v740 = vunpack.c.l.b16 %v674
  %v741 = vunpack.c.h.b16 %v674
  %v742 = vunpack.c.l.b16 %v675
  %v743 = vunpack.c.h.b16 %v675
  %v744 = vunpack.c.l.b16 %v676
  %v745 = vunpack.c.h.b16 %v676
  %v746 = vunpack.c.l.b16 %v677
  %v747 = vunpack.c.h.b16 %v677
  %v748 = vunpack.c.l.b16 %v678
  %v749 = vunpack.c.h.b16 %v678
  %v750 = vunpack.c.l.b16 %v679
  %v751 = vunpack.c.h.b16 %v679
  %v752 = vunpack.c.l.b16 %v680
  %v753 = vunpack.c.h.b16 %v680
  %v754 = vunpack.c.l.b16 %v681
  %v755 = vunpack.c.h.b16 %v681
  %v756 = vunpack.c.l.b16 %v682
  %v757 = vunpack.c.h.b16 %v682
  %v758 = vunpack.c.l.b16 %v683
  %v759 = vunpack.c.h.b16 %v683
  %v760 = vunpack.c.l.b16 %v684
  %v761 = vunpack.c.h.b16 %v684
  %v762 = vunpack.c.l.b16 %v685
  %v763 = vunpack.c.h.b16 %v685
  %v764 = vunpack.c.l.b16 %v686
  %v765 = vunpack.c.h.b16 %v686
  %v766 = vunpack.c.l.b16 %v687
  %v767 = vunpack.c.h.b16 %v687
  %v768 = vunpack.c.l.b16 %v688
  %v769 = vunpack.c.h.b16 %v688
  %v770 = vunpack.c.l.b16 %v689
  %v771 = vunpack.c.h.b16 %v689
  %v772 = vunpack.c.l.b16 %v690
  %v773 = vunpack.c.h.b16 %v690
  %v774 = vunpack.c.l.b16 %v691
  %v775 = vunpack.c.h.b16 %v691
  %v776 = vunpack.c.l.b16 %v692
  %v777 = vunpack.c.h.b16 %v692
  %v778 = vunpack.c.l.b16 %v693
  %v779 = vunpack.c.h.b16 %v693
  %v780 = vunpack.c.l.b16 %v694
  %v781 = vunpack.c.h.b16 %v694
  %v782 = vunpack.c.l.b16 %v695
  %v783 = vunpack.c.h.b16 %v695
  %v784 = vunpack.c.l.b16 %v696
  %v785 = vunpack.c.h.b16 %v696
  %v786 = vunpack.c.l.b16 %v697
  %v787 = vunpack.c.h.b16 %v697
  %v788 = vunpack.c.l.b16 %v698
  %v789 = vunpack.c.h.b16 %v698
  %v790 = vunpack.c.l.b16 %v699
  %v791 = vunpack.c.h.b16 %v699
  %v792 = vunpack.c.l.b16 %v700
  %v793 = vunpack.c.h.b16 %v700
  %v794 = vunpack.c.l.b16 %v701
  %v795 = vunpack.c.h.b16 %v701
  %v796 = vunpack.c.l.b16 %v702
  %v797 = vunpack.c.h.b16 %v702
  %v798 = vunpack.c.l.b16 %v703
  %v799 = vunpack.c.h.b16 %v703
  %v800 = vpack.c.b16 %v740, %v736
  %v801 = vpack.c.b16 %v741, %v737
  %v802 = vpack.c.b16 %v742, %v738
  %v803 = vpack.c.b16 %v743, %v739
  %v804 = vpack.c.b16 %v748, %v744
  %v805 = vpack.c.b16 %v749, %v745
  %v806 = vpack.c.b16 %v750, %v746
  %v807 = vpack.c.b16 %v751, %v747
  %v808 = vpack.c.b16 %v756, %v752
  %v809 = vpack.c.b16 %v757, %v753
  %v810 = vpack.c.b16 %v758, %v754
  %v811 = vpack.c.b16 %v759, %v755
  %v812 = vpack.c.b16 %v764, %v760
  %v813 = vpack.c.b16 %v765, %v761
  %v814 = vpack.c.b16 %v766, %v762
  %v815 = vpack.c.b16 %v767, %v763
  %v816 = vpack.c.b16 %v772, %v768
  %v817 = vpack.c.b16 %v773, %v769
  %v818 = vpack.c.b16 %v774, %v770
  %v819 = vpack.c.b16 %v775, %v771
  %v820 = vpack.c.b16 %v780, %v776
  %v821 = vpack.c.b16 %v781, %v777
  %v822 = vpack.c.b16 %v782, %v778
  %v823 = vpack.c.b16 %v783, %v779
  %v824 = vpack.c.b16 %v788, %v784
  %v825 = vpack.c.b16 %v789, %v785
  %v826 = vpack.c.b16 %v790, %v786
  %v827 = vpack.c.b16 %v791, %v787
  %v828 = vpack.c.b16 %v796, %v792
  %v829 = vpack.c.b16 %v797, %v793
  %v830 = vpack.c.b16 %v798, %v794
  %v831 = vpack.c.b16 %v799, %v795
  %864 = vmatpush.bf16.msra.mxu0 %v828
  %865 = vmatpush.bf16.msra.mxu0 %v824
  %866 = vmatpush.bf16.msra.mxu0 %v820
  %867 = vmatpush.bf16.msra.mxu0 %v816
  %868 = vmatpush.bf16.msra.mxu0 %v812
  %869 = vmatpush.bf16.msra.mxu0 %v808
  %870 = vmatpush.bf16.msra.mxu0 %v804
  %871 = vmatpush.bf16.msra.mxu0 %v800
  %872 = vmatmul.bf16.gmra.mxu0 %v664
  %v873 = vpop.f32.mrf.mxu0
  %v874 = vadd.f32 0.0, %v873
  %v875 = vpop.f32.mrf.mxu0
  %876 = vdwg.mxu0
  %877 = vmatpush.bf16.msra.mxu0 %v829
  %878 = vmatpush.bf16.msra.mxu0 %v825
  %879 = vmatpush.bf16.msra.mxu0 %v821
  %880 = vmatpush.bf16.msra.mxu0 %v817
  %881 = vmatpush.bf16.msra.mxu0 %v813
  %882 = vmatpush.bf16.msra.mxu0 %v809
  %883 = vmatpush.bf16.msra.mxu0 %v805
  %884 = vmatpush.bf16.msra.mxu0 %v801
  %885 = vmatmul.bf16.gmra.mxu0 %v664
  %v886 = vpop.f32.mrf.mxu0
  %v887 = vadd.f32 0.0, %v886
  %v888 = vpop.f32.mrf.mxu0
  %889 = vdwg.mxu0
  %890 = vmatpush.bf16.msra.mxu0 %v830
  %891 = vmatpush.bf16.msra.mxu0 %v826
  %892 = vmatpush.bf16.msra.mxu0 %v822
  %893 = vmatpush.bf16.msra.mxu0 %v818
  %894 = vmatpush.bf16.msra.mxu0 %v814
  %895 = vmatpush.bf16.msra.mxu0 %v810
  %896 = vmatpush.bf16.msra.mxu0 %v806
  %897 = vmatpush.bf16.msra.mxu0 %v802
  %898 = vmatmul.bf16.gmra.mxu0 %v664
  %v899 = vpop.f32.mrf.mxu0
  %v900 = vadd.f32 0.0, %v899
  %v901 = vpop.f32.mrf.mxu0
  %902 = vdwg.mxu0
  %903 = vmatpush.bf16.msra.mxu0 %v831
  %904 = vmatpush.bf16.msra.mxu0 %v827
  %905 = vmatpush.bf16.msra.mxu0 %v823
  %906 = vmatpush.bf16.msra.mxu0 %v819
  %907 = vmatpush.bf16.msra.mxu0 %v815
  %908 = vmatpush.bf16.msra.mxu0 %v811
  %909 = vmatpush.bf16.msra.mxu0 %v807
  %910 = vmatpush.bf16.msra.mxu0 %v803
  %911 = vmatmul.bf16.gmra.mxu0 %v664
  %v912 = vpop.f32.mrf.mxu0
  %v913 = vadd.f32 0.0, %v912
  %v914 = vpop.f32.mrf.mxu0
  %915 = vdwg.mxu0
  %v916 = vadd.f32 %v668, %v874
  %v917 = vadd.f32 %v669, %v887
  %v918 = vadd.f32 %v670, %v900
  %v919 = vadd.f32 %v671, %v913
  %v920 = vxor.u32 %v916, 2147483648
  %v921 = vxor.u32 %v917, 2147483648
  %v922 = vxor.u32 %v918, 2147483648
  %v923 = vmul.f32 %v920, 1.442695
  %v924 = vpow.pop %v923
  %v925 = vmul.f32 %v921, 1.442695
  %v926 = vpow.pop %v925
  %v927 = vmul.f32 %v922, 1.442695
  %v928 = vpow.pop %v927
  %v929 = vadd.f32 %v924, 1.0
  %v930 = vadd.f32 %v926, 1.0
  %v931 = vadd.f32 %v928, 1.0
  %v932 = vrcp.pop %v929
  %v933 = vmul.f32 %v929, %v932
  %v934 = vsub.f32 1.0, %v933
  %v935 = vmul.f32 %v932, %v934
  %v936 = vadd.f32 %v932, %v935
  %vm937 = vweird.f32 %v929
  %vm938 = vweird.f32 %v932
  %vm939 = vmor %vm937, %vm938
  %v940 = vsel %vm939, %v932, %v936
  %v941 = vand.u32 2147483647, %v929
  %vm942 = vcmp.eq.f32.partialorder %v941, 8.507059e+37
  %v943 = vand.u32 %v929, 2147483648
  %v944 = vor.u32 1.1754944e-38, %v943
  %v945 = vsel %vm942, %v944, %v940
  %v946 = vmul.f32 1.0, %v945
  %v947 = vrcp.pop %v930
  %v948 = vmul.f32 %v930, %v947
  %v949 = vsub.f32 1.0, %v948
  %v950 = vmul.f32 %v947, %v949
  %v951 = vadd.f32 %v947, %v950
  %vm952 = vweird.f32 %v930
  %vm953 = vweird.f32 %v947
  %vm954 = vmor %vm952, %vm953
  %v955 = vsel %vm954, %v947, %v951
  %v956 = vand.u32 2147483647, %v930
  %vm957 = vcmp.eq.f32.partialorder %v956, 8.507059e+37
  %v958 = vand.u32 %v930, 2147483648
  %v959 = vor.u32 1.1754944e-38, %v958
  %v960 = vsel %vm957, %v959, %v955
  %v961 = vmul.f32 1.0, %v960
  %v962 = vrcp.pop %v931
  %v963 = vmul.f32 %v931, %v962
  %v964 = vsub.f32 1.0, %v963
  %v965 = vmul.f32 %v962, %v964
  %v966 = vadd.f32 %v962, %v965
  %vm967 = vweird.f32 %v931
  %vm968 = vweird.f32 %v962
  %vm969 = vmor %vm967, %vm968
  %v970 = vsel %vm969, %v962, %v966
  %v971 = vand.u32 2147483647, %v931
  %vm972 = vcmp.eq.f32.partialorder %v971, 8.507059e+37
  %v973 = vand.u32 %v931, 2147483648
  %v974 = vor.u32 1.1754944e-38, %v973
  %v975 = vsel %vm972, %v974, %v970
  %v976 = vmul.f32 1.0, %v975
  %v977 = vtanh.pop %v919
  %v978 = vmul.f32 %v961, %v661
  %v979 = vmul.f32 %v946, %v977
  %v980 = vadd.f32 %v978, %v979
  %v981 = vtanh.pop %v980
  %v982 = vmul.f32 %v976, %v981
  %v983 = vpack.c.bf16 %v982, %v982
  %s984 = scalar_lea.vmem %s4, 8
  %985 = vst [vmem:[%s984] sm:$0xf] %v983
  %s986 = scalar_lea.vmem %s0, 96
  %v987 = vld [vmem:[%s986] sm:$0xff]
  %v988 = vld [vmem:[%s986 + $0x8] sm:$0xff]
  %v989 = vld [vmem:[%s986 + $0x10] sm:$0xff]
  %v990 = vld [vmem:[%s986 + $0x18] sm:$0xff]
  %v991 = vld [vmem:[%s3] sm:$0xff]
  %v992 = vld [vmem:[%s3 + $0x8] sm:$0xff]
  %v993 = vld [vmem:[%s3 + $0x10] sm:$0xff]
  %v994 = vld [vmem:[%s3 + $0x18] sm:$0xff]
  %v995 = vld [vmem:[%s3 + $0x20] sm:$0xff]
  %v996 = vld [vmem:[%s3 + $0x28] sm:$0xff]
  %v997 = vld [vmem:[%s3 + $0x30] sm:$0xff]
  %v998 = vld [vmem:[%s3 + $0x38] sm:$0xff]
  %v999 = vld [vmem:[%s3 + $0x40] sm:$0xff]
  %v1000 = vld [vmem:[%s3 + $0x48] sm:$0xff]
  %v1001 = vld [vmem:[%s3 + $0x50] sm:$0xff]
  %v1002 = vld [vmem:[%s3 + $0x58] sm:$0xff]
  %v1003 = vld [vmem:[%s3 + $0x60] sm:$0xff]
  %v1004 = vld [vmem:[%s3 + $0x68] sm:$0xff]
  %v1005 = vld [vmem:[%s3 + $0x70] sm:$0xff]
  %v1006 = vld [vmem:[%s3 + $0x78] sm:$0xff]
  %v1007 = vld [vmem:[%s3 + $0x80] sm:$0xff]
  %v1008 = vld [vmem:[%s3 + $0x88] sm:$0xff]
  %v1009 = vld [vmem:[%s3 + $0x90] sm:$0xff]
  %v1010 = vld [vmem:[%s3 + $0x98] sm:$0xff]
  %v1011 = vld [vmem:[%s3 + $0xa0] sm:$0xff]
  %v1012 = vld [vmem:[%s3 + $0xa8] sm:$0xff]
  %v1013 = vld [vmem:[%s3 + $0xb0] sm:$0xff]
  %v1014 = vld [vmem:[%s3 + $0xb8] sm:$0xff]
  %v1015 = vld [vmem:[%s3 + $0xc0] sm:$0xff]
  %v1016 = vld [vmem:[%s3 + $0xc8] sm:$0xff]
  %v1017 = vld [vmem:[%s3 + $0xd0] sm:$0xff]
  %v1018 = vld [vmem:[%s3 + $0xd8] sm:$0xff]
  %v1019 = vld [vmem:[%s3 + $0xe0] sm:$0xff]
  %v1020 = vld [vmem:[%s3 + $0xe8] sm:$0xff]
  %v1021 = vld [vmem:[%s3 + $0xf0] sm:$0xff]
  %v1022 = vld [vmem:[%s3 + $0xf8] sm:$0xff]
  %v1055 = vunpack.c.l.b16 %v991
  %v1056 = vunpack.c.h.b16 %v991
  %v1057 = vunpack.c.l.b16 %v992
  %v1058 = vunpack.c.h.b16 %v992
  %v1059 = vunpack.c.l.b16 %v993
  %v1060 = vunpack.c.h.b16 %v993
  %v1061 = vunpack.c.l.b16 %v994
  %v1062 = vunpack.c.h.b16 %v994
  %v1063 = vunpack.c.l.b16 %v995
  %v1064 = vunpack.c.h.b16 %v995
  %v1065 = vunpack.c.l.b16 %v996
  %v1066 = vunpack.c.h.b16 %v996
  %v1067 = vunpack.c.l.b16 %v997
  %v1068 = vunpack.c.h.b16 %v997
  %v1069 = vunpack.c.l.b16 %v998
  %v1070 = vunpack.c.h.b16 %v998
  %v1071 = vunpack.c.l.b16 %v999
  %v1072 = vunpack.c.h.b16 %v999
  %v1073 = vunpack.c.l.b16 %v1000
  %v1074 = vunpack.c.h.b16 %v1000
  %v1075 = vunpack.c.l.b16 %v1001
  %v1076 = vunpack.c.h.b16 %v1001
  %v1077 = vunpack.c.l.b16 %v1002
  %v1078 = vunpack.c.h.b16 %v1002
  %v1079 = vunpack.c.l.b16 %v1003
  %v1080 = vunpack.c.h.b16 %v1003
  %v1081 = vunpack.c.l.b16 %v1004
  %v1082 = vunpack.c.h.b16 %v1004
  %v1083 = vunpack.c.l.b16 %v1005
  %v1084 = vunpack.c.h.b16 %v1005
  %v1085 = vunpack.c.l.b16 %v1006
  %v1086 = vunpack.c.h.b16 %v1006
  %v1087 = vunpack.c.l.b16 %v1007
  %v1088 = vunpack.c.h.b16 %v1007
  %v1089 = vunpack.c.l.b16 %v1008
  %v1090 = vunpack.c.h.b16 %v1008
  %v1091 = vunpack.c.l.b16 %v1009
  %v1092 = vunpack.c.h.b16 %v1009
  %v1093 = vunpack.c.l.b16 %v1010
  %v1094 = vunpack.c.h.b16 %v1010
  %v1095 = vunpack.c.l.b16 %v1011
  %v1096 = vunpack.c.h.b16 %v1011
  %v1097 = vunpack.c.l.b16 %v1012
  %v1098 = vunpack.c.h.b16 %v1012
  %v1099 = vunpack.c.l.b16 %v1013
  %v1100 = vunpack.c.h.b16 %v1013
  %v1101 = vunpack.c.l.b16 %v1014
  %v1102 = vunpack.c.h.b16 %v1014
  %v1103 = vunpack.c.l.b16 %v1015
  %v1104 = vunpack.c.h.b16 %v1015
  %v1105 = vunpack.c.l.b16 %v1016
  %v1106 = vunpack.c.h.b16 %v1016
  %v1107 = vunpack.c.l.b16 %v1017
  %v1108 = vunpack.c.h.b16 %v1017
  %v1109 = vunpack.c.l.b16 %v1018
  %v1110 = vunpack.c.h.b16 %v1018
  %v1111 = vunpack.c.l.b16 %v1019
  %v1112 = vunpack.c.h.b16 %v1019
  %v1113 = vunpack.c.l.b16 %v1020
  %v1114 = vunpack.c.h.b16 %v1020
  %v1115 = vunpack.c.l.b16 %v1021
  %v1116 = vunpack.c.h.b16 %v1021
  %v1117 = vunpack.c.l.b16 %v1022
  %v1118 = vunpack.c.h.b16 %v1022
  %v1119 = vpack.c.b16 %v1059, %v1055
  %v1120 = vpack.c.b16 %v1060, %v1056
  %v1121 = vpack.c.b16 %v1061, %v1057
  %v1122 = vpack.c.b16 %v1062, %v1058
  %v1123 = vpack.c.b16 %v1067, %v1063
  %v1124 = vpack.c.b16 %v1068, %v1064
  %v1125 = vpack.c.b16 %v1069, %v1065
  %v1126 = vpack.c.b16 %v1070, %v1066
  %v1127 = vpack.c.b16 %v1075, %v1071
  %v1128 = vpack.c.b16 %v1076, %v1072
  %v1129 = vpack.c.b16 %v1077, %v1073
  %v1130 = vpack.c.b16 %v1078, %v1074
  %v1131 = vpack.c.b16 %v1083, %v1079
  %v1132 = vpack.c.b16 %v1084, %v1080
  %v1133 = vpack.c.b16 %v1085, %v1081
  %v1134 = vpack.c.b16 %v1086, %v1082
  %v1135 = vpack.c.b16 %v1091, %v1087
  %v1136 = vpack.c.b16 %v1092, %v1088
  %v1137 = vpack.c.b16 %v1093, %v1089
  %v1138 = vpack.c.b16 %v1094, %v1090
  %v1139 = vpack.c.b16 %v1099, %v1095
  %v1140 = vpack.c.b16 %v1100, %v1096
  %v1141 = vpack.c.b16 %v1101, %v1097
  %v1142 = vpack.c.b16 %v1102, %v1098
  %v1143 = vpack.c.b16 %v1107, %v1103
  %v1144 = vpack.c.b16 %v1108, %v1104
  %v1145 = vpack.c.b16 %v1109, %v1105
  %v1146 = vpack.c.b16 %v1110, %v1106
  %v1147 = vpack.c.b16 %v1115, %v1111
  %v1148 = vpack.c.b16 %v1116, %v1112
  %v1149 = vpack.c.b16 %v1117, %v1113
  %v1150 = vpack.c.b16 %v1118, %v1114
  %1183 = vmatpush.bf16.msra.mxu0 %v1147
  %1184 = vmatpush.bf16.msra.mxu0 %v1143
  %1185 = vmatpush.bf16.msra.mxu0 %v1139
  %1186 = vmatpush.bf16.msra.mxu0 %v1135
  %1187 = vmatpush.bf16.msra.mxu0 %v1131
  %1188 = vmatpush.bf16.msra.mxu0 %v1127
  %1189 = vmatpush.bf16.msra.mxu0 %v1123
  %1190 = vmatpush.bf16.msra.mxu0 %v1119
  %1191 = vmatmul.bf16.gmra.mxu0 %v983
  %v1192 = vpop.f32.mrf.mxu0
  %v1193 = vadd.f32 0.0, %v1192
  %v1194 = vpop.f32.mrf.mxu0
  %1195 = vdwg.mxu0
  %1196 = vmatpush.bf16.msra.mxu0 %v1148
  %1197 = vmatpush.bf16.msra.mxu0 %v1144
  %1198 = vmatpush.bf16.msra.mxu0 %v1140
  %1199 = vmatpush.bf16.msra.mxu0 %v1136
  %1200 = vmatpush.bf16.msra.mxu0 %v1132
  %1201 = vmatpush.bf16.msra.mxu0 %v1128
  %1202 = vmatpush.bf16.msra.mxu0 %v1124
  %1203 = vmatpush.bf16.msra.mxu0 %v1120
  %1204 = vmatmul.bf16.gmra.mxu0 %v983
  %v1205 = vpop.f32.mrf.mxu0
  %v1206 = vadd.f32 0.0, %v1205
  %v1207 = vpop.f32.mrf.mxu0
  %1208 = vdwg.mxu0
  %1209 = vmatpush.bf16.msra.mxu0 %v1149
  %1210 = vmatpush.bf16.msra.mxu0 %v1145
  %1211 = vmatpush.bf16.msra.mxu0 %v1141
  %1212 = vmatpush.bf16.msra.mxu0 %v1137
  %1213 = vmatpush.bf16.msra.mxu0 %v1133
  %1214 = vmatpush.bf16.msra.mxu0 %v1129
  %1215 = vmatpush.bf16.msra.mxu0 %v1125
  %1216 = vmatpush.bf16.msra.mxu0 %v1121
  %1217 = vmatmul.bf16.gmra.mxu0 %v983
  %v1218 = vpop.f32.mrf.mxu0
  %v1219 = vadd.f32 0.0, %v1218
  %v1220 = vpop.f32.mrf.mxu0
  %1221 = vdwg.mxu0
  %1222 = vmatpush.bf16.msra.mxu0 %v1150
  %1223 = vmatpush.bf16.msra.mxu0 %v1146
  %1224 = vmatpush.bf16.msra.mxu0 %v1142
  %1225 = vmatpush.bf16.msra.mxu0 %v1138
  %1226 = vmatpush.bf16.msra.mxu0 %v1134
  %1227 = vmatpush.bf16.msra.mxu0 %v1130
  %1228 = vmatpush.bf16.msra.mxu0 %v1126
  %1229 = vmatpush.bf16.msra.mxu0 %v1122
  %1230 = vmatmul.bf16.gmra.mxu0 %v983
  %v1231 = vpop.f32.mrf.mxu0
  %v1232 = vadd.f32 0.0, %v1231
  %v1233 = vpop.f32.mrf.mxu0
  %1234 = vdwg.mxu0
  %v1235 = vadd.f32 %v987, %v1193
  %v1236 = vadd.f32 %v988, %v1206
  %v1237 = vadd.f32 %v989, %v1219
  %v1238 = vadd.f32 %v990, %v1232
  %v1239 = vxor.u32 %v1235, 2147483648
  %v1240 = vxor.u32 %v1236, 2147483648
  %v1241 = vxor.u32 %v1237, 2147483648
  %v1242 = vmul.f32 %v1239, 1.442695
  %v1243 = vpow.pop %v1242
  %v1244 = vmul.f32 %v1240, 1.442695
  %v1245 = vpow.pop %v1244
  %v1246 = vmul.f32 %v1241, 1.442695
  %v1247 = vpow.pop %v1246
  %v1248 = vadd.f32 %v1243, 1.0
  %v1249 = vadd.f32 %v1245, 1.0
  %v1250 = vadd.f32 %v1247, 1.0
  %v1251 = vrcp.pop %v1248
  %v1252 = vmul.f32 %v1248, %v1251
  %v1253 = vsub.f32 1.0, %v1252
  %v1254 = vmul.f32 %v1251, %v1253
  %v1255 = vadd.f32 %v1251, %v1254
  %vm1256 = vweird.f32 %v1248
  %vm1257 = vweird.f32 %v1251
  %vm1258 = vmor %vm1256, %vm1257
  %v1259 = vsel %vm1258, %v1251, %v1255
  %v1260 = vand.u32 2147483647, %v1248
  %vm1261 = vcmp.eq.f32.partialorder %v1260, 8.507059e+37
  %v1262 = vand.u32 %v1248, 2147483648
  %v1263 = vor.u32 1.1754944e-38, %v1262
  %v1264 = vsel %vm1261, %v1263, %v1259
  %v1265 = vmul.f32 1.0, %v1264
  %v1266 = vrcp.pop %v1249
  %v1267 = vmul.f32 %v1249, %v1266
  %v1268 = vsub.f32 1.0, %v1267
  %v1269 = vmul.f32 %v1266, %v1268
  %v1270 = vadd.f32 %v1266, %v1269
  %vm1271 = vweird.f32 %v1249
  %vm1272 = vweird.f32 %v1266
  %vm1273 = vmor %vm1271, %vm1272
  %v1274 = vsel %vm1273, %v1266, %v1270
  %v1275 = vand.u32 2147483647, %v1249
  %vm1276 = vcmp.eq.f32.partialorder %v1275, 8.507059e+37
  %v1277 = vand.u32 %v1249, 2147483648
  %v1278 = vor.u32 1.1754944e-38, %v1277
  %v1279 = vsel %vm1276, %v1278, %v1274
  %v1280 = vmul.f32 1.0, %v1279
  %v1281 = vrcp.pop %v1250
  %v1282 = vmul.f32 %v1250, %v1281
  %v1283 = vsub.f32 1.0, %v1282
  %v1284 = vmul.f32 %v1281, %v1283
  %v1285 = vadd.f32 %v1281, %v1284
  %vm1286 = vweird.f32 %v1250
  %vm1287 = vweird.f32 %v1281
  %vm1288 = vmor %vm1286, %vm1287
  %v1289 = vsel %vm1288, %v1281, %v1285
  %v1290 = vand.u32 2147483647, %v1250
  %vm1291 = vcmp.eq.f32.partialorder %v1290, 8.507059e+37
  %v1292 = vand.u32 %v1250, 2147483648
  %v1293 = vor.u32 1.1754944e-38, %v1292
  %v1294 = vsel %vm1291, %v1293, %v1289
  %v1295 = vmul.f32 1.0, %v1294
  %v1296 = vtanh.pop %v1238
  %v1297 = vmul.f32 %v1280, %v980
  %v1298 = vmul.f32 %v1265, %v1296
  %v1299 = vadd.f32 %v1297, %v1298
  %v1300 = vtanh.pop %v1299
  %v1301 = vmul.f32 %v1295, %v1300
  %v1302 = vpack.c.bf16 %v1301, %v1301
  %s1303 = scalar_lea.vmem %s4, 12
  %1304 = vst [vmem:[%s1303] sm:$0xf] %v1302
  %s1305 = scalar_lea.vmem %s0, 128
  %v1306 = vld [vmem:[%s1305] sm:$0xff]
  %v1307 = vld [vmem:[%s1305 + $0x8] sm:$0xff]
  %v1308 = vld [vmem:[%s1305 + $0x10] sm:$0xff]
  %v1309 = vld [vmem:[%s1305 + $0x18] sm:$0xff]
  %v1310 = vld [vmem:[%s3] sm:$0xff]
  %v1311 = vld [vmem:[%s3 + $0x8] sm:$0xff]
  %v1312 = vld [vmem:[%s3 + $0x10] sm:$0xff]
  %v1313 = vld [vmem:[%s3 + $0x18] sm:$0xff]
  %v1314 = vld [vmem:[%s3 + $0x20] sm:$0xff]
  %v1315 = vld [vmem:[%s3 + $0x28] sm:$0xff]
  %v1316 = vld [vmem:[%s3 + $0x30] sm:$0xff]
  %v1317 = vld [vmem:[%s3 + $0x38] sm:$0xff]
  %v1318 = vld [vmem:[%s3 + $0x40] sm:$0xff]
  %v1319 = vld [vmem:[%s3 + $0x48] sm:$0xff]
  %v1320 = vld [vmem:[%s3 + $0x50] sm:$0xff]
  %v1321 = vld [vmem:[%s3 + $0x58] sm:$0xff]
  %v1322 = vld [vmem:[%s3 + $0x60] sm:$0xff]
  %v1323 = vld [vmem:[%s3 + $0x68] sm:$0xff]
  %v1324 = vld [vmem:[%s3 + $0x70] sm:$0xff]
  %v1325 = vld [vmem:[%s3 + $0x78] sm:$0xff]
  %v1326 = vld [vmem:[%s3 + $0x80] sm:$0xff]
  %v1327 = vld [vmem:[%s3 + $0x88] sm:$0xff]
  %v1328 = vld [vmem:[%s3 + $0x90] sm:$0xff]
  %v1329 = vld [vmem:[%s3 + $0x98] sm:$0xff]
  %v1330 = vld [vmem:[%s3 + $0xa0] sm:$0xff]
  %v1331 = vld [vmem:[%s3 + $0xa8] sm:$0xff]
  %v1332 = vld [vmem:[%s3 + $0xb0] sm:$0xff]
  %v1333 = vld [vmem:[%s3 + $0xb8] sm:$0xff]
  %v1334 = vld [vmem:[%s3 + $0xc0] sm:$0xff]
  %v1335 = vld [vmem:[%s3 + $0xc8] sm:$0xff]
  %v1336 = vld [vmem:[%s3 + $0xd0] sm:$0xff]
  %v1337 = vld [vmem:[%s3 + $0xd8] sm:$0xff]
  %v1338 = vld [vmem:[%s3 + $0xe0] sm:$0xff]
  %v1339 = vld [vmem:[%s3 + $0xe8] sm:$0xff]
  %v1340 = vld [vmem:[%s3 + $0xf0] sm:$0xff]
  %v1341 = vld [vmem:[%s3 + $0xf8] sm:$0xff]
  %v1374 = vunpack.c.l.b16 %v1310
  %v1375 = vunpack.c.h.b16 %v1310
  %v1376 = vunpack.c.l.b16 %v1311
  %v1377 = vunpack.c.h.b16 %v1311
  %v1378 = vunpack.c.l.b16 %v1312
  %v1379 = vunpack.c.h.b16 %v1312
  %v1380 = vunpack.c.l.b16 %v1313
  %v1381 = vunpack.c.h.b16 %v1313
  %v1382 = vunpack.c.l.b16 %v1314
  %v1383 = vunpack.c.h.b16 %v1314
  %v1384 = vunpack.c.l.b16 %v1315
  %v1385 = vunpack.c.h.b16 %v1315
  %v1386 = vunpack.c.l.b16 %v1316
  %v1387 = vunpack.c.h.b16 %v1316
  %v1388 = vunpack.c.l.b16 %v1317
  %v1389 = vunpack.c.h.b16 %v1317
  %v1390 = vunpack.c.l.b16 %v1318
  %v1391 = vunpack.c.h.b16 %v1318
  %v1392 = vunpack.c.l.b16 %v1319
  %v1393 = vunpack.c.h.b16 %v1319
  %v1394 = vunpack.c.l.b16 %v1320
  %v1395 = vunpack.c.h.b16 %v1320
  %v1396 = vunpack.c.l.b16 %v1321
  %v1397 = vunpack.c.h.b16 %v1321
  %v1398 = vunpack.c.l.b16 %v1322
  %v1399 = vunpack.c.h.b16 %v1322
  %v1400 = vunpack.c.l.b16 %v1323
  %v1401 = vunpack.c.h.b16 %v1323
  %v1402 = vunpack.c.l.b16 %v1324
  %v1403 = vunpack.c.h.b16 %v1324
  %v1404 = vunpack.c.l.b16 %v1325
  %v1405 = vunpack.c.h.b16 %v1325
  %v1406 = vunpack.c.l.b16 %v1326
  %v1407 = vunpack.c.h.b16 %v1326
  %v1408 = vunpack.c.l.b16 %v1327
  %v1409 = vunpack.c.h.b16 %v1327
  %v1410 = vunpack.c.l.b16 %v1328
  %v1411 = vunpack.c.h.b16 %v1328
  %v1412 = vunpack.c.l.b16 %v1329
  %v1413 = vunpack.c.h.b16 %v1329
  %v1414 = vunpack.c.l.b16 %v1330
  %v1415 = vunpack.c.h.b16 %v1330
  %v1416 = vunpack.c.l.b16 %v1331
  %v1417 = vunpack.c.h.b16 %v1331
  %v1418 = vunpack.c.l.b16 %v1332
  %v1419 = vunpack.c.h.b16 %v1332
  %v1420 = vunpack.c.l.b16 %v1333
  %v1421 = vunpack.c.h.b16 %v1333
  %v1422 = vunpack.c.l.b16 %v1334
  %v1423 = vunpack.c.h.b16 %v1334
  %v1424 = vunpack.c.l.b16 %v1335
  %v1425 = vunpack.c.h.b16 %v1335
  %v1426 = vunpack.c.l.b16 %v1336
  %v1427 = vunpack.c.h.b16 %v1336
  %v1428 = vunpack.c.l.b16 %v1337
  %v1429 = vunpack.c.h.b16 %v1337
  %v1430 = vunpack.c.l.b16 %v1338
  %v1431 = vunpack.c.h.b16 %v1338
  %v1432 = vunpack.c.l.b16 %v1339
  %v1433 = vunpack.c.h.b16 %v1339
  %v1434 = vunpack.c.l.b16 %v1340
  %v1435 = vunpack.c.h.b16 %v1340
  %v1436 = vunpack.c.l.b16 %v1341
  %v1437 = vunpack.c.h.b16 %v1341
  %v1438 = vpack.c.b16 %v1378, %v1374
  %v1439 = vpack.c.b16 %v1379, %v1375
  %v1440 = vpack.c.b16 %v1380, %v1376
  %v1441 = vpack.c.b16 %v1381, %v1377
  %v1442 = vpack.c.b16 %v1386, %v1382
  %v1443 = vpack.c.b16 %v1387, %v1383
  %v1444 = vpack.c.b16 %v1388, %v1384
  %v1445 = vpack.c.b16 %v1389, %v1385
  %v1446 = vpack.c.b16 %v1394, %v1390
  %v1447 = vpack.c.b16 %v1395, %v1391
  %v1448 = vpack.c.b16 %v1396, %v1392
  %v1449 = vpack.c.b16 %v1397, %v1393
  %v1450 = vpack.c.b16 %v1402, %v1398
  %v1451 = vpack.c.b16 %v1403, %v1399
  %v1452 = vpack.c.b16 %v1404, %v1400
  %v1453 = vpack.c.b16 %v1405, %v1401
  %v1454 = vpack.c.b16 %v1410, %v1406
  %v1455 = vpack.c.b16 %v1411, %v1407
  %v1456 = vpack.c.b16 %v1412, %v1408
  %v1457 = vpack.c.b16 %v1413, %v1409
  %v1458 = vpack.c.b16 %v1418, %v1414
  %v1459 = vpack.c.b16 %v1419, %v1415
  %v1460 = vpack.c.b16 %v1420, %v1416
  %v1461 = vpack.c.b16 %v1421, %v1417
  %v1462 = vpack.c.b16 %v1426, %v1422
  %v1463 = vpack.c.b16 %v1427, %v1423
  %v1464 = vpack.c.b16 %v1428, %v1424
  %v1465 = vpack.c.b16 %v1429, %v1425
  %v1466 = vpack.c.b16 %v1434, %v1430
  %v1467 = vpack.c.b16 %v1435, %v1431
  %v1468 = vpack.c.b16 %v1436, %v1432
  %v1469 = vpack.c.b16 %v1437, %v1433
  %1502 = vmatpush.bf16.msra.mxu0 %v1466
  %1503 = vmatpush.bf16.msra.mxu0 %v1462
  %1504 = vmatpush.bf16.msra.mxu0 %v1458
  %1505 = vmatpush.bf16.msra.mxu0 %v1454
  %1506 = vmatpush.bf16.msra.mxu0 %v1450
  %1507 = vmatpush.bf16.msra.mxu0 %v1446
  %1508 = vmatpush.bf16.msra.mxu0 %v1442
  %1509 = vmatpush.bf16.msra.mxu0 %v1438
  %1510 = vmatmul.bf16.gmra.mxu0 %v1302
  %v1511 = vpop.f32.mrf.mxu0
  %v1512 = vadd.f32 0.0, %v1511
  %v1513 = vpop.f32.mrf.mxu0
  %1514 = vdwg.mxu0
  %1515 = vmatpush.bf16.msra.mxu0 %v1467
  %1516 = vmatpush.bf16.msra.mxu0 %v1463
  %1517 = vmatpush.bf16.msra.mxu0 %v1459
  %1518 = vmatpush.bf16.msra.mxu0 %v1455
  %1519 = vmatpush.bf16.msra.mxu0 %v1451
  %1520 = vmatpush.bf16.msra.mxu0 %v1447
  %1521 = vmatpush.bf16.msra.mxu0 %v1443
  %1522 = vmatpush.bf16.msra.mxu0 %v1439
  %1523 = vmatmul.bf16.gmra.mxu0 %v1302
  %v1524 = vpop.f32.mrf.mxu0
  %v1525 = vadd.f32 0.0, %v1524
  %v1526 = vpop.f32.mrf.mxu0
  %1527 = vdwg.mxu0
  %1528 = vmatpush.bf16.msra.mxu0 %v1468
  %1529 = vmatpush.bf16.msra.mxu0 %v1464
  %1530 = vmatpush.bf16.msra.mxu0 %v1460
  %1531 = vmatpush.bf16.msra.mxu0 %v1456
  %1532 = vmatpush.bf16.msra.mxu0 %v1452
  %1533 = vmatpush.bf16.msra.mxu0 %v1448
  %1534 = vmatpush.bf16.msra.mxu0 %v1444
  %1535 = vmatpush.bf16.msra.mxu0 %v1440
  %1536 = vmatmul.bf16.gmra.mxu0 %v1302
  %v1537 = vpop.f32.mrf.mxu0
  %v1538 = vadd.f32 0.0, %v1537
  %v1539 = vpop.f32.mrf.mxu0
  %1540 = vdwg.mxu0
  %1541 = vmatpush.bf16.msra.mxu0 %v1469
  %1542 = vmatpush.bf16.msra.mxu0 %v1465
  %1543 = vmatpush.bf16.msra.mxu0 %v1461
  %1544 = vmatpush.bf16.msra.mxu0 %v1457
  %1545 = vmatpush.bf16.msra.mxu0 %v1453
  %1546 = vmatpush.bf16.msra.mxu0 %v1449
  %1547 = vmatpush.bf16.msra.mxu0 %v1445
  %1548 = vmatpush.bf16.msra.mxu0 %v1441
  %1549 = vmatmul.bf16.gmra.mxu0 %v1302
  %v1550 = vpop.f32.mrf.mxu0
  %v1551 = vadd.f32 0.0, %v1550
  %v1552 = vpop.f32.mrf.mxu0
  %1553 = vdwg.mxu0
  %v1554 = vadd.f32 %v1306, %v1512
  %v1555 = vadd.f32 %v1307, %v1525
  %v1556 = vadd.f32 %v1308, %v1538
  %v1557 = vadd.f32 %v1309, %v1551
  %v1558 = vxor.u32 %v1554, 2147483648
  %v1559 = vxor.u32 %v1555, 2147483648
  %v1560 = vxor.u32 %v1556, 2147483648
  %v1561 = vmul.f32 %v1558, 1.442695
  %v1562 = vpow.pop %v1561
  %v1563 = vmul.f32 %v1559, 1.442695
  %v1564 = vpow.pop %v1563
  %v1565 = vmul.f32 %v1560, 1.442695
  %v1566 = vpow.pop %v1565
  %v1567 = vadd.f32 %v1562, 1.0
  %v1568 = vadd.f32 %v1564, 1.0
  %v1569 = vadd.f32 %v1566, 1.0
  %v1570 = vrcp.pop %v1567
  %v1571 = vmul.f32 %v1567, %v1570
  %v1572 = vsub.f32 1.0, %v1571
  %v1573 = vmul.f32 %v1570, %v1572
  %v1574 = vadd.f32 %v1570, %v1573
  %vm1575 = vweird.f32 %v1567
  %vm1576 = vweird.f32 %v1570
  %vm1577 = vmor %vm1575, %vm1576
  %v1578 = vsel %vm1577, %v1570, %v1574
  %v1579 = vand.u32 2147483647, %v1567
  %vm1580 = vcmp.eq.f32.partialorder %v1579, 8.507059e+37
  %v1581 = vand.u32 %v1567, 2147483648
  %v1582 = vor.u32 1.1754944e-38, %v1581
  %v1583 = vsel %vm1580, %v1582, %v1578
  %v1584 = vmul.f32 1.0, %v1583
  %v1585 = vrcp.pop %v1568
  %v1586 = vmul.f32 %v1568, %v1585
  %v1587 = vsub.f32 1.0, %v1586
  %v1588 = vmul.f32 %v1585, %v1587
  %v1589 = vadd.f32 %v1585, %v1588
  %vm1590 = vweird.f32 %v1568
  %vm1591 = vweird.f32 %v1585
  %vm1592 = vmor %vm1590, %vm1591
  %v1593 = vsel %vm1592, %v1585, %v1589
  %v1594 = vand.u32 2147483647, %v1568
  %vm1595 = vcmp.eq.f32.partialorder %v1594, 8.507059e+37
  %v1596 = vand.u32 %v1568, 2147483648
  %v1597 = vor.u32 1.1754944e-38, %v1596
  %v1598 = vsel %vm1595, %v1597, %v1593
  %v1599 = vmul.f32 1.0, %v1598
  %v1600 = vrcp.pop %v1569
  %v1601 = vmul.f32 %v1569, %v1600
  %v1602 = vsub.f32 1.0, %v1601
  %v1603 = vmul.f32 %v1600, %v1602
  %v1604 = vadd.f32 %v1600, %v1603
  %vm1605 = vweird.f32 %v1569
  %vm1606 = vweird.f32 %v1600
  %vm1607 = vmor %vm1605, %vm1606
  %v1608 = vsel %vm1607, %v1600, %v1604
  %v1609 = vand.u32 2147483647, %v1569
  %vm1610 = vcmp.eq.f32.partialorder %v1609, 8.507059e+37
  %v1611 = vand.u32 %v1569, 2147483648
  %v1612 = vor.u32 1.1754944e-38, %v1611
  %v1613 = vsel %vm1610, %v1612, %v1608
  %v1614 = vmul.f32 1.0, %v1613
  %v1615 = vtanh.pop %v1557
  %v1616 = vmul.f32 %v1599, %v1299
  %v1617 = vmul.f32 %v1584, %v1615
  %v1618 = vadd.f32 %v1616, %v1617
  %v1619 = vtanh.pop %v1618
  %v1620 = vmul.f32 %v1614, %v1619
  %v1621 = vpack.c.bf16 %v1620, %v1620
  %s1622 = scalar_lea.vmem %s4, 16
  %1623 = vst [vmem:[%s1622] sm:$0xf] %v1621
  %s1624 = scalar_lea.vmem %s0, 160
  %v1625 = vld [vmem:[%s1624] sm:$0xff]
  %v1626 = vld [vmem:[%s1624 + $0x8] sm:$0xff]
  %v1627 = vld [vmem:[%s1624 + $0x10] sm:$0xff]
  %v1628 = vld [vmem:[%s1624 + $0x18] sm:$0xff]
  %v1629 = vld [vmem:[%s3] sm:$0xff]
  %v1630 = vld [vmem:[%s3 + $0x8] sm:$0xff]
  %v1631 = vld [vmem:[%s3 + $0x10] sm:$0xff]
  %v1632 = vld [vmem:[%s3 + $0x18] sm:$0xff]
  %v1633 = vld [vmem:[%s3 + $0x20] sm:$0xff]
  %v1634 = vld [vmem:[%s3 + $0x28] sm:$0xff]
  %v1635 = vld [vmem:[%s3 + $0x30] sm:$0xff]
  %v1636 = vld [vmem:[%s3 + $0x38] sm:$0xff]
  %v1637 = vld [vmem:[%s3 + $0x40] sm:$0xff]
  %v1638 = vld [vmem:[%s3 + $0x48] sm:$0xff]
  %v1639 = vld [vmem:[%s3 + $0x50] sm:$0xff]
  %v1640 = vld [vmem:[%s3 + $0x58] sm:$0xff]
  %v1641 = vld [vmem:[%s3 + $0x60] sm:$0xff]
  %v1642 = vld [vmem:[%s3 + $0x68] sm:$0xff]
  %v1643 = vld [vmem:[%s3 + $0x70] sm:$0xff]
  %v1644 = vld [vmem:[%s3 + $0x78] sm:$0xff]
  %v1645 = vld [vmem:[%s3 + $0x80] sm:$0xff]
  %v1646 = vld [vmem:[%s3 + $0x88] sm:$0xff]
  %v1647 = vld [vmem:[%s3 + $0x90] sm:$0xff]
  %v1648 = vld [vmem:[%s3 + $0x98] sm:$0xff]
  %v1649 = vld [vmem:[%s3 + $0xa0] sm:$0xff]
  %v1650 = vld [vmem:[%s3 + $0xa8] sm:$0xff]
  %v1651 = vld [vmem:[%s3 + $0xb0] sm:$0xff]
  %v1652 = vld [vmem:[%s3 + $0xb8] sm:$0xff]
  %v1653 = vld [vmem:[%s3 + $0xc0] sm:$0xff]
  %v1654 = vld [vmem:[%s3 + $0xc8] sm:$0xff]
  %v1655 = vld [vmem:[%s3 + $0xd0] sm:$0xff]
  %v1656 = vld [vmem:[%s3 + $0xd8] sm:$0xff]
  %v1657 = vld [vmem:[%s3 + $0xe0] sm:$0xff]
  %v1658 = vld [vmem:[%s3 + $0xe8] sm:$0xff]
  %v1659 = vld [vmem:[%s3 + $0xf0] sm:$0xff]
  %v1660 = vld [vmem:[%s3 + $0xf8] sm:$0xff]
  %v1693 = vunpack.c.l.b16 %v1629
  %v1694 = vunpack.c.h.b16 %v1629
  %v1695 = vunpack.c.l.b16 %v1630
  %v1696 = vunpack.c.h.b16 %v1630
  %v1697 = vunpack.c.l.b16 %v1631
  %v1698 = vunpack.c.h.b16 %v1631
  %v1699 = vunpack.c.l.b16 %v1632
  %v1700 = vunpack.c.h.b16 %v1632
  %v1701 = vunpack.c.l.b16 %v1633
  %v1702 = vunpack.c.h.b16 %v1633
  %v1703 = vunpack.c.l.b16 %v1634
  %v1704 = vunpack.c.h.b16 %v1634
  %v1705 = vunpack.c.l.b16 %v1635
  %v1706 = vunpack.c.h.b16 %v1635
  %v1707 = vunpack.c.l.b16 %v1636
  %v1708 = vunpack.c.h.b16 %v1636
  %v1709 = vunpack.c.l.b16 %v1637
  %v1710 = vunpack.c.h.b16 %v1637
  %v1711 = vunpack.c.l.b16 %v1638
  %v1712 = vunpack.c.h.b16 %v1638
  %v1713 = vunpack.c.l.b16 %v1639
  %v1714 = vunpack.c.h.b16 %v1639
  %v1715 = vunpack.c.l.b16 %v1640
  %v1716 = vunpack.c.h.b16 %v1640
  %v1717 = vunpack.c.l.b16 %v1641
  %v1718 = vunpack.c.h.b16 %v1641
  %v1719 = vunpack.c.l.b16 %v1642
  %v1720 = vunpack.c.h.b16 %v1642
  %v1721 = vunpack.c.l.b16 %v1643
  %v1722 = vunpack.c.h.b16 %v1643
  %v1723 = vunpack.c.l.b16 %v1644
  %v1724 = vunpack.c.h.b16 %v1644
  %v1725 = vunpack.c.l.b16 %v1645
  %v1726 = vunpack.c.h.b16 %v1645
  %v1727 = vunpack.c.l.b16 %v1646
  %v1728 = vunpack.c.h.b16 %v1646
  %v1729 = vunpack.c.l.b16 %v1647
  %v1730 = vunpack.c.h.b16 %v1647
  %v1731 = vunpack.c.l.b16 %v1648
  %v1732 = vunpack.c.h.b16 %v1648
  %v1733 = vunpack.c.l.b16 %v1649
  %v1734 = vunpack.c.h.b16 %v1649
  %v1735 = vunpack.c.l.b16 %v1650
  %v1736 = vunpack.c.h.b16 %v1650
  %v1737 = vunpack.c.l.b16 %v1651
  %v1738 = vunpack.c.h.b16 %v1651
  %v1739 = vunpack.c.l.b16 %v1652
  %v1740 = vunpack.c.h.b16 %v1652
  %v1741 = vunpack.c.l.b16 %v1653
  %v1742 = vunpack.c.h.b16 %v1653
  %v1743 = vunpack.c.l.b16 %v1654
  %v1744 = vunpack.c.h.b16 %v1654
  %v1745 = vunpack.c.l.b16 %v1655
  %v1746 = vunpack.c.h.b16 %v1655
  %v1747 = vunpack.c.l.b16 %v1656
  %v1748 = vunpack.c.h.b16 %v1656
  %v1749 = vunpack.c.l.b16 %v1657
  %v1750 = vunpack.c.h.b16 %v1657
  %v1751 = vunpack.c.l.b16 %v1658
  %v1752 = vunpack.c.h.b16 %v1658
  %v1753 = vunpack.c.l.b16 %v1659
  %v1754 = vunpack.c.h.b16 %v1659
  %v1755 = vunpack.c.l.b16 %v1660
  %v1756 = vunpack.c.h.b16 %v1660
  %v1757 = vpack.c.b16 %v1697, %v1693
  %v1758 = vpack.c.b16 %v1698, %v1694
  %v1759 = vpack.c.b16 %v1699, %v1695
  %v1760 = vpack.c.b16 %v1700, %v1696
  %v1761 = vpack.c.b16 %v1705, %v1701
  %v1762 = vpack.c.b16 %v1706, %v1702
  %v1763 = vpack.c.b16 %v1707, %v1703
  %v1764 = vpack.c.b16 %v1708, %v1704
  %v1765 = vpack.c.b16 %v1713, %v1709
  %v1766 = vpack.c.b16 %v1714, %v1710
  %v1767 = vpack.c.b16 %v1715, %v1711
  %v1768 = vpack.c.b16 %v1716, %v1712
  %v1769 = vpack.c.b16 %v1721, %v1717
  %v1770 = vpack.c.b16 %v1722, %v1718
  %v1771 = vpack.c.b16 %v1723, %v1719
  %v1772 = vpack.c.b16 %v1724, %v1720
  %v1773 = vpack.c.b16 %v1729, %v1725
  %v1774 = vpack.c.b16 %v1730, %v1726
  %v1775 = vpack.c.b16 %v1731, %v1727
  %v1776 = vpack.c.b16 %v1732, %v1728
  %v1777 = vpack.c.b16 %v1737, %v1733
  %v1778 = vpack.c.b16 %v1738, %v1734
  %v1779 = vpack.c.b16 %v1739, %v1735
  %v1780 = vpack.c.b16 %v1740, %v1736
  %v1781 = vpack.c.b16 %v1745, %v1741
  %v1782 = vpack.c.b16 %v1746, %v1742
  %v1783 = vpack.c.b16 %v1747, %v1743
  %v1784 = vpack.c.b16 %v1748, %v1744
  %v1785 = vpack.c.b16 %v1753, %v1749
  %v1786 = vpack.c.b16 %v1754, %v1750
  %v1787 = vpack.c.b16 %v1755, %v1751
  %v1788 = vpack.c.b16 %v1756, %v1752
  %1821 = vmatpush.bf16.msra.mxu0 %v1785
  %1822 = vmatpush.bf16.msra.mxu0 %v1781
  %1823 = vmatpush.bf16.msra.mxu0 %v1777
  %1824 = vmatpush.bf16.msra.mxu0 %v1773
  %1825 = vmatpush.bf16.msra.mxu0 %v1769
  %1826 = vmatpush.bf16.msra.mxu0 %v1765
  %1827 = vmatpush.bf16.msra.mxu0 %v1761
  %1828 = vmatpush.bf16.msra.mxu0 %v1757
  %1829 = vmatmul.bf16.gmra.mxu0 %v1621
  %v1830 = vpop.f32.mrf.mxu0
  %v1831 = vadd.f32 0.0, %v1830
  %v1832 = vpop.f32.mrf.mxu0
  %1833 = vdwg.mxu0
  %1834 = vmatpush.bf16.msra.mxu0 %v1786
  %1835 = vmatpush.bf16.msra.mxu0 %v1782
  %1836 = vmatpush.bf16.msra.mxu0 %v1778
  %1837 = vmatpush.bf16.msra.mxu0 %v1774
  %1838 = vmatpush.bf16.msra.mxu0 %v1770
  %1839 = vmatpush.bf16.msra.mxu0 %v1766
  %1840 = vmatpush.bf16.msra.mxu0 %v1762
  %1841 = vmatpush.bf16.msra.mxu0 %v1758
  %1842 = vmatmul.bf16.gmra.mxu0 %v1621
  %v1843 = vpop.f32.mrf.mxu0
  %v1844 = vadd.f32 0.0, %v1843
  %v1845 = vpop.f32.mrf.mxu0
  %1846 = vdwg.mxu0
  %1847 = vmatpush.bf16.msra.mxu0 %v1787
  %1848 = vmatpush.bf16.msra.mxu0 %v1783
  %1849 = vmatpush.bf16.msra.mxu0 %v1779
  %1850 = vmatpush.bf16.msra.mxu0 %v1775
  %1851 = vmatpush.bf16.msra.mxu0 %v1771
  %1852 = vmatpush.bf16.msra.mxu0 %v1767
  %1853 = vmatpush.bf16.msra.mxu0 %v1763
  %1854 = vmatpush.bf16.msra.mxu0 %v1759
  %1855 = vmatmul.bf16.gmra.mxu0 %v1621
  %v1856 = vpop.f32.mrf.mxu0
  %v1857 = vadd.f32 0.0, %v1856
  %v1858 = vpop.f32.mrf.mxu0
  %1859 = vdwg.mxu0
  %1860 = vmatpush.bf16.msra.mxu0 %v1788
  %1861 = vmatpush.bf16.msra.mxu0 %v1784
  %1862 = vmatpush.bf16.msra.mxu0 %v1780
  %1863 = vmatpush.bf16.msra.mxu0 %v1776
  %1864 = vmatpush.bf16.msra.mxu0 %v1772
  %1865 = vmatpush.bf16.msra.mxu0 %v1768
  %1866 = vmatpush.bf16.msra.mxu0 %v1764
  %1867 = vmatpush.bf16.msra.mxu0 %v1760
  %1868 = vmatmul.bf16.gmra.mxu0 %v1621
  %v1869 = vpop.f32.mrf.mxu0
  %v1870 = vadd.f32 0.0, %v1869
  %v1871 = vpop.f32.mrf.mxu0
  %1872 = vdwg.mxu0
  %v1873 = vadd.f32 %v1625, %v1831
  %v1874 = vadd.f32 %v1626, %v1844
  %v1875 = vadd.f32 %v1627, %v1857
  %v1876 = vadd.f32 %v1628, %v1870
  %v1877 = vxor.u32 %v1873, 2147483648
  %v1878 = vxor.u32 %v1874, 2147483648
  %v1879 = vxor.u32 %v1875, 2147483648
  %v1880 = vmul.f32 %v1877, 1.442695
  %v1881 = vpow.pop %v1880
  %v1882 = vmul.f32 %v1878, 1.442695
  %v1883 = vpow.pop %v1882
  %v1884 = vmul.f32 %v1879, 1.442695
  %v1885 = vpow.pop %v1884
  %v1886 = vadd.f32 %v1881, 1.0
  %v1887 = vadd.f32 %v1883, 1.0
  %v1888 = vadd.f32 %v1885, 1.0
  %v1889 = vrcp.pop %v1886
  %v1890 = vmul.f32 %v1886, %v1889
  %v1891 = vsub.f32 1.0, %v1890
  %v1892 = vmul.f32 %v1889, %v1891
  %v1893 = vadd.f32 %v1889, %v1892
  %vm1894 = vweird.f32 %v1886
  %vm1895 = vweird.f32 %v1889
  %vm1896 = vmor %vm1894, %vm1895
  %v1897 = vsel %vm1896, %v1889, %v1893
  %v1898 = vand.u32 2147483647, %v1886
  %vm1899 = vcmp.eq.f32.partialorder %v1898, 8.507059e+37
  %v1900 = vand.u32 %v1886, 2147483648
  %v1901 = vor.u32 1.1754944e-38, %v1900
  %v1902 = vsel %vm1899, %v1901, %v1897
  %v1903 = vmul.f32 1.0, %v1902
  %v1904 = vrcp.pop %v1887
  %v1905 = vmul.f32 %v1887, %v1904
  %v1906 = vsub.f32 1.0, %v1905
  %v1907 = vmul.f32 %v1904, %v1906
  %v1908 = vadd.f32 %v1904, %v1907
  %vm1909 = vweird.f32 %v1887
  %vm1910 = vweird.f32 %v1904
  %vm1911 = vmor %vm1909, %vm1910
  %v1912 = vsel %vm1911, %v1904, %v1908
  %v1913 = vand.u32 2147483647, %v1887
  %vm1914 = vcmp.eq.f32.partialorder %v1913, 8.507059e+37
  %v1915 = vand.u32 %v1887, 2147483648
  %v1916 = vor.u32 1.1754944e-38, %v1915
  %v1917 = vsel %vm1914, %v1916, %v1912
  %v1918 = vmul.f32 1.0, %v1917
  %v1919 = vrcp.pop %v1888
  %v1920 = vmul.f32 %v1888, %v1919
  %v1921 = vsub.f32 1.0, %v1920
  %v1922 = vmul.f32 %v1919, %v1921
  %v1923 = vadd.f32 %v1919, %v1922
  %vm1924 = vweird.f32 %v1888
  %vm1925 = vweird.f32 %v1919
  %vm1926 = vmor %vm1924, %vm1925
  %v1927 = vsel %vm1926, %v1919, %v1923
  %v1928 = vand.u32 2147483647, %v1888
  %vm1929 = vcmp.eq.f32.partialorder %v1928, 8.507059e+37
  %v1930 = vand.u32 %v1888, 2147483648
  %v1931 = vor.u32 1.1754944e-38, %v1930
  %v1932 = vsel %vm1929, %v1931, %v1927
  %v1933 = vmul.f32 1.0, %v1932
  %v1934 = vtanh.pop %v1876
  %v1935 = vmul.f32 %v1918, %v1618
  %v1936 = vmul.f32 %v1903, %v1934
  %v1937 = vadd.f32 %v1935, %v1936
  %v1938 = vtanh.pop %v1937
  %v1939 = vmul.f32 %v1933, %v1938
  %v1940 = vpack.c.bf16 %v1939, %v1939
  %s1941 = scalar_lea.vmem %s4, 20
  %1942 = vst [vmem:[%s1941] sm:$0xf] %v1940
  %s1943 = scalar_lea.vmem %s0, 192
  %v1944 = vld [vmem:[%s1943] sm:$0xff]
  %v1945 = vld [vmem:[%s1943 + $0x8] sm:$0xff]
  %v1946 = vld [vmem:[%s1943 + $0x10] sm:$0xff]
  %v1947 = vld [vmem:[%s1943 + $0x18] sm:$0xff]
  %v1948 = vld [vmem:[%s3] sm:$0xff]
  %v1949 = vld [vmem:[%s3 + $0x8] sm:$0xff]
  %v1950 = vld [vmem:[%s3 + $0x10] sm:$0xff]
  %v1951 = vld [vmem:[%s3 + $0x18] sm:$0xff]
  %v1952 = vld [vmem:[%s3 + $0x20] sm:$0xff]
  %v1953 = vld [vmem:[%s3 + $0x28] sm:$0xff]
  %v1954 = vld [vmem:[%s3 + $0x30] sm:$0xff]
  %v1955 = vld [vmem:[%s3 + $0x38] sm:$0xff]
  %v1956 = vld [vmem:[%s3 + $0x40] sm:$0xff]
  %v1957 = vld [vmem:[%s3 + $0x48] sm:$0xff]
  %v1958 = vld [vmem:[%s3 + $0x50] sm:$0xff]
  %v1959 = vld [vmem:[%s3 + $0x58] sm:$0xff]
  %v1960 = vld [vmem:[%s3 + $0x60] sm:$0xff]
  %v1961 = vld [vmem:[%s3 + $0x68] sm:$0xff]
  %v1962 = vld [vmem:[%s3 + $0x70] sm:$0xff]
  %v1963 = vld [vmem:[%s3 + $0x78] sm:$0xff]
  %v1964 = vld [vmem:[%s3 + $0x80] sm:$0xff]
  %v1965 = vld [vmem:[%s3 + $0x88] sm:$0xff]
  %v1966 = vld [vmem:[%s3 + $0x90] sm:$0xff]
  %v1967 = vld [vmem:[%s3 + $0x98] sm:$0xff]
  %v1968 = vld [vmem:[%s3 + $0xa0] sm:$0xff]
  %v1969 = vld [vmem:[%s3 + $0xa8] sm:$0xff]
  %v1970 = vld [vmem:[%s3 + $0xb0] sm:$0xff]
  %v1971 = vld [vmem:[%s3 + $0xb8] sm:$0xff]
  %v1972 = vld [vmem:[%s3 + $0xc0] sm:$0xff]
  %v1973 = vld [vmem:[%s3 + $0xc8] sm:$0xff]
  %v1974 = vld [vmem:[%s3 + $0xd0] sm:$0xff]
  %v1975 = vld [vmem:[%s3 + $0xd8] sm:$0xff]
  %v1976 = vld [vmem:[%s3 + $0xe0] sm:$0xff]
  %v1977 = vld [vmem:[%s3 + $0xe8] sm:$0xff]
  %v1978 = vld [vmem:[%s3 + $0xf0] sm:$0xff]
  %v1979 = vld [vmem:[%s3 + $0xf8] sm:$0xff]
  %v2012 = vunpack.c.l.b16 %v1948
  %v2013 = vunpack.c.h.b16 %v1948
  %v2014 = vunpack.c.l.b16 %v1949
  %v2015 = vunpack.c.h.b16 %v1949
  %v2016 = vunpack.c.l.b16 %v1950
  %v2017 = vunpack.c.h.b16 %v1950
  %v2018 = vunpack.c.l.b16 %v1951
  %v2019 = vunpack.c.h.b16 %v1951
  %v2020 = vunpack.c.l.b16 %v1952
  %v2021 = vunpack.c.h.b16 %v1952
  %v2022 = vunpack.c.l.b16 %v1953
  %v2023 = vunpack.c.h.b16 %v1953
  %v2024 = vunpack.c.l.b16 %v1954
  %v2025 = vunpack.c.h.b16 %v1954
  %v2026 = vunpack.c.l.b16 %v1955
  %v2027 = vunpack.c.h.b16 %v1955
  %v2028 = vunpack.c.l.b16 %v1956
  %v2029 = vunpack.c.h.b16 %v1956
  %v2030 = vunpack.c.l.b16 %v1957
  %v2031 = vunpack.c.h.b16 %v1957
  %v2032 = vunpack.c.l.b16 %v1958
  %v2033 = vunpack.c.h.b16 %v1958
  %v2034 = vunpack.c.l.b16 %v1959
  %v2035 = vunpack.c.h.b16 %v1959
  %v2036 = vunpack.c.l.b16 %v1960
  %v2037 = vunpack.c.h.b16 %v1960
  %v2038 = vunpack.c.l.b16 %v1961
  %v2039 = vunpack.c.h.b16 %v1961
  %v2040 = vunpack.c.l.b16 %v1962
  %v2041 = vunpack.c.h.b16 %v1962
  %v2042 = vunpack.c.l.b16 %v1963
  %v2043 = vunpack.c.h.b16 %v1963
  %v2044 = vunpack.c.l.b16 %v1964
  %v2045 = vunpack.c.h.b16 %v1964
  %v2046 = vunpack.c.l.b16 %v1965
  %v2047 = vunpack.c.h.b16 %v1965
  %v2048 = vunpack.c.l.b16 %v1966
  %v2049 = vunpack.c.h.b16 %v1966
  %v2050 = vunpack.c.l.b16 %v1967
  %v2051 = vunpack.c.h.b16 %v1967
  %v2052 = vunpack.c.l.b16 %v1968
  %v2053 = vunpack.c.h.b16 %v1968
  %v2054 = vunpack.c.l.b16 %v1969
  %v2055 = vunpack.c.h.b16 %v1969
  %v2056 = vunpack.c.l.b16 %v1970
  %v2057 = vunpack.c.h.b16 %v1970
  %v2058 = vunpack.c.l.b16 %v1971
  %v2059 = vunpack.c.h.b16 %v1971
  %v2060 = vunpack.c.l.b16 %v1972
  %v2061 = vunpack.c.h.b16 %v1972
  %v2062 = vunpack.c.l.b16 %v1973
  %v2063 = vunpack.c.h.b16 %v1973
  %v2064 = vunpack.c.l.b16 %v1974
  %v2065 = vunpack.c.h.b16 %v1974
  %v2066 = vunpack.c.l.b16 %v1975
  %v2067 = vunpack.c.h.b16 %v1975
  %v2068 = vunpack.c.l.b16 %v1976
  %v2069 = vunpack.c.h.b16 %v1976
  %v2070 = vunpack.c.l.b16 %v1977
  %v2071 = vunpack.c.h.b16 %v1977
  %v2072 = vunpack.c.l.b16 %v1978
  %v2073 = vunpack.c.h.b16 %v1978
  %v2074 = vunpack.c.l.b16 %v1979
  %v2075 = vunpack.c.h.b16 %v1979
  %v2076 = vpack.c.b16 %v2016, %v2012
  %v2077 = vpack.c.b16 %v2017, %v2013
  %v2078 = vpack.c.b16 %v2018, %v2014
  %v2079 = vpack.c.b16 %v2019, %v2015
  %v2080 = vpack.c.b16 %v2024, %v2020
  %v2081 = vpack.c.b16 %v2025, %v2021
  %v2082 = vpack.c.b16 %v2026, %v2022
  %v2083 = vpack.c.b16 %v2027, %v2023
  %v2084 = vpack.c.b16 %v2032, %v2028
  %v2085 = vpack.c.b16 %v2033, %v2029
  %v2086 = vpack.c.b16 %v2034, %v2030
  %v2087 = vpack.c.b16 %v2035, %v2031
  %v2088 = vpack.c.b16 %v2040, %v2036
  %v2089 = vpack.c.b16 %v2041, %v2037
  %v2090 = vpack.c.b16 %v2042, %v2038
  %v2091 = vpack.c.b16 %v2043, %v2039
  %v2092 = vpack.c.b16 %v2048, %v2044
  %v2093 = vpack.c.b16 %v2049, %v2045
  %v2094 = vpack.c.b16 %v2050, %v2046
  %v2095 = vpack.c.b16 %v2051, %v2047
  %v2096 = vpack.c.b16 %v2056, %v2052
  %v2097 = vpack.c.b16 %v2057, %v2053
  %v2098 = vpack.c.b16 %v2058, %v2054
  %v2099 = vpack.c.b16 %v2059, %v2055
  %v2100 = vpack.c.b16 %v2064, %v2060
  %v2101 = vpack.c.b16 %v2065, %v2061
  %v2102 = vpack.c.b16 %v2066, %v2062
  %v2103 = vpack.c.b16 %v2067, %v2063
  %v2104 = vpack.c.b16 %v2072, %v2068
  %v2105 = vpack.c.b16 %v2073, %v2069
  %v2106 = vpack.c.b16 %v2074, %v2070
  %v2107 = vpack.c.b16 %v2075, %v2071
  %2140 = vmatpush.bf16.msra.mxu0 %v2104
  %2141 = vmatpush.bf16.msra.mxu0 %v2100
  %2142 = vmatpush.bf16.msra.mxu0 %v2096
  %2143 = vmatpush.bf16.msra.mxu0 %v2092
  %2144 = vmatpush.bf16.msra.mxu0 %v2088
  %2145 = vmatpush.bf16.msra.mxu0 %v2084
  %2146 = vmatpush.bf16.msra.mxu0 %v2080
  %2147 = vmatpush.bf16.msra.mxu0 %v2076
  %2148 = vmatmul.bf16.gmra.mxu0 %v1940
  %v2149 = vpop.f32.mrf.mxu0
  %v2150 = vadd.f32 0.0, %v2149
  %v2151 = vpop.f32.mrf.mxu0
  %2152 = vdwg.mxu0
  %2153 = vmatpush.bf16.msra.mxu0 %v2105
  %2154 = vmatpush.bf16.msra.mxu0 %v2101
  %2155 = vmatpush.bf16.msra.mxu0 %v2097
  %2156 = vmatpush.bf16.msra.mxu0 %v2093
  %2157 = vmatpush.bf16.msra.mxu0 %v2089
  %2158 = vmatpush.bf16.msra.mxu0 %v2085
  %2159 = vmatpush.bf16.msra.mxu0 %v2081
  %2160 = vmatpush.bf16.msra.mxu0 %v2077
  %2161 = vmatmul.bf16.gmra.mxu0 %v1940
  %v2162 = vpop.f32.mrf.mxu0
  %v2163 = vadd.f32 0.0, %v2162
  %v2164 = vpop.f32.mrf.mxu0
  %2165 = vdwg.mxu0
  %2166 = vmatpush.bf16.msra.mxu0 %v2106
  %2167 = vmatpush.bf16.msra.mxu0 %v2102
  %2168 = vmatpush.bf16.msra.mxu0 %v2098
  %2169 = vmatpush.bf16.msra.mxu0 %v2094
  %2170 = vmatpush.bf16.msra.mxu0 %v2090
  %2171 = vmatpush.bf16.msra.mxu0 %v2086
  %2172 = vmatpush.bf16.msra.mxu0 %v2082
  %2173 = vmatpush.bf16.msra.mxu0 %v2078
  %2174 = vmatmul.bf16.gmra.mxu0 %v1940
  %v2175 = vpop.f32.mrf.mxu0
  %v2176 = vadd.f32 0.0, %v2175
  %v2177 = vpop.f32.mrf.mxu0
  %2178 = vdwg.mxu0
  %2179 = vmatpush.bf16.msra.mxu0 %v2107
  %2180 = vmatpush.bf16.msra.mxu0 %v2103
  %2181 = vmatpush.bf16.msra.mxu0 %v2099
  %2182 = vmatpush.bf16.msra.mxu0 %v2095
  %2183 = vmatpush.bf16.msra.mxu0 %v2091
  %2184 = vmatpush.bf16.msra.mxu0 %v2087
  %2185 = vmatpush.bf16.msra.mxu0 %v2083
  %2186 = vmatpush.bf16.msra.mxu0 %v2079
  %2187 = vmatmul.bf16.gmra.mxu0 %v1940
  %v2188 = vpop.f32.mrf.mxu0
  %v2189 = vadd.f32 0.0, %v2188
  %v2190 = vpop.f32.mrf.mxu0
  %2191 = vdwg.mxu0
  %v2192 = vadd.f32 %v1944, %v2150
  %v2193 = vadd.f32 %v1945, %v2163
  %v2194 = vadd.f32 %v1946, %v2176
  %v2195 = vadd.f32 %v1947, %v2189
  %v2196 = vxor.u32 %v2192, 2147483648
  %v2197 = vxor.u32 %v2193, 2147483648
  %v2198 = vxor.u32 %v2194, 2147483648
  %v2199 = vmul.f32 %v2196, 1.442695
  %v2200 = vpow.pop %v2199
  %v2201 = vmul.f32 %v2197, 1.442695
  %v2202 = vpow.pop %v2201
  %v2203 = vmul.f32 %v2198, 1.442695
  %v2204 = vpow.pop %v2203
  %v2205 = vadd.f32 %v2200, 1.0
  %v2206 = vadd.f32 %v2202, 1.0
  %v2207 = vadd.f32 %v2204, 1.0
  %v2208 = vrcp.pop %v2205
  %v2209 = vmul.f32 %v2205, %v2208
  %v2210 = vsub.f32 1.0, %v2209
  %v2211 = vmul.f32 %v2208, %v2210
  %v2212 = vadd.f32 %v2208, %v2211
  %vm2213 = vweird.f32 %v2205
  %vm2214 = vweird.f32 %v2208
  %vm2215 = vmor %vm2213, %vm2214
  %v2216 = vsel %vm2215, %v2208, %v2212
  %v2217 = vand.u32 2147483647, %v2205
  %vm2218 = vcmp.eq.f32.partialorder %v2217, 8.507059e+37
  %v2219 = vand.u32 %v2205, 2147483648
  %v2220 = vor.u32 1.1754944e-38, %v2219
  %v2221 = vsel %vm2218, %v2220, %v2216
  %v2222 = vmul.f32 1.0, %v2221
  %v2223 = vrcp.pop %v2206
  %v2224 = vmul.f32 %v2206, %v2223
  %v2225 = vsub.f32 1.0, %v2224
  %v2226 = vmul.f32 %v2223, %v2225
  %v2227 = vadd.f32 %v2223, %v2226
  %vm2228 = vweird.f32 %v2206
  %vm2229 = vweird.f32 %v2223
  %vm2230 = vmor %vm2228, %vm2229
  %v2231 = vsel %vm2230, %v2223, %v2227
  %v2232 = vand.u32 2147483647, %v2206
  %vm2233 = vcmp.eq.f32.partialorder %v2232, 8.507059e+37
  %v2234 = vand.u32 %v2206, 2147483648
  %v2235 = vor.u32 1.1754944e-38, %v2234
  %v2236 = vsel %vm2233, %v2235, %v2231
  %v2237 = vmul.f32 1.0, %v2236
  %v2238 = vrcp.pop %v2207
  %v2239 = vmul.f32 %v2207, %v2238
  %v2240 = vsub.f32 1.0, %v2239
  %v2241 = vmul.f32 %v2238, %v2240
  %v2242 = vadd.f32 %v2238, %v2241
  %vm2243 = vweird.f32 %v2207
  %vm2244 = vweird.f32 %v2238
  %vm2245 = vmor %vm2243, %vm2244
  %v2246 = vsel %vm2245, %v2238, %v2242
  %v2247 = vand.u32 2147483647, %v2207
  %vm2248 = vcmp.eq.f32.partialorder %v2247, 8.507059e+37
  %v2249 = vand.u32 %v2207, 2147483648
  %v2250 = vor.u32 1.1754944e-38, %v2249
  %v2251 = vsel %vm2248, %v2250, %v2246
  %v2252 = vmul.f32 1.0, %v2251
  %v2253 = vtanh.pop %v2195
  %v2254 = vmul.f32 %v2237, %v1937
  %v2255 = vmul.f32 %v2222, %v2253
  %v2256 = vadd.f32 %v2254, %v2255
  %v2257 = vtanh.pop %v2256
  %v2258 = vmul.f32 %v2252, %v2257
  %v2259 = vpack.c.bf16 %v2258, %v2258
  %s2260 = scalar_lea.vmem %s4, 24
  %2261 = vst [vmem:[%s2260] sm:$0xf] %v2259
  %s2262 = scalar_lea.vmem %s0, 224
  %v2263 = vld [vmem:[%s2262] sm:$0xff]
  %v2264 = vld [vmem:[%s2262 + $0x8] sm:$0xff]
  %v2265 = vld [vmem:[%s2262 + $0x10] sm:$0xff]
  %v2266 = vld [vmem:[%s2262 + $0x18] sm:$0xff]
  %v2267 = vld [vmem:[%s3] sm:$0xff]
  %v2268 = vld [vmem:[%s3 + $0x8] sm:$0xff]
  %v2269 = vld [vmem:[%s3 + $0x10] sm:$0xff]
  %v2270 = vld [vmem:[%s3 + $0x18] sm:$0xff]
  %v2271 = vld [vmem:[%s3 + $0x20] sm:$0xff]
  %v2272 = vld [vmem:[%s3 + $0x28] sm:$0xff]
  %v2273 = vld [vmem:[%s3 + $0x30] sm:$0xff]
  %v2274 = vld [vmem:[%s3 + $0x38] sm:$0xff]
  %v2275 = vld [vmem:[%s3 + $0x40] sm:$0xff]
  %v2276 = vld [vmem:[%s3 + $0x48] sm:$0xff]
  %v2277 = vld [vmem:[%s3 + $0x50] sm:$0xff]
  %v2278 = vld [vmem:[%s3 + $0x58] sm:$0xff]
  %v2279 = vld [vmem:[%s3 + $0x60] sm:$0xff]
  %v2280 = vld [vmem:[%s3 + $0x68] sm:$0xff]
  %v2281 = vld [vmem:[%s3 + $0x70] sm:$0xff]
  %v2282 = vld [vmem:[%s3 + $0x78] sm:$0xff]
  %v2283 = vld [vmem:[%s3 + $0x80] sm:$0xff]
  %v2284 = vld [vmem:[%s3 + $0x88] sm:$0xff]
  %v2285 = vld [vmem:[%s3 + $0x90] sm:$0xff]
  %v2286 = vld [vmem:[%s3 + $0x98] sm:$0xff]
  %v2287 = vld [vmem:[%s3 + $0xa0] sm:$0xff]
  %v2288 = vld [vmem:[%s3 + $0xa8] sm:$0xff]
  %v2289 = vld [vmem:[%s3 + $0xb0] sm:$0xff]
  %v2290 = vld [vmem:[%s3 + $0xb8] sm:$0xff]
  %v2291 = vld [vmem:[%s3 + $0xc0] sm:$0xff]
  %v2292 = vld [vmem:[%s3 + $0xc8] sm:$0xff]
  %v2293 = vld [vmem:[%s3 + $0xd0] sm:$0xff]
  %v2294 = vld [vmem:[%s3 + $0xd8] sm:$0xff]
  %v2295 = vld [vmem:[%s3 + $0xe0] sm:$0xff]
  %v2296 = vld [vmem:[%s3 + $0xe8] sm:$0xff]
  %v2297 = vld [vmem:[%s3 + $0xf0] sm:$0xff]
  %v2298 = vld [vmem:[%s3 + $0xf8] sm:$0xff]
  %v2331 = vunpack.c.l.b16 %v2267
  %v2332 = vunpack.c.h.b16 %v2267
  %v2333 = vunpack.c.l.b16 %v2268
  %v2334 = vunpack.c.h.b16 %v2268
  %v2335 = vunpack.c.l.b16 %v2269
  %v2336 = vunpack.c.h.b16 %v2269
  %v2337 = vunpack.c.l.b16 %v2270
  %v2338 = vunpack.c.h.b16 %v2270
  %v2339 = vunpack.c.l.b16 %v2271
  %v2340 = vunpack.c.h.b16 %v2271
  %v2341 = vunpack.c.l.b16 %v2272
  %v2342 = vunpack.c.h.b16 %v2272
  %v2343 = vunpack.c.l.b16 %v2273
  %v2344 = vunpack.c.h.b16 %v2273
  %v2345 = vunpack.c.l.b16 %v2274
  %v2346 = vunpack.c.h.b16 %v2274
  %v2347 = vunpack.c.l.b16 %v2275
  %v2348 = vunpack.c.h.b16 %v2275
  %v2349 = vunpack.c.l.b16 %v2276
  %v2350 = vunpack.c.h.b16 %v2276
  %v2351 = vunpack.c.l.b16 %v2277
  %v2352 = vunpack.c.h.b16 %v2277
  %v2353 = vunpack.c.l.b16 %v2278
  %v2354 = vunpack.c.h.b16 %v2278
  %v2355 = vunpack.c.l.b16 %v2279
  %v2356 = vunpack.c.h.b16 %v2279
  %v2357 = vunpack.c.l.b16 %v2280
  %v2358 = vunpack.c.h.b16 %v2280
  %v2359 = vunpack.c.l.b16 %v2281
  %v2360 = vunpack.c.h.b16 %v2281
  %v2361 = vunpack.c.l.b16 %v2282
  %v2362 = vunpack.c.h.b16 %v2282
  %v2363 = vunpack.c.l.b16 %v2283
  %v2364 = vunpack.c.h.b16 %v2283
  %v2365 = vunpack.c.l.b16 %v2284
  %v2366 = vunpack.c.h.b16 %v2284
  %v2367 = vunpack.c.l.b16 %v2285
  %v2368 = vunpack.c.h.b16 %v2285
  %v2369 = vunpack.c.l.b16 %v2286
  %v2370 = vunpack.c.h.b16 %v2286
  %v2371 = vunpack.c.l.b16 %v2287
  %v2372 = vunpack.c.h.b16 %v2287
  %v2373 = vunpack.c.l.b16 %v2288
  %v2374 = vunpack.c.h.b16 %v2288
  %v2375 = vunpack.c.l.b16 %v2289
  %v2376 = vunpack.c.h.b16 %v2289
  %v2377 = vunpack.c.l.b16 %v2290
  %v2378 = vunpack.c.h.b16 %v2290
  %v2379 = vunpack.c.l.b16 %v2291
  %v2380 = vunpack.c.h.b16 %v2291
  %v2381 = vunpack.c.l.b16 %v2292
  %v2382 = vunpack.c.h.b16 %v2292
  %v2383 = vunpack.c.l.b16 %v2293
  %v2384 = vunpack.c.h.b16 %v2293
  %v2385 = vunpack.c.l.b16 %v2294
  %v2386 = vunpack.c.h.b16 %v2294
  %v2387 = vunpack.c.l.b16 %v2295
  %v2388 = vunpack.c.h.b16 %v2295
  %v2389 = vunpack.c.l.b16 %v2296
  %v2390 = vunpack.c.h.b16 %v2296
  %v2391 = vunpack.c.l.b16 %v2297
  %v2392 = vunpack.c.h.b16 %v2297
  %v2393 = vunpack.c.l.b16 %v2298
  %v2394 = vunpack.c.h.b16 %v2298
  %v2395 = vpack.c.b16 %v2335, %v2331
  %v2396 = vpack.c.b16 %v2336, %v2332
  %v2397 = vpack.c.b16 %v2337, %v2333
  %v2398 = vpack.c.b16 %v2338, %v2334
  %v2399 = vpack.c.b16 %v2343, %v2339
  %v2400 = vpack.c.b16 %v2344, %v2340
  %v2401 = vpack.c.b16 %v2345, %v2341
  %v2402 = vpack.c.b16 %v2346, %v2342
  %v2403 = vpack.c.b16 %v2351, %v2347
  %v2404 = vpack.c.b16 %v2352, %v2348
  %v2405 = vpack.c.b16 %v2353, %v2349
  %v2406 = vpack.c.b16 %v2354, %v2350
  %v2407 = vpack.c.b16 %v2359, %v2355
  %v2408 = vpack.c.b16 %v2360, %v2356
  %v2409 = vpack.c.b16 %v2361, %v2357
  %v2410 = vpack.c.b16 %v2362, %v2358
  %v2411 = vpack.c.b16 %v2367, %v2363
  %v2412 = vpack.c.b16 %v2368, %v2364
  %v2413 = vpack.c.b16 %v2369, %v2365
  %v2414 = vpack.c.b16 %v2370, %v2366
  %v2415 = vpack.c.b16 %v2375, %v2371
  %v2416 = vpack.c.b16 %v2376, %v2372
  %v2417 = vpack.c.b16 %v2377, %v2373
  %v2418 = vpack.c.b16 %v2378, %v2374
  %v2419 = vpack.c.b16 %v2383, %v2379
  %v2420 = vpack.c.b16 %v2384, %v2380
  %v2421 = vpack.c.b16 %v2385, %v2381
  %v2422 = vpack.c.b16 %v2386, %v2382
  %v2423 = vpack.c.b16 %v2391, %v2387
  %v2424 = vpack.c.b16 %v2392, %v2388
  %v2425 = vpack.c.b16 %v2393, %v2389
  %v2426 = vpack.c.b16 %v2394, %v2390
  %2459 = vmatpush.bf16.msra.mxu0 %v2423
  %2460 = vmatpush.bf16.msra.mxu0 %v2419
  %2461 = vmatpush.bf16.msra.mxu0 %v2415
  %2462 = vmatpush.bf16.msra.mxu0 %v2411
  %2463 = vmatpush.bf16.msra.mxu0 %v2407
  %2464 = vmatpush.bf16.msra.mxu0 %v2403
  %2465 = vmatpush.bf16.msra.mxu0 %v2399
  %2466 = vmatpush.bf16.msra.mxu0 %v2395
  %2467 = vmatmul.bf16.gmra.mxu0 %v2259
  %v2468 = vpop.f32.mrf.mxu0
  %v2469 = vadd.f32 0.0, %v2468
  %v2470 = vpop.f32.mrf.mxu0
  %2471 = vdwg.mxu0
  %2472 = vmatpush.bf16.msra.mxu0 %v2424
  %2473 = vmatpush.bf16.msra.mxu0 %v2420
  %2474 = vmatpush.bf16.msra.mxu0 %v2416
  %2475 = vmatpush.bf16.msra.mxu0 %v2412
  %2476 = vmatpush.bf16.msra.mxu0 %v2408
  %2477 = vmatpush.bf16.msra.mxu0 %v2404
  %2478 = vmatpush.bf16.msra.mxu0 %v2400
  %2479 = vmatpush.bf16.msra.mxu0 %v2396
  %2480 = vmatmul.bf16.gmra.mxu0 %v2259
  %v2481 = vpop.f32.mrf.mxu0
  %v2482 = vadd.f32 0.0, %v2481
  %v2483 = vpop.f32.mrf.mxu0
  %2484 = vdwg.mxu0
  %2485 = vmatpush.bf16.msra.mxu0 %v2425
  %2486 = vmatpush.bf16.msra.mxu0 %v2421
  %2487 = vmatpush.bf16.msra.mxu0 %v2417
  %2488 = vmatpush.bf16.msra.mxu0 %v2413
  %2489 = vmatpush.bf16.msra.mxu0 %v2409
  %2490 = vmatpush.bf16.msra.mxu0 %v2405
  %2491 = vmatpush.bf16.msra.mxu0 %v2401
  %2492 = vmatpush.bf16.msra.mxu0 %v2397
  %2493 = vmatmul.bf16.gmra.mxu0 %v2259
  %v2494 = vpop.f32.mrf.mxu0
  %v2495 = vadd.f32 0.0, %v2494
  %v2496 = vpop.f32.mrf.mxu0
  %2497 = vdwg.mxu0
  %2498 = vmatpush.bf16.msra.mxu0 %v2426
  %2499 = vmatpush.bf16.msra.mxu0 %v2422
  %2500 = vmatpush.bf16.msra.mxu0 %v2418
  %2501 = vmatpush.bf16.msra.mxu0 %v2414
  %2502 = vmatpush.bf16.msra.mxu0 %v2410
  %2503 = vmatpush.bf16.msra.mxu0 %v2406
  %2504 = vmatpush.bf16.msra.mxu0 %v2402
  %2505 = vmatpush.bf16.msra.mxu0 %v2398
  %2506 = vmatmul.bf16.gmra.mxu0 %v2259
  %v2507 = vpop.f32.mrf.mxu0
  %v2508 = vadd.f32 0.0, %v2507
  %v2509 = vpop.f32.mrf.mxu0
  %2510 = vdwg.mxu0
  %v2511 = vadd.f32 %v2263, %v2469
  %v2512 = vadd.f32 %v2264, %v2482
  %v2513 = vadd.f32 %v2265, %v2495
  %v2514 = vadd.f32 %v2266, %v2508
  %v2515 = vxor.u32 %v2511, 2147483648
  %v2516 = vxor.u32 %v2512, 2147483648
  %v2517 = vxor.u32 %v2513, 2147483648
  %v2518 = vmul.f32 %v2515, 1.442695
  %v2519 = vpow.pop %v2518
  %v2520 = vmul.f32 %v2516, 1.442695
  %v2521 = vpow.pop %v2520
  %v2522 = vmul.f32 %v2517, 1.442695
  %v2523 = vpow.pop %v2522
  %v2524 = vadd.f32 %v2519, 1.0
  %v2525 = vadd.f32 %v2521, 1.0
  %v2526 = vadd.f32 %v2523, 1.0
  %v2527 = vrcp.pop %v2524
  %v2528 = vmul.f32 %v2524, %v2527
  %v2529 = vsub.f32 1.0, %v2528
  %v2530 = vmul.f32 %v2527, %v2529
  %v2531 = vadd.f32 %v2527, %v2530
  %vm2532 = vweird.f32 %v2524
  %vm2533 = vweird.f32 %v2527
  %vm2534 = vmor %vm2532, %vm2533
  %v2535 = vsel %vm2534, %v2527, %v2531
  %v2536 = vand.u32 2147483647, %v2524
  %vm2537 = vcmp.eq.f32.partialorder %v2536, 8.507059e+37
  %v2538 = vand.u32 %v2524, 2147483648
  %v2539 = vor.u32 1.1754944e-38, %v2538
  %v2540 = vsel %vm2537, %v2539, %v2535
  %v2541 = vmul.f32 1.0, %v2540
  %v2542 = vrcp.pop %v2525
  %v2543 = vmul.f32 %v2525, %v2542
  %v2544 = vsub.f32 1.0, %v2543
  %v2545 = vmul.f32 %v2542, %v2544
  %v2546 = vadd.f32 %v2542, %v2545
  %vm2547 = vweird.f32 %v2525
  %vm2548 = vweird.f32 %v2542
  %vm2549 = vmor %vm2547, %vm2548
  %v2550 = vsel %vm2549, %v2542, %v2546
  %v2551 = vand.u32 2147483647, %v2525
  %vm2552 = vcmp.eq.f32.partialorder %v2551, 8.507059e+37
  %v2553 = vand.u32 %v2525, 2147483648
  %v2554 = vor.u32 1.1754944e-38, %v2553
  %v2555 = vsel %vm2552, %v2554, %v2550
  %v2556 = vmul.f32 1.0, %v2555
  %v2557 = vrcp.pop %v2526
  %v2558 = vmul.f32 %v2526, %v2557
  %v2559 = vsub.f32 1.0, %v2558
  %v2560 = vmul.f32 %v2557, %v2559
  %v2561 = vadd.f32 %v2557, %v2560
  %vm2562 = vweird.f32 %v2526
  %vm2563 = vweird.f32 %v2557
  %vm2564 = vmor %vm2562, %vm2563
  %v2565 = vsel %vm2564, %v2557, %v2561
  %v2566 = vand.u32 2147483647, %v2526
  %vm2567 = vcmp.eq.f32.partialorder %v2566, 8.507059e+37
  %v2568 = vand.u32 %v2526, 2147483648
  %v2569 = vor.u32 1.1754944e-38, %v2568
  %v2570 = vsel %vm2567, %v2569, %v2565
  %v2571 = vmul.f32 1.0, %v2570
  %v2572 = vtanh.pop %v2514
  %v2573 = vmul.f32 %v2556, %v2256
  %v2574 = vmul.f32 %v2541, %v2572
  %v2575 = vadd.f32 %v2573, %v2574
  %v2576 = vtanh.pop %v2575
  %v2577 = vmul.f32 %v2571, %v2576
  %v2578 = vpack.c.bf16 %v2577, %v2577
  %s2579 = scalar_lea.vmem %s4, 28
  %2580 = vst [vmem:[%s2579] sm:$0xf] %v2578
  %s2581 = scalar_lea.vmem %s0, 256
  %v2582 = vld [vmem:[%s2581] sm:$0xff]
  %v2583 = vld [vmem:[%s2581 + $0x8] sm:$0xff]
  %v2584 = vld [vmem:[%s2581 + $0x10] sm:$0xff]
  %v2585 = vld [vmem:[%s2581 + $0x18] sm:$0xff]
  %v2586 = vld [vmem:[%s3] sm:$0xff]
  %v2587 = vld [vmem:[%s3 + $0x8] sm:$0xff]
  %v2588 = vld [vmem:[%s3 + $0x10] sm:$0xff]
  %v2589 = vld [vmem:[%s3 + $0x18] sm:$0xff]
  %v2590 = vld [vmem:[%s3 + $0x20] sm:$0xff]
  %v2591 = vld [vmem:[%s3 + $0x28] sm:$0xff]
  %v2592 = vld [vmem:[%s3 + $0x30] sm:$0xff]
  %v2593 = vld [vmem:[%s3 + $0x38] sm:$0xff]
  %v2594 = vld [vmem:[%s3 + $0x40] sm:$0xff]
  %v2595 = vld [vmem:[%s3 + $0x48] sm:$0xff]
  %v2596 = vld [vmem:[%s3 + $0x50] sm:$0xff]
  %v2597 = vld [vmem:[%s3 + $0x58] sm:$0xff]
  %v2598 = vld [vmem:[%s3 + $0x60] sm:$0xff]
  %v2599 = vld [vmem:[%s3 + $0x68] sm:$0xff]
  %v2600 = vld [vmem:[%s3 + $0x70] sm:$0xff]
  %v2601 = vld [vmem:[%s3 + $0x78] sm:$0xff]
  %v2602 = vld [vmem:[%s3 + $0x80] sm:$0xff]
  %v2603 = vld [vmem:[%s3 + $0x88] sm:$0xff]
  %v2604 = vld [vmem:[%s3 + $0x90] sm:$0xff]
  %v2605 = vld [vmem:[%s3 + $0x98] sm:$0xff]
  %v2606 = vld [vmem:[%s3 + $0xa0] sm:$0xff]
  %v2607 = vld [vmem:[%s3 + $0xa8] sm:$0xff]
  %v2608 = vld [vmem:[%s3 + $0xb0] sm:$0xff]
  %v2609 = vld [vmem:[%s3 + $0xb8] sm:$0xff]
  %v2610 = vld [vmem:[%s3 + $0xc0] sm:$0xff]
  %v2611 = vld [vmem:[%s3 + $0xc8] sm:$0xff]
  %v2612 = vld [vmem:[%s3 + $0xd0] sm:$0xff]
  %v2613 = vld [vmem:[%s3 + $0xd8] sm:$0xff]
  %v2614 = vld [vmem:[%s3 + $0xe0] sm:$0xff]
  %v2615 = vld [vmem:[%s3 + $0xe8] sm:$0xff]
  %v2616 = vld [vmem:[%s3 + $0xf0] sm:$0xff]
  %v2617 = vld [vmem:[%s3 + $0xf8] sm:$0xff]
  %v2650 = vunpack.c.l.b16 %v2586
  %v2651 = vunpack.c.h.b16 %v2586
  %v2652 = vunpack.c.l.b16 %v2587
  %v2653 = vunpack.c.h.b16 %v2587
  %v2654 = vunpack.c.l.b16 %v2588
  %v2655 = vunpack.c.h.b16 %v2588
  %v2656 = vunpack.c.l.b16 %v2589
  %v2657 = vunpack.c.h.b16 %v2589
  %v2658 = vunpack.c.l.b16 %v2590
  %v2659 = vunpack.c.h.b16 %v2590
  %v2660 = vunpack.c.l.b16 %v2591
  %v2661 = vunpack.c.h.b16 %v2591
  %v2662 = vunpack.c.l.b16 %v2592
  %v2663 = vunpack.c.h.b16 %v2592
  %v2664 = vunpack.c.l.b16 %v2593
  %v2665 = vunpack.c.h.b16 %v2593
  %v2666 = vunpack.c.l.b16 %v2594
  %v2667 = vunpack.c.h.b16 %v2594
  %v2668 = vunpack.c.l.b16 %v2595
  %v2669 = vunpack.c.h.b16 %v2595
  %v2670 = vunpack.c.l.b16 %v2596
  %v2671 = vunpack.c.h.b16 %v2596
  %v2672 = vunpack.c.l.b16 %v2597
  %v2673 = vunpack.c.h.b16 %v2597
  %v2674 = vunpack.c.l.b16 %v2598
  %v2675 = vunpack.c.h.b16 %v2598
  %v2676 = vunpack.c.l.b16 %v2599
  %v2677 = vunpack.c.h.b16 %v2599
  %v2678 = vunpack.c.l.b16 %v2600
  %v2679 = vunpack.c.h.b16 %v2600
  %v2680 = vunpack.c.l.b16 %v2601
  %v2681 = vunpack.c.h.b16 %v2601
  %v2682 = vunpack.c.l.b16 %v2602
  %v2683 = vunpack.c.h.b16 %v2602
  %v2684 = vunpack.c.l.b16 %v2603
  %v2685 = vunpack.c.h.b16 %v2603
  %v2686 = vunpack.c.l.b16 %v2604
  %v2687 = vunpack.c.h.b16 %v2604
  %v2688 = vunpack.c.l.b16 %v2605
  %v2689 = vunpack.c.h.b16 %v2605
  %v2690 = vunpack.c.l.b16 %v2606
  %v2691 = vunpack.c.h.b16 %v2606
  %v2692 = vunpack.c.l.b16 %v2607
  %v2693 = vunpack.c.h.b16 %v2607
  %v2694 = vunpack.c.l.b16 %v2608
  %v2695 = vunpack.c.h.b16 %v2608
  %v2696 = vunpack.c.l.b16 %v2609
  %v2697 = vunpack.c.h.b16 %v2609
  %v2698 = vunpack.c.l.b16 %v2610
  %v2699 = vunpack.c.h.b16 %v2610
  %v2700 = vunpack.c.l.b16 %v2611
  %v2701 = vunpack.c.h.b16 %v2611
  %v2702 = vunpack.c.l.b16 %v2612
  %v2703 = vunpack.c.h.b16 %v2612
  %v2704 = vunpack.c.l.b16 %v2613
  %v2705 = vunpack.c.h.b16 %v2613
  %v2706 = vunpack.c.l.b16 %v2614
  %v2707 = vunpack.c.h.b16 %v2614
  %v2708 = vunpack.c.l.b16 %v2615
  %v2709 = vunpack.c.h.b16 %v2615
  %v2710 = vunpack.c.l.b16 %v2616
  %v2711 = vunpack.c.h.b16 %v2616
  %v2712 = vunpack.c.l.b16 %v2617
  %v2713 = vunpack.c.h.b16 %v2617
  %v2714 = vpack.c.b16 %v2654, %v2650
  %v2715 = vpack.c.b16 %v2655, %v2651
  %v2716 = vpack.c.b16 %v2656, %v2652
  %v2717 = vpack.c.b16 %v2657, %v2653
  %v2718 = vpack.c.b16 %v2662, %v2658
  %v2719 = vpack.c.b16 %v2663, %v2659
  %v2720 = vpack.c.b16 %v2664, %v2660
  %v2721 = vpack.c.b16 %v2665, %v2661
  %v2722 = vpack.c.b16 %v2670, %v2666
  %v2723 = vpack.c.b16 %v2671, %v2667
  %v2724 = vpack.c.b16 %v2672, %v2668
  %v2725 = vpack.c.b16 %v2673, %v2669
  %v2726 = vpack.c.b16 %v2678, %v2674
  %v2727 = vpack.c.b16 %v2679, %v2675
  %v2728 = vpack.c.b16 %v2680, %v2676
  %v2729 = vpack.c.b16 %v2681, %v2677
  %v2730 = vpack.c.b16 %v2686, %v2682
  %v2731 = vpack.c.b16 %v2687, %v2683
  %v2732 = vpack.c.b16 %v2688, %v2684
  %v2733 = vpack.c.b16 %v2689, %v2685
  %v2734 = vpack.c.b16 %v2694, %v2690
  %v2735 = vpack.c.b16 %v2695, %v2691
  %v2736 = vpack.c.b16 %v2696, %v2692
  %v2737 = vpack.c.b16 %v2697, %v2693
  %v2738 = vpack.c.b16 %v2702, %v2698
  %v2739 = vpack.c.b16 %v2703, %v2699
  %v2740 = vpack.c.b16 %v2704, %v2700
  %v2741 = vpack.c.b16 %v2705, %v2701
  %v2742 = vpack.c.b16 %v2710, %v2706
  %v2743 = vpack.c.b16 %v2711, %v2707
  %v2744 = vpack.c.b16 %v2712, %v2708
  %v2745 = vpack.c.b16 %v2713, %v2709
  %2778 = vmatpush.bf16.msra.mxu0 %v2742
  %2779 = vmatpush.bf16.msra.mxu0 %v2738
  %2780 = vmatpush.bf16.msra.mxu0 %v2734
  %2781 = vmatpush.bf16.msra.mxu0 %v2730
  %2782 = vmatpush.bf16.msra.mxu0 %v2726
  %2783 = vmatpush.bf16.msra.mxu0 %v2722
  %2784 = vmatpush.bf16.msra.mxu0 %v2718
  %2785 = vmatpush.bf16.msra.mxu0 %v2714
  %2786 = vmatmul.bf16.gmra.mxu0 %v2578
  %v2787 = vpop.f32.mrf.mxu0
  %v2788 = vadd.f32 0.0, %v2787
  %v2789 = vpop.f32.mrf.mxu0
  %2790 = vdwg.mxu0
  %2791 = vmatpush.bf16.msra.mxu0 %v2743
  %2792 = vmatpush.bf16.msra.mxu0 %v2739
  %2793 = vmatpush.bf16.msra.mxu0 %v2735
  %2794 = vmatpush.bf16.msra.mxu0 %v2731
  %2795 = vmatpush.bf16.msra.mxu0 %v2727
  %2796 = vmatpush.bf16.msra.mxu0 %v2723
  %2797 = vmatpush.bf16.msra.mxu0 %v2719
  %2798 = vmatpush.bf16.msra.mxu0 %v2715
  %2799 = vmatmul.bf16.gmra.mxu0 %v2578
  %v2800 = vpop.f32.mrf.mxu0
  %v2801 = vadd.f32 0.0, %v2800
  %v2802 = vpop.f32.mrf.mxu0
  %2803 = vdwg.mxu0
  %2804 = vmatpush.bf16.msra.mxu0 %v2744
  %2805 = vmatpush.bf16.msra.mxu0 %v2740
  %2806 = vmatpush.bf16.msra.mxu0 %v2736
  %2807 = vmatpush.bf16.msra.mxu0 %v2732
  %2808 = vmatpush.bf16.msra.mxu0 %v2728
  %2809 = vmatpush.bf16.msra.mxu0 %v2724
  %2810 = vmatpush.bf16.msra.mxu0 %v2720
  %2811 = vmatpush.bf16.msra.mxu0 %v2716
  %2812 = vmatmul.bf16.gmra.mxu0 %v2578
  %v2813 = vpop.f32.mrf.mxu0
  %v2814 = vadd.f32 0.0, %v2813
  %v2815 = vpop.f32.mrf.mxu0
  %2816 = vdwg.mxu0
  %2817 = vmatpush.bf16.msra.mxu0 %v2745
  %2818 = vmatpush.bf16.msra.mxu0 %v2741
  %2819 = vmatpush.bf16.msra.mxu0 %v2737
  %2820 = vmatpush.bf16.msra.mxu0 %v2733
  %2821 = vmatpush.bf16.msra.mxu0 %v2729
  %2822 = vmatpush.bf16.msra.mxu0 %v2725
  %2823 = vmatpush.bf16.msra.mxu0 %v2721
  %2824 = vmatpush.bf16.msra.mxu0 %v2717
  %2825 = vmatmul.bf16.gmra.mxu0 %v2578
  %v2826 = vpop.f32.mrf.mxu0
  %v2827 = vadd.f32 0.0, %v2826
  %v2828 = vpop.f32.mrf.mxu0
  %2829 = vdwg.mxu0
  %v2830 = vadd.f32 %v2582, %v2788
  %v2831 = vadd.f32 %v2583, %v2801
  %v2832 = vadd.f32 %v2584, %v2814
  %v2833 = vadd.f32 %v2585, %v2827
  %v2834 = vxor.u32 %v2830, 2147483648
  %v2835 = vxor.u32 %v2831, 2147483648
  %v2836 = vxor.u32 %v2832, 2147483648
  %v2837 = vmul.f32 %v2834, 1.442695
  %v2838 = vpow.pop %v2837
  %v2839 = vmul.f32 %v2835, 1.442695
  %v2840 = vpow.pop %v2839
  %v2841 = vmul.f32 %v2836, 1.442695
  %v2842 = vpow.pop %v2841
  %v2843 = vadd.f32 %v2838, 1.0
  %v2844 = vadd.f32 %v2840, 1.0
  %v2845 = vadd.f32 %v2842, 1.0
  %v2846 = vrcp.pop %v2843
  %v2847 = vmul.f32 %v2843, %v2846
  %v2848 = vsub.f32 1.0, %v2847
  %v2849 = vmul.f32 %v2846, %v2848
  %v2850 = vadd.f32 %v2846, %v2849
  %vm2851 = vweird.f32 %v2843
  %vm2852 = vweird.f32 %v2846
  %vm2853 = vmor %vm2851, %vm2852
  %v2854 = vsel %vm2853, %v2846, %v2850
  %v2855 = vand.u32 2147483647, %v2843
  %vm2856 = vcmp.eq.f32.partialorder %v2855, 8.507059e+37
  %v2857 = vand.u32 %v2843, 2147483648
  %v2858 = vor.u32 1.1754944e-38, %v2857
  %v2859 = vsel %vm2856, %v2858, %v2854
  %v2860 = vmul.f32 1.0, %v2859
  %v2861 = vrcp.pop %v2844
  %v2862 = vmul.f32 %v2844, %v2861
  %v2863 = vsub.f32 1.0, %v2862
  %v2864 = vmul.f32 %v2861, %v2863
  %v2865 = vadd.f32 %v2861, %v2864
  %vm2866 = vweird.f32 %v2844
  %vm2867 = vweird.f32 %v2861
  %vm2868 = vmor %vm2866, %vm2867
  %v2869 = vsel %vm2868, %v2861, %v2865
  %v2870 = vand.u32 2147483647, %v2844
  %vm2871 = vcmp.eq.f32.partialorder %v2870, 8.507059e+37
  %v2872 = vand.u32 %v2844, 2147483648
  %v2873 = vor.u32 1.1754944e-38, %v2872
  %v2874 = vsel %vm2871, %v2873, %v2869
  %v2875 = vmul.f32 1.0, %v2874
  %v2876 = vrcp.pop %v2845
  %v2877 = vmul.f32 %v2845, %v2876
  %v2878 = vsub.f32 1.0, %v2877
  %v2879 = vmul.f32 %v2876, %v2878
  %v2880 = vadd.f32 %v2876, %v2879
  %vm2881 = vweird.f32 %v2845
  %vm2882 = vweird.f32 %v2876
  %vm2883 = vmor %vm2881, %vm2882
  %v2884 = vsel %vm2883, %v2876, %v2880
  %v2885 = vand.u32 2147483647, %v2845
  %vm2886 = vcmp.eq.f32.partialorder %v2885, 8.507059e+37
  %v2887 = vand.u32 %v2845, 2147483648
  %v2888 = vor.u32 1.1754944e-38, %v2887
  %v2889 = vsel %vm2886, %v2888, %v2884
  %v2890 = vmul.f32 1.0, %v2889
  %v2891 = vtanh.pop %v2833
  %v2892 = vmul.f32 %v2875, %v2575
  %v2893 = vmul.f32 %v2860, %v2891
  %v2894 = vadd.f32 %v2892, %v2893
  %v2895 = vtanh.pop %v2894
  %v2896 = vmul.f32 %v2890, %v2895
  %v2897 = vpack.c.bf16 %v2896, %v2896
  %s2898 = scalar_lea.vmem %s4, 32
  %2899 = vst [vmem:[%s2898] sm:$0xf] %v2897
  %s2900 = scalar_lea.vmem %s0, 288
  %v2901 = vld [vmem:[%s2900] sm:$0xff]
  %v2902 = vld [vmem:[%s2900 + $0x8] sm:$0xff]
  %v2903 = vld [vmem:[%s2900 + $0x10] sm:$0xff]
  %v2904 = vld [vmem:[%s2900 + $0x18] sm:$0xff]
  %v2905 = vld [vmem:[%s3] sm:$0xff]
  %v2906 = vld [vmem:[%s3 + $0x8] sm:$0xff]
  %v2907 = vld [vmem:[%s3 + $0x10] sm:$0xff]
  %v2908 = vld [vmem:[%s3 + $0x18] sm:$0xff]
  %v2909 = vld [vmem:[%s3 + $0x20] sm:$0xff]
  %v2910 = vld [vmem:[%s3 + $0x28] sm:$0xff]
  %v2911 = vld [vmem:[%s3 + $0x30] sm:$0xff]
  %v2912 = vld [vmem:[%s3 + $0x38] sm:$0xff]
  %v2913 = vld [vmem:[%s3 + $0x40] sm:$0xff]
  %v2914 = vld [vmem:[%s3 + $0x48] sm:$0xff]
  %v2915 = vld [vmem:[%s3 + $0x50] sm:$0xff]
  %v2916 = vld [vmem:[%s3 + $0x58] sm:$0xff]
  %v2917 = vld [vmem:[%s3 + $0x60] sm:$0xff]
  %v2918 = vld [vmem:[%s3 + $0x68] sm:$0xff]
  %v2919 = vld [vmem:[%s3 + $0x70] sm:$0xff]
  %v2920 = vld [vmem:[%s3 + $0x78] sm:$0xff]
  %v2921 = vld [vmem:[%s3 + $0x80] sm:$0xff]
  %v2922 = vld [vmem:[%s3 + $0x88] sm:$0xff]
  %v2923 = vld [vmem:[%s3 + $0x90] sm:$0xff]
  %v2924 = vld [vmem:[%s3 + $0x98] sm:$0xff]
  %v2925 = vld [vmem:[%s3 + $0xa0] sm:$0xff]
  %v2926 = vld [vmem:[%s3 + $0xa8] sm:$0xff]
  %v2927 = vld [vmem:[%s3 + $0xb0] sm:$0xff]
  %v2928 = vld [vmem:[%s3 + $0xb8] sm:$0xff]
  %v2929 = vld [vmem:[%s3 + $0xc0] sm:$0xff]
  %v2930 = vld [vmem:[%s3 + $0xc8] sm:$0xff]
  %v2931 = vld [vmem:[%s3 + $0xd0] sm:$0xff]
  %v2932 = vld [vmem:[%s3 + $0xd8] sm:$0xff]
  %v2933 = vld [vmem:[%s3 + $0xe0] sm:$0xff]
  %v2934 = vld [vmem:[%s3 + $0xe8] sm:$0xff]
  %v2935 = vld [vmem:[%s3 + $0xf0] sm:$0xff]
  %v2936 = vld [vmem:[%s3 + $0xf8] sm:$0xff]
  %v2969 = vunpack.c.l.b16 %v2905
  %v2970 = vunpack.c.h.b16 %v2905
  %v2971 = vunpack.c.l.b16 %v2906
  %v2972 = vunpack.c.h.b16 %v2906
  %v2973 = vunpack.c.l.b16 %v2907
  %v2974 = vunpack.c.h.b16 %v2907
  %v2975 = vunpack.c.l.b16 %v2908
  %v2976 = vunpack.c.h.b16 %v2908
  %v2977 = vunpack.c.l.b16 %v2909
  %v2978 = vunpack.c.h.b16 %v2909
  %v2979 = vunpack.c.l.b16 %v2910
  %v2980 = vunpack.c.h.b16 %v2910
  %v2981 = vunpack.c.l.b16 %v2911
  %v2982 = vunpack.c.h.b16 %v2911
  %v2983 = vunpack.c.l.b16 %v2912
  %v2984 = vunpack.c.h.b16 %v2912
  %v2985 = vunpack.c.l.b16 %v2913
  %v2986 = vunpack.c.h.b16 %v2913
  %v2987 = vunpack.c.l.b16 %v2914
  %v2988 = vunpack.c.h.b16 %v2914
  %v2989 = vunpack.c.l.b16 %v2915
  %v2990 = vunpack.c.h.b16 %v2915
  %v2991 = vunpack.c.l.b16 %v2916
  %v2992 = vunpack.c.h.b16 %v2916
  %v2993 = vunpack.c.l.b16 %v2917
  %v2994 = vunpack.c.h.b16 %v2917
  %v2995 = vunpack.c.l.b16 %v2918
  %v2996 = vunpack.c.h.b16 %v2918
  %v2997 = vunpack.c.l.b16 %v2919
  %v2998 = vunpack.c.h.b16 %v2919
  %v2999 = vunpack.c.l.b16 %v2920
  %v3000 = vunpack.c.h.b16 %v2920
  %v3001 = vunpack.c.l.b16 %v2921
  %v3002 = vunpack.c.h.b16 %v2921
  %v3003 = vunpack.c.l.b16 %v2922
  %v3004 = vunpack.c.h.b16 %v2922
  %v3005 = vunpack.c.l.b16 %v2923
  %v3006 = vunpack.c.h.b16 %v2923
  %v3007 = vunpack.c.l.b16 %v2924
  %v3008 = vunpack.c.h.b16 %v2924
  %v3009 = vunpack.c.l.b16 %v2925
  %v3010 = vunpack.c.h.b16 %v2925
  %v3011 = vunpack.c.l.b16 %v2926
  %v3012 = vunpack.c.h.b16 %v2926
  %v3013 = vunpack.c.l.b16 %v2927
  %v3014 = vunpack.c.h.b16 %v2927
  %v3015 = vunpack.c.l.b16 %v2928
  %v3016 = vunpack.c.h.b16 %v2928
  %v3017 = vunpack.c.l.b16 %v2929
  %v3018 = vunpack.c.h.b16 %v2929
  %v3019 = vunpack.c.l.b16 %v2930
  %v3020 = vunpack.c.h.b16 %v2930
  %v3021 = vunpack.c.l.b16 %v2931
  %v3022 = vunpack.c.h.b16 %v2931
  %v3023 = vunpack.c.l.b16 %v2932
  %v3024 = vunpack.c.h.b16 %v2932
  %v3025 = vunpack.c.l.b16 %v2933
  %v3026 = vunpack.c.h.b16 %v2933
  %v3027 = vunpack.c.l.b16 %v2934
  %v3028 = vunpack.c.h.b16 %v2934
  %v3029 = vunpack.c.l.b16 %v2935
  %v3030 = vunpack.c.h.b16 %v2935
  %v3031 = vunpack.c.l.b16 %v2936
  %v3032 = vunpack.c.h.b16 %v2936
  %v3033 = vpack.c.b16 %v2973, %v2969
  %v3034 = vpack.c.b16 %v2974, %v2970
  %v3035 = vpack.c.b16 %v2975, %v2971
  %v3036 = vpack.c.b16 %v2976, %v2972
  %v3037 = vpack.c.b16 %v2981, %v2977
  %v3038 = vpack.c.b16 %v2982, %v2978
  %v3039 = vpack.c.b16 %v2983, %v2979
  %v3040 = vpack.c.b16 %v2984, %v2980
  %v3041 = vpack.c.b16 %v2989, %v2985
  %v3042 = vpack.c.b16 %v2990, %v2986
  %v3043 = vpack.c.b16 %v2991, %v2987
  %v3044 = vpack.c.b16 %v2992, %v2988
  %v3045 = vpack.c.b16 %v2997, %v2993
  %v3046 = vpack.c.b16 %v2998, %v2994
  %v3047 = vpack.c.b16 %v2999, %v2995
  %v3048 = vpack.c.b16 %v3000, %v2996
  %v3049 = vpack.c.b16 %v3005, %v3001
  %v3050 = vpack.c.b16 %v3006, %v3002
  %v3051 = vpack.c.b16 %v3007, %v3003
  %v3052 = vpack.c.b16 %v3008, %v3004
  %v3053 = vpack.c.b16 %v3013, %v3009
  %v3054 = vpack.c.b16 %v3014, %v3010
  %v3055 = vpack.c.b16 %v3015, %v3011
  %v3056 = vpack.c.b16 %v3016, %v3012
  %v3057 = vpack.c.b16 %v3021, %v3017
  %v3058 = vpack.c.b16 %v3022, %v3018
  %v3059 = vpack.c.b16 %v3023, %v3019
  %v3060 = vpack.c.b16 %v3024, %v3020
  %v3061 = vpack.c.b16 %v3029, %v3025
  %v3062 = vpack.c.b16 %v3030, %v3026
  %v3063 = vpack.c.b16 %v3031, %v3027
  %v3064 = vpack.c.b16 %v3032, %v3028
  %3097 = vmatpush.bf16.msra.mxu0 %v3061
  %3098 = vmatpush.bf16.msra.mxu0 %v3057
  %3099 = vmatpush.bf16.msra.mxu0 %v3053
  %3100 = vmatpush.bf16.msra.mxu0 %v3049
  %3101 = vmatpush.bf16.msra.mxu0 %v3045
  %3102 = vmatpush.bf16.msra.mxu0 %v3041
  %3103 = vmatpush.bf16.msra.mxu0 %v3037
  %3104 = vmatpush.bf16.msra.mxu0 %v3033
  %3105 = vmatmul.bf16.gmra.mxu0 %v2897
  %v3106 = vpop.f32.mrf.mxu0
  %v3107 = vadd.f32 0.0, %v3106
  %v3108 = vpop.f32.mrf.mxu0
  %3109 = vdwg.mxu0
  %3110 = vmatpush.bf16.msra.mxu0 %v3062
  %3111 = vmatpush.bf16.msra.mxu0 %v3058
  %3112 = vmatpush.bf16.msra.mxu0 %v3054
  %3113 = vmatpush.bf16.msra.mxu0 %v3050
  %3114 = vmatpush.bf16.msra.mxu0 %v3046
  %3115 = vmatpush.bf16.msra.mxu0 %v3042
  %3116 = vmatpush.bf16.msra.mxu0 %v3038
  %3117 = vmatpush.bf16.msra.mxu0 %v3034
  %3118 = vmatmul.bf16.gmra.mxu0 %v2897
  %v3119 = vpop.f32.mrf.mxu0
  %v3120 = vadd.f32 0.0, %v3119
  %v3121 = vpop.f32.mrf.mxu0
  %3122 = vdwg.mxu0
  %3123 = vmatpush.bf16.msra.mxu0 %v3063
  %3124 = vmatpush.bf16.msra.mxu0 %v3059
  %3125 = vmatpush.bf16.msra.mxu0 %v3055
  %3126 = vmatpush.bf16.msra.mxu0 %v3051
  %3127 = vmatpush.bf16.msra.mxu0 %v3047
  %3128 = vmatpush.bf16.msra.mxu0 %v3043
  %3129 = vmatpush.bf16.msra.mxu0 %v3039
  %3130 = vmatpush.bf16.msra.mxu0 %v3035
  %3131 = vmatmul.bf16.gmra.mxu0 %v2897
  %v3132 = vpop.f32.mrf.mxu0
  %v3133 = vadd.f32 0.0, %v3132
  %v3134 = vpop.f32.mrf.mxu0
  %3135 = vdwg.mxu0
  %3136 = vmatpush.bf16.msra.mxu0 %v3064
  %3137 = vmatpush.bf16.msra.mxu0 %v3060
  %3138 = vmatpush.bf16.msra.mxu0 %v3056
  %3139 = vmatpush.bf16.msra.mxu0 %v3052
  %3140 = vmatpush.bf16.msra.mxu0 %v3048
  %3141 = vmatpush.bf16.msra.mxu0 %v3044
  %3142 = vmatpush.bf16.msra.mxu0 %v3040
  %3143 = vmatpush.bf16.msra.mxu0 %v3036
  %3144 = vmatmul.bf16.gmra.mxu0 %v2897
  %v3145 = vpop.f32.mrf.mxu0
  %v3146 = vadd.f32 0.0, %v3145
  %v3147 = vpop.f32.mrf.mxu0
  %3148 = vdwg.mxu0
  %v3149 = vadd.f32 %v2901, %v3107
  %v3150 = vadd.f32 %v2902, %v3120
  %v3151 = vadd.f32 %v2903, %v3133
  %v3152 = vadd.f32 %v2904, %v3146
  %v3153 = vxor.u32 %v3149, 2147483648
  %v3154 = vxor.u32 %v3150, 2147483648
  %v3155 = vxor.u32 %v3151, 2147483648
  %v3156 = vmul.f32 %v3153, 1.442695
  %v3157 = vpow.pop %v3156
  %v3158 = vmul.f32 %v3154, 1.442695
  %v3159 = vpow.pop %v3158
  %v3160 = vmul.f32 %v3155, 1.442695
  %v3161 = vpow.pop %v3160
  %v3162 = vadd.f32 %v3157, 1.0
  %v3163 = vadd.f32 %v3159, 1.0
  %v3164 = vadd.f32 %v3161, 1.0
  %v3165 = vrcp.pop %v3162
  %v3166 = vmul.f32 %v3162, %v3165
  %v3167 = vsub.f32 1.0, %v3166
  %v3168 = vmul.f32 %v3165, %v3167
  %v3169 = vadd.f32 %v3165, %v3168
  %vm3170 = vweird.f32 %v3162
  %vm3171 = vweird.f32 %v3165
  %vm3172 = vmor %vm3170, %vm3171
  %v3173 = vsel %vm3172, %v3165, %v3169
  %v3174 = vand.u32 2147483647, %v3162
  %vm3175 = vcmp.eq.f32.partialorder %v3174, 8.507059e+37
  %v3176 = vand.u32 %v3162, 2147483648
  %v3177 = vor.u32 1.1754944e-38, %v3176
  %v3178 = vsel %vm3175, %v3177, %v3173
  %v3179 = vmul.f32 1.0, %v3178
  %v3180 = vrcp.pop %v3163
  %v3181 = vmul.f32 %v3163, %v3180
  %v3182 = vsub.f32 1.0, %v3181
  %v3183 = vmul.f32 %v3180, %v3182
  %v3184 = vadd.f32 %v3180, %v3183
  %vm3185 = vweird.f32 %v3163
  %vm3186 = vweird.f32 %v3180
  %vm3187 = vmor %vm3185, %vm3186
  %v3188 = vsel %vm3187, %v3180, %v3184
  %v3189 = vand.u32 2147483647, %v3163
  %vm3190 = vcmp.eq.f32.partialorder %v3189, 8.507059e+37
  %v3191 = vand.u32 %v3163, 2147483648
  %v3192 = vor.u32 1.1754944e-38, %v3191
  %v3193 = vsel %vm3190, %v3192, %v3188
  %v3194 = vmul.f32 1.0, %v3193
  %v3195 = vrcp.pop %v3164
  %v3196 = vmul.f32 %v3164, %v3195
  %v3197 = vsub.f32 1.0, %v3196
  %v3198 = vmul.f32 %v3195, %v3197
  %v3199 = vadd.f32 %v3195, %v3198
  %vm3200 = vweird.f32 %v3164
  %vm3201 = vweird.f32 %v3195
  %vm3202 = vmor %vm3200, %vm3201
  %v3203 = vsel %vm3202, %v3195, %v3199
  %v3204 = vand.u32 2147483647, %v3164
  %vm3205 = vcmp.eq.f32.partialorder %v3204, 8.507059e+37
  %v3206 = vand.u32 %v3164, 2147483648
  %v3207 = vor.u32 1.1754944e-38, %v3206
  %v3208 = vsel %vm3205, %v3207, %v3203
  %v3209 = vmul.f32 1.0, %v3208
  %v3210 = vtanh.pop %v3152
  %v3211 = vmul.f32 %v3194, %v2894
  %v3212 = vmul.f32 %v3179, %v3210
  %v3213 = vadd.f32 %v3211, %v3212
  %v3214 = vtanh.pop %v3213
  %v3215 = vmul.f32 %v3209, %v3214
  %v3216 = vpack.c.bf16 %v3215, %v3215
  %s3217 = scalar_lea.vmem %s4, 36
  %3218 = vst [vmem:[%s3217] sm:$0xf] %v3216
  %s3219 = scalar_lea.vmem %s0, 320
  %v3220 = vld [vmem:[%s3219] sm:$0xff]
  %v3221 = vld [vmem:[%s3219 + $0x8] sm:$0xff]
  %v3222 = vld [vmem:[%s3219 + $0x10] sm:$0xff]
  %v3223 = vld [vmem:[%s3219 + $0x18] sm:$0xff]
  %v3224 = vld [vmem:[%s3] sm:$0xff]
  %v3225 = vld [vmem:[%s3 + $0x8] sm:$0xff]
  %v3226 = vld [vmem:[%s3 + $0x10] sm:$0xff]
  %v3227 = vld [vmem:[%s3 + $0x18] sm:$0xff]
  %v3228 = vld [vmem:[%s3 + $0x20] sm:$0xff]
  %v3229 = vld [vmem:[%s3 + $0x28] sm:$0xff]
  %v3230 = vld [vmem:[%s3 + $0x30] sm:$0xff]
  %v3231 = vld [vmem:[%s3 + $0x38] sm:$0xff]
  %v3232 = vld [vmem:[%s3 + $0x40] sm:$0xff]
  %v3233 = vld [vmem:[%s3 + $0x48] sm:$0xff]
  %v3234 = vld [vmem:[%s3 + $0x50] sm:$0xff]
  %v3235 = vld [vmem:[%s3 + $0x58] sm:$0xff]
  %v3236 = vld [vmem:[%s3 + $0x60] sm:$0xff]
  %v3237 = vld [vmem:[%s3 + $0x68] sm:$0xff]
  %v3238 = vld [vmem:[%s3 + $0x70] sm:$0xff]
  %v3239 = vld [vmem:[%s3 + $0x78] sm:$0xff]
  %v3240 = vld [vmem:[%s3 + $0x80] sm:$0xff]
  %v3241 = vld [vmem:[%s3 + $0x88] sm:$0xff]
  %v3242 = vld [vmem:[%s3 + $0x90] sm:$0xff]
  %v3243 = vld [vmem:[%s3 + $0x98] sm:$0xff]
  %v3244 = vld [vmem:[%s3 + $0xa0] sm:$0xff]
  %v3245 = vld [vmem:[%s3 + $0xa8] sm:$0xff]
  %v3246 = vld [vmem:[%s3 + $0xb0] sm:$0xff]
  %v3247 = vld [vmem:[%s3 + $0xb8] sm:$0xff]
  %v3248 = vld [vmem:[%s3 + $0xc0] sm:$0xff]
  %v3249 = vld [vmem:[%s3 + $0xc8] sm:$0xff]
  %v3250 = vld [vmem:[%s3 + $0xd0] sm:$0xff]
  %v3251 = vld [vmem:[%s3 + $0xd8] sm:$0xff]
  %v3252 = vld [vmem:[%s3 + $0xe0] sm:$0xff]
  %v3253 = vld [vmem:[%s3 + $0xe8] sm:$0xff]
  %v3254 = vld [vmem:[%s3 + $0xf0] sm:$0xff]
  %v3255 = vld [vmem:[%s3 + $0xf8] sm:$0xff]
  %v3288 = vunpack.c.l.b16 %v3224
  %v3289 = vunpack.c.h.b16 %v3224
  %v3290 = vunpack.c.l.b16 %v3225
  %v3291 = vunpack.c.h.b16 %v3225
  %v3292 = vunpack.c.l.b16 %v3226
  %v3293 = vunpack.c.h.b16 %v3226
  %v3294 = vunpack.c.l.b16 %v3227
  %v3295 = vunpack.c.h.b16 %v3227
  %v3296 = vunpack.c.l.b16 %v3228
  %v3297 = vunpack.c.h.b16 %v3228
  %v3298 = vunpack.c.l.b16 %v3229
  %v3299 = vunpack.c.h.b16 %v3229
  %v3300 = vunpack.c.l.b16 %v3230
  %v3301 = vunpack.c.h.b16 %v3230
  %v3302 = vunpack.c.l.b16 %v3231
  %v3303 = vunpack.c.h.b16 %v3231
  %v3304 = vunpack.c.l.b16 %v3232
  %v3305 = vunpack.c.h.b16 %v3232
  %v3306 = vunpack.c.l.b16 %v3233
  %v3307 = vunpack.c.h.b16 %v3233
  %v3308 = vunpack.c.l.b16 %v3234
  %v3309 = vunpack.c.h.b16 %v3234
  %v3310 = vunpack.c.l.b16 %v3235
  %v3311 = vunpack.c.h.b16 %v3235
  %v3312 = vunpack.c.l.b16 %v3236
  %v3313 = vunpack.c.h.b16 %v3236
  %v3314 = vunpack.c.l.b16 %v3237
  %v3315 = vunpack.c.h.b16 %v3237
  %v3316 = vunpack.c.l.b16 %v3238
  %v3317 = vunpack.c.h.b16 %v3238
  %v3318 = vunpack.c.l.b16 %v3239
  %v3319 = vunpack.c.h.b16 %v3239
  %v3320 = vunpack.c.l.b16 %v3240
  %v3321 = vunpack.c.h.b16 %v3240
  %v3322 = vunpack.c.l.b16 %v3241
  %v3323 = vunpack.c.h.b16 %v3241
  %v3324 = vunpack.c.l.b16 %v3242
  %v3325 = vunpack.c.h.b16 %v3242
  %v3326 = vunpack.c.l.b16 %v3243
  %v3327 = vunpack.c.h.b16 %v3243
  %v3328 = vunpack.c.l.b16 %v3244
  %v3329 = vunpack.c.h.b16 %v3244
  %v3330 = vunpack.c.l.b16 %v3245
  %v3331 = vunpack.c.h.b16 %v3245
  %v3332 = vunpack.c.l.b16 %v3246
  %v3333 = vunpack.c.h.b16 %v3246
  %v3334 = vunpack.c.l.b16 %v3247
  %v3335 = vunpack.c.h.b16 %v3247
  %v3336 = vunpack.c.l.b16 %v3248
  %v3337 = vunpack.c.h.b16 %v3248
  %v3338 = vunpack.c.l.b16 %v3249
  %v3339 = vunpack.c.h.b16 %v3249
  %v3340 = vunpack.c.l.b16 %v3250
  %v3341 = vunpack.c.h.b16 %v3250
  %v3342 = vunpack.c.l.b16 %v3251
  %v3343 = vunpack.c.h.b16 %v3251
  %v3344 = vunpack.c.l.b16 %v3252
  %v3345 = vunpack.c.h.b16 %v3252
  %v3346 = vunpack.c.l.b16 %v3253
  %v3347 = vunpack.c.h.b16 %v3253
  %v3348 = vunpack.c.l.b16 %v3254
  %v3349 = vunpack.c.h.b16 %v3254
  %v3350 = vunpack.c.l.b16 %v3255
  %v3351 = vunpack.c.h.b16 %v3255
  %v3352 = vpack.c.b16 %v3292, %v3288
  %v3353 = vpack.c.b16 %v3293, %v3289
  %v3354 = vpack.c.b16 %v3294, %v3290
  %v3355 = vpack.c.b16 %v3295, %v3291
  %v3356 = vpack.c.b16 %v3300, %v3296
  %v3357 = vpack.c.b16 %v3301, %v3297
  %v3358 = vpack.c.b16 %v3302, %v3298
  %v3359 = vpack.c.b16 %v3303, %v3299
  %v3360 = vpack.c.b16 %v3308, %v3304
  %v3361 = vpack.c.b16 %v3309, %v3305
  %v3362 = vpack.c.b16 %v3310, %v3306
  %v3363 = vpack.c.b16 %v3311, %v3307
  %v3364 = vpack.c.b16 %v3316, %v3312
  %v3365 = vpack.c.b16 %v3317, %v3313
  %v3366 = vpack.c.b16 %v3318, %v3314
  %v3367 = vpack.c.b16 %v3319, %v3315
  %v3368 = vpack.c.b16 %v3324, %v3320
  %v3369 = vpack.c.b16 %v3325, %v3321
  %v3370 = vpack.c.b16 %v3326, %v3322
  %v3371 = vpack.c.b16 %v3327, %v3323
  %v3372 = vpack.c.b16 %v3332, %v3328
  %v3373 = vpack.c.b16 %v3333, %v3329
  %v3374 = vpack.c.b16 %v3334, %v3330
  %v3375 = vpack.c.b16 %v3335, %v3331
  %v3376 = vpack.c.b16 %v3340, %v3336
  %v3377 = vpack.c.b16 %v3341, %v3337
  %v3378 = vpack.c.b16 %v3342, %v3338
  %v3379 = vpack.c.b16 %v3343, %v3339
  %v3380 = vpack.c.b16 %v3348, %v3344
  %v3381 = vpack.c.b16 %v3349, %v3345
  %v3382 = vpack.c.b16 %v3350, %v3346
  %v3383 = vpack.c.b16 %v3351, %v3347
  %3416 = vmatpush.bf16.msra.mxu0 %v3380
  %3417 = vmatpush.bf16.msra.mxu0 %v3376
  %3418 = vmatpush.bf16.msra.mxu0 %v3372
  %3419 = vmatpush.bf16.msra.mxu0 %v3368
  %3420 = vmatpush.bf16.msra.mxu0 %v3364
  %3421 = vmatpush.bf16.msra.mxu0 %v3360
  %3422 = vmatpush.bf16.msra.mxu0 %v3356
  %3423 = vmatpush.bf16.msra.mxu0 %v3352
  %3424 = vmatmul.bf16.gmra.mxu0 %v3216
  %v3425 = vpop.f32.mrf.mxu0
  %v3426 = vadd.f32 0.0, %v3425
  %v3427 = vpop.f32.mrf.mxu0
  %3428 = vdwg.mxu0
  %3429 = vmatpush.bf16.msra.mxu0 %v3381
  %3430 = vmatpush.bf16.msra.mxu0 %v3377
  %3431 = vmatpush.bf16.msra.mxu0 %v3373
  %3432 = vmatpush.bf16.msra.mxu0 %v3369
  %3433 = vmatpush.bf16.msra.mxu0 %v3365
  %3434 = vmatpush.bf16.msra.mxu0 %v3361
  %3435 = vmatpush.bf16.msra.mxu0 %v3357
  %3436 = vmatpush.bf16.msra.mxu0 %v3353
  %3437 = vmatmul.bf16.gmra.mxu0 %v3216
  %v3438 = vpop.f32.mrf.mxu0
  %v3439 = vadd.f32 0.0, %v3438
  %v3440 = vpop.f32.mrf.mxu0
  %3441 = vdwg.mxu0
  %3442 = vmatpush.bf16.msra.mxu0 %v3382
  %3443 = vmatpush.bf16.msra.mxu0 %v3378
  %3444 = vmatpush.bf16.msra.mxu0 %v3374
  %3445 = vmatpush.bf16.msra.mxu0 %v3370
  %3446 = vmatpush.bf16.msra.mxu0 %v3366
  %3447 = vmatpush.bf16.msra.mxu0 %v3362
  %3448 = vmatpush.bf16.msra.mxu0 %v3358
  %3449 = vmatpush.bf16.msra.mxu0 %v3354
  %3450 = vmatmul.bf16.gmra.mxu0 %v3216
  %v3451 = vpop.f32.mrf.mxu0
  %v3452 = vadd.f32 0.0, %v3451
  %v3453 = vpop.f32.mrf.mxu0
  %3454 = vdwg.mxu0
  %3455 = vmatpush.bf16.msra.mxu0 %v3383
  %3456 = vmatpush.bf16.msra.mxu0 %v3379
  %3457 = vmatpush.bf16.msra.mxu0 %v3375
  %3458 = vmatpush.bf16.msra.mxu0 %v3371
  %3459 = vmatpush.bf16.msra.mxu0 %v3367
  %3460 = vmatpush.bf16.msra.mxu0 %v3363
  %3461 = vmatpush.bf16.msra.mxu0 %v3359
  %3462 = vmatpush.bf16.msra.mxu0 %v3355
  %3463 = vmatmul.bf16.gmra.mxu0 %v3216
  %v3464 = vpop.f32.mrf.mxu0
  %v3465 = vadd.f32 0.0, %v3464
  %v3466 = vpop.f32.mrf.mxu0
  %3467 = vdwg.mxu0
  %v3468 = vadd.f32 %v3220, %v3426
  %v3469 = vadd.f32 %v3221, %v3439
  %v3470 = vadd.f32 %v3222, %v3452
  %v3471 = vadd.f32 %v3223, %v3465
  %v3472 = vxor.u32 %v3468, 2147483648
  %v3473 = vxor.u32 %v3469, 2147483648
  %v3474 = vxor.u32 %v3470, 2147483648
  %v3475 = vmul.f32 %v3472, 1.442695
  %v3476 = vpow.pop %v3475
  %v3477 = vmul.f32 %v3473, 1.442695
  %v3478 = vpow.pop %v3477
  %v3479 = vmul.f32 %v3474, 1.442695
  %v3480 = vpow.pop %v3479
  %v3481 = vadd.f32 %v3476, 1.0
  %v3482 = vadd.f32 %v3478, 1.0
  %v3483 = vadd.f32 %v3480, 1.0
  %v3484 = vrcp.pop %v3481
  %v3485 = vmul.f32 %v3481, %v3484
  %v3486 = vsub.f32 1.0, %v3485
  %v3487 = vmul.f32 %v3484, %v3486
  %v3488 = vadd.f32 %v3484, %v3487
  %vm3489 = vweird.f32 %v3481
  %vm3490 = vweird.f32 %v3484
  %vm3491 = vmor %vm3489, %vm3490
  %v3492 = vsel %vm3491, %v3484, %v3488
  %v3493 = vand.u32 2147483647, %v3481
  %vm3494 = vcmp.eq.f32.partialorder %v3493, 8.507059e+37
  %v3495 = vand.u32 %v3481, 2147483648
  %v3496 = vor.u32 1.1754944e-38, %v3495
  %v3497 = vsel %vm3494, %v3496, %v3492
  %v3498 = vmul.f32 1.0, %v3497
  %v3499 = vrcp.pop %v3482
  %v3500 = vmul.f32 %v3482, %v3499
  %v3501 = vsub.f32 1.0, %v3500
  %v3502 = vmul.f32 %v3499, %v3501
  %v3503 = vadd.f32 %v3499, %v3502
  %vm3504 = vweird.f32 %v3482
  %vm3505 = vweird.f32 %v3499
  %vm3506 = vmor %vm3504, %vm3505
  %v3507 = vsel %vm3506, %v3499, %v3503
  %v3508 = vand.u32 2147483647, %v3482
  %vm3509 = vcmp.eq.f32.partialorder %v3508, 8.507059e+37
  %v3510 = vand.u32 %v3482, 2147483648
  %v3511 = vor.u32 1.1754944e-38, %v3510
  %v3512 = vsel %vm3509, %v3511, %v3507
  %v3513 = vmul.f32 1.0, %v3512
  %v3514 = vrcp.pop %v3483
  %v3515 = vmul.f32 %v3483, %v3514
  %v3516 = vsub.f32 1.0, %v3515
  %v3517 = vmul.f32 %v3514, %v3516
  %v3518 = vadd.f32 %v3514, %v3517
  %vm3519 = vweird.f32 %v3483
  %vm3520 = vweird.f32 %v3514
  %vm3521 = vmor %vm3519, %vm3520
  %v3522 = vsel %vm3521, %v3514, %v3518
  %v3523 = vand.u32 2147483647, %v3483
  %vm3524 = vcmp.eq.f32.partialorder %v3523, 8.507059e+37
  %v3525 = vand.u32 %v3483, 2147483648
  %v3526 = vor.u32 1.1754944e-38, %v3525
  %v3527 = vsel %vm3524, %v3526, %v3522
  %v3528 = vmul.f32 1.0, %v3527
  %v3529 = vtanh.pop %v3471
  %v3530 = vmul.f32 %v3513, %v3213
  %v3531 = vmul.f32 %v3498, %v3529
  %v3532 = vadd.f32 %v3530, %v3531
  %v3533 = vtanh.pop %v3532
  %v3534 = vmul.f32 %v3528, %v3533
  %v3535 = vpack.c.bf16 %v3534, %v3534
  %s3536 = scalar_lea.vmem %s4, 40
  %3537 = vst [vmem:[%s3536] sm:$0xf] %v3535
  %s3538 = scalar_lea.vmem %s0, 352
  %v3539 = vld [vmem:[%s3538] sm:$0xff]
  %v3540 = vld [vmem:[%s3538 + $0x8] sm:$0xff]
  %v3541 = vld [vmem:[%s3538 + $0x10] sm:$0xff]
  %v3542 = vld [vmem:[%s3538 + $0x18] sm:$0xff]
  %v3543 = vld [vmem:[%s3] sm:$0xff]
  %v3544 = vld [vmem:[%s3 + $0x8] sm:$0xff]
  %v3545 = vld [vmem:[%s3 + $0x10] sm:$0xff]
  %v3546 = vld [vmem:[%s3 + $0x18] sm:$0xff]
  %v3547 = vld [vmem:[%s3 + $0x20] sm:$0xff]
  %v3548 = vld [vmem:[%s3 + $0x28] sm:$0xff]
  %v3549 = vld [vmem:[%s3 + $0x30] sm:$0xff]
  %v3550 = vld [vmem:[%s3 + $0x38] sm:$0xff]
  %v3551 = vld [vmem:[%s3 + $0x40] sm:$0xff]
  %v3552 = vld [vmem:[%s3 + $0x48] sm:$0xff]
  %v3553 = vld [vmem:[%s3 + $0x50] sm:$0xff]
  %v3554 = vld [vmem:[%s3 + $0x58] sm:$0xff]
  %v3555 = vld [vmem:[%s3 + $0x60] sm:$0xff]
  %v3556 = vld [vmem:[%s3 + $0x68] sm:$0xff]
  %v3557 = vld [vmem:[%s3 + $0x70] sm:$0xff]
  %v3558 = vld [vmem:[%s3 + $0x78] sm:$0xff]
  %v3559 = vld [vmem:[%s3 + $0x80] sm:$0xff]
  %v3560 = vld [vmem:[%s3 + $0x88] sm:$0xff]
  %v3561 = vld [vmem:[%s3 + $0x90] sm:$0xff]
  %v3562 = vld [vmem:[%s3 + $0x98] sm:$0xff]
  %v3563 = vld [vmem:[%s3 + $0xa0] sm:$0xff]
  %v3564 = vld [vmem:[%s3 + $0xa8] sm:$0xff]
  %v3565 = vld [vmem:[%s3 + $0xb0] sm:$0xff]
  %v3566 = vld [vmem:[%s3 + $0xb8] sm:$0xff]
  %v3567 = vld [vmem:[%s3 + $0xc0] sm:$0xff]
  %v3568 = vld [vmem:[%s3 + $0xc8] sm:$0xff]
  %v3569 = vld [vmem:[%s3 + $0xd0] sm:$0xff]
  %v3570 = vld [vmem:[%s3 + $0xd8] sm:$0xff]
  %v3571 = vld [vmem:[%s3 + $0xe0] sm:$0xff]
  %v3572 = vld [vmem:[%s3 + $0xe8] sm:$0xff]
  %v3573 = vld [vmem:[%s3 + $0xf0] sm:$0xff]
  %v3574 = vld [vmem:[%s3 + $0xf8] sm:$0xff]
  %v3607 = vunpack.c.l.b16 %v3543
  %v3608 = vunpack.c.h.b16 %v3543
  %v3609 = vunpack.c.l.b16 %v3544
  %v3610 = vunpack.c.h.b16 %v3544
  %v3611 = vunpack.c.l.b16 %v3545
  %v3612 = vunpack.c.h.b16 %v3545
  %v3613 = vunpack.c.l.b16 %v3546
  %v3614 = vunpack.c.h.b16 %v3546
  %v3615 = vunpack.c.l.b16 %v3547
  %v3616 = vunpack.c.h.b16 %v3547
  %v3617 = vunpack.c.l.b16 %v3548
  %v3618 = vunpack.c.h.b16 %v3548
  %v3619 = vunpack.c.l.b16 %v3549
  %v3620 = vunpack.c.h.b16 %v3549
  %v3621 = vunpack.c.l.b16 %v3550
  %v3622 = vunpack.c.h.b16 %v3550
  %v3623 = vunpack.c.l.b16 %v3551
  %v3624 = vunpack.c.h.b16 %v3551
  %v3625 = vunpack.c.l.b16 %v3552
  %v3626 = vunpack.c.h.b16 %v3552
  %v3627 = vunpack.c.l.b16 %v3553
  %v3628 = vunpack.c.h.b16 %v3553
  %v3629 = vunpack.c.l.b16 %v3554
  %v3630 = vunpack.c.h.b16 %v3554
  %v3631 = vunpack.c.l.b16 %v3555
  %v3632 = vunpack.c.h.b16 %v3555
  %v3633 = vunpack.c.l.b16 %v3556
  %v3634 = vunpack.c.h.b16 %v3556
  %v3635 = vunpack.c.l.b16 %v3557
  %v3636 = vunpack.c.h.b16 %v3557
  %v3637 = vunpack.c.l.b16 %v3558
  %v3638 = vunpack.c.h.b16 %v3558
  %v3639 = vunpack.c.l.b16 %v3559
  %v3640 = vunpack.c.h.b16 %v3559
  %v3641 = vunpack.c.l.b16 %v3560
  %v3642 = vunpack.c.h.b16 %v3560
  %v3643 = vunpack.c.l.b16 %v3561
  %v3644 = vunpack.c.h.b16 %v3561
  %v3645 = vunpack.c.l.b16 %v3562
  %v3646 = vunpack.c.h.b16 %v3562
  %v3647 = vunpack.c.l.b16 %v3563
  %v3648 = vunpack.c.h.b16 %v3563
  %v3649 = vunpack.c.l.b16 %v3564
  %v3650 = vunpack.c.h.b16 %v3564
  %v3651 = vunpack.c.l.b16 %v3565
  %v3652 = vunpack.c.h.b16 %v3565
  %v3653 = vunpack.c.l.b16 %v3566
  %v3654 = vunpack.c.h.b16 %v3566
  %v3655 = vunpack.c.l.b16 %v3567
  %v3656 = vunpack.c.h.b16 %v3567
  %v3657 = vunpack.c.l.b16 %v3568
  %v3658 = vunpack.c.h.b16 %v3568
  %v3659 = vunpack.c.l.b16 %v3569
  %v3660 = vunpack.c.h.b16 %v3569
  %v3661 = vunpack.c.l.b16 %v3570
  %v3662 = vunpack.c.h.b16 %v3570
  %v3663 = vunpack.c.l.b16 %v3571
  %v3664 = vunpack.c.h.b16 %v3571
  %v3665 = vunpack.c.l.b16 %v3572
  %v3666 = vunpack.c.h.b16 %v3572
  %v3667 = vunpack.c.l.b16 %v3573
  %v3668 = vunpack.c.h.b16 %v3573
  %v3669 = vunpack.c.l.b16 %v3574
  %v3670 = vunpack.c.h.b16 %v3574
  %v3671 = vpack.c.b16 %v3611, %v3607
  %v3672 = vpack.c.b16 %v3612, %v3608
  %v3673 = vpack.c.b16 %v3613, %v3609
  %v3674 = vpack.c.b16 %v3614, %v3610
  %v3675 = vpack.c.b16 %v3619, %v3615
  %v3676 = vpack.c.b16 %v3620, %v3616
  %v3677 = vpack.c.b16 %v3621, %v3617
  %v3678 = vpack.c.b16 %v3622, %v3618
  %v3679 = vpack.c.b16 %v3627, %v3623
  %v3680 = vpack.c.b16 %v3628, %v3624
  %v3681 = vpack.c.b16 %v3629, %v3625
  %v3682 = vpack.c.b16 %v3630, %v3626
  %v3683 = vpack.c.b16 %v3635, %v3631
  %v3684 = vpack.c.b16 %v3636, %v3632
  %v3685 = vpack.c.b16 %v3637, %v3633
  %v3686 = vpack.c.b16 %v3638, %v3634
  %v3687 = vpack.c.b16 %v3643, %v3639
  %v3688 = vpack.c.b16 %v3644, %v3640
  %v3689 = vpack.c.b16 %v3645, %v3641
  %v3690 = vpack.c.b16 %v3646, %v3642
  %v3691 = vpack.c.b16 %v3651, %v3647
  %v3692 = vpack.c.b16 %v3652, %v3648
  %v3693 = vpack.c.b16 %v3653, %v3649
  %v3694 = vpack.c.b16 %v3654, %v3650
  %v3695 = vpack.c.b16 %v3659, %v3655
  %v3696 = vpack.c.b16 %v3660, %v3656
  %v3697 = vpack.c.b16 %v3661, %v3657
  %v3698 = vpack.c.b16 %v3662, %v3658
  %v3699 = vpack.c.b16 %v3667, %v3663
  %v3700 = vpack.c.b16 %v3668, %v3664
  %v3701 = vpack.c.b16 %v3669, %v3665
  %v3702 = vpack.c.b16 %v3670, %v3666
  %3735 = vmatpush.bf16.msra.mxu0 %v3699
  %3736 = vmatpush.bf16.msra.mxu0 %v3695
  %3737 = vmatpush.bf16.msra.mxu0 %v3691
  %3738 = vmatpush.bf16.msra.mxu0 %v3687
  %3739 = vmatpush.bf16.msra.mxu0 %v3683
  %3740 = vmatpush.bf16.msra.mxu0 %v3679
  %3741 = vmatpush.bf16.msra.mxu0 %v3675
  %3742 = vmatpush.bf16.msra.mxu0 %v3671
  %3743 = vmatmul.bf16.gmra.mxu0 %v3535
  %v3744 = vpop.f32.mrf.mxu0
  %v3745 = vadd.f32 0.0, %v3744
  %v3746 = vpop.f32.mrf.mxu0
  %3747 = vdwg.mxu0
  %3748 = vmatpush.bf16.msra.mxu0 %v3700
  %3749 = vmatpush.bf16.msra.mxu0 %v3696
  %3750 = vmatpush.bf16.msra.mxu0 %v3692
  %3751 = vmatpush.bf16.msra.mxu0 %v3688
  %3752 = vmatpush.bf16.msra.mxu0 %v3684
  %3753 = vmatpush.bf16.msra.mxu0 %v3680
  %3754 = vmatpush.bf16.msra.mxu0 %v3676
  %3755 = vmatpush.bf16.msra.mxu0 %v3672
  %3756 = vmatmul.bf16.gmra.mxu0 %v3535
  %v3757 = vpop.f32.mrf.mxu0
  %v3758 = vadd.f32 0.0, %v3757
  %v3759 = vpop.f32.mrf.mxu0
  %3760 = vdwg.mxu0
  %3761 = vmatpush.bf16.msra.mxu0 %v3701
  %3762 = vmatpush.bf16.msra.mxu0 %v3697
  %3763 = vmatpush.bf16.msra.mxu0 %v3693
  %3764 = vmatpush.bf16.msra.mxu0 %v3689
  %3765 = vmatpush.bf16.msra.mxu0 %v3685
  %3766 = vmatpush.bf16.msra.mxu0 %v3681
  %3767 = vmatpush.bf16.msra.mxu0 %v3677
  %3768 = vmatpush.bf16.msra.mxu0 %v3673
  %3769 = vmatmul.bf16.gmra.mxu0 %v3535
  %v3770 = vpop.f32.mrf.mxu0
  %v3771 = vadd.f32 0.0, %v3770
  %v3772 = vpop.f32.mrf.mxu0
  %3773 = vdwg.mxu0
  %3774 = vmatpush.bf16.msra.mxu0 %v3702
  %3775 = vmatpush.bf16.msra.mxu0 %v3698
  %3776 = vmatpush.bf16.msra.mxu0 %v3694
  %3777 = vmatpush.bf16.msra.mxu0 %v3690
  %3778 = vmatpush.bf16.msra.mxu0 %v3686
  %3779 = vmatpush.bf16.msra.mxu0 %v3682
  %3780 = vmatpush.bf16.msra.mxu0 %v3678
  %3781 = vmatpush.bf16.msra.mxu0 %v3674
  %3782 = vmatmul.bf16.gmra.mxu0 %v3535
  %v3783 = vpop.f32.mrf.mxu0
  %v3784 = vadd.f32 0.0, %v3783
  %v3785 = vpop.f32.mrf.mxu0
  %3786 = vdwg.mxu0
  %v3787 = vadd.f32 %v3539, %v3745
  %v3788 = vadd.f32 %v3540, %v3758
  %v3789 = vadd.f32 %v3541, %v3771
  %v3790 = vadd.f32 %v3542, %v3784
  %v3791 = vxor.u32 %v3787, 2147483648
  %v3792 = vxor.u32 %v3788, 2147483648
  %v3793 = vxor.u32 %v3789, 2147483648
  %v3794 = vmul.f32 %v3791, 1.442695
  %v3795 = vpow.pop %v3794
  %v3796 = vmul.f32 %v3792, 1.442695
  %v3797 = vpow.pop %v3796
  %v3798 = vmul.f32 %v3793, 1.442695
  %v3799 = vpow.pop %v3798
  %v3800 = vadd.f32 %v3795, 1.0
  %v3801 = vadd.f32 %v3797, 1.0
  %v3802 = vadd.f32 %v3799, 1.0
  %v3803 = vrcp.pop %v3800
  %v3804 = vmul.f32 %v3800, %v3803
  %v3805 = vsub.f32 1.0, %v3804
  %v3806 = vmul.f32 %v3803, %v3805
  %v3807 = vadd.f32 %v3803, %v3806
  %vm3808 = vweird.f32 %v3800
  %vm3809 = vweird.f32 %v3803
  %vm3810 = vmor %vm3808, %vm3809
  %v3811 = vsel %vm3810, %v3803, %v3807
  %v3812 = vand.u32 2147483647, %v3800
  %vm3813 = vcmp.eq.f32.partialorder %v3812, 8.507059e+37
  %v3814 = vand.u32 %v3800, 2147483648
  %v3815 = vor.u32 1.1754944e-38, %v3814
  %v3816 = vsel %vm3813, %v3815, %v3811
  %v3817 = vmul.f32 1.0, %v3816
  %v3818 = vrcp.pop %v3801
  %v3819 = vmul.f32 %v3801, %v3818
  %v3820 = vsub.f32 1.0, %v3819
  %v3821 = vmul.f32 %v3818, %v3820
  %v3822 = vadd.f32 %v3818, %v3821
  %vm3823 = vweird.f32 %v3801
  %vm3824 = vweird.f32 %v3818
  %vm3825 = vmor %vm3823, %vm3824
  %v3826 = vsel %vm3825, %v3818, %v3822
  %v3827 = vand.u32 2147483647, %v3801
  %vm3828 = vcmp.eq.f32.partialorder %v3827, 8.507059e+37
  %v3829 = vand.u32 %v3801, 2147483648
  %v3830 = vor.u32 1.1754944e-38, %v3829
  %v3831 = vsel %vm3828, %v3830, %v3826
  %v3832 = vmul.f32 1.0, %v3831
  %v3833 = vrcp.pop %v3802
  %v3834 = vmul.f32 %v3802, %v3833
  %v3835 = vsub.f32 1.0, %v3834
  %v3836 = vmul.f32 %v3833, %v3835
  %v3837 = vadd.f32 %v3833, %v3836
  %vm3838 = vweird.f32 %v3802
  %vm3839 = vweird.f32 %v3833
  %vm3840 = vmor %vm3838, %vm3839
  %v3841 = vsel %vm3840, %v3833, %v3837
  %v3842 = vand.u32 2147483647, %v3802
  %vm3843 = vcmp.eq.f32.partialorder %v3842, 8.507059e+37
  %v3844 = vand.u32 %v3802, 2147483648
  %v3845 = vor.u32 1.1754944e-38, %v3844
  %v3846 = vsel %vm3843, %v3845, %v3841
  %v3847 = vmul.f32 1.0, %v3846
  %v3848 = vtanh.pop %v3790
  %v3849 = vmul.f32 %v3832, %v3532
  %v3850 = vmul.f32 %v3817, %v3848
  %v3851 = vadd.f32 %v3849, %v3850
  %v3852 = vtanh.pop %v3851
  %v3853 = vmul.f32 %v3847, %v3852
  %v3854 = vpack.c.bf16 %v3853, %v3853
  %s3855 = scalar_lea.vmem %s4, 44
  %3856 = vst [vmem:[%s3855] sm:$0xf] %v3854
  %s3857 = scalar_lea.vmem %s0, 384
  %v3858 = vld [vmem:[%s3857] sm:$0xff]
  %v3859 = vld [vmem:[%s3857 + $0x8] sm:$0xff]
  %v3860 = vld [vmem:[%s3857 + $0x10] sm:$0xff]
  %v3861 = vld [vmem:[%s3857 + $0x18] sm:$0xff]
  %v3862 = vld [vmem:[%s3] sm:$0xff]
  %v3863 = vld [vmem:[%s3 + $0x8] sm:$0xff]
  %v3864 = vld [vmem:[%s3 + $0x10] sm:$0xff]
  %v3865 = vld [vmem:[%s3 + $0x18] sm:$0xff]
  %v3866 = vld [vmem:[%s3 + $0x20] sm:$0xff]
  %v3867 = vld [vmem:[%s3 + $0x28] sm:$0xff]
  %v3868 = vld [vmem:[%s3 + $0x30] sm:$0xff]
  %v3869 = vld [vmem:[%s3 + $0x38] sm:$0xff]
  %v3870 = vld [vmem:[%s3 + $0x40] sm:$0xff]
  %v3871 = vld [vmem:[%s3 + $0x48] sm:$0xff]
  %v3872 = vld [vmem:[%s3 + $0x50] sm:$0xff]
  %v3873 = vld [vmem:[%s3 + $0x58] sm:$0xff]
  %v3874 = vld [vmem:[%s3 + $0x60] sm:$0xff]
  %v3875 = vld [vmem:[%s3 + $0x68] sm:$0xff]
  %v3876 = vld [vmem:[%s3 + $0x70] sm:$0xff]
  %v3877 = vld [vmem:[%s3 + $0x78] sm:$0xff]
  %v3878 = vld [vmem:[%s3 + $0x80] sm:$0xff]
  %v3879 = vld [vmem:[%s3 + $0x88] sm:$0xff]
  %v3880 = vld [vmem:[%s3 + $0x90] sm:$0xff]
  %v3881 = vld [vmem:[%s3 + $0x98] sm:$0xff]
  %v3882 = vld [vmem:[%s3 + $0xa0] sm:$0xff]
  %v3883 = vld [vmem:[%s3 + $0xa8] sm:$0xff]
  %v3884 = vld [vmem:[%s3 + $0xb0] sm:$0xff]
  %v3885 = vld [vmem:[%s3 + $0xb8] sm:$0xff]
  %v3886 = vld [vmem:[%s3 + $0xc0] sm:$0xff]
  %v3887 = vld [vmem:[%s3 + $0xc8] sm:$0xff]
  %v3888 = vld [vmem:[%s3 + $0xd0] sm:$0xff]
  %v3889 = vld [vmem:[%s3 + $0xd8] sm:$0xff]
  %v3890 = vld [vmem:[%s3 + $0xe0] sm:$0xff]
  %v3891 = vld [vmem:[%s3 + $0xe8] sm:$0xff]
  %v3892 = vld [vmem:[%s3 + $0xf0] sm:$0xff]
  %v3893 = vld [vmem:[%s3 + $0xf8] sm:$0xff]
  %v3926 = vunpack.c.l.b16 %v3862
  %v3927 = vunpack.c.h.b16 %v3862
  %v3928 = vunpack.c.l.b16 %v3863
  %v3929 = vunpack.c.h.b16 %v3863
  %v3930 = vunpack.c.l.b16 %v3864
  %v3931 = vunpack.c.h.b16 %v3864
  %v3932 = vunpack.c.l.b16 %v3865
  %v3933 = vunpack.c.h.b16 %v3865
  %v3934 = vunpack.c.l.b16 %v3866
  %v3935 = vunpack.c.h.b16 %v3866
  %v3936 = vunpack.c.l.b16 %v3867
  %v3937 = vunpack.c.h.b16 %v3867
  %v3938 = vunpack.c.l.b16 %v3868
  %v3939 = vunpack.c.h.b16 %v3868
  %v3940 = vunpack.c.l.b16 %v3869
  %v3941 = vunpack.c.h.b16 %v3869
  %v3942 = vunpack.c.l.b16 %v3870
  %v3943 = vunpack.c.h.b16 %v3870
  %v3944 = vunpack.c.l.b16 %v3871
  %v3945 = vunpack.c.h.b16 %v3871
  %v3946 = vunpack.c.l.b16 %v3872
  %v3947 = vunpack.c.h.b16 %v3872
  %v3948 = vunpack.c.l.b16 %v3873
  %v3949 = vunpack.c.h.b16 %v3873
  %v3950 = vunpack.c.l.b16 %v3874
  %v3951 = vunpack.c.h.b16 %v3874
  %v3952 = vunpack.c.l.b16 %v3875
  %v3953 = vunpack.c.h.b16 %v3875
  %v3954 = vunpack.c.l.b16 %v3876
  %v3955 = vunpack.c.h.b16 %v3876
  %v3956 = vunpack.c.l.b16 %v3877
  %v3957 = vunpack.c.h.b16 %v3877
  %v3958 = vunpack.c.l.b16 %v3878
  %v3959 = vunpack.c.h.b16 %v3878
  %v3960 = vunpack.c.l.b16 %v3879
  %v3961 = vunpack.c.h.b16 %v3879
  %v3962 = vunpack.c.l.b16 %v3880
  %v3963 = vunpack.c.h.b16 %v3880
  %v3964 = vunpack.c.l.b16 %v3881
  %v3965 = vunpack.c.h.b16 %v3881
  %v3966 = vunpack.c.l.b16 %v3882
  %v3967 = vunpack.c.h.b16 %v3882
  %v3968 = vunpack.c.l.b16 %v3883
  %v3969 = vunpack.c.h.b16 %v3883
  %v3970 = vunpack.c.l.b16 %v3884
  %v3971 = vunpack.c.h.b16 %v3884
  %v3972 = vunpack.c.l.b16 %v3885
  %v3973 = vunpack.c.h.b16 %v3885
  %v3974 = vunpack.c.l.b16 %v3886
  %v3975 = vunpack.c.h.b16 %v3886
  %v3976 = vunpack.c.l.b16 %v3887
  %v3977 = vunpack.c.h.b16 %v3887
  %v3978 = vunpack.c.l.b16 %v3888
  %v3979 = vunpack.c.h.b16 %v3888
  %v3980 = vunpack.c.l.b16 %v3889
  %v3981 = vunpack.c.h.b16 %v3889
  %v3982 = vunpack.c.l.b16 %v3890
  %v3983 = vunpack.c.h.b16 %v3890
  %v3984 = vunpack.c.l.b16 %v3891
  %v3985 = vunpack.c.h.b16 %v3891
  %v3986 = vunpack.c.l.b16 %v3892
  %v3987 = vunpack.c.h.b16 %v3892
  %v3988 = vunpack.c.l.b16 %v3893
  %v3989 = vunpack.c.h.b16 %v3893
  %v3990 = vpack.c.b16 %v3930, %v3926
  %v3991 = vpack.c.b16 %v3931, %v3927
  %v3992 = vpack.c.b16 %v3932, %v3928
  %v3993 = vpack.c.b16 %v3933, %v3929
  %v3994 = vpack.c.b16 %v3938, %v3934
  %v3995 = vpack.c.b16 %v3939, %v3935
  %v3996 = vpack.c.b16 %v3940, %v3936
  %v3997 = vpack.c.b16 %v3941, %v3937
  %v3998 = vpack.c.b16 %v3946, %v3942
  %v3999 = vpack.c.b16 %v3947, %v3943
  %v4000 = vpack.c.b16 %v3948, %v3944
  %v4001 = vpack.c.b16 %v3949, %v3945
  %v4002 = vpack.c.b16 %v3954, %v3950
  %v4003 = vpack.c.b16 %v3955, %v3951
  %v4004 = vpack.c.b16 %v3956, %v3952
  %v4005 = vpack.c.b16 %v3957, %v3953
  %v4006 = vpack.c.b16 %v3962, %v3958
  %v4007 = vpack.c.b16 %v3963, %v3959
  %v4008 = vpack.c.b16 %v3964, %v3960
  %v4009 = vpack.c.b16 %v3965, %v3961
  %v4010 = vpack.c.b16 %v3970, %v3966
  %v4011 = vpack.c.b16 %v3971, %v3967
  %v4012 = vpack.c.b16 %v3972, %v3968
  %v4013 = vpack.c.b16 %v3973, %v3969
  %v4014 = vpack.c.b16 %v3978, %v3974
  %v4015 = vpack.c.b16 %v3979, %v3975
  %v4016 = vpack.c.b16 %v3980, %v3976
  %v4017 = vpack.c.b16 %v3981, %v3977
  %v4018 = vpack.c.b16 %v3986, %v3982
  %v4019 = vpack.c.b16 %v3987, %v3983
  %v4020 = vpack.c.b16 %v3988, %v3984
  %v4021 = vpack.c.b16 %v3989, %v3985
  %4054 = vmatpush.bf16.msra.mxu0 %v4018
  %4055 = vmatpush.bf16.msra.mxu0 %v4014
  %4056 = vmatpush.bf16.msra.mxu0 %v4010
  %4057 = vmatpush.bf16.msra.mxu0 %v4006
  %4058 = vmatpush.bf16.msra.mxu0 %v4002
  %4059 = vmatpush.bf16.msra.mxu0 %v3998
  %4060 = vmatpush.bf16.msra.mxu0 %v3994
  %4061 = vmatpush.bf16.msra.mxu0 %v3990
  %4062 = vmatmul.bf16.gmra.mxu0 %v3854
  %v4063 = vpop.f32.mrf.mxu0
  %v4064 = vadd.f32 0.0, %v4063
  %v4065 = vpop.f32.mrf.mxu0
  %4066 = vdwg.mxu0
  %4067 = vmatpush.bf16.msra.mxu0 %v4019
  %4068 = vmatpush.bf16.msra.mxu0 %v4015
  %4069 = vmatpush.bf16.msra.mxu0 %v4011
  %4070 = vmatpush.bf16.msra.mxu0 %v4007
  %4071 = vmatpush.bf16.msra.mxu0 %v4003
  %4072 = vmatpush.bf16.msra.mxu0 %v3999
  %4073 = vmatpush.bf16.msra.mxu0 %v3995
  %4074 = vmatpush.bf16.msra.mxu0 %v3991
  %4075 = vmatmul.bf16.gmra.mxu0 %v3854
  %v4076 = vpop.f32.mrf.mxu0
  %v4077 = vadd.f32 0.0, %v4076
  %v4078 = vpop.f32.mrf.mxu0
  %4079 = vdwg.mxu0
  %4080 = vmatpush.bf16.msra.mxu0 %v4020
  %4081 = vmatpush.bf16.msra.mxu0 %v4016
  %4082 = vmatpush.bf16.msra.mxu0 %v4012
  %4083 = vmatpush.bf16.msra.mxu0 %v4008
  %4084 = vmatpush.bf16.msra.mxu0 %v4004
  %4085 = vmatpush.bf16.msra.mxu0 %v4000
  %4086 = vmatpush.bf16.msra.mxu0 %v3996
  %4087 = vmatpush.bf16.msra.mxu0 %v3992
  %4088 = vmatmul.bf16.gmra.mxu0 %v3854
  %v4089 = vpop.f32.mrf.mxu0
  %v4090 = vadd.f32 0.0, %v4089
  %v4091 = vpop.f32.mrf.mxu0
  %4092 = vdwg.mxu0
  %4093 = vmatpush.bf16.msra.mxu0 %v4021
  %4094 = vmatpush.bf16.msra.mxu0 %v4017
  %4095 = vmatpush.bf16.msra.mxu0 %v4013
  %4096 = vmatpush.bf16.msra.mxu0 %v4009
  %4097 = vmatpush.bf16.msra.mxu0 %v4005
  %4098 = vmatpush.bf16.msra.mxu0 %v4001
  %4099 = vmatpush.bf16.msra.mxu0 %v3997
  %4100 = vmatpush.bf16.msra.mxu0 %v3993
  %4101 = vmatmul.bf16.gmra.mxu0 %v3854
  %v4102 = vpop.f32.mrf.mxu0
  %v4103 = vadd.f32 0.0, %v4102
  %v4104 = vpop.f32.mrf.mxu0
  %4105 = vdwg.mxu0
  %v4106 = vadd.f32 %v3858, %v4064
  %v4107 = vadd.f32 %v3859, %v4077
  %v4108 = vadd.f32 %v3860, %v4090
  %v4109 = vadd.f32 %v3861, %v4103
  %v4110 = vxor.u32 %v4106, 2147483648
  %v4111 = vxor.u32 %v4107, 2147483648
  %v4112 = vxor.u32 %v4108, 2147483648
  %v4113 = vmul.f32 %v4110, 1.442695
  %v4114 = vpow.pop %v4113
  %v4115 = vmul.f32 %v4111, 1.442695
  %v4116 = vpow.pop %v4115
  %v4117 = vmul.f32 %v4112, 1.442695
  %v4118 = vpow.pop %v4117
  %v4119 = vadd.f32 %v4114, 1.0
  %v4120 = vadd.f32 %v4116, 1.0
  %v4121 = vadd.f32 %v4118, 1.0
  %v4122 = vrcp.pop %v4119
  %v4123 = vmul.f32 %v4119, %v4122
  %v4124 = vsub.f32 1.0, %v4123
  %v4125 = vmul.f32 %v4122, %v4124
  %v4126 = vadd.f32 %v4122, %v4125
  %vm4127 = vweird.f32 %v4119
  %vm4128 = vweird.f32 %v4122
  %vm4129 = vmor %vm4127, %vm4128
  %v4130 = vsel %vm4129, %v4122, %v4126
  %v4131 = vand.u32 2147483647, %v4119
  %vm4132 = vcmp.eq.f32.partialorder %v4131, 8.507059e+37
  %v4133 = vand.u32 %v4119, 2147483648
  %v4134 = vor.u32 1.1754944e-38, %v4133
  %v4135 = vsel %vm4132, %v4134, %v4130
  %v4136 = vmul.f32 1.0, %v4135
  %v4137 = vrcp.pop %v4120
  %v4138 = vmul.f32 %v4120, %v4137
  %v4139 = vsub.f32 1.0, %v4138
  %v4140 = vmul.f32 %v4137, %v4139
  %v4141 = vadd.f32 %v4137, %v4140
  %vm4142 = vweird.f32 %v4120
  %vm4143 = vweird.f32 %v4137
  %vm4144 = vmor %vm4142, %vm4143
  %v4145 = vsel %vm4144, %v4137, %v4141
  %v4146 = vand.u32 2147483647, %v4120
  %vm4147 = vcmp.eq.f32.partialorder %v4146, 8.507059e+37
  %v4148 = vand.u32 %v4120, 2147483648
  %v4149 = vor.u32 1.1754944e-38, %v4148
  %v4150 = vsel %vm4147, %v4149, %v4145
  %v4151 = vmul.f32 1.0, %v4150
  %v4152 = vrcp.pop %v4121
  %v4153 = vmul.f32 %v4121, %v4152
  %v4154 = vsub.f32 1.0, %v4153
  %v4155 = vmul.f32 %v4152, %v4154
  %v4156 = vadd.f32 %v4152, %v4155
  %vm4157 = vweird.f32 %v4121
  %vm4158 = vweird.f32 %v4152
  %vm4159 = vmor %vm4157, %vm4158
  %v4160 = vsel %vm4159, %v4152, %v4156
  %v4161 = vand.u32 2147483647, %v4121
  %vm4162 = vcmp.eq.f32.partialorder %v4161, 8.507059e+37
  %v4163 = vand.u32 %v4121, 2147483648
  %v4164 = vor.u32 1.1754944e-38, %v4163
  %v4165 = vsel %vm4162, %v4164, %v4160
  %v4166 = vmul.f32 1.0, %v4165
  %v4167 = vtanh.pop %v4109
  %v4168 = vmul.f32 %v4151, %v3851
  %v4169 = vmul.f32 %v4136, %v4167
  %v4170 = vadd.f32 %v4168, %v4169
  %v4171 = vtanh.pop %v4170
  %v4172 = vmul.f32 %v4166, %v4171
  %v4173 = vpack.c.bf16 %v4172, %v4172
  %s4174 = scalar_lea.vmem %s4, 48
  %4175 = vst [vmem:[%s4174] sm:$0xf] %v4173
  %s4176 = scalar_lea.vmem %s0, 416
  %v4177 = vld [vmem:[%s4176] sm:$0xff]
  %v4178 = vld [vmem:[%s4176 + $0x8] sm:$0xff]
  %v4179 = vld [vmem:[%s4176 + $0x10] sm:$0xff]
  %v4180 = vld [vmem:[%s4176 + $0x18] sm:$0xff]
  %v4181 = vld [vmem:[%s3] sm:$0xff]
  %v4182 = vld [vmem:[%s3 + $0x8] sm:$0xff]
  %v4183 = vld [vmem:[%s3 + $0x10] sm:$0xff]
  %v4184 = vld [vmem:[%s3 + $0x18] sm:$0xff]
  %v4185 = vld [vmem:[%s3 + $0x20] sm:$0xff]
  %v4186 = vld [vmem:[%s3 + $0x28] sm:$0xff]
  %v4187 = vld [vmem:[%s3 + $0x30] sm:$0xff]
  %v4188 = vld [vmem:[%s3 + $0x38] sm:$0xff]
  %v4189 = vld [vmem:[%s3 + $0x40] sm:$0xff]
  %v4190 = vld [vmem:[%s3 + $0x48] sm:$0xff]
  %v4191 = vld [vmem:[%s3 + $0x50] sm:$0xff]
  %v4192 = vld [vmem:[%s3 + $0x58] sm:$0xff]
  %v4193 = vld [vmem:[%s3 + $0x60] sm:$0xff]
  %v4194 = vld [vmem:[%s3 + $0x68] sm:$0xff]
  %v4195 = vld [vmem:[%s3 + $0x70] sm:$0xff]
  %v4196 = vld [vmem:[%s3 + $0x78] sm:$0xff]
  %v4197 = vld [vmem:[%s3 + $0x80] sm:$0xff]
  %v4198 = vld [vmem:[%s3 + $0x88] sm:$0xff]
  %v4199 = vld [vmem:[%s3 + $0x90] sm:$0xff]
  %v4200 = vld [vmem:[%s3 + $0x98] sm:$0xff]
  %v4201 = vld [vmem:[%s3 + $0xa0] sm:$0xff]
  %v4202 = vld [vmem:[%s3 + $0xa8] sm:$0xff]
  %v4203 = vld [vmem:[%s3 + $0xb0] sm:$0xff]
  %v4204 = vld [vmem:[%s3 + $0xb8] sm:$0xff]
  %v4205 = vld [vmem:[%s3 + $0xc0] sm:$0xff]
  %v4206 = vld [vmem:[%s3 + $0xc8] sm:$0xff]
  %v4207 = vld [vmem:[%s3 + $0xd0] sm:$0xff]
  %v4208 = vld [vmem:[%s3 + $0xd8] sm:$0xff]
  %v4209 = vld [vmem:[%s3 + $0xe0] sm:$0xff]
  %v4210 = vld [vmem:[%s3 + $0xe8] sm:$0xff]
  %v4211 = vld [vmem:[%s3 + $0xf0] sm:$0xff]
  %v4212 = vld [vmem:[%s3 + $0xf8] sm:$0xff]
  %v4245 = vunpack.c.l.b16 %v4181
  %v4246 = vunpack.c.h.b16 %v4181
  %v4247 = vunpack.c.l.b16 %v4182
  %v4248 = vunpack.c.h.b16 %v4182
  %v4249 = vunpack.c.l.b16 %v4183
  %v4250 = vunpack.c.h.b16 %v4183
  %v4251 = vunpack.c.l.b16 %v4184
  %v4252 = vunpack.c.h.b16 %v4184
  %v4253 = vunpack.c.l.b16 %v4185
  %v4254 = vunpack.c.h.b16 %v4185
  %v4255 = vunpack.c.l.b16 %v4186
  %v4256 = vunpack.c.h.b16 %v4186
  %v4257 = vunpack.c.l.b16 %v4187
  %v4258 = vunpack.c.h.b16 %v4187
  %v4259 = vunpack.c.l.b16 %v4188
  %v4260 = vunpack.c.h.b16 %v4188
  %v4261 = vunpack.c.l.b16 %v4189
  %v4262 = vunpack.c.h.b16 %v4189
  %v4263 = vunpack.c.l.b16 %v4190
  %v4264 = vunpack.c.h.b16 %v4190
  %v4265 = vunpack.c.l.b16 %v4191
  %v4266 = vunpack.c.h.b16 %v4191
  %v4267 = vunpack.c.l.b16 %v4192
  %v4268 = vunpack.c.h.b16 %v4192
  %v4269 = vunpack.c.l.b16 %v4193
  %v4270 = vunpack.c.h.b16 %v4193
  %v4271 = vunpack.c.l.b16 %v4194
  %v4272 = vunpack.c.h.b16 %v4194
  %v4273 = vunpack.c.l.b16 %v4195
  %v4274 = vunpack.c.h.b16 %v4195
  %v4275 = vunpack.c.l.b16 %v4196
  %v4276 = vunpack.c.h.b16 %v4196
  %v4277 = vunpack.c.l.b16 %v4197
  %v4278 = vunpack.c.h.b16 %v4197
  %v4279 = vunpack.c.l.b16 %v4198
  %v4280 = vunpack.c.h.b16 %v4198
  %v4281 = vunpack.c.l.b16 %v4199
  %v4282 = vunpack.c.h.b16 %v4199
  %v4283 = vunpack.c.l.b16 %v4200
  %v4284 = vunpack.c.h.b16 %v4200
  %v4285 = vunpack.c.l.b16 %v4201
  %v4286 = vunpack.c.h.b16 %v4201
  %v4287 = vunpack.c.l.b16 %v4202
  %v4288 = vunpack.c.h.b16 %v4202
  %v4289 = vunpack.c.l.b16 %v4203
  %v4290 = vunpack.c.h.b16 %v4203
  %v4291 = vunpack.c.l.b16 %v4204
  %v4292 = vunpack.c.h.b16 %v4204
  %v4293 = vunpack.c.l.b16 %v4205
  %v4294 = vunpack.c.h.b16 %v4205
  %v4295 = vunpack.c.l.b16 %v4206
  %v4296 = vunpack.c.h.b16 %v4206
  %v4297 = vunpack.c.l.b16 %v4207
  %v4298 = vunpack.c.h.b16 %v4207
  %v4299 = vunpack.c.l.b16 %v4208
  %v4300 = vunpack.c.h.b16 %v4208
  %v4301 = vunpack.c.l.b16 %v4209
  %v4302 = vunpack.c.h.b16 %v4209
  %v4303 = vunpack.c.l.b16 %v4210
  %v4304 = vunpack.c.h.b16 %v4210
  %v4305 = vunpack.c.l.b16 %v4211
  %v4306 = vunpack.c.h.b16 %v4211
  %v4307 = vunpack.c.l.b16 %v4212
  %v4308 = vunpack.c.h.b16 %v4212
  %v4309 = vpack.c.b16 %v4249, %v4245
  %v4310 = vpack.c.b16 %v4250, %v4246
  %v4311 = vpack.c.b16 %v4251, %v4247
  %v4312 = vpack.c.b16 %v4252, %v4248
  %v4313 = vpack.c.b16 %v4257, %v4253
  %v4314 = vpack.c.b16 %v4258, %v4254
  %v4315 = vpack.c.b16 %v4259, %v4255
  %v4316 = vpack.c.b16 %v4260, %v4256
  %v4317 = vpack.c.b16 %v4265, %v4261
  %v4318 = vpack.c.b16 %v4266, %v4262
  %v4319 = vpack.c.b16 %v4267, %v4263
  %v4320 = vpack.c.b16 %v4268, %v4264
  %v4321 = vpack.c.b16 %v4273, %v4269
  %v4322 = vpack.c.b16 %v4274, %v4270
  %v4323 = vpack.c.b16 %v4275, %v4271
  %v4324 = vpack.c.b16 %v4276, %v4272
  %v4325 = vpack.c.b16 %v4281, %v4277
  %v4326 = vpack.c.b16 %v4282, %v4278
  %v4327 = vpack.c.b16 %v4283, %v4279
  %v4328 = vpack.c.b16 %v4284, %v4280
  %v4329 = vpack.c.b16 %v4289, %v4285
  %v4330 = vpack.c.b16 %v4290, %v4286
  %v4331 = vpack.c.b16 %v4291, %v4287
  %v4332 = vpack.c.b16 %v4292, %v4288
  %v4333 = vpack.c.b16 %v4297, %v4293
  %v4334 = vpack.c.b16 %v4298, %v4294
  %v4335 = vpack.c.b16 %v4299, %v4295
  %v4336 = vpack.c.b16 %v4300, %v4296
  %v4337 = vpack.c.b16 %v4305, %v4301
  %v4338 = vpack.c.b16 %v4306, %v4302
  %v4339 = vpack.c.b16 %v4307, %v4303
  %v4340 = vpack.c.b16 %v4308, %v4304
  %4373 = vmatpush.bf16.msra.mxu0 %v4337
  %4374 = vmatpush.bf16.msra.mxu0 %v4333
  %4375 = vmatpush.bf16.msra.mxu0 %v4329
  %4376 = vmatpush.bf16.msra.mxu0 %v4325
  %4377 = vmatpush.bf16.msra.mxu0 %v4321
  %4378 = vmatpush.bf16.msra.mxu0 %v4317
  %4379 = vmatpush.bf16.msra.mxu0 %v4313
  %4380 = vmatpush.bf16.msra.mxu0 %v4309
  %4381 = vmatmul.bf16.gmra.mxu0 %v4173
  %v4382 = vpop.f32.mrf.mxu0
  %v4383 = vadd.f32 0.0, %v4382
  %v4384 = vpop.f32.mrf.mxu0
  %4385 = vdwg.mxu0
  %4386 = vmatpush.bf16.msra.mxu0 %v4338
  %4387 = vmatpush.bf16.msra.mxu0 %v4334
  %4388 = vmatpush.bf16.msra.mxu0 %v4330
  %4389 = vmatpush.bf16.msra.mxu0 %v4326
  %4390 = vmatpush.bf16.msra.mxu0 %v4322
  %4391 = vmatpush.bf16.msra.mxu0 %v4318
  %4392 = vmatpush.bf16.msra.mxu0 %v4314
  %4393 = vmatpush.bf16.msra.mxu0 %v4310
  %4394 = vmatmul.bf16.gmra.mxu0 %v4173
  %v4395 = vpop.f32.mrf.mxu0
  %v4396 = vadd.f32 0.0, %v4395
  %v4397 = vpop.f32.mrf.mxu0
  %4398 = vdwg.mxu0
  %4399 = vmatpush.bf16.msra.mxu0 %v4339
  %4400 = vmatpush.bf16.msra.mxu0 %v4335
  %4401 = vmatpush.bf16.msra.mxu0 %v4331
  %4402 = vmatpush.bf16.msra.mxu0 %v4327
  %4403 = vmatpush.bf16.msra.mxu0 %v4323
  %4404 = vmatpush.bf16.msra.mxu0 %v4319
  %4405 = vmatpush.bf16.msra.mxu0 %v4315
  %4406 = vmatpush.bf16.msra.mxu0 %v4311
  %4407 = vmatmul.bf16.gmra.mxu0 %v4173
  %v4408 = vpop.f32.mrf.mxu0
  %v4409 = vadd.f32 0.0, %v4408
  %v4410 = vpop.f32.mrf.mxu0
  %4411 = vdwg.mxu0
  %4412 = vmatpush.bf16.msra.mxu0 %v4340
  %4413 = vmatpush.bf16.msra.mxu0 %v4336
  %4414 = vmatpush.bf16.msra.mxu0 %v4332
  %4415 = vmatpush.bf16.msra.mxu0 %v4328
  %4416 = vmatpush.bf16.msra.mxu0 %v4324
  %4417 = vmatpush.bf16.msra.mxu0 %v4320
  %4418 = vmatpush.bf16.msra.mxu0 %v4316
  %4419 = vmatpush.bf16.msra.mxu0 %v4312
  %4420 = vmatmul.bf16.gmra.mxu0 %v4173
  %v4421 = vpop.f32.mrf.mxu0
  %v4422 = vadd.f32 0.0, %v4421
  %v4423 = vpop.f32.mrf.mxu0
  %4424 = vdwg.mxu0
  %v4425 = vadd.f32 %v4177, %v4383
  %v4426 = vadd.f32 %v4178, %v4396
  %v4427 = vadd.f32 %v4179, %v4409
  %v4428 = vadd.f32 %v4180, %v4422
  %v4429 = vxor.u32 %v4425, 2147483648
  %v4430 = vxor.u32 %v4426, 2147483648
  %v4431 = vxor.u32 %v4427, 2147483648
  %v4432 = vmul.f32 %v4429, 1.442695
  %v4433 = vpow.pop %v4432
  %v4434 = vmul.f32 %v4430, 1.442695
  %v4435 = vpow.pop %v4434
  %v4436 = vmul.f32 %v4431, 1.442695
  %v4437 = vpow.pop %v4436
  %v4438 = vadd.f32 %v4433, 1.0
  %v4439 = vadd.f32 %v4435, 1.0
  %v4440 = vadd.f32 %v4437, 1.0
  %v4441 = vrcp.pop %v4438
  %v4442 = vmul.f32 %v4438, %v4441
  %v4443 = vsub.f32 1.0, %v4442
  %v4444 = vmul.f32 %v4441, %v4443
  %v4445 = vadd.f32 %v4441, %v4444
  %vm4446 = vweird.f32 %v4438
  %vm4447 = vweird.f32 %v4441
  %vm4448 = vmor %vm4446, %vm4447
  %v4449 = vsel %vm4448, %v4441, %v4445
  %v4450 = vand.u32 2147483647, %v4438
  %vm4451 = vcmp.eq.f32.partialorder %v4450, 8.507059e+37
  %v4452 = vand.u32 %v4438, 2147483648
  %v4453 = vor.u32 1.1754944e-38, %v4452
  %v4454 = vsel %vm4451, %v4453, %v4449
  %v4455 = vmul.f32 1.0, %v4454
  %v4456 = vrcp.pop %v4439
  %v4457 = vmul.f32 %v4439, %v4456
  %v4458 = vsub.f32 1.0, %v4457
  %v4459 = vmul.f32 %v4456, %v4458
  %v4460 = vadd.f32 %v4456, %v4459
  %vm4461 = vweird.f32 %v4439
  %vm4462 = vweird.f32 %v4456
  %vm4463 = vmor %vm4461, %vm4462
  %v4464 = vsel %vm4463, %v4456, %v4460
  %v4465 = vand.u32 2147483647, %v4439
  %vm4466 = vcmp.eq.f32.partialorder %v4465, 8.507059e+37
  %v4467 = vand.u32 %v4439, 2147483648
  %v4468 = vor.u32 1.1754944e-38, %v4467
  %v4469 = vsel %vm4466, %v4468, %v4464
  %v4470 = vmul.f32 1.0, %v4469
  %v4471 = vrcp.pop %v4440
  %v4472 = vmul.f32 %v4440, %v4471
  %v4473 = vsub.f32 1.0, %v4472
  %v4474 = vmul.f32 %v4471, %v4473
  %v4475 = vadd.f32 %v4471, %v4474
  %vm4476 = vweird.f32 %v4440
  %vm4477 = vweird.f32 %v4471
  %vm4478 = vmor %vm4476, %vm4477
  %v4479 = vsel %vm4478, %v4471, %v4475
  %v4480 = vand.u32 2147483647, %v4440
  %vm4481 = vcmp.eq.f32.partialorder %v4480, 8.507059e+37
  %v4482 = vand.u32 %v4440, 2147483648
  %v4483 = vor.u32 1.1754944e-38, %v4482
  %v4484 = vsel %vm4481, %v4483, %v4479
  %v4485 = vmul.f32 1.0, %v4484
  %v4486 = vtanh.pop %v4428
  %v4487 = vmul.f32 %v4470, %v4170
  %v4488 = vmul.f32 %v4455, %v4486
  %v4489 = vadd.f32 %v4487, %v4488
  %v4490 = vtanh.pop %v4489
  %v4491 = vmul.f32 %v4485, %v4490
  %v4492 = vpack.c.bf16 %v4491, %v4491
  %s4493 = scalar_lea.vmem %s4, 52
  %4494 = vst [vmem:[%s4493] sm:$0xf] %v4492
  %s4495 = scalar_lea.vmem %s0, 448
  %v4496 = vld [vmem:[%s4495] sm:$0xff]
  %v4497 = vld [vmem:[%s4495 + $0x8] sm:$0xff]
  %v4498 = vld [vmem:[%s4495 + $0x10] sm:$0xff]
  %v4499 = vld [vmem:[%s4495 + $0x18] sm:$0xff]
  %v4500 = vld [vmem:[%s3] sm:$0xff]
  %v4501 = vld [vmem:[%s3 + $0x8] sm:$0xff]
  %v4502 = vld [vmem:[%s3 + $0x10] sm:$0xff]
  %v4503 = vld [vmem:[%s3 + $0x18] sm:$0xff]
  %v4504 = vld [vmem:[%s3 + $0x20] sm:$0xff]
  %v4505 = vld [vmem:[%s3 + $0x28] sm:$0xff]
  %v4506 = vld [vmem:[%s3 + $0x30] sm:$0xff]
  %v4507 = vld [vmem:[%s3 + $0x38] sm:$0xff]
  %v4508 = vld [vmem:[%s3 + $0x40] sm:$0xff]
  %v4509 = vld [vmem:[%s3 + $0x48] sm:$0xff]
  %v4510 = vld [vmem:[%s3 + $0x50] sm:$0xff]
  %v4511 = vld [vmem:[%s3 + $0x58] sm:$0xff]
  %v4512 = vld [vmem:[%s3 + $0x60] sm:$0xff]
  %v4513 = vld [vmem:[%s3 + $0x68] sm:$0xff]
  %v4514 = vld [vmem:[%s3 + $0x70] sm:$0xff]
  %v4515 = vld [vmem:[%s3 + $0x78] sm:$0xff]
  %v4516 = vld [vmem:[%s3 + $0x80] sm:$0xff]
  %v4517 = vld [vmem:[%s3 + $0x88] sm:$0xff]
  %v4518 = vld [vmem:[%s3 + $0x90] sm:$0xff]
  %v4519 = vld [vmem:[%s3 + $0x98] sm:$0xff]
  %v4520 = vld [vmem:[%s3 + $0xa0] sm:$0xff]
  %v4521 = vld [vmem:[%s3 + $0xa8] sm:$0xff]
  %v4522 = vld [vmem:[%s3 + $0xb0] sm:$0xff]
  %v4523 = vld [vmem:[%s3 + $0xb8] sm:$0xff]
  %v4524 = vld [vmem:[%s3 + $0xc0] sm:$0xff]
  %v4525 = vld [vmem:[%s3 + $0xc8] sm:$0xff]
  %v4526 = vld [vmem:[%s3 + $0xd0] sm:$0xff]
  %v4527 = vld [vmem:[%s3 + $0xd8] sm:$0xff]
  %v4528 = vld [vmem:[%s3 + $0xe0] sm:$0xff]
  %v4529 = vld [vmem:[%s3 + $0xe8] sm:$0xff]
  %v4530 = vld [vmem:[%s3 + $0xf0] sm:$0xff]
  %v4531 = vld [vmem:[%s3 + $0xf8] sm:$0xff]
  %v4564 = vunpack.c.l.b16 %v4500
  %v4565 = vunpack.c.h.b16 %v4500
  %v4566 = vunpack.c.l.b16 %v4501
  %v4567 = vunpack.c.h.b16 %v4501
  %v4568 = vunpack.c.l.b16 %v4502
  %v4569 = vunpack.c.h.b16 %v4502
  %v4570 = vunpack.c.l.b16 %v4503
  %v4571 = vunpack.c.h.b16 %v4503
  %v4572 = vunpack.c.l.b16 %v4504
  %v4573 = vunpack.c.h.b16 %v4504
  %v4574 = vunpack.c.l.b16 %v4505
  %v4575 = vunpack.c.h.b16 %v4505
  %v4576 = vunpack.c.l.b16 %v4506
  %v4577 = vunpack.c.h.b16 %v4506
  %v4578 = vunpack.c.l.b16 %v4507
  %v4579 = vunpack.c.h.b16 %v4507
  %v4580 = vunpack.c.l.b16 %v4508
  %v4581 = vunpack.c.h.b16 %v4508
  %v4582 = vunpack.c.l.b16 %v4509
  %v4583 = vunpack.c.h.b16 %v4509
  %v4584 = vunpack.c.l.b16 %v4510
  %v4585 = vunpack.c.h.b16 %v4510
  %v4586 = vunpack.c.l.b16 %v4511
  %v4587 = vunpack.c.h.b16 %v4511
  %v4588 = vunpack.c.l.b16 %v4512
  %v4589 = vunpack.c.h.b16 %v4512
  %v4590 = vunpack.c.l.b16 %v4513
  %v4591 = vunpack.c.h.b16 %v4513
  %v4592 = vunpack.c.l.b16 %v4514
  %v4593 = vunpack.c.h.b16 %v4514
  %v4594 = vunpack.c.l.b16 %v4515
  %v4595 = vunpack.c.h.b16 %v4515
  %v4596 = vunpack.c.l.b16 %v4516
  %v4597 = vunpack.c.h.b16 %v4516
  %v4598 = vunpack.c.l.b16 %v4517
  %v4599 = vunpack.c.h.b16 %v4517
  %v4600 = vunpack.c.l.b16 %v4518
  %v4601 = vunpack.c.h.b16 %v4518
  %v4602 = vunpack.c.l.b16 %v4519
  %v4603 = vunpack.c.h.b16 %v4519
  %v4604 = vunpack.c.l.b16 %v4520
  %v4605 = vunpack.c.h.b16 %v4520
  %v4606 = vunpack.c.l.b16 %v4521
  %v4607 = vunpack.c.h.b16 %v4521
  %v4608 = vunpack.c.l.b16 %v4522
  %v4609 = vunpack.c.h.b16 %v4522
  %v4610 = vunpack.c.l.b16 %v4523
  %v4611 = vunpack.c.h.b16 %v4523
  %v4612 = vunpack.c.l.b16 %v4524
  %v4613 = vunpack.c.h.b16 %v4524
  %v4614 = vunpack.c.l.b16 %v4525
  %v4615 = vunpack.c.h.b16 %v4525
  %v4616 = vunpack.c.l.b16 %v4526
  %v4617 = vunpack.c.h.b16 %v4526
  %v4618 = vunpack.c.l.b16 %v4527
  %v4619 = vunpack.c.h.b16 %v4527
  %v4620 = vunpack.c.l.b16 %v4528
  %v4621 = vunpack.c.h.b16 %v4528
  %v4622 = vunpack.c.l.b16 %v4529
  %v4623 = vunpack.c.h.b16 %v4529
  %v4624 = vunpack.c.l.b16 %v4530
  %v4625 = vunpack.c.h.b16 %v4530
  %v4626 = vunpack.c.l.b16 %v4531
  %v4627 = vunpack.c.h.b16 %v4531
  %v4628 = vpack.c.b16 %v4568, %v4564
  %v4629 = vpack.c.b16 %v4569, %v4565
  %v4630 = vpack.c.b16 %v4570, %v4566
  %v4631 = vpack.c.b16 %v4571, %v4567
  %v4632 = vpack.c.b16 %v4576, %v4572
  %v4633 = vpack.c.b16 %v4577, %v4573
  %v4634 = vpack.c.b16 %v4578, %v4574
  %v4635 = vpack.c.b16 %v4579, %v4575
  %v4636 = vpack.c.b16 %v4584, %v4580
  %v4637 = vpack.c.b16 %v4585, %v4581
  %v4638 = vpack.c.b16 %v4586, %v4582
  %v4639 = vpack.c.b16 %v4587, %v4583
  %v4640 = vpack.c.b16 %v4592, %v4588
  %v4641 = vpack.c.b16 %v4593, %v4589
  %v4642 = vpack.c.b16 %v4594, %v4590
  %v4643 = vpack.c.b16 %v4595, %v4591
  %v4644 = vpack.c.b16 %v4600, %v4596
  %v4645 = vpack.c.b16 %v4601, %v4597
  %v4646 = vpack.c.b16 %v4602, %v4598
  %v4647 = vpack.c.b16 %v4603, %v4599
  %v4648 = vpack.c.b16 %v4608, %v4604
  %v4649 = vpack.c.b16 %v4609, %v4605
  %v4650 = vpack.c.b16 %v4610, %v4606
  %v4651 = vpack.c.b16 %v4611, %v4607
  %v4652 = vpack.c.b16 %v4616, %v4612
  %v4653 = vpack.c.b16 %v4617, %v4613
  %v4654 = vpack.c.b16 %v4618, %v4614
  %v4655 = vpack.c.b16 %v4619, %v4615
  %v4656 = vpack.c.b16 %v4624, %v4620
  %v4657 = vpack.c.b16 %v4625, %v4621
  %v4658 = vpack.c.b16 %v4626, %v4622
  %v4659 = vpack.c.b16 %v4627, %v4623
  %4692 = vmatpush.bf16.msra.mxu0 %v4656
  %4693 = vmatpush.bf16.msra.mxu0 %v4652
  %4694 = vmatpush.bf16.msra.mxu0 %v4648
  %4695 = vmatpush.bf16.msra.mxu0 %v4644
  %4696 = vmatpush.bf16.msra.mxu0 %v4640
  %4697 = vmatpush.bf16.msra.mxu0 %v4636
  %4698 = vmatpush.bf16.msra.mxu0 %v4632
  %4699 = vmatpush.bf16.msra.mxu0 %v4628
  %4700 = vmatmul.bf16.gmra.mxu0 %v4492
  %v4701 = vpop.f32.mrf.mxu0
  %v4702 = vadd.f32 0.0, %v4701
  %v4703 = vpop.f32.mrf.mxu0
  %4704 = vdwg.mxu0
  %4705 = vmatpush.bf16.msra.mxu0 %v4657
  %4706 = vmatpush.bf16.msra.mxu0 %v4653
  %4707 = vmatpush.bf16.msra.mxu0 %v4649
  %4708 = vmatpush.bf16.msra.mxu0 %v4645
  %4709 = vmatpush.bf16.msra.mxu0 %v4641
  %4710 = vmatpush.bf16.msra.mxu0 %v4637
  %4711 = vmatpush.bf16.msra.mxu0 %v4633
  %4712 = vmatpush.bf16.msra.mxu0 %v4629
  %4713 = vmatmul.bf16.gmra.mxu0 %v4492
  %v4714 = vpop.f32.mrf.mxu0
  %v4715 = vadd.f32 0.0, %v4714
  %v4716 = vpop.f32.mrf.mxu0
  %4717 = vdwg.mxu0
  %4718 = vmatpush.bf16.msra.mxu0 %v4658
  %4719 = vmatpush.bf16.msra.mxu0 %v4654
  %4720 = vmatpush.bf16.msra.mxu0 %v4650
  %4721 = vmatpush.bf16.msra.mxu0 %v4646
  %4722 = vmatpush.bf16.msra.mxu0 %v4642
  %4723 = vmatpush.bf16.msra.mxu0 %v4638
  %4724 = vmatpush.bf16.msra.mxu0 %v4634
  %4725 = vmatpush.bf16.msra.mxu0 %v4630
  %4726 = vmatmul.bf16.gmra.mxu0 %v4492
  %v4727 = vpop.f32.mrf.mxu0
  %v4728 = vadd.f32 0.0, %v4727
  %v4729 = vpop.f32.mrf.mxu0
  %4730 = vdwg.mxu0
  %4731 = vmatpush.bf16.msra.mxu0 %v4659
  %4732 = vmatpush.bf16.msra.mxu0 %v4655
  %4733 = vmatpush.bf16.msra.mxu0 %v4651
  %4734 = vmatpush.bf16.msra.mxu0 %v4647
  %4735 = vmatpush.bf16.msra.mxu0 %v4643
  %4736 = vmatpush.bf16.msra.mxu0 %v4639
  %4737 = vmatpush.bf16.msra.mxu0 %v4635
  %4738 = vmatpush.bf16.msra.mxu0 %v4631
  %4739 = vmatmul.bf16.gmra.mxu0 %v4492
  %v4740 = vpop.f32.mrf.mxu0
  %v4741 = vadd.f32 0.0, %v4740
  %v4742 = vpop.f32.mrf.mxu0
  %4743 = vdwg.mxu0
  %v4744 = vadd.f32 %v4496, %v4702
  %v4745 = vadd.f32 %v4497, %v4715
  %v4746 = vadd.f32 %v4498, %v4728
  %v4747 = vadd.f32 %v4499, %v4741
  %v4748 = vxor.u32 %v4744, 2147483648
  %v4749 = vxor.u32 %v4745, 2147483648
  %v4750 = vxor.u32 %v4746, 2147483648
  %v4751 = vmul.f32 %v4748, 1.442695
  %v4752 = vpow.pop %v4751
  %v4753 = vmul.f32 %v4749, 1.442695
  %v4754 = vpow.pop %v4753
  %v4755 = vmul.f32 %v4750, 1.442695
  %v4756 = vpow.pop %v4755
  %v4757 = vadd.f32 %v4752, 1.0
  %v4758 = vadd.f32 %v4754, 1.0
  %v4759 = vadd.f32 %v4756, 1.0
  %v4760 = vrcp.pop %v4757
  %v4761 = vmul.f32 %v4757, %v4760
  %v4762 = vsub.f32 1.0, %v4761
  %v4763 = vmul.f32 %v4760, %v4762
  %v4764 = vadd.f32 %v4760, %v4763
  %vm4765 = vweird.f32 %v4757
  %vm4766 = vweird.f32 %v4760
  %vm4767 = vmor %vm4765, %vm4766
  %v4768 = vsel %vm4767, %v4760, %v4764
  %v4769 = vand.u32 2147483647, %v4757
  %vm4770 = vcmp.eq.f32.partialorder %v4769, 8.507059e+37
  %v4771 = vand.u32 %v4757, 2147483648
  %v4772 = vor.u32 1.1754944e-38, %v4771
  %v4773 = vsel %vm4770, %v4772, %v4768
  %v4774 = vmul.f32 1.0, %v4773
  %v4775 = vrcp.pop %v4758
  %v4776 = vmul.f32 %v4758, %v4775
  %v4777 = vsub.f32 1.0, %v4776
  %v4778 = vmul.f32 %v4775, %v4777
  %v4779 = vadd.f32 %v4775, %v4778
  %vm4780 = vweird.f32 %v4758
  %vm4781 = vweird.f32 %v4775
  %vm4782 = vmor %vm4780, %vm4781
  %v4783 = vsel %vm4782, %v4775, %v4779
  %v4784 = vand.u32 2147483647, %v4758
  %vm4785 = vcmp.eq.f32.partialorder %v4784, 8.507059e+37
  %v4786 = vand.u32 %v4758, 2147483648
  %v4787 = vor.u32 1.1754944e-38, %v4786
  %v4788 = vsel %vm4785, %v4787, %v4783
  %v4789 = vmul.f32 1.0, %v4788
  %v4790 = vrcp.pop %v4759
  %v4791 = vmul.f32 %v4759, %v4790
  %v4792 = vsub.f32 1.0, %v4791
  %v4793 = vmul.f32 %v4790, %v4792
  %v4794 = vadd.f32 %v4790, %v4793
  %vm4795 = vweird.f32 %v4759
  %vm4796 = vweird.f32 %v4790
  %vm4797 = vmor %vm4795, %vm4796
  %v4798 = vsel %vm4797, %v4790, %v4794
  %v4799 = vand.u32 2147483647, %v4759
  %vm4800 = vcmp.eq.f32.partialorder %v4799, 8.507059e+37
  %v4801 = vand.u32 %v4759, 2147483648
  %v4802 = vor.u32 1.1754944e-38, %v4801
  %v4803 = vsel %vm4800, %v4802, %v4798
  %v4804 = vmul.f32 1.0, %v4803
  %v4805 = vtanh.pop %v4747
  %v4806 = vmul.f32 %v4789, %v4489
  %v4807 = vmul.f32 %v4774, %v4805
  %v4808 = vadd.f32 %v4806, %v4807
  %v4809 = vtanh.pop %v4808
  %v4810 = vmul.f32 %v4804, %v4809
  %v4811 = vpack.c.bf16 %v4810, %v4810
  %s4812 = scalar_lea.vmem %s4, 56
  %4813 = vst [vmem:[%s4812] sm:$0xf] %v4811
  %s4814 = scalar_lea.vmem %s0, 480
  %v4815 = vld [vmem:[%s4814] sm:$0xff]
  %v4816 = vld [vmem:[%s4814 + $0x8] sm:$0xff]
  %v4817 = vld [vmem:[%s4814 + $0x10] sm:$0xff]
  %v4818 = vld [vmem:[%s4814 + $0x18] sm:$0xff]
  %v4819 = vld [vmem:[%s3] sm:$0xff]
  %v4820 = vld [vmem:[%s3 + $0x8] sm:$0xff]
  %v4821 = vld [vmem:[%s3 + $0x10] sm:$0xff]
  %v4822 = vld [vmem:[%s3 + $0x18] sm:$0xff]
  %v4823 = vld [vmem:[%s3 + $0x20] sm:$0xff]
  %v4824 = vld [vmem:[%s3 + $0x28] sm:$0xff]
  %v4825 = vld [vmem:[%s3 + $0x30] sm:$0xff]
  %v4826 = vld [vmem:[%s3 + $0x38] sm:$0xff]
  %v4827 = vld [vmem:[%s3 + $0x40] sm:$0xff]
  %v4828 = vld [vmem:[%s3 + $0x48] sm:$0xff]
  %v4829 = vld [vmem:[%s3 + $0x50] sm:$0xff]
  %v4830 = vld [vmem:[%s3 + $0x58] sm:$0xff]
  %v4831 = vld [vmem:[%s3 + $0x60] sm:$0xff]
  %v4832 = vld [vmem:[%s3 + $0x68] sm:$0xff]
  %v4833 = vld [vmem:[%s3 + $0x70] sm:$0xff]
  %v4834 = vld [vmem:[%s3 + $0x78] sm:$0xff]
  %v4835 = vld [vmem:[%s3 + $0x80] sm:$0xff]
  %v4836 = vld [vmem:[%s3 + $0x88] sm:$0xff]
  %v4837 = vld [vmem:[%s3 + $0x90] sm:$0xff]
  %v4838 = vld [vmem:[%s3 + $0x98] sm:$0xff]
  %v4839 = vld [vmem:[%s3 + $0xa0] sm:$0xff]
  %v4840 = vld [vmem:[%s3 + $0xa8] sm:$0xff]
  %v4841 = vld [vmem:[%s3 + $0xb0] sm:$0xff]
  %v4842 = vld [vmem:[%s3 + $0xb8] sm:$0xff]
  %v4843 = vld [vmem:[%s3 + $0xc0] sm:$0xff]
  %v4844 = vld [vmem:[%s3 + $0xc8] sm:$0xff]
  %v4845 = vld [vmem:[%s3 + $0xd0] sm:$0xff]
  %v4846 = vld [vmem:[%s3 + $0xd8] sm:$0xff]
  %v4847 = vld [vmem:[%s3 + $0xe0] sm:$0xff]
  %v4848 = vld [vmem:[%s3 + $0xe8] sm:$0xff]
  %v4849 = vld [vmem:[%s3 + $0xf0] sm:$0xff]
  %v4850 = vld [vmem:[%s3 + $0xf8] sm:$0xff]
  %v4883 = vunpack.c.l.b16 %v4819
  %v4884 = vunpack.c.h.b16 %v4819
  %v4885 = vunpack.c.l.b16 %v4820
  %v4886 = vunpack.c.h.b16 %v4820
  %v4887 = vunpack.c.l.b16 %v4821
  %v4888 = vunpack.c.h.b16 %v4821
  %v4889 = vunpack.c.l.b16 %v4822
  %v4890 = vunpack.c.h.b16 %v4822
  %v4891 = vunpack.c.l.b16 %v4823
  %v4892 = vunpack.c.h.b16 %v4823
  %v4893 = vunpack.c.l.b16 %v4824
  %v4894 = vunpack.c.h.b16 %v4824
  %v4895 = vunpack.c.l.b16 %v4825
  %v4896 = vunpack.c.h.b16 %v4825
  %v4897 = vunpack.c.l.b16 %v4826
  %v4898 = vunpack.c.h.b16 %v4826
  %v4899 = vunpack.c.l.b16 %v4827
  %v4900 = vunpack.c.h.b16 %v4827
  %v4901 = vunpack.c.l.b16 %v4828
  %v4902 = vunpack.c.h.b16 %v4828
  %v4903 = vunpack.c.l.b16 %v4829
  %v4904 = vunpack.c.h.b16 %v4829
  %v4905 = vunpack.c.l.b16 %v4830
  %v4906 = vunpack.c.h.b16 %v4830
  %v4907 = vunpack.c.l.b16 %v4831
  %v4908 = vunpack.c.h.b16 %v4831
  %v4909 = vunpack.c.l.b16 %v4832
  %v4910 = vunpack.c.h.b16 %v4832
  %v4911 = vunpack.c.l.b16 %v4833
  %v4912 = vunpack.c.h.b16 %v4833
  %v4913 = vunpack.c.l.b16 %v4834
  %v4914 = vunpack.c.h.b16 %v4834
  %v4915 = vunpack.c.l.b16 %v4835
  %v4916 = vunpack.c.h.b16 %v4835
  %v4917 = vunpack.c.l.b16 %v4836
  %v4918 = vunpack.c.h.b16 %v4836
  %v4919 = vunpack.c.l.b16 %v4837
  %v4920 = vunpack.c.h.b16 %v4837
  %v4921 = vunpack.c.l.b16 %v4838
  %v4922 = vunpack.c.h.b16 %v4838
  %v4923 = vunpack.c.l.b16 %v4839
  %v4924 = vunpack.c.h.b16 %v4839
  %v4925 = vunpack.c.l.b16 %v4840
  %v4926 = vunpack.c.h.b16 %v4840
  %v4927 = vunpack.c.l.b16 %v4841
  %v4928 = vunpack.c.h.b16 %v4841
  %v4929 = vunpack.c.l.b16 %v4842
  %v4930 = vunpack.c.h.b16 %v4842
  %v4931 = vunpack.c.l.b16 %v4843
  %v4932 = vunpack.c.h.b16 %v4843
  %v4933 = vunpack.c.l.b16 %v4844
  %v4934 = vunpack.c.h.b16 %v4844
  %v4935 = vunpack.c.l.b16 %v4845
  %v4936 = vunpack.c.h.b16 %v4845
  %v4937 = vunpack.c.l.b16 %v4846
  %v4938 = vunpack.c.h.b16 %v4846
  %v4939 = vunpack.c.l.b16 %v4847
  %v4940 = vunpack.c.h.b16 %v4847
  %v4941 = vunpack.c.l.b16 %v4848
  %v4942 = vunpack.c.h.b16 %v4848
  %v4943 = vunpack.c.l.b16 %v4849
  %v4944 = vunpack.c.h.b16 %v4849
  %v4945 = vunpack.c.l.b16 %v4850
  %v4946 = vunpack.c.h.b16 %v4850
  %v4947 = vpack.c.b16 %v4887, %v4883
  %v4948 = vpack.c.b16 %v4888, %v4884
  %v4949 = vpack.c.b16 %v4889, %v4885
  %v4950 = vpack.c.b16 %v4890, %v4886
  %v4951 = vpack.c.b16 %v4895, %v4891
  %v4952 = vpack.c.b16 %v4896, %v4892
  %v4953 = vpack.c.b16 %v4897, %v4893
  %v4954 = vpack.c.b16 %v4898, %v4894
  %v4955 = vpack.c.b16 %v4903, %v4899
  %v4956 = vpack.c.b16 %v4904, %v4900
  %v4957 = vpack.c.b16 %v4905, %v4901
  %v4958 = vpack.c.b16 %v4906, %v4902
  %v4959 = vpack.c.b16 %v4911, %v4907
  %v4960 = vpack.c.b16 %v4912, %v4908
  %v4961 = vpack.c.b16 %v4913, %v4909
  %v4962 = vpack.c.b16 %v4914, %v4910
  %v4963 = vpack.c.b16 %v4919, %v4915
  %v4964 = vpack.c.b16 %v4920, %v4916
  %v4965 = vpack.c.b16 %v4921, %v4917
  %v4966 = vpack.c.b16 %v4922, %v4918
  %v4967 = vpack.c.b16 %v4927, %v4923
  %v4968 = vpack.c.b16 %v4928, %v4924
  %v4969 = vpack.c.b16 %v4929, %v4925
  %v4970 = vpack.c.b16 %v4930, %v4926
  %v4971 = vpack.c.b16 %v4935, %v4931
  %v4972 = vpack.c.b16 %v4936, %v4932
  %v4973 = vpack.c.b16 %v4937, %v4933
  %v4974 = vpack.c.b16 %v4938, %v4934
  %v4975 = vpack.c.b16 %v4943, %v4939
  %v4976 = vpack.c.b16 %v4944, %v4940
  %v4977 = vpack.c.b16 %v4945, %v4941
  %v4978 = vpack.c.b16 %v4946, %v4942
  %5011 = vmatpush.bf16.msra.mxu0 %v4975
  %5012 = vmatpush.bf16.msra.mxu0 %v4971
  %5013 = vmatpush.bf16.msra.mxu0 %v4967
  %5014 = vmatpush.bf16.msra.mxu0 %v4963
  %5015 = vmatpush.bf16.msra.mxu0 %v4959
  %5016 = vmatpush.bf16.msra.mxu0 %v4955
  %5017 = vmatpush.bf16.msra.mxu0 %v4951
  %5018 = vmatpush.bf16.msra.mxu0 %v4947
  %5019 = vmatmul.bf16.gmra.mxu0 %v4811
  %v5020 = vpop.f32.mrf.mxu0
  %v5021 = vadd.f32 0.0, %v5020
  %v5022 = vpop.f32.mrf.mxu0
  %5023 = vdwg.mxu0
  %5024 = vmatpush.bf16.msra.mxu0 %v4976
  %5025 = vmatpush.bf16.msra.mxu0 %v4972
  %5026 = vmatpush.bf16.msra.mxu0 %v4968
  %5027 = vmatpush.bf16.msra.mxu0 %v4964
  %5028 = vmatpush.bf16.msra.mxu0 %v4960
  %5029 = vmatpush.bf16.msra.mxu0 %v4956
  %5030 = vmatpush.bf16.msra.mxu0 %v4952
  %5031 = vmatpush.bf16.msra.mxu0 %v4948
  %5032 = vmatmul.bf16.gmra.mxu0 %v4811
  %v5033 = vpop.f32.mrf.mxu0
  %v5034 = vadd.f32 0.0, %v5033
  %v5035 = vpop.f32.mrf.mxu0
  %5036 = vdwg.mxu0
  %5037 = vmatpush.bf16.msra.mxu0 %v4977
  %5038 = vmatpush.bf16.msra.mxu0 %v4973
  %5039 = vmatpush.bf16.msra.mxu0 %v4969
  %5040 = vmatpush.bf16.msra.mxu0 %v4965
  %5041 = vmatpush.bf16.msra.mxu0 %v4961
  %5042 = vmatpush.bf16.msra.mxu0 %v4957
  %5043 = vmatpush.bf16.msra.mxu0 %v4953
  %5044 = vmatpush.bf16.msra.mxu0 %v4949
  %5045 = vmatmul.bf16.gmra.mxu0 %v4811
  %v5046 = vpop.f32.mrf.mxu0
  %v5047 = vadd.f32 0.0, %v5046
  %v5048 = vpop.f32.mrf.mxu0
  %5049 = vdwg.mxu0
  %5050 = vmatpush.bf16.msra.mxu0 %v4978
  %5051 = vmatpush.bf16.msra.mxu0 %v4974
  %5052 = vmatpush.bf16.msra.mxu0 %v4970
  %5053 = vmatpush.bf16.msra.mxu0 %v4966
  %5054 = vmatpush.bf16.msra.mxu0 %v4962
  %5055 = vmatpush.bf16.msra.mxu0 %v4958
  %5056 = vmatpush.bf16.msra.mxu0 %v4954
  %5057 = vmatpush.bf16.msra.mxu0 %v4950
  %5058 = vmatmul.bf16.gmra.mxu0 %v4811
  %v5059 = vpop.f32.mrf.mxu0
  %v5060 = vadd.f32 0.0, %v5059
  %v5061 = vpop.f32.mrf.mxu0
  %5062 = vdwg.mxu0
  %v5063 = vadd.f32 %v4815, %v5021
  %v5064 = vadd.f32 %v4816, %v5034
  %v5065 = vadd.f32 %v4817, %v5047
  %v5066 = vadd.f32 %v4818, %v5060
  %v5067 = vxor.u32 %v5063, 2147483648
  %v5068 = vxor.u32 %v5064, 2147483648
  %v5069 = vxor.u32 %v5065, 2147483648
  %v5070 = vmul.f32 %v5067, 1.442695
  %v5071 = vpow.pop %v5070
  %v5072 = vmul.f32 %v5068, 1.442695
  %v5073 = vpow.pop %v5072
  %v5074 = vmul.f32 %v5069, 1.442695
  %v5075 = vpow.pop %v5074
  %v5076 = vadd.f32 %v5071, 1.0
  %v5077 = vadd.f32 %v5073, 1.0
  %v5078 = vadd.f32 %v5075, 1.0
  %v5079 = vrcp.pop %v5076
  %v5080 = vmul.f32 %v5076, %v5079
  %v5081 = vsub.f32 1.0, %v5080
  %v5082 = vmul.f32 %v5079, %v5081
  %v5083 = vadd.f32 %v5079, %v5082
  %vm5084 = vweird.f32 %v5076
  %vm5085 = vweird.f32 %v5079
  %vm5086 = vmor %vm5084, %vm5085
  %v5087 = vsel %vm5086, %v5079, %v5083
  %v5088 = vand.u32 2147483647, %v5076
  %vm5089 = vcmp.eq.f32.partialorder %v5088, 8.507059e+37
  %v5090 = vand.u32 %v5076, 2147483648
  %v5091 = vor.u32 1.1754944e-38, %v5090
  %v5092 = vsel %vm5089, %v5091, %v5087
  %v5093 = vmul.f32 1.0, %v5092
  %v5094 = vrcp.pop %v5077
  %v5095 = vmul.f32 %v5077, %v5094
  %v5096 = vsub.f32 1.0, %v5095
  %v5097 = vmul.f32 %v5094, %v5096
  %v5098 = vadd.f32 %v5094, %v5097
  %vm5099 = vweird.f32 %v5077
  %vm5100 = vweird.f32 %v5094
  %vm5101 = vmor %vm5099, %vm5100
  %v5102 = vsel %vm5101, %v5094, %v5098
  %v5103 = vand.u32 2147483647, %v5077
  %vm5104 = vcmp.eq.f32.partialorder %v5103, 8.507059e+37
  %v5105 = vand.u32 %v5077, 2147483648
  %v5106 = vor.u32 1.1754944e-38, %v5105
  %v5107 = vsel %vm5104, %v5106, %v5102
  %v5108 = vmul.f32 1.0, %v5107
  %v5109 = vrcp.pop %v5078
  %v5110 = vmul.f32 %v5078, %v5109
  %v5111 = vsub.f32 1.0, %v5110
  %v5112 = vmul.f32 %v5109, %v5111
  %v5113 = vadd.f32 %v5109, %v5112
  %vm5114 = vweird.f32 %v5078
  %vm5115 = vweird.f32 %v5109
  %vm5116 = vmor %vm5114, %vm5115
  %v5117 = vsel %vm5116, %v5109, %v5113
  %v5118 = vand.u32 2147483647, %v5078
  %vm5119 = vcmp.eq.f32.partialorder %v5118, 8.507059e+37
  %v5120 = vand.u32 %v5078, 2147483648
  %v5121 = vor.u32 1.1754944e-38, %v5120
  %v5122 = vsel %vm5119, %v5121, %v5117
  %v5123 = vmul.f32 1.0, %v5122
  %v5124 = vtanh.pop %v5066
  %v5125 = vmul.f32 %v5108, %v4808
  %v5126 = vmul.f32 %v5093, %v5124
  %v5127 = vadd.f32 %v5125, %v5126
  %v5128 = vtanh.pop %v5127
  %v5129 = vmul.f32 %v5123, %v5128
  %v5130 = vpack.c.bf16 %v5129, %v5129
  %s5131 = scalar_lea.vmem %s4, 60
  %5132 = vst [vmem:[%s5131] sm:$0xf] %v5130
  %s5133 = scalar_lea.vmem %s0, 512
  %v5134 = vld [vmem:[%s5133] sm:$0xff]
  %v5135 = vld [vmem:[%s5133 + $0x8] sm:$0xff]
  %v5136 = vld [vmem:[%s5133 + $0x10] sm:$0xff]
  %v5137 = vld [vmem:[%s5133 + $0x18] sm:$0xff]
  %v5138 = vld [vmem:[%s3] sm:$0xff]
  %v5139 = vld [vmem:[%s3 + $0x8] sm:$0xff]
  %v5140 = vld [vmem:[%s3 + $0x10] sm:$0xff]
  %v5141 = vld [vmem:[%s3 + $0x18] sm:$0xff]
  %v5142 = vld [vmem:[%s3 + $0x20] sm:$0xff]
  %v5143 = vld [vmem:[%s3 + $0x28] sm:$0xff]
  %v5144 = vld [vmem:[%s3 + $0x30] sm:$0xff]
  %v5145 = vld [vmem:[%s3 + $0x38] sm:$0xff]
  %v5146 = vld [vmem:[%s3 + $0x40] sm:$0xff]
  %v5147 = vld [vmem:[%s3 + $0x48] sm:$0xff]
  %v5148 = vld [vmem:[%s3 + $0x50] sm:$0xff]
  %v5149 = vld [vmem:[%s3 + $0x58] sm:$0xff]
  %v5150 = vld [vmem:[%s3 + $0x60] sm:$0xff]
  %v5151 = vld [vmem:[%s3 + $0x68] sm:$0xff]
  %v5152 = vld [vmem:[%s3 + $0x70] sm:$0xff]
  %v5153 = vld [vmem:[%s3 + $0x78] sm:$0xff]
  %v5154 = vld [vmem:[%s3 + $0x80] sm:$0xff]
  %v5155 = vld [vmem:[%s3 + $0x88] sm:$0xff]
  %v5156 = vld [vmem:[%s3 + $0x90] sm:$0xff]
  %v5157 = vld [vmem:[%s3 + $0x98] sm:$0xff]
  %v5158 = vld [vmem:[%s3 + $0xa0] sm:$0xff]
  %v5159 = vld [vmem:[%s3 + $0xa8] sm:$0xff]
  %v5160 = vld [vmem:[%s3 + $0xb0] sm:$0xff]
  %v5161 = vld [vmem:[%s3 + $0xb8] sm:$0xff]
  %v5162 = vld [vmem:[%s3 + $0xc0] sm:$0xff]
  %v5163 = vld [vmem:[%s3 + $0xc8] sm:$0xff]
  %v5164 = vld [vmem:[%s3 + $0xd0] sm:$0xff]
  %v5165 = vld [vmem:[%s3 + $0xd8] sm:$0xff]
  %v5166 = vld [vmem:[%s3 + $0xe0] sm:$0xff]
  %v5167 = vld [vmem:[%s3 + $0xe8] sm:$0xff]
  %v5168 = vld [vmem:[%s3 + $0xf0] sm:$0xff]
  %v5169 = vld [vmem:[%s3 + $0xf8] sm:$0xff]
  %v5202 = vunpack.c.l.b16 %v5138
  %v5203 = vunpack.c.h.b16 %v5138
  %v5204 = vunpack.c.l.b16 %v5139
  %v5205 = vunpack.c.h.b16 %v5139
  %v5206 = vunpack.c.l.b16 %v5140
  %v5207 = vunpack.c.h.b16 %v5140
  %v5208 = vunpack.c.l.b16 %v5141
  %v5209 = vunpack.c.h.b16 %v5141
  %v5210 = vunpack.c.l.b16 %v5142
  %v5211 = vunpack.c.h.b16 %v5142
  %v5212 = vunpack.c.l.b16 %v5143
  %v5213 = vunpack.c.h.b16 %v5143
  %v5214 = vunpack.c.l.b16 %v5144
  %v5215 = vunpack.c.h.b16 %v5144
  %v5216 = vunpack.c.l.b16 %v5145
  %v5217 = vunpack.c.h.b16 %v5145
  %v5218 = vunpack.c.l.b16 %v5146
  %v5219 = vunpack.c.h.b16 %v5146
  %v5220 = vunpack.c.l.b16 %v5147
  %v5221 = vunpack.c.h.b16 %v5147
  %v5222 = vunpack.c.l.b16 %v5148
  %v5223 = vunpack.c.h.b16 %v5148
  %v5224 = vunpack.c.l.b16 %v5149
  %v5225 = vunpack.c.h.b16 %v5149
  %v5226 = vunpack.c.l.b16 %v5150
  %v5227 = vunpack.c.h.b16 %v5150
  %v5228 = vunpack.c.l.b16 %v5151
  %v5229 = vunpack.c.h.b16 %v5151
  %v5230 = vunpack.c.l.b16 %v5152
  %v5231 = vunpack.c.h.b16 %v5152
  %v5232 = vunpack.c.l.b16 %v5153
  %v5233 = vunpack.c.h.b16 %v5153
  %v5234 = vunpack.c.l.b16 %v5154
  %v5235 = vunpack.c.h.b16 %v5154
  %v5236 = vunpack.c.l.b16 %v5155
  %v5237 = vunpack.c.h.b16 %v5155
  %v5238 = vunpack.c.l.b16 %v5156
  %v5239 = vunpack.c.h.b16 %v5156
  %v5240 = vunpack.c.l.b16 %v5157
  %v5241 = vunpack.c.h.b16 %v5157
  %v5242 = vunpack.c.l.b16 %v5158
  %v5243 = vunpack.c.h.b16 %v5158
  %v5244 = vunpack.c.l.b16 %v5159
  %v5245 = vunpack.c.h.b16 %v5159
  %v5246 = vunpack.c.l.b16 %v5160
  %v5247 = vunpack.c.h.b16 %v5160
  %v5248 = vunpack.c.l.b16 %v5161
  %v5249 = vunpack.c.h.b16 %v5161
  %v5250 = vunpack.c.l.b16 %v5162
  %v5251 = vunpack.c.h.b16 %v5162
  %v5252 = vunpack.c.l.b16 %v5163
  %v5253 = vunpack.c.h.b16 %v5163
  %v5254 = vunpack.c.l.b16 %v5164
  %v5255 = vunpack.c.h.b16 %v5164
  %v5256 = vunpack.c.l.b16 %v5165
  %v5257 = vunpack.c.h.b16 %v5165
  %v5258 = vunpack.c.l.b16 %v5166
  %v5259 = vunpack.c.h.b16 %v5166
  %v5260 = vunpack.c.l.b16 %v5167
  %v5261 = vunpack.c.h.b16 %v5167
  %v5262 = vunpack.c.l.b16 %v5168
  %v5263 = vunpack.c.h.b16 %v5168
  %v5264 = vunpack.c.l.b16 %v5169
  %v5265 = vunpack.c.h.b16 %v5169
  %v5266 = vpack.c.b16 %v5206, %v5202
  %v5267 = vpack.c.b16 %v5207, %v5203
  %v5268 = vpack.c.b16 %v5208, %v5204
  %v5269 = vpack.c.b16 %v5209, %v5205
  %v5270 = vpack.c.b16 %v5214, %v5210
  %v5271 = vpack.c.b16 %v5215, %v5211
  %v5272 = vpack.c.b16 %v5216, %v5212
  %v5273 = vpack.c.b16 %v5217, %v5213
  %v5274 = vpack.c.b16 %v5222, %v5218
  %v5275 = vpack.c.b16 %v5223, %v5219
  %v5276 = vpack.c.b16 %v5224, %v5220
  %v5277 = vpack.c.b16 %v5225, %v5221
  %v5278 = vpack.c.b16 %v5230, %v5226
  %v5279 = vpack.c.b16 %v5231, %v5227
  %v5280 = vpack.c.b16 %v5232, %v5228
  %v5281 = vpack.c.b16 %v5233, %v5229
  %v5282 = vpack.c.b16 %v5238, %v5234
  %v5283 = vpack.c.b16 %v5239, %v5235
  %v5284 = vpack.c.b16 %v5240, %v5236
  %v5285 = vpack.c.b16 %v5241, %v5237
  %v5286 = vpack.c.b16 %v5246, %v5242
  %v5287 = vpack.c.b16 %v5247, %v5243
  %v5288 = vpack.c.b16 %v5248, %v5244
  %v5289 = vpack.c.b16 %v5249, %v5245
  %v5290 = vpack.c.b16 %v5254, %v5250
  %v5291 = vpack.c.b16 %v5255, %v5251
  %v5292 = vpack.c.b16 %v5256, %v5252
  %v5293 = vpack.c.b16 %v5257, %v5253
  %v5294 = vpack.c.b16 %v5262, %v5258
  %v5295 = vpack.c.b16 %v5263, %v5259
  %v5296 = vpack.c.b16 %v5264, %v5260
  %v5297 = vpack.c.b16 %v5265, %v5261
  %5330 = vmatpush.bf16.msra.mxu0 %v5294
  %5331 = vmatpush.bf16.msra.mxu0 %v5290
  %5332 = vmatpush.bf16.msra.mxu0 %v5286
  %5333 = vmatpush.bf16.msra.mxu0 %v5282
  %5334 = vmatpush.bf16.msra.mxu0 %v5278
  %5335 = vmatpush.bf16.msra.mxu0 %v5274
  %5336 = vmatpush.bf16.msra.mxu0 %v5270
  %5337 = vmatpush.bf16.msra.mxu0 %v5266
  %5338 = vmatmul.bf16.gmra.mxu0 %v5130
  %v5339 = vpop.f32.mrf.mxu0
  %v5340 = vadd.f32 0.0, %v5339
  %v5341 = vpop.f32.mrf.mxu0
  %5342 = vdwg.mxu0
  %5343 = vmatpush.bf16.msra.mxu0 %v5295
  %5344 = vmatpush.bf16.msra.mxu0 %v5291
  %5345 = vmatpush.bf16.msra.mxu0 %v5287
  %5346 = vmatpush.bf16.msra.mxu0 %v5283
  %5347 = vmatpush.bf16.msra.mxu0 %v5279
  %5348 = vmatpush.bf16.msra.mxu0 %v5275
  %5349 = vmatpush.bf16.msra.mxu0 %v5271
  %5350 = vmatpush.bf16.msra.mxu0 %v5267
  %5351 = vmatmul.bf16.gmra.mxu0 %v5130
  %v5352 = vpop.f32.mrf.mxu0
  %v5353 = vadd.f32 0.0, %v5352
  %v5354 = vpop.f32.mrf.mxu0
  %5355 = vdwg.mxu0
  %5356 = vmatpush.bf16.msra.mxu0 %v5296
  %5357 = vmatpush.bf16.msra.mxu0 %v5292
  %5358 = vmatpush.bf16.msra.mxu0 %v5288
  %5359 = vmatpush.bf16.msra.mxu0 %v5284
  %5360 = vmatpush.bf16.msra.mxu0 %v5280
  %5361 = vmatpush.bf16.msra.mxu0 %v5276
  %5362 = vmatpush.bf16.msra.mxu0 %v5272
  %5363 = vmatpush.bf16.msra.mxu0 %v5268
  %5364 = vmatmul.bf16.gmra.mxu0 %v5130
  %v5365 = vpop.f32.mrf.mxu0
  %v5366 = vadd.f32 0.0, %v5365
  %v5367 = vpop.f32.mrf.mxu0
  %5368 = vdwg.mxu0
  %5369 = vmatpush.bf16.msra.mxu0 %v5297
  %5370 = vmatpush.bf16.msra.mxu0 %v5293
  %5371 = vmatpush.bf16.msra.mxu0 %v5289
  %5372 = vmatpush.bf16.msra.mxu0 %v5285
  %5373 = vmatpush.bf16.msra.mxu0 %v5281
  %5374 = vmatpush.bf16.msra.mxu0 %v5277
  %5375 = vmatpush.bf16.msra.mxu0 %v5273
  %5376 = vmatpush.bf16.msra.mxu0 %v5269
  %5377 = vmatmul.bf16.gmra.mxu0 %v5130
  %v5378 = vpop.f32.mrf.mxu0
  %v5379 = vadd.f32 0.0, %v5378
  %v5380 = vpop.f32.mrf.mxu0
  %5381 = vdwg.mxu0
  %v5382 = vadd.f32 %v5134, %v5340
  %v5383 = vadd.f32 %v5135, %v5353
  %v5384 = vadd.f32 %v5136, %v5366
  %v5385 = vadd.f32 %v5137, %v5379
  %v5386 = vxor.u32 %v5382, 2147483648
  %v5387 = vxor.u32 %v5383, 2147483648
  %v5388 = vxor.u32 %v5384, 2147483648
  %v5389 = vmul.f32 %v5386, 1.442695
  %v5390 = vpow.pop %v5389
  %v5391 = vmul.f32 %v5387, 1.442695
  %v5392 = vpow.pop %v5391
  %v5393 = vmul.f32 %v5388, 1.442695
  %v5394 = vpow.pop %v5393
  %v5395 = vadd.f32 %v5390, 1.0
  %v5396 = vadd.f32 %v5392, 1.0
  %v5397 = vadd.f32 %v5394, 1.0
  %v5398 = vrcp.pop %v5395
  %v5399 = vmul.f32 %v5395, %v5398
  %v5400 = vsub.f32 1.0, %v5399
  %v5401 = vmul.f32 %v5398, %v5400
  %v5402 = vadd.f32 %v5398, %v5401
  %vm5403 = vweird.f32 %v5395
  %vm5404 = vweird.f32 %v5398
  %vm5405 = vmor %vm5403, %vm5404
  %v5406 = vsel %vm5405, %v5398, %v5402
  %v5407 = vand.u32 2147483647, %v5395
  %vm5408 = vcmp.eq.f32.partialorder %v5407, 8.507059e+37
  %v5409 = vand.u32 %v5395, 2147483648
  %v5410 = vor.u32 1.1754944e-38, %v5409
  %v5411 = vsel %vm5408, %v5410, %v5406
  %v5412 = vmul.f32 1.0, %v5411
  %v5413 = vrcp.pop %v5396
  %v5414 = vmul.f32 %v5396, %v5413
  %v5415 = vsub.f32 1.0, %v5414
  %v5416 = vmul.f32 %v5413, %v5415
  %v5417 = vadd.f32 %v5413, %v5416
  %vm5418 = vweird.f32 %v5396
  %vm5419 = vweird.f32 %v5413
  %vm5420 = vmor %vm5418, %vm5419
  %v5421 = vsel %vm5420, %v5413, %v5417
  %v5422 = vand.u32 2147483647, %v5396
  %vm5423 = vcmp.eq.f32.partialorder %v5422, 8.507059e+37
  %v5424 = vand.u32 %v5396, 2147483648
  %v5425 = vor.u32 1.1754944e-38, %v5424
  %v5426 = vsel %vm5423, %v5425, %v5421
  %v5427 = vmul.f32 1.0, %v5426
  %v5428 = vrcp.pop %v5397
  %v5429 = vmul.f32 %v5397, %v5428
  %v5430 = vsub.f32 1.0, %v5429
  %v5431 = vmul.f32 %v5428, %v5430
  %v5432 = vadd.f32 %v5428, %v5431
  %vm5433 = vweird.f32 %v5397
  %vm5434 = vweird.f32 %v5428
  %vm5435 = vmor %vm5433, %vm5434
  %v5436 = vsel %vm5435, %v5428, %v5432
  %v5437 = vand.u32 2147483647, %v5397
  %vm5438 = vcmp.eq.f32.partialorder %v5437, 8.507059e+37
  %v5439 = vand.u32 %v5397, 2147483648
  %v5440 = vor.u32 1.1754944e-38, %v5439
  %v5441 = vsel %vm5438, %v5440, %v5436
  %v5442 = vmul.f32 1.0, %v5441
  %v5443 = vtanh.pop %v5385
  %v5444 = vmul.f32 %v5427, %v5127
  %v5445 = vmul.f32 %v5412, %v5443
  %v5446 = vadd.f32 %v5444, %v5445
  %v5447 = vtanh.pop %v5446
  %v5448 = vmul.f32 %v5442, %v5447
  %v5449 = vpack.c.bf16 %v5448, %v5448
  %s5450 = scalar_lea.vmem %s4, 64
  %5451 = vst [vmem:[%s5450] sm:$0xf] %v5449
  %s5452 = scalar_lea.vmem %s0, 544
  %v5453 = vld [vmem:[%s5452] sm:$0xff]
  %v5454 = vld [vmem:[%s5452 + $0x8] sm:$0xff]
  %v5455 = vld [vmem:[%s5452 + $0x10] sm:$0xff]
  %v5456 = vld [vmem:[%s5452 + $0x18] sm:$0xff]
  %v5457 = vld [vmem:[%s3] sm:$0xff]
  %v5458 = vld [vmem:[%s3 + $0x8] sm:$0xff]
  %v5459 = vld [vmem:[%s3 + $0x10] sm:$0xff]
  %v5460 = vld [vmem:[%s3 + $0x18] sm:$0xff]
  %v5461 = vld [vmem:[%s3 + $0x20] sm:$0xff]
  %v5462 = vld [vmem:[%s3 + $0x28] sm:$0xff]
  %v5463 = vld [vmem:[%s3 + $0x30] sm:$0xff]
  %v5464 = vld [vmem:[%s3 + $0x38] sm:$0xff]
  %v5465 = vld [vmem:[%s3 + $0x40] sm:$0xff]
  %v5466 = vld [vmem:[%s3 + $0x48] sm:$0xff]
  %v5467 = vld [vmem:[%s3 + $0x50] sm:$0xff]
  %v5468 = vld [vmem:[%s3 + $0x58] sm:$0xff]
  %v5469 = vld [vmem:[%s3 + $0x60] sm:$0xff]
  %v5470 = vld [vmem:[%s3 + $0x68] sm:$0xff]
  %v5471 = vld [vmem:[%s3 + $0x70] sm:$0xff]
  %v5472 = vld [vmem:[%s3 + $0x78] sm:$0xff]
  %v5473 = vld [vmem:[%s3 + $0x80] sm:$0xff]
  %v5474 = vld [vmem:[%s3 + $0x88] sm:$0xff]
  %v5475 = vld [vmem:[%s3 + $0x90] sm:$0xff]
  %v5476 = vld [vmem:[%s3 + $0x98] sm:$0xff]
  %v5477 = vld [vmem:[%s3 + $0xa0] sm:$0xff]
  %v5478 = vld [vmem:[%s3 + $0xa8] sm:$0xff]
  %v5479 = vld [vmem:[%s3 + $0xb0] sm:$0xff]
  %v5480 = vld [vmem:[%s3 + $0xb8] sm:$0xff]
  %v5481 = vld [vmem:[%s3 + $0xc0] sm:$0xff]
  %v5482 = vld [vmem:[%s3 + $0xc8] sm:$0xff]
  %v5483 = vld [vmem:[%s3 + $0xd0] sm:$0xff]
  %v5484 = vld [vmem:[%s3 + $0xd8] sm:$0xff]
  %v5485 = vld [vmem:[%s3 + $0xe0] sm:$0xff]
  %v5486 = vld [vmem:[%s3 + $0xe8] sm:$0xff]
  %v5487 = vld [vmem:[%s3 + $0xf0] sm:$0xff]
  %v5488 = vld [vmem:[%s3 + $0xf8] sm:$0xff]
  %v5521 = vunpack.c.l.b16 %v5457
  %v5522 = vunpack.c.h.b16 %v5457
  %v5523 = vunpack.c.l.b16 %v5458
  %v5524 = vunpack.c.h.b16 %v5458
  %v5525 = vunpack.c.l.b16 %v5459
  %v5526 = vunpack.c.h.b16 %v5459
  %v5527 = vunpack.c.l.b16 %v5460
  %v5528 = vunpack.c.h.b16 %v5460
  %v5529 = vunpack.c.l.b16 %v5461
  %v5530 = vunpack.c.h.b16 %v5461
  %v5531 = vunpack.c.l.b16 %v5462
  %v5532 = vunpack.c.h.b16 %v5462
  %v5533 = vunpack.c.l.b16 %v5463
  %v5534 = vunpack.c.h.b16 %v5463
  %v5535 = vunpack.c.l.b16 %v5464
  %v5536 = vunpack.c.h.b16 %v5464
  %v5537 = vunpack.c.l.b16 %v5465
  %v5538 = vunpack.c.h.b16 %v5465
  %v5539 = vunpack.c.l.b16 %v5466
  %v5540 = vunpack.c.h.b16 %v5466
  %v5541 = vunpack.c.l.b16 %v5467
  %v5542 = vunpack.c.h.b16 %v5467
  %v5543 = vunpack.c.l.b16 %v5468
  %v5544 = vunpack.c.h.b16 %v5468
  %v5545 = vunpack.c.l.b16 %v5469
  %v5546 = vunpack.c.h.b16 %v5469
  %v5547 = vunpack.c.l.b16 %v5470
  %v5548 = vunpack.c.h.b16 %v5470
  %v5549 = vunpack.c.l.b16 %v5471
  %v5550 = vunpack.c.h.b16 %v5471
  %v5551 = vunpack.c.l.b16 %v5472
  %v5552 = vunpack.c.h.b16 %v5472
  %v5553 = vunpack.c.l.b16 %v5473
  %v5554 = vunpack.c.h.b16 %v5473
  %v5555 = vunpack.c.l.b16 %v5474
  %v5556 = vunpack.c.h.b16 %v5474
  %v5557 = vunpack.c.l.b16 %v5475
  %v5558 = vunpack.c.h.b16 %v5475
  %v5559 = vunpack.c.l.b16 %v5476
  %v5560 = vunpack.c.h.b16 %v5476
  %v5561 = vunpack.c.l.b16 %v5477
  %v5562 = vunpack.c.h.b16 %v5477
  %v5563 = vunpack.c.l.b16 %v5478
  %v5564 = vunpack.c.h.b16 %v5478
  %v5565 = vunpack.c.l.b16 %v5479
  %v5566 = vunpack.c.h.b16 %v5479
  %v5567 = vunpack.c.l.b16 %v5480
  %v5568 = vunpack.c.h.b16 %v5480
  %v5569 = vunpack.c.l.b16 %v5481
  %v5570 = vunpack.c.h.b16 %v5481
  %v5571 = vunpack.c.l.b16 %v5482
  %v5572 = vunpack.c.h.b16 %v5482
  %v5573 = vunpack.c.l.b16 %v5483
  %v5574 = vunpack.c.h.b16 %v5483
  %v5575 = vunpack.c.l.b16 %v5484
  %v5576 = vunpack.c.h.b16 %v5484
  %v5577 = vunpack.c.l.b16 %v5485
  %v5578 = vunpack.c.h.b16 %v5485
  %v5579 = vunpack.c.l.b16 %v5486
  %v5580 = vunpack.c.h.b16 %v5486
  %v5581 = vunpack.c.l.b16 %v5487
  %v5582 = vunpack.c.h.b16 %v5487
  %v5583 = vunpack.c.l.b16 %v5488
  %v5584 = vunpack.c.h.b16 %v5488
  %v5585 = vpack.c.b16 %v5525, %v5521
  %v5586 = vpack.c.b16 %v5526, %v5522
  %v5587 = vpack.c.b16 %v5527, %v5523
  %v5588 = vpack.c.b16 %v5528, %v5524
  %v5589 = vpack.c.b16 %v5533, %v5529
  %v5590 = vpack.c.b16 %v5534, %v5530
  %v5591 = vpack.c.b16 %v5535, %v5531
  %v5592 = vpack.c.b16 %v5536, %v5532
  %v5593 = vpack.c.b16 %v5541, %v5537
  %v5594 = vpack.c.b16 %v5542, %v5538
  %v5595 = vpack.c.b16 %v5543, %v5539
  %v5596 = vpack.c.b16 %v5544, %v5540
  %v5597 = vpack.c.b16 %v5549, %v5545
  %v5598 = vpack.c.b16 %v5550, %v5546
  %v5599 = vpack.c.b16 %v5551, %v5547
  %v5600 = vpack.c.b16 %v5552, %v5548
  %v5601 = vpack.c.b16 %v5557, %v5553
  %v5602 = vpack.c.b16 %v5558, %v5554
  %v5603 = vpack.c.b16 %v5559, %v5555
  %v5604 = vpack.c.b16 %v5560, %v5556
  %v5605 = vpack.c.b16 %v5565, %v5561
  %v5606 = vpack.c.b16 %v5566, %v5562
  %v5607 = vpack.c.b16 %v5567, %v5563
  %v5608 = vpack.c.b16 %v5568, %v5564
  %v5609 = vpack.c.b16 %v5573, %v5569
  %v5610 = vpack.c.b16 %v5574, %v5570
  %v5611 = vpack.c.b16 %v5575, %v5571
  %v5612 = vpack.c.b16 %v5576, %v5572
  %v5613 = vpack.c.b16 %v5581, %v5577
  %v5614 = vpack.c.b16 %v5582, %v5578
  %v5615 = vpack.c.b16 %v5583, %v5579
  %v5616 = vpack.c.b16 %v5584, %v5580
  %5649 = vmatpush.bf16.msra.mxu0 %v5613
  %5650 = vmatpush.bf16.msra.mxu0 %v5609
  %5651 = vmatpush.bf16.msra.mxu0 %v5605
  %5652 = vmatpush.bf16.msra.mxu0 %v5601
  %5653 = vmatpush.bf16.msra.mxu0 %v5597
  %5654 = vmatpush.bf16.msra.mxu0 %v5593
  %5655 = vmatpush.bf16.msra.mxu0 %v5589
  %5656 = vmatpush.bf16.msra.mxu0 %v5585
  %5657 = vmatmul.bf16.gmra.mxu0 %v5449
  %v5658 = vpop.f32.mrf.mxu0
  %v5659 = vadd.f32 0.0, %v5658
  %v5660 = vpop.f32.mrf.mxu0
  %5661 = vdwg.mxu0
  %5662 = vmatpush.bf16.msra.mxu0 %v5614
  %5663 = vmatpush.bf16.msra.mxu0 %v5610
  %5664 = vmatpush.bf16.msra.mxu0 %v5606
  %5665 = vmatpush.bf16.msra.mxu0 %v5602
  %5666 = vmatpush.bf16.msra.mxu0 %v5598
  %5667 = vmatpush.bf16.msra.mxu0 %v5594
  %5668 = vmatpush.bf16.msra.mxu0 %v5590
  %5669 = vmatpush.bf16.msra.mxu0 %v5586
  %5670 = vmatmul.bf16.gmra.mxu0 %v5449
  %v5671 = vpop.f32.mrf.mxu0
  %v5672 = vadd.f32 0.0, %v5671
  %v5673 = vpop.f32.mrf.mxu0
  %5674 = vdwg.mxu0
  %5675 = vmatpush.bf16.msra.mxu0 %v5615
  %5676 = vmatpush.bf16.msra.mxu0 %v5611
  %5677 = vmatpush.bf16.msra.mxu0 %v5607
  %5678 = vmatpush.bf16.msra.mxu0 %v5603
  %5679 = vmatpush.bf16.msra.mxu0 %v5599
  %5680 = vmatpush.bf16.msra.mxu0 %v5595
  %5681 = vmatpush.bf16.msra.mxu0 %v5591
  %5682 = vmatpush.bf16.msra.mxu0 %v5587
  %5683 = vmatmul.bf16.gmra.mxu0 %v5449
  %v5684 = vpop.f32.mrf.mxu0
  %v5685 = vadd.f32 0.0, %v5684
  %v5686 = vpop.f32.mrf.mxu0
  %5687 = vdwg.mxu0
  %5688 = vmatpush.bf16.msra.mxu0 %v5616
  %5689 = vmatpush.bf16.msra.mxu0 %v5612
  %5690 = vmatpush.bf16.msra.mxu0 %v5608
  %5691 = vmatpush.bf16.msra.mxu0 %v5604
  %5692 = vmatpush.bf16.msra.mxu0 %v5600
  %5693 = vmatpush.bf16.msra.mxu0 %v5596
  %5694 = vmatpush.bf16.msra.mxu0 %v5592
  %5695 = vmatpush.bf16.msra.mxu0 %v5588
  %5696 = vmatmul.bf16.gmra.mxu0 %v5449
  %v5697 = vpop.f32.mrf.mxu0
  %v5698 = vadd.f32 0.0, %v5697
  %v5699 = vpop.f32.mrf.mxu0
  %5700 = vdwg.mxu0
  %v5701 = vadd.f32 %v5453, %v5659
  %v5702 = vadd.f32 %v5454, %v5672
  %v5703 = vadd.f32 %v5455, %v5685
  %v5704 = vadd.f32 %v5456, %v5698
  %v5705 = vxor.u32 %v5701, 2147483648
  %v5706 = vxor.u32 %v5702, 2147483648
  %v5707 = vxor.u32 %v5703, 2147483648
  %v5708 = vmul.f32 %v5705, 1.442695
  %v5709 = vpow.pop %v5708
  %v5710 = vmul.f32 %v5706, 1.442695
  %v5711 = vpow.pop %v5710
  %v5712 = vmul.f32 %v5707, 1.442695
  %v5713 = vpow.pop %v5712
  %v5714 = vadd.f32 %v5709, 1.0
  %v5715 = vadd.f32 %v5711, 1.0
  %v5716 = vadd.f32 %v5713, 1.0
  %v5717 = vrcp.pop %v5714
  %v5718 = vmul.f32 %v5714, %v5717
  %v5719 = vsub.f32 1.0, %v5718
  %v5720 = vmul.f32 %v5717, %v5719
  %v5721 = vadd.f32 %v5717, %v5720
  %vm5722 = vweird.f32 %v5714
  %vm5723 = vweird.f32 %v5717
  %vm5724 = vmor %vm5722, %vm5723
  %v5725 = vsel %vm5724, %v5717, %v5721
  %v5726 = vand.u32 2147483647, %v5714
  %vm5727 = vcmp.eq.f32.partialorder %v5726, 8.507059e+37
  %v5728 = vand.u32 %v5714, 2147483648
  %v5729 = vor.u32 1.1754944e-38, %v5728
  %v5730 = vsel %vm5727, %v5729, %v5725
  %v5731 = vmul.f32 1.0, %v5730
  %v5732 = vrcp.pop %v5715
  %v5733 = vmul.f32 %v5715, %v5732
  %v5734 = vsub.f32 1.0, %v5733
  %v5735 = vmul.f32 %v5732, %v5734
  %v5736 = vadd.f32 %v5732, %v5735
  %vm5737 = vweird.f32 %v5715
  %vm5738 = vweird.f32 %v5732
  %vm5739 = vmor %vm5737, %vm5738
  %v5740 = vsel %vm5739, %v5732, %v5736
  %v5741 = vand.u32 2147483647, %v5715
  %vm5742 = vcmp.eq.f32.partialorder %v5741, 8.507059e+37
  %v5743 = vand.u32 %v5715, 2147483648
  %v5744 = vor.u32 1.1754944e-38, %v5743
  %v5745 = vsel %vm5742, %v5744, %v5740
  %v5746 = vmul.f32 1.0, %v5745
  %v5747 = vrcp.pop %v5716
  %v5748 = vmul.f32 %v5716, %v5747
  %v5749 = vsub.f32 1.0, %v5748
  %v5750 = vmul.f32 %v5747, %v5749
  %v5751 = vadd.f32 %v5747, %v5750
  %vm5752 = vweird.f32 %v5716
  %vm5753 = vweird.f32 %v5747
  %vm5754 = vmor %vm5752, %vm5753
  %v5755 = vsel %vm5754, %v5747, %v5751
  %v5756 = vand.u32 2147483647, %v5716
  %vm5757 = vcmp.eq.f32.partialorder %v5756, 8.507059e+37
  %v5758 = vand.u32 %v5716, 2147483648
  %v5759 = vor.u32 1.1754944e-38, %v5758
  %v5760 = vsel %vm5757, %v5759, %v5755
  %v5761 = vmul.f32 1.0, %v5760
  %v5762 = vtanh.pop %v5704
  %v5763 = vmul.f32 %v5746, %v5446
  %v5764 = vmul.f32 %v5731, %v5762
  %v5765 = vadd.f32 %v5763, %v5764
  %v5766 = vtanh.pop %v5765
  %v5767 = vmul.f32 %v5761, %v5766
  %v5768 = vpack.c.bf16 %v5767, %v5767
  %s5769 = scalar_lea.vmem %s4, 68
  %5770 = vst [vmem:[%s5769] sm:$0xf] %v5768
  %s5771 = scalar_lea.vmem %s0, 576
  %v5772 = vld [vmem:[%s5771] sm:$0xff]
  %v5773 = vld [vmem:[%s5771 + $0x8] sm:$0xff]
  %v5774 = vld [vmem:[%s5771 + $0x10] sm:$0xff]
  %v5775 = vld [vmem:[%s5771 + $0x18] sm:$0xff]
  %v5776 = vld [vmem:[%s3] sm:$0xff]
  %v5777 = vld [vmem:[%s3 + $0x8] sm:$0xff]
  %v5778 = vld [vmem:[%s3 + $0x10] sm:$0xff]
  %v5779 = vld [vmem:[%s3 + $0x18] sm:$0xff]
  %v5780 = vld [vmem:[%s3 + $0x20] sm:$0xff]
  %v5781 = vld [vmem:[%s3 + $0x28] sm:$0xff]
  %v5782 = vld [vmem:[%s3 + $0x30] sm:$0xff]
  %v5783 = vld [vmem:[%s3 + $0x38] sm:$0xff]
  %v5784 = vld [vmem:[%s3 + $0x40] sm:$0xff]
  %v5785 = vld [vmem:[%s3 + $0x48] sm:$0xff]
  %v5786 = vld [vmem:[%s3 + $0x50] sm:$0xff]
  %v5787 = vld [vmem:[%s3 + $0x58] sm:$0xff]
  %v5788 = vld [vmem:[%s3 + $0x60] sm:$0xff]
  %v5789 = vld [vmem:[%s3 + $0x68] sm:$0xff]
  %v5790 = vld [vmem:[%s3 + $0x70] sm:$0xff]
  %v5791 = vld [vmem:[%s3 + $0x78] sm:$0xff]
  %v5792 = vld [vmem:[%s3 + $0x80] sm:$0xff]
  %v5793 = vld [vmem:[%s3 + $0x88] sm:$0xff]
  %v5794 = vld [vmem:[%s3 + $0x90] sm:$0xff]
  %v5795 = vld [vmem:[%s3 + $0x98] sm:$0xff]
  %v5796 = vld [vmem:[%s3 + $0xa0] sm:$0xff]
  %v5797 = vld [vmem:[%s3 + $0xa8] sm:$0xff]
  %v5798 = vld [vmem:[%s3 + $0xb0] sm:$0xff]
  %v5799 = vld [vmem:[%s3 + $0xb8] sm:$0xff]
  %v5800 = vld [vmem:[%s3 + $0xc0] sm:$0xff]
  %v5801 = vld [vmem:[%s3 + $0xc8] sm:$0xff]
  %v5802 = vld [vmem:[%s3 + $0xd0] sm:$0xff]
  %v5803 = vld [vmem:[%s3 + $0xd8] sm:$0xff]
  %v5804 = vld [vmem:[%s3 + $0xe0] sm:$0xff]
  %v5805 = vld [vmem:[%s3 + $0xe8] sm:$0xff]
  %v5806 = vld [vmem:[%s3 + $0xf0] sm:$0xff]
  %v5807 = vld [vmem:[%s3 + $0xf8] sm:$0xff]
  %v5840 = vunpack.c.l.b16 %v5776
  %v5841 = vunpack.c.h.b16 %v5776
  %v5842 = vunpack.c.l.b16 %v5777
  %v5843 = vunpack.c.h.b16 %v5777
  %v5844 = vunpack.c.l.b16 %v5778
  %v5845 = vunpack.c.h.b16 %v5778
  %v5846 = vunpack.c.l.b16 %v5779
  %v5847 = vunpack.c.h.b16 %v5779
  %v5848 = vunpack.c.l.b16 %v5780
  %v5849 = vunpack.c.h.b16 %v5780
  %v5850 = vunpack.c.l.b16 %v5781
  %v5851 = vunpack.c.h.b16 %v5781
  %v5852 = vunpack.c.l.b16 %v5782
  %v5853 = vunpack.c.h.b16 %v5782
  %v5854 = vunpack.c.l.b16 %v5783
  %v5855 = vunpack.c.h.b16 %v5783
  %v5856 = vunpack.c.l.b16 %v5784
  %v5857 = vunpack.c.h.b16 %v5784
  %v5858 = vunpack.c.l.b16 %v5785
  %v5859 = vunpack.c.h.b16 %v5785
  %v5860 = vunpack.c.l.b16 %v5786
  %v5861 = vunpack.c.h.b16 %v5786
  %v5862 = vunpack.c.l.b16 %v5787
  %v5863 = vunpack.c.h.b16 %v5787
  %v5864 = vunpack.c.l.b16 %v5788
  %v5865 = vunpack.c.h.b16 %v5788
  %v5866 = vunpack.c.l.b16 %v5789
  %v5867 = vunpack.c.h.b16 %v5789
  %v5868 = vunpack.c.l.b16 %v5790
  %v5869 = vunpack.c.h.b16 %v5790
  %v5870 = vunpack.c.l.b16 %v5791
  %v5871 = vunpack.c.h.b16 %v5791
  %v5872 = vunpack.c.l.b16 %v5792
  %v5873 = vunpack.c.h.b16 %v5792
  %v5874 = vunpack.c.l.b16 %v5793
  %v5875 = vunpack.c.h.b16 %v5793
  %v5876 = vunpack.c.l.b16 %v5794
  %v5877 = vunpack.c.h.b16 %v5794
  %v5878 = vunpack.c.l.b16 %v5795
  %v5879 = vunpack.c.h.b16 %v5795
  %v5880 = vunpack.c.l.b16 %v5796
  %v5881 = vunpack.c.h.b16 %v5796
  %v5882 = vunpack.c.l.b16 %v5797
  %v5883 = vunpack.c.h.b16 %v5797
  %v5884 = vunpack.c.l.b16 %v5798
  %v5885 = vunpack.c.h.b16 %v5798
  %v5886 = vunpack.c.l.b16 %v5799
  %v5887 = vunpack.c.h.b16 %v5799
  %v5888 = vunpack.c.l.b16 %v5800
  %v5889 = vunpack.c.h.b16 %v5800
  %v5890 = vunpack.c.l.b16 %v5801
  %v5891 = vunpack.c.h.b16 %v5801
  %v5892 = vunpack.c.l.b16 %v5802
  %v5893 = vunpack.c.h.b16 %v5802
  %v5894 = vunpack.c.l.b16 %v5803
  %v5895 = vunpack.c.h.b16 %v5803
  %v5896 = vunpack.c.l.b16 %v5804
  %v5897 = vunpack.c.h.b16 %v5804
  %v5898 = vunpack.c.l.b16 %v5805
  %v5899 = vunpack.c.h.b16 %v5805
  %v5900 = vunpack.c.l.b16 %v5806
  %v5901 = vunpack.c.h.b16 %v5806
  %v5902 = vunpack.c.l.b16 %v5807
  %v5903 = vunpack.c.h.b16 %v5807
  %v5904 = vpack.c.b16 %v5844, %v5840
  %v5905 = vpack.c.b16 %v5845, %v5841
  %v5906 = vpack.c.b16 %v5846, %v5842
  %v5907 = vpack.c.b16 %v5847, %v5843
  %v5908 = vpack.c.b16 %v5852, %v5848
  %v5909 = vpack.c.b16 %v5853, %v5849
  %v5910 = vpack.c.b16 %v5854, %v5850
  %v5911 = vpack.c.b16 %v5855, %v5851
  %v5912 = vpack.c.b16 %v5860, %v5856
  %v5913 = vpack.c.b16 %v5861, %v5857
  %v5914 = vpack.c.b16 %v5862, %v5858
  %v5915 = vpack.c.b16 %v5863, %v5859
  %v5916 = vpack.c.b16 %v5868, %v5864
  %v5917 = vpack.c.b16 %v5869, %v5865
  %v5918 = vpack.c.b16 %v5870, %v5866
  %v5919 = vpack.c.b16 %v5871, %v5867
  %v5920 = vpack.c.b16 %v5876, %v5872
  %v5921 = vpack.c.b16 %v5877, %v5873
  %v5922 = vpack.c.b16 %v5878, %v5874
  %v5923 = vpack.c.b16 %v5879, %v5875
  %v5924 = vpack.c.b16 %v5884, %v5880
  %v5925 = vpack.c.b16 %v5885, %v5881
  %v5926 = vpack.c.b16 %v5886, %v5882
  %v5927 = vpack.c.b16 %v5887, %v5883
  %v5928 = vpack.c.b16 %v5892, %v5888
  %v5929 = vpack.c.b16 %v5893, %v5889
  %v5930 = vpack.c.b16 %v5894, %v5890
  %v5931 = vpack.c.b16 %v5895, %v5891
  %v5932 = vpack.c.b16 %v5900, %v5896
  %v5933 = vpack.c.b16 %v5901, %v5897
  %v5934 = vpack.c.b16 %v5902, %v5898
  %v5935 = vpack.c.b16 %v5903, %v5899
  %5968 = vmatpush.bf16.msra.mxu0 %v5932
  %5969 = vmatpush.bf16.msra.mxu0 %v5928
  %5970 = vmatpush.bf16.msra.mxu0 %v5924
  %5971 = vmatpush.bf16.msra.mxu0 %v5920
  %5972 = vmatpush.bf16.msra.mxu0 %v5916
  %5973 = vmatpush.bf16.msra.mxu0 %v5912
  %5974 = vmatpush.bf16.msra.mxu0 %v5908
  %5975 = vmatpush.bf16.msra.mxu0 %v5904
  %5976 = vmatmul.bf16.gmra.mxu0 %v5768
  %v5977 = vpop.f32.mrf.mxu0
  %v5978 = vadd.f32 0.0, %v5977
  %v5979 = vpop.f32.mrf.mxu0
  %5980 = vdwg.mxu0
  %5981 = vmatpush.bf16.msra.mxu0 %v5933
  %5982 = vmatpush.bf16.msra.mxu0 %v5929
  %5983 = vmatpush.bf16.msra.mxu0 %v5925
  %5984 = vmatpush.bf16.msra.mxu0 %v5921
  %5985 = vmatpush.bf16.msra.mxu0 %v5917
  %5986 = vmatpush.bf16.msra.mxu0 %v5913
  %5987 = vmatpush.bf16.msra.mxu0 %v5909
  %5988 = vmatpush.bf16.msra.mxu0 %v5905
  %5989 = vmatmul.bf16.gmra.mxu0 %v5768
  %v5990 = vpop.f32.mrf.mxu0
  %v5991 = vadd.f32 0.0, %v5990
  %v5992 = vpop.f32.mrf.mxu0
  %5993 = vdwg.mxu0
  %5994 = vmatpush.bf16.msra.mxu0 %v5934
  %5995 = vmatpush.bf16.msra.mxu0 %v5930
  %5996 = vmatpush.bf16.msra.mxu0 %v5926
  %5997 = vmatpush.bf16.msra.mxu0 %v5922
  %5998 = vmatpush.bf16.msra.mxu0 %v5918
  %5999 = vmatpush.bf16.msra.mxu0 %v5914
  %6000 = vmatpush.bf16.msra.mxu0 %v5910
  %6001 = vmatpush.bf16.msra.mxu0 %v5906
  %6002 = vmatmul.bf16.gmra.mxu0 %v5768
  %v6003 = vpop.f32.mrf.mxu0
  %v6004 = vadd.f32 0.0, %v6003
  %v6005 = vpop.f32.mrf.mxu0
  %6006 = vdwg.mxu0
  %6007 = vmatpush.bf16.msra.mxu0 %v5935
  %6008 = vmatpush.bf16.msra.mxu0 %v5931
  %6009 = vmatpush.bf16.msra.mxu0 %v5927
  %6010 = vmatpush.bf16.msra.mxu0 %v5923
  %6011 = vmatpush.bf16.msra.mxu0 %v5919
  %6012 = vmatpush.bf16.msra.mxu0 %v5915
  %6013 = vmatpush.bf16.msra.mxu0 %v5911
  %6014 = vmatpush.bf16.msra.mxu0 %v5907
  %6015 = vmatmul.bf16.gmra.mxu0 %v5768
  %v6016 = vpop.f32.mrf.mxu0
  %v6017 = vadd.f32 0.0, %v6016
  %v6018 = vpop.f32.mrf.mxu0
  %6019 = vdwg.mxu0
  %v6020 = vadd.f32 %v5772, %v5978
  %v6021 = vadd.f32 %v5773, %v5991
  %v6022 = vadd.f32 %v5774, %v6004
  %v6023 = vadd.f32 %v5775, %v6017
  %v6024 = vxor.u32 %v6020, 2147483648
  %v6025 = vxor.u32 %v6021, 2147483648
  %v6026 = vxor.u32 %v6022, 2147483648
  %v6027 = vmul.f32 %v6024, 1.442695
  %v6028 = vpow.pop %v6027
  %v6029 = vmul.f32 %v6025, 1.442695
  %v6030 = vpow.pop %v6029
  %v6031 = vmul.f32 %v6026, 1.442695
  %v6032 = vpow.pop %v6031
  %v6033 = vadd.f32 %v6028, 1.0
  %v6034 = vadd.f32 %v6030, 1.0
  %v6035 = vadd.f32 %v6032, 1.0
  %v6036 = vrcp.pop %v6033
  %v6037 = vmul.f32 %v6033, %v6036
  %v6038 = vsub.f32 1.0, %v6037
  %v6039 = vmul.f32 %v6036, %v6038
  %v6040 = vadd.f32 %v6036, %v6039
  %vm6041 = vweird.f32 %v6033
  %vm6042 = vweird.f32 %v6036
  %vm6043 = vmor %vm6041, %vm6042
  %v6044 = vsel %vm6043, %v6036, %v6040
  %v6045 = vand.u32 2147483647, %v6033
  %vm6046 = vcmp.eq.f32.partialorder %v6045, 8.507059e+37
  %v6047 = vand.u32 %v6033, 2147483648
  %v6048 = vor.u32 1.1754944e-38, %v6047
  %v6049 = vsel %vm6046, %v6048, %v6044
  %v6050 = vmul.f32 1.0, %v6049
  %v6051 = vrcp.pop %v6034
  %v6052 = vmul.f32 %v6034, %v6051
  %v6053 = vsub.f32 1.0, %v6052
  %v6054 = vmul.f32 %v6051, %v6053
  %v6055 = vadd.f32 %v6051, %v6054
  %vm6056 = vweird.f32 %v6034
  %vm6057 = vweird.f32 %v6051
  %vm6058 = vmor %vm6056, %vm6057
  %v6059 = vsel %vm6058, %v6051, %v6055
  %v6060 = vand.u32 2147483647, %v6034
  %vm6061 = vcmp.eq.f32.partialorder %v6060, 8.507059e+37
  %v6062 = vand.u32 %v6034, 2147483648
  %v6063 = vor.u32 1.1754944e-38, %v6062
  %v6064 = vsel %vm6061, %v6063, %v6059
  %v6065 = vmul.f32 1.0, %v6064
  %v6066 = vrcp.pop %v6035
  %v6067 = vmul.f32 %v6035, %v6066
  %v6068 = vsub.f32 1.0, %v6067
  %v6069 = vmul.f32 %v6066, %v6068
  %v6070 = vadd.f32 %v6066, %v6069
  %vm6071 = vweird.f32 %v6035
  %vm6072 = vweird.f32 %v6066
  %vm6073 = vmor %vm6071, %vm6072
  %v6074 = vsel %vm6073, %v6066, %v6070
  %v6075 = vand.u32 2147483647, %v6035
  %vm6076 = vcmp.eq.f32.partialorder %v6075, 8.507059e+37
  %v6077 = vand.u32 %v6035, 2147483648
  %v6078 = vor.u32 1.1754944e-38, %v6077
  %v6079 = vsel %vm6076, %v6078, %v6074
  %v6080 = vmul.f32 1.0, %v6079
  %v6081 = vtanh.pop %v6023
  %v6082 = vmul.f32 %v6065, %v5765
  %v6083 = vmul.f32 %v6050, %v6081
  %v6084 = vadd.f32 %v6082, %v6083
  %v6085 = vtanh.pop %v6084
  %v6086 = vmul.f32 %v6080, %v6085
  %v6087 = vpack.c.bf16 %v6086, %v6086
  %s6088 = scalar_lea.vmem %s4, 72
  %6089 = vst [vmem:[%s6088] sm:$0xf] %v6087
  %s6090 = scalar_lea.vmem %s0, 608
  %v6091 = vld [vmem:[%s6090] sm:$0xff]
  %v6092 = vld [vmem:[%s6090 + $0x8] sm:$0xff]
  %v6093 = vld [vmem:[%s6090 + $0x10] sm:$0xff]
  %v6094 = vld [vmem:[%s6090 + $0x18] sm:$0xff]
  %v6095 = vld [vmem:[%s3] sm:$0xff]
  %v6096 = vld [vmem:[%s3 + $0x8] sm:$0xff]
  %v6097 = vld [vmem:[%s3 + $0x10] sm:$0xff]
  %v6098 = vld [vmem:[%s3 + $0x18] sm:$0xff]
  %v6099 = vld [vmem:[%s3 + $0x20] sm:$0xff]
  %v6100 = vld [vmem:[%s3 + $0x28] sm:$0xff]
  %v6101 = vld [vmem:[%s3 + $0x30] sm:$0xff]
  %v6102 = vld [vmem:[%s3 + $0x38] sm:$0xff]
  %v6103 = vld [vmem:[%s3 + $0x40] sm:$0xff]
  %v6104 = vld [vmem:[%s3 + $0x48] sm:$0xff]
  %v6105 = vld [vmem:[%s3 + $0x50] sm:$0xff]
  %v6106 = vld [vmem:[%s3 + $0x58] sm:$0xff]
  %v6107 = vld [vmem:[%s3 + $0x60] sm:$0xff]
  %v6108 = vld [vmem:[%s3 + $0x68] sm:$0xff]
  %v6109 = vld [vmem:[%s3 + $0x70] sm:$0xff]
  %v6110 = vld [vmem:[%s3 + $0x78] sm:$0xff]
  %v6111 = vld [vmem:[%s3 + $0x80] sm:$0xff]
  %v6112 = vld [vmem:[%s3 + $0x88] sm:$0xff]
  %v6113 = vld [vmem:[%s3 + $0x90] sm:$0xff]
  %v6114 = vld [vmem:[%s3 + $0x98] sm:$0xff]
  %v6115 = vld [vmem:[%s3 + $0xa0] sm:$0xff]
  %v6116 = vld [vmem:[%s3 + $0xa8] sm:$0xff]
  %v6117 = vld [vmem:[%s3 + $0xb0] sm:$0xff]
  %v6118 = vld [vmem:[%s3 + $0xb8] sm:$0xff]
  %v6119 = vld [vmem:[%s3 + $0xc0] sm:$0xff]
  %v6120 = vld [vmem:[%s3 + $0xc8] sm:$0xff]
  %v6121 = vld [vmem:[%s3 + $0xd0] sm:$0xff]
  %v6122 = vld [vmem:[%s3 + $0xd8] sm:$0xff]
  %v6123 = vld [vmem:[%s3 + $0xe0] sm:$0xff]
  %v6124 = vld [vmem:[%s3 + $0xe8] sm:$0xff]
  %v6125 = vld [vmem:[%s3 + $0xf0] sm:$0xff]
  %v6126 = vld [vmem:[%s3 + $0xf8] sm:$0xff]
  %v6159 = vunpack.c.l.b16 %v6095
  %v6160 = vunpack.c.h.b16 %v6095
  %v6161 = vunpack.c.l.b16 %v6096
  %v6162 = vunpack.c.h.b16 %v6096
  %v6163 = vunpack.c.l.b16 %v6097
  %v6164 = vunpack.c.h.b16 %v6097
  %v6165 = vunpack.c.l.b16 %v6098
  %v6166 = vunpack.c.h.b16 %v6098
  %v6167 = vunpack.c.l.b16 %v6099
  %v6168 = vunpack.c.h.b16 %v6099
  %v6169 = vunpack.c.l.b16 %v6100
  %v6170 = vunpack.c.h.b16 %v6100
  %v6171 = vunpack.c.l.b16 %v6101
  %v6172 = vunpack.c.h.b16 %v6101
  %v6173 = vunpack.c.l.b16 %v6102
  %v6174 = vunpack.c.h.b16 %v6102
  %v6175 = vunpack.c.l.b16 %v6103
  %v6176 = vunpack.c.h.b16 %v6103
  %v6177 = vunpack.c.l.b16 %v6104
  %v6178 = vunpack.c.h.b16 %v6104
  %v6179 = vunpack.c.l.b16 %v6105
  %v6180 = vunpack.c.h.b16 %v6105
  %v6181 = vunpack.c.l.b16 %v6106
  %v6182 = vunpack.c.h.b16 %v6106
  %v6183 = vunpack.c.l.b16 %v6107
  %v6184 = vunpack.c.h.b16 %v6107
  %v6185 = vunpack.c.l.b16 %v6108
  %v6186 = vunpack.c.h.b16 %v6108
  %v6187 = vunpack.c.l.b16 %v6109
  %v6188 = vunpack.c.h.b16 %v6109
  %v6189 = vunpack.c.l.b16 %v6110
  %v6190 = vunpack.c.h.b16 %v6110
  %v6191 = vunpack.c.l.b16 %v6111
  %v6192 = vunpack.c.h.b16 %v6111
  %v6193 = vunpack.c.l.b16 %v6112
  %v6194 = vunpack.c.h.b16 %v6112
  %v6195 = vunpack.c.l.b16 %v6113
  %v6196 = vunpack.c.h.b16 %v6113
  %v6197 = vunpack.c.l.b16 %v6114
  %v6198 = vunpack.c.h.b16 %v6114
  %v6199 = vunpack.c.l.b16 %v6115
  %v6200 = vunpack.c.h.b16 %v6115
  %v6201 = vunpack.c.l.b16 %v6116
  %v6202 = vunpack.c.h.b16 %v6116
  %v6203 = vunpack.c.l.b16 %v6117
  %v6204 = vunpack.c.h.b16 %v6117
  %v6205 = vunpack.c.l.b16 %v6118
  %v6206 = vunpack.c.h.b16 %v6118
  %v6207 = vunpack.c.l.b16 %v6119
  %v6208 = vunpack.c.h.b16 %v6119
  %v6209 = vunpack.c.l.b16 %v6120
  %v6210 = vunpack.c.h.b16 %v6120
  %v6211 = vunpack.c.l.b16 %v6121
  %v6212 = vunpack.c.h.b16 %v6121
  %v6213 = vunpack.c.l.b16 %v6122
  %v6214 = vunpack.c.h.b16 %v6122
  %v6215 = vunpack.c.l.b16 %v6123
  %v6216 = vunpack.c.h.b16 %v6123
  %v6217 = vunpack.c.l.b16 %v6124
  %v6218 = vunpack.c.h.b16 %v6124
  %v6219 = vunpack.c.l.b16 %v6125
  %v6220 = vunpack.c.h.b16 %v6125
  %v6221 = vunpack.c.l.b16 %v6126
  %v6222 = vunpack.c.h.b16 %v6126
  %v6223 = vpack.c.b16 %v6163, %v6159
  %v6224 = vpack.c.b16 %v6164, %v6160
  %v6225 = vpack.c.b16 %v6165, %v6161
  %v6226 = vpack.c.b16 %v6166, %v6162
  %v6227 = vpack.c.b16 %v6171, %v6167
  %v6228 = vpack.c.b16 %v6172, %v6168
  %v6229 = vpack.c.b16 %v6173, %v6169
  %v6230 = vpack.c.b16 %v6174, %v6170
  %v6231 = vpack.c.b16 %v6179, %v6175
  %v6232 = vpack.c.b16 %v6180, %v6176
  %v6233 = vpack.c.b16 %v6181, %v6177
  %v6234 = vpack.c.b16 %v6182, %v6178
  %v6235 = vpack.c.b16 %v6187, %v6183
  %v6236 = vpack.c.b16 %v6188, %v6184
  %v6237 = vpack.c.b16 %v6189, %v6185
  %v6238 = vpack.c.b16 %v6190, %v6186
  %v6239 = vpack.c.b16 %v6195, %v6191
  %v6240 = vpack.c.b16 %v6196, %v6192
  %v6241 = vpack.c.b16 %v6197, %v6193
  %v6242 = vpack.c.b16 %v6198, %v6194
  %v6243 = vpack.c.b16 %v6203, %v6199
  %v6244 = vpack.c.b16 %v6204, %v6200
  %v6245 = vpack.c.b16 %v6205, %v6201
  %v6246 = vpack.c.b16 %v6206, %v6202
  %v6247 = vpack.c.b16 %v6211, %v6207
  %v6248 = vpack.c.b16 %v6212, %v6208
  %v6249 = vpack.c.b16 %v6213, %v6209
  %v6250 = vpack.c.b16 %v6214, %v6210
  %v6251 = vpack.c.b16 %v6219, %v6215
  %v6252 = vpack.c.b16 %v6220, %v6216
  %v6253 = vpack.c.b16 %v6221, %v6217
  %v6254 = vpack.c.b16 %v6222, %v6218
  %6287 = vmatpush.bf16.msra.mxu0 %v6251
  %6288 = vmatpush.bf16.msra.mxu0 %v6247
  %6289 = vmatpush.bf16.msra.mxu0 %v6243
  %6290 = vmatpush.bf16.msra.mxu0 %v6239
  %6291 = vmatpush.bf16.msra.mxu0 %v6235
  %6292 = vmatpush.bf16.msra.mxu0 %v6231
  %6293 = vmatpush.bf16.msra.mxu0 %v6227
  %6294 = vmatpush.bf16.msra.mxu0 %v6223
  %6295 = vmatmul.bf16.gmra.mxu0 %v6087
  %v6296 = vpop.f32.mrf.mxu0
  %v6297 = vadd.f32 0.0, %v6296
  %v6298 = vpop.f32.mrf.mxu0
  %6299 = vdwg.mxu0
  %6300 = vmatpush.bf16.msra.mxu0 %v6252
  %6301 = vmatpush.bf16.msra.mxu0 %v6248
  %6302 = vmatpush.bf16.msra.mxu0 %v6244
  %6303 = vmatpush.bf16.msra.mxu0 %v6240
  %6304 = vmatpush.bf16.msra.mxu0 %v6236
  %6305 = vmatpush.bf16.msra.mxu0 %v6232
  %6306 = vmatpush.bf16.msra.mxu0 %v6228
  %6307 = vmatpush.bf16.msra.mxu0 %v6224
  %6308 = vmatmul.bf16.gmra.mxu0 %v6087
  %v6309 = vpop.f32.mrf.mxu0
  %v6310 = vadd.f32 0.0, %v6309
  %v6311 = vpop.f32.mrf.mxu0
  %6312 = vdwg.mxu0
  %6313 = vmatpush.bf16.msra.mxu0 %v6253
  %6314 = vmatpush.bf16.msra.mxu0 %v6249
  %6315 = vmatpush.bf16.msra.mxu0 %v6245
  %6316 = vmatpush.bf16.msra.mxu0 %v6241
  %6317 = vmatpush.bf16.msra.mxu0 %v6237
  %6318 = vmatpush.bf16.msra.mxu0 %v6233
  %6319 = vmatpush.bf16.msra.mxu0 %v6229
  %6320 = vmatpush.bf16.msra.mxu0 %v6225
  %6321 = vmatmul.bf16.gmra.mxu0 %v6087
  %v6322 = vpop.f32.mrf.mxu0
  %v6323 = vadd.f32 0.0, %v6322
  %v6324 = vpop.f32.mrf.mxu0
  %6325 = vdwg.mxu0
  %6326 = vmatpush.bf16.msra.mxu0 %v6254
  %6327 = vmatpush.bf16.msra.mxu0 %v6250
  %6328 = vmatpush.bf16.msra.mxu0 %v6246
  %6329 = vmatpush.bf16.msra.mxu0 %v6242
  %6330 = vmatpush.bf16.msra.mxu0 %v6238
  %6331 = vmatpush.bf16.msra.mxu0 %v6234
  %6332 = vmatpush.bf16.msra.mxu0 %v6230
  %6333 = vmatpush.bf16.msra.mxu0 %v6226
  %6334 = vmatmul.bf16.gmra.mxu0 %v6087
  %v6335 = vpop.f32.mrf.mxu0
  %v6336 = vadd.f32 0.0, %v6335
  %v6337 = vpop.f32.mrf.mxu0
  %6338 = vdwg.mxu0
  %v6339 = vadd.f32 %v6091, %v6297
  %v6340 = vadd.f32 %v6092, %v6310
  %v6341 = vadd.f32 %v6093, %v6323
  %v6342 = vadd.f32 %v6094, %v6336
  %v6343 = vxor.u32 %v6339, 2147483648
  %v6344 = vxor.u32 %v6340, 2147483648
  %v6345 = vxor.u32 %v6341, 2147483648
  %v6346 = vmul.f32 %v6343, 1.442695
  %v6347 = vpow.pop %v6346
  %v6348 = vmul.f32 %v6344, 1.442695
  %v6349 = vpow.pop %v6348
  %v6350 = vmul.f32 %v6345, 1.442695
  %v6351 = vpow.pop %v6350
  %v6352 = vadd.f32 %v6347, 1.0
  %v6353 = vadd.f32 %v6349, 1.0
  %v6354 = vadd.f32 %v6351, 1.0
  %v6355 = vrcp.pop %v6352
  %v6356 = vmul.f32 %v6352, %v6355
  %v6357 = vsub.f32 1.0, %v6356
  %v6358 = vmul.f32 %v6355, %v6357
  %v6359 = vadd.f32 %v6355, %v6358
  %vm6360 = vweird.f32 %v6352
  %vm6361 = vweird.f32 %v6355
  %vm6362 = vmor %vm6360, %vm6361
  %v6363 = vsel %vm6362, %v6355, %v6359
  %v6364 = vand.u32 2147483647, %v6352
  %vm6365 = vcmp.eq.f32.partialorder %v6364, 8.507059e+37
  %v6366 = vand.u32 %v6352, 2147483648
  %v6367 = vor.u32 1.1754944e-38, %v6366
  %v6368 = vsel %vm6365, %v6367, %v6363
  %v6369 = vmul.f32 1.0, %v6368
  %v6370 = vrcp.pop %v6353
  %v6371 = vmul.f32 %v6353, %v6370
  %v6372 = vsub.f32 1.0, %v6371
  %v6373 = vmul.f32 %v6370, %v6372
  %v6374 = vadd.f32 %v6370, %v6373
  %vm6375 = vweird.f32 %v6353
  %vm6376 = vweird.f32 %v6370
  %vm6377 = vmor %vm6375, %vm6376
  %v6378 = vsel %vm6377, %v6370, %v6374
  %v6379 = vand.u32 2147483647, %v6353
  %vm6380 = vcmp.eq.f32.partialorder %v6379, 8.507059e+37
  %v6381 = vand.u32 %v6353, 2147483648
  %v6382 = vor.u32 1.1754944e-38, %v6381
  %v6383 = vsel %vm6380, %v6382, %v6378
  %v6384 = vmul.f32 1.0, %v6383
  %v6385 = vrcp.pop %v6354
  %v6386 = vmul.f32 %v6354, %v6385
  %v6387 = vsub.f32 1.0, %v6386
  %v6388 = vmul.f32 %v6385, %v6387
  %v6389 = vadd.f32 %v6385, %v6388
  %vm6390 = vweird.f32 %v6354
  %vm6391 = vweird.f32 %v6385
  %vm6392 = vmor %vm6390, %vm6391
  %v6393 = vsel %vm6392, %v6385, %v6389
  %v6394 = vand.u32 2147483647, %v6354
  %vm6395 = vcmp.eq.f32.partialorder %v6394, 8.507059e+37
  %v6396 = vand.u32 %v6354, 2147483648
  %v6397 = vor.u32 1.1754944e-38, %v6396
  %v6398 = vsel %vm6395, %v6397, %v6393
  %v6399 = vmul.f32 1.0, %v6398
  %v6400 = vtanh.pop %v6342
  %v6401 = vmul.f32 %v6384, %v6084
  %v6402 = vmul.f32 %v6369, %v6400
  %v6403 = vadd.f32 %v6401, %v6402
  %v6404 = vtanh.pop %v6403
  %v6405 = vmul.f32 %v6399, %v6404
  %v6406 = vpack.c.bf16 %v6405, %v6405
  %s6407 = scalar_lea.vmem %s4, 76
  %6408 = vst [vmem:[%s6407] sm:$0xf] %v6406
  %6409 = vst [vmem:[#allocation2] sm:$0xff] %v6405
  %6410 = vst [vmem:[#allocation3] sm:$0xff] %v6403
  // Predicated region
  $region22: #{lstm_forward.1} parent=0 // pred_check
    %p6411 = pneg %p20
  $region23: #{lstm_forward.1} parent=0 // pred_check_branch
    %6413 = sbr.rel (%p6411) target = $region25
  $region24: #{lstm_forward.1} parent=0 // pred_region
    %6414 = vst [vmem:[%s5] sm:$0xff] %v6405
    %6415 = vst [vmem:[%s6] sm:$0xff] %v6403
  $region25: #{lstm_forward.1} parent=0 // pred_fallthru
    _
  // Predicated region
  $region26: #{lstm_forward.1} parent=0 // pred_check
    _
  $region27: #{lstm_forward.1} parent=0 // pred_check_branch
    %6417 = sbr.rel (0) target = $region29
  $region28: #{lstm_forward.1} parent=0 // pred_region
    _
  $region29: #{lstm_forward.1} parent=0 // pred_fallthru
    _
  // Predicated region
  $region30: #{lstm_forward.1} parent=0 // pred_check
    _
  $region31: #{lstm_forward.1} parent=0 // pred_check_branch
    %6419 = sbr.rel (0) target = $region33
  $region32: #{lstm_forward.1} parent=0 // pred_region
    _
  $region33: #{lstm_forward.1} parent=0 // pred_fallthru
    _
  // Predicated region
  $region34: #{lstm_forward.1} parent=0 // pred_check
    _
  $region35: #{lstm_forward.1} parent=0 // pred_check_branch
    %6421 = sbr.rel (0) target = $region37
  $region36: #{lstm_forward.1} parent=0 // pred_region
    _
  $region37: #{lstm_forward.1} parent=0 // pred_fallthru
    _
  // Predicated region
  $region38: #{lstm_forward.1} parent=0 // pred_check
    _
  $region39: #{lstm_forward.1} parent=0 // pred_check_branch
    %6423 = sbr.rel (0) target = $region41
  $region40: #{lstm_forward.1} parent=0 // pred_region
    _
  $region41: #{lstm_forward.1} parent=0 // pred_fallthru
    _
  // Predicated region
  $region42: #{lstm_forward.1} parent=0 // pred_check
    _
  $region43: #{lstm_forward.1} parent=0 // pred_check_branch
    %6425 = sbr.rel (0) target = $region45
  $region44: #{lstm_forward.1} parent=0 // pred_region
    _
  $region45: #{lstm_forward.1} parent=0 // pred_fallthru
    _
  // Predicated region
  $region46: #{lstm_forward.1} parent=0 // pred_check
    _
  $region47: #{lstm_forward.1} parent=0 // pred_check_branch
    %6427 = sbr.rel (0) target = $region49
  $region48: #{lstm_forward.1} parent=0 // pred_region
    _
  $region49: #{lstm_forward.1} parent=0 // pred_fallthru
    _

</llo_original>
